<compile_context>
chip_gen: v6e
topology: v6e:2x2x1
jax: 0.10.0
libtpu: 0.0.40
codegen_flags: <defaults>
</compile_context>

<pallas_src>
import functools

import jax
import jax.numpy as jnp
from jax import lax
from jax.experimental import pallas as pl
from jax.experimental.pallas import tpu as pltpu


def _round_up(x, m):
    return (x + m - 1) // m * m


def _vmem_capacity_bytes():
    try:
        return int(pltpu.get_tpu_info().vmem_capacity_bytes)
    except Exception:
        return 64 * 1024 * 1024            # conservative default (v7x per-TC VMEM)


# ----------------------------------------------------------------------------
# 3x3 "valid" conv on a VMEM slab -> f32 accumulator (BN scale already folded
# into the weights).  Nine per-tap matmuls; no im2col patch is materialized.
# ----------------------------------------------------------------------------
def _conv3x3_valid(slab, w_ref, rows, cols, cin):
    """slab: (rows+2, >=cols+2, cin) -> (rows*cols, cout) in f32."""
    acc = None
    for dy in range(3):
        for dx in range(3):
            tap = slab[dy:dy + rows, dx:dx + cols, :].reshape(rows * cols, cin)
            d = jnp.dot(tap, w_ref[dy, dx], preferred_element_type=jnp.float32)
            acc = d if acc is None else acc + d
    return acc


# ----------------------------------------------------------------------------
# Fused ResBlock kernel: conv1+BN+ReLU -> (reflection pad in VMEM) -> conv2+BN
# -> +residual, for one (batch, row-tile) grid step.
# ----------------------------------------------------------------------------
def _resblock_kernel(xm_ref, xt_ref, xb_ref, w1_ref, w2_ref, sh1_ref, sh2_ref,
                     out_ref, xs_ref, yp_ref, *, TH, W, C):
    i = pl.program_id(1)
    nt = pl.num_programs(1)
    cdt = xs_ref.dtype

    # ---- assemble conv1's reflection-padded input slab in VMEM ----
    # slab row s <-> x row (i*TH - 2 + s); cols [1, W+1) are real, col 0 / W+1
    # are the W reflection.  The halo blocks are edge-clamped by their index
    # maps, so at the top image edge slab row 1 (= x[-1]) already holds x[1]
    # and at the bottom edge slab row TH+2 (= x[H]) holds x[H-2]; the remaining
    # out-of-image slab rows feed only y halo rows that are overwritten below.
    xs_ref[0:2, 1:W + 1, :] = xt_ref[0].astype(cdt)
    xs_ref[2:TH + 2, 1:W + 1, :] = xm_ref[0].astype(cdt)
    xs_ref[TH + 2:TH + 4, 1:W + 1, :] = xb_ref[0].astype(cdt)
    xs_ref[:, 0:1, :] = xs_ref[:, 2:3, :]                 # left  reflect: x[:,-1] = x[:,1]
    xs_ref[:, W + 1:W + 2, :] = xs_ref[:, W - 1:W, :]     # right reflect: x[:, W] = x[:,W-2]

    # ---- conv1 + folded BN + ReLU over TH+2 rows (incl. conv2's halo rows) ----
    a1 = _conv3x3_valid(xs_ref[...], w1_ref, TH + 2, W, C)      # ((TH+2)*W, C) f32
    y = jnp.maximum(a1 + sh1_ref[...], 0.0).astype(cdt).reshape(TH + 2, W, C)

    # ---- build conv2's reflection-padded input slab ----
    yp_ref[:, 1:W + 1, :] = y
    yp_ref[:, 0:1, :] = y[:, 1:2, :]                      # left  reflect
    yp_ref[:, W + 1:W + 2, :] = y[:, W - 2:W - 1, :]      # right reflect

    @pl.when(i == 0)            # top image edge: halo row y[-1] := y[1]
    def _():
        yp_ref[0:1] = yp_ref[2:3]

    @pl.when(i == nt - 1)       # bottom image edge: halo row y[H] := y[H-2]
    def _():
        yp_ref[TH + 1:TH + 2] = yp_ref[TH - 1:TH]

    # ---- conv2 + folded BN + residual (residual comes from the same x tile) ----
    a2 = _conv3x3_valid(yp_ref[...], w2_ref, TH, W, C)          # (TH*W, C) f32
    out = (a2 + sh2_ref[...]).reshape(TH, W, C) + xm_ref[0].astype(jnp.float32)
    out_ref[0] = out.astype(out_ref.dtype)


# ----------------------------------------------------------------------------
# VMEM-budget-aware tile-height selection.
# ----------------------------------------------------------------------------
def _pick_tile_h(H, W, C, io_item, c_item, budget, single_image):
    """Largest even divisor of H whose per-step VMEM working set fits `budget`."""
    Wp = _round_up(W + 2, 8)

    def vmem_need(th):
        io_blk = th * W * C * io_item              # input row-tile == output row-tile
        halo = 2 * W * C * io_item
        scratch = ((th + 4) + (th + 2)) * Wp * C * c_item
        f32_tmp = 4 * (th + 2) * W * C * 4         # a1 / y / a2 / out f32 temporaries
        wts = 2 * 2 * 9 * C * C * c_item           # two weights, double-buffered
        return 2 * (2 * io_blk + 2 * halo) + scratch + f32_tmp + wts

    # When N == 1, keep >= 2 row tiles so a v7x megacore can shard the grid.
    cap = H if not single_image else max(2, H // 2)
    best = 2
    for th in range(2, min(H, 512) + 1, 2):
        if H % th == 0 and th <= cap and vmem_need(th) <= budget:
            best = th
    return best


# ----------------------------------------------------------------------------
# Public forward (NCHW in / NCHW out).
# ----------------------------------------------------------------------------
def resblock_forward(x_nchw, params, *, tile_h=None, compute_dtype=None):
    eps = 1e-5
    x = jnp.transpose(x_nchw, (0, 2, 3, 1))                  # NCHW -> NHWC
    N, H, W, C = x.shape
    io_dtype = x.dtype
    cdt = jnp.dtype(io_dtype if compute_dtype is None else compute_dtype)
    assert H % 2 == 0 and H >= 2 and W >= 2, \
        "kernel assumes even H >= 2 and W >= 2 (reflection padding / halo blocks)"
    # TODO(synk): odd H or non-divisor tile heights would need edge-tile masking.

    # ---- host-side reparameterization: fold conv bias + BN into weight/shift ----
    s1 = params["gamma1"] / jnp.sqrt(params["var1"] + eps)
    s2 = params["gamma2"] / jnp.sqrt(params["var2"] + eps)
    w1 = (jnp.transpose(params["w1"], (2, 3, 1, 0)) * s1).astype(cdt)    # OIHW -> HWIO
    w2 = (jnp.transpose(params["w2"], (2, 3, 1, 0)) * s2).astype(cdt)
    sh1 = ((params["b1"] - params["mean1"]) * s1
           + params["beta1"]).reshape(1, C).astype(jnp.float32)
    sh2 = ((params["b2"] - params["mean2"]) * s2
           + params["beta2"]).reshape(1, C).astype(jnp.float32)

    # ---- generation-aware VMEM budget / tile height ----
    vmem_cap = _vmem_capacity_bytes()
    vmem_limit = int(min(vmem_cap * 3 // 4, 100 * 1024 * 1024))  # ~48 MiB v7x, ~96 MiB v5e/v6e
    io_item = jnp.dtype(io_dtype).itemsize
    c_item = cdt.itemsize
    if tile_h is None:
        TH = _pick_tile_h(H, W, C, io_item, c_item, int(vmem_limit * 0.8), N == 1)
    else:
        TH = tile_h
    assert H % TH == 0 and TH % 2 == 0, "tile_h must be an even divisor of H"
    nt = H // TH
    TH2 = TH // 2
    last_halo_blk = H // 2 - 1
    Wp = _round_up(W + 2, 8)                   # sublane-aligned scratch width

    kern = functools.partial(_resblock_kernel, TH=TH, W=W, C=C)

    out = pl.pallas_call(
        kern,
        out_shape=jax.ShapeDtypeStruct((N, H, W, C), io_dtype),
        grid_spec=pltpu.PrefetchScalarGridSpec(
            num_scalar_prefetch=0,
            grid=(N, nt),
            in_specs=[
                # row tile of x (also serves as the residual)
                pl.BlockSpec((1, TH, W, C), lambda n, i: (n, i, 0, 0)),
                # 2-row top halo (x rows r0-2, r0-1), clamped at the top edge
                pl.BlockSpec((1, 2, W, C),
                             lambda n, i: (n, jnp.maximum(i * TH2 - 1, 0), 0, 0)),
                # 2-row bottom halo (x rows r0+TH, r0+TH+1), clamped at the bottom edge
                pl.BlockSpec((1, 2, W, C),
                             lambda n, i: (n, jnp.minimum((i + 1) * TH2, last_halo_blk), 0, 0)),
                # weights / shifts: constant index map -> fetched once, stay resident.
                # NOTE: at large C these could be single-buffered (pl.Buffered(1))
                # to save a few MiB of VMEM; left at the default for compatibility.
                pl.BlockSpec((3, 3, C, C), lambda n, i: (0, 0, 0, 0)),
                pl.BlockSpec((3, 3, C, C), lambda n, i: (0, 0, 0, 0)),
                pl.BlockSpec((1, C), lambda n, i: (0, 0)),
                pl.BlockSpec((1, C), lambda n, i: (0, 0)),
            ],
            out_specs=pl.BlockSpec((1, TH, W, C), lambda n, i: (n, i, 0, 0)),
            scratch_shapes=[
                pltpu.VMEM((TH + 4, Wp, C), cdt),   # conv1 reflection-padded input slab
                pltpu.VMEM((TH + 2, Wp, C), cdt),   # conv2 reflection-padded input slab
            ],
        ),
        compiler_params=pltpu.CompilerParams(
            dimension_semantics=("parallel", "parallel"),
            vmem_limit_bytes=vmem_limit,
        ),
    )(x, x, x, w1, w2, sh1, sh2)

    return jnp.transpose(out, (0, 3, 1, 2))                  # NHWC -> NCHW


# ----------------------------------------------------------------------------
# Pure-JAX reference (same semantics) for the correctness check.
# ----------------------------------------------------------------------------
def resblock_reference(x, p):
    eps = 1e-5

    def bn(z, g, b, m, v):
        return (z - m[None, :, None, None]) / jnp.sqrt(v[None, :, None, None] + eps) \
               * g[None, :, None, None] + b[None, :, None, None]

    def conv(z, w, b):
        zp = jnp.pad(z, ((0, 0), (0, 0), (1, 1), (1, 1)), mode="reflect")
        y = lax.conv_general_dilated(zp, w, (1, 1), "VALID",
                                     dimension_numbers=("NCHW", "OIHW", "NCHW"))
        return y + b[None, :, None, None]

    y = jax.nn.relu(bn(conv(x, p["w1"], p["b1"]),
                       p["gamma1"], p["beta1"], p["mean1"], p["var1"]))
    y = bn(conv(y, p["w2"], p["b2"]),
           p["gamma2"], p["beta2"], p["mean2"], p["var2"])
    return x + y


def init_params(key, c):
    ks = jax.random.split(key, 12)
    p = {}
    p["w1"] = 0.1 * jax.random.normal(ks[0], (c, c, 3, 3), jnp.float32)   # OIHW
    p["b1"] = 0.1 * jax.random.normal(ks[1], (c,), jnp.float32)
    p["gamma1"] = 1.0 + 0.1 * jax.random.normal(ks[2], (c,), jnp.float32)
    p["beta1"] = 0.1 * jax.random.normal(ks[3], (c,), jnp.float32)
    p["mean1"] = 0.1 * jax.random.normal(ks[4], (c,), jnp.float32)
    p["var1"] = 1.0 + 0.1 * jnp.abs(jax.random.normal(ks[5], (c,), jnp.float32))
    p["w2"] = 0.1 * jax.random.normal(ks[6], (c, c, 3, 3), jnp.float32)
    p["b2"] = 0.1 * jax.random.normal(ks[7], (c,), jnp.float32)
    p["gamma2"] = 1.0 + 0.1 * jax.random.normal(ks[8], (c,), jnp.float32)
    p["beta2"] = 0.1 * jax.random.normal(ks[9], (c,), jnp.float32)
    p["mean2"] = 0.1 * jax.random.normal(ks[10], (c,), jnp.float32)
    p["var2"] = 1.0 + 0.1 * jnp.abs(jax.random.normal(ks[11], (c,), jnp.float32))
    return p


if __name__ == "__main__":
    N, C, H, W = 2, 4, 16, 16
    key = jax.random.PRNGKey(0)
    kx, kp = jax.random.split(key)

    x = jax.random.normal(kx, (N, C, H, W), jnp.float32)      # NCHW, like PyTorch
    params = init_params(kp, C)

    ref = jax.block_until_ready(resblock_reference(x, params))

    fwd = jax.jit(resblock_forward, static_argnames=("tile_h", "compute_dtype"))

    # default (VMEM-budget-chosen) row tiling, f32 compute
    out = jax.block_until_ready(fwd(x, params))
    assert out.shape == (N, C, H, W)
    assert jnp.allclose(out, ref, atol=1e-3, rtol=1e-3), \
        f"max abs diff {jnp.max(jnp.abs(out - ref))}"

    # force 4 row tiles to exercise halo-block clamping + reflection fix-ups
    out_tiled = jax.block_until_ready(fwd(x, params, tile_h=4))
    assert jnp.allclose(out_tiled, ref, atol=1e-3, rtol=1e-3), \
        f"max abs diff (tiled) {jnp.max(jnp.abs(out_tiled - ref))}"

    # bf16 MXU path (f32 accumulation + f32 epilogue), looser tolerance
    out_bf16 = jax.block_until_ready(
        fwd(x, params, tile_h=8, compute_dtype=jnp.bfloat16))
    assert jnp.allclose(out_bf16, ref, atol=5e-2, rtol=5e-2), \
        f"max abs diff (bf16) {jnp.max(jnp.abs(out_bf16 - ref))}"

    print("KERNEL_OK")
</pallas_src>

<mosaic_0001>
module attributes {stable_mosaic.version = 11 : i64} {
  func.func @_resblock_kernel(%arg0: i32, %arg1: i32, %arg2: memref<1x16x16x4xf32, #tpu.memory_space<vmem>>, %arg3: memref<1x2x16x4xf32, #tpu.memory_space<vmem>>, %arg4: memref<1x2x16x4xf32, #tpu.memory_space<vmem>>, %arg5: memref<3x3x4x4xf32, #tpu.memory_space<vmem>>, %arg6: memref<3x3x4x4xf32, #tpu.memory_space<vmem>>, %arg7: memref<1x4xf32, #tpu.memory_space<vmem>>, %arg8: memref<1x4xf32, #tpu.memory_space<vmem>>, %arg9: memref<1x16x16x4xf32, #tpu.memory_space<vmem>>, %arg10: memref<20x24x4xf32, #tpu.memory_space<vmem>>, %arg11: memref<18x24x4xf32, #tpu.memory_space<vmem>>) attributes {dimension_semantics = [#tpu.dimension_semantics<parallel>, #tpu.dimension_semantics<parallel>], iteration_bounds = array<i64: 2, 1>, scalar_prefetch = 0 : i64, scratch_operands = 2 : i64, tpu.core_type = #tpu.core_type<tc>, window_params = [{transform_indices = @transform_0, window_bounds = array<i64: 1, 16, 16, 4>}, {transform_indices = @transform_1, window_bounds = array<i64: 1, 2, 16, 4>}, {transform_indices = @transform_2, window_bounds = array<i64: 1, 2, 16, 4>}, {pipeline_mode = #tpu.pipeline_mode<synchronous>, transform_indices = @transform_3, window_bounds = array<i64: 3, 3, 4, 4>}, {pipeline_mode = #tpu.pipeline_mode<synchronous>, transform_indices = @transform_4, window_bounds = array<i64: 3, 3, 4, 4>}, {pipeline_mode = #tpu.pipeline_mode<synchronous>, transform_indices = @transform_5, window_bounds = array<i64: 1, 4>}, {pipeline_mode = #tpu.pipeline_mode<synchronous>, transform_indices = @transform_6, window_bounds = array<i64: 1, 4>}, {transform_indices = @transform_7, window_bounds = array<i64: 1, 16, 16, 4>}]} {
    %c0 = arith.constant 0 : index
    %c0_0 = arith.constant 0 : index
    %c0_1 = arith.constant 0 : index
    %c0_2 = arith.constant 0 : index
    %0 = vector.load %arg3[%c0, %c0_0, %c0_1, %c0_2] : memref<1x2x16x4xf32, #tpu.memory_space<vmem>>, vector<1x2x16x4xf32>
    %1 = vector.shape_cast %0 : vector<1x2x16x4xf32> to vector<2x16x4xf32>
    %c0_3 = arith.constant 0 : index
    %c1 = arith.constant 1 : index
    %c0_4 = arith.constant 0 : index
    %2 = vector.load %arg10[%c0_3, %c1, %c0_4] : memref<20x24x4xf32, #tpu.memory_space<vmem>>, vector<2x16x4xf32>
    tpu.vector_store %arg10[%c0_3, %c1, %c0_4], %1 {strides = array<i32>} : memref<20x24x4xf32, #tpu.memory_space<vmem>>, vector<2x16x4xf32>,
    %c0_5 = arith.constant 0 : index
    %c0_6 = arith.constant 0 : index
    %c0_7 = arith.constant 0 : index
    %c0_8 = arith.constant 0 : index
    %3 = vector.load %arg2[%c0_5, %c0_6, %c0_7, %c0_8] : memref<1x16x16x4xf32, #tpu.memory_space<vmem>>, vector<1x16x16x4xf32>
    %4 = vector.shape_cast %3 : vector<1x16x16x4xf32> to vector<16x16x4xf32>
    %c2 = arith.constant 2 : index
    %c1_9 = arith.constant 1 : index
    %c0_10 = arith.constant 0 : index
    %5 = vector.load %arg10[%c2, %c1_9, %c0_10] : memref<20x24x4xf32, #tpu.memory_space<vmem>>, vector<16x16x4xf32>
    tpu.vector_store %arg10[%c2, %c1_9, %c0_10], %4 {strides = array<i32>} : memref<20x24x4xf32, #tpu.memory_space<vmem>>, vector<16x16x4xf32>,
    %c0_11 = arith.constant 0 : index
    %c0_12 = arith.constant 0 : index
    %c0_13 = arith.constant 0 : index
    %c0_14 = arith.constant 0 : index
    %6 = vector.load %arg4[%c0_11, %c0_12, %c0_13, %c0_14] : memref<1x2x16x4xf32, #tpu.memory_space<vmem>>, vector<1x2x16x4xf32>
    %7 = vector.shape_cast %6 : vector<1x2x16x4xf32> to vector<2x16x4xf32>
    %c18 = arith.constant 18 : index
    %c1_15 = arith.constant 1 : index
    %c0_16 = arith.constant 0 : index
    %8 = vector.load %arg10[%c18, %c1_15, %c0_16] : memref<20x24x4xf32, #tpu.memory_space<vmem>>, vector<2x16x4xf32>
    tpu.vector_store %arg10[%c18, %c1_15, %c0_16], %7 {strides = array<i32>} : memref<20x24x4xf32, #tpu.memory_space<vmem>>, vector<2x16x4xf32>,
    %c0_17 = arith.constant 0 : index
    %c2_18 = arith.constant 2 : index
    %c0_19 = arith.constant 0 : index
    %9 = vector.load %arg10[%c0_17, %c2_18, %c0_19] : memref<20x24x4xf32, #tpu.memory_space<vmem>>, vector<20x1x4xf32>
    %c0_20 = arith.constant 0 : index
    %c0_21 = arith.constant 0 : index
    %c0_22 = arith.constant 0 : index
    %10 = vector.load %arg10[%c0_20, %c0_21, %c0_22] : memref<20x24x4xf32, #tpu.memory_space<vmem>>, vector<20x1x4xf32>
    tpu.vector_store %arg10[%c0_20, %c0_21, %c0_22], %9 {strides = array<i32>} : memref<20x24x4xf32, #tpu.memory_space<vmem>>, vector<20x1x4xf32>,
    %c0_23 = arith.constant 0 : index
    %c15 = arith.constant 15 : index
    %c0_24 = arith.constant 0 : index
    %11 = vector.load %arg10[%c0_23, %c15, %c0_24] : memref<20x24x4xf32, #tpu.memory_space<vmem>>, vector<20x1x4xf32>
    %c0_25 = arith.constant 0 : index
    %c17 = arith.constant 17 : index
    %c0_26 = arith.constant 0 : index
    %12 = vector.load %arg10[%c0_25, %c17, %c0_26] : memref<20x24x4xf32, #tpu.memory_space<vmem>>, vector<20x1x4xf32>
    tpu.vector_store %arg10[%c0_25, %c17, %c0_26], %11 {strides = array<i32>} : memref<20x24x4xf32, #tpu.memory_space<vmem>>, vector<20x1x4xf32>,
    %c0_27 = arith.constant 0 : index
    %c0_28 = arith.constant 0 : index
    %c0_29 = arith.constant 0 : index
    %13 = vector.load %arg10[%c0_27, %c0_28, %c0_29] : memref<20x24x4xf32, #tpu.memory_space<vmem>>, vector<20x24x4xf32>
    %14 = vector.extract_strided_slice %13 {offsets = [0, 0, 0], sizes = [18, 16, 4], strides = [1, 1, 1]} : vector<20x24x4xf32> to vector<18x16x4xf32>
    %15 = vector.shape_cast %14 : vector<18x16x4xf32> to vector<288x4xf32>
    %c0_30 = arith.constant 0 : index
    %c0_31 = arith.constant 0 : index
    %c0_32 = arith.constant 0 : index
    %c0_33 = arith.constant 0 : index
    %16 = vector.load %arg5[%c0_30, %c0_31, %c0_32, %c0_33] : memref<3x3x4x4xf32, #tpu.memory_space<vmem>>, vector<1x1x4x4xf32>
    %17 = vector.shape_cast %16 : vector<1x1x4x4xf32> to vector<4x4xf32>
    %cst = arith.constant dense<0.000000e+00> : vector<288x4xf32>
    %18 = tpu.matmul %15, %17, %cst {dimension_numbers = #tpu.dot_dimension_numbers<[1], [0], [0], [1], [0, 0, 1, 1], [], []>} : vector<288x4xf32>, vector<4x4xf32>, vector<288x4xf32> -> vector<288x4xf32>
    %19 = vector.extract_strided_slice %13 {offsets = [0, 1, 0], sizes = [18, 16, 4], strides = [1, 1, 1]} : vector<20x24x4xf32> to vector<18x16x4xf32>
    %20 = vector.shape_cast %19 : vector<18x16x4xf32> to vector<288x4xf32>
    %c0_34 = arith.constant 0 : index
    %c1_35 = arith.constant 1 : index
    %c0_36 = arith.constant 0 : index
    %c0_37 = arith.constant 0 : index
    %21 = vector.load %arg5[%c0_34, %c1_35, %c0_36, %c0_37] : memref<3x3x4x4xf32, #tpu.memory_space<vmem>>, vector<1x1x4x4xf32>
    %22 = vector.shape_cast %21 : vector<1x1x4x4xf32> to vector<4x4xf32>
    %cst_38 = arith.constant dense<0.000000e+00> : vector<288x4xf32>
    %23 = tpu.matmul %20, %22, %cst_38 {dimension_numbers = #tpu.dot_dimension_numbers<[1], [0], [0], [1], [0, 0, 1, 1], [], []>} : vector<288x4xf32>, vector<4x4xf32>, vector<288x4xf32> -> vector<288x4xf32>
    %24 = arith.addf %18, %23 : vector<288x4xf32>
    %25 = vector.extract_strided_slice %13 {offsets = [0, 2, 0], sizes = [18, 16, 4], strides = [1, 1, 1]} : vector<20x24x4xf32> to vector<18x16x4xf32>
    %26 = vector.shape_cast %25 : vector<18x16x4xf32> to vector<288x4xf32>
    %c0_39 = arith.constant 0 : index
    %c2_40 = arith.constant 2 : index
    %c0_41 = arith.constant 0 : index
    %c0_42 = arith.constant 0 : index
    %27 = vector.load %arg5[%c0_39, %c2_40, %c0_41, %c0_42] : memref<3x3x4x4xf32, #tpu.memory_space<vmem>>, vector<1x1x4x4xf32>
    %28 = vector.shape_cast %27 : vector<1x1x4x4xf32> to vector<4x4xf32>
    %cst_43 = arith.constant dense<0.000000e+00> : vector<288x4xf32>
    %29 = tpu.matmul %26, %28, %cst_43 {dimension_numbers = #tpu.dot_dimension_numbers<[1], [0], [0], [1], [0, 0, 1, 1], [], []>} : vector<288x4xf32>, vector<4x4xf32>, vector<288x4xf32> -> vector<288x4xf32>
    %30 = arith.addf %24, %29 : vector<288x4xf32>
    %31 = vector.extract_strided_slice %13 {offsets = [1, 0, 0], sizes = [18, 16, 4], strides = [1, 1, 1]} : vector<20x24x4xf32> to vector<18x16x4xf32>
    %32 = vector.shape_cast %31 : vector<18x16x4xf32> to vector<288x4xf32>
    %c1_44 = arith.constant 1 : index
    %c0_45 = arith.constant 0 : index
    %c0_46 = arith.constant 0 : index
    %c0_47 = arith.constant 0 : index
    %33 = vector.load %arg5[%c1_44, %c0_45, %c0_46, %c0_47] : memref<3x3x4x4xf32, #tpu.memory_space<vmem>>, vector<1x1x4x4xf32>
    %34 = vector.shape_cast %33 : vector<1x1x4x4xf32> to vector<4x4xf32>
    %cst_48 = arith.constant dense<0.000000e+00> : vector<288x4xf32>
    %35 = tpu.matmul %32, %34, %cst_48 {dimension_numbers = #tpu.dot_dimension_numbers<[1], [0], [0], [1], [0, 0, 1, 1], [], []>} : vector<288x4xf32>, vector<4x4xf32>, vector<288x4xf32> -> vector<288x4xf32>
    %36 = arith.addf %30, %35 : vector<288x4xf32>
    %37 = vector.extract_strided_slice %13 {offsets = [1, 1, 0], sizes = [18, 16, 4], strides = [1, 1, 1]} : vector<20x24x4xf32> to vector<18x16x4xf32>
    %38 = vector.shape_cast %37 : vector<18x16x4xf32> to vector<288x4xf32>
    %c1_49 = arith.constant 1 : index
    %c1_50 = arith.constant 1 : index
    %c0_51 = arith.constant 0 : index
    %c0_52 = arith.constant 0 : index
    %39 = vector.load %arg5[%c1_49, %c1_50, %c0_51, %c0_52] : memref<3x3x4x4xf32, #tpu.memory_space<vmem>>, vector<1x1x4x4xf32>
    %40 = vector.shape_cast %39 : vector<1x1x4x4xf32> to vector<4x4xf32>
    %cst_53 = arith.constant dense<0.000000e+00> : vector<288x4xf32>
    %41 = tpu.matmul %38, %40, %cst_53 {dimension_numbers = #tpu.dot_dimension_numbers<[1], [0], [0], [1], [0, 0, 1, 1], [], []>} : vector<288x4xf32>, vector<4x4xf32>, vector<288x4xf32> -> vector<288x4xf32>
    %42 = arith.addf %36, %41 : vector<288x4xf32>
    %43 = vector.extract_strided_slice %13 {offsets = [1, 2, 0], sizes = [18, 16, 4], strides = [1, 1, 1]} : vector<20x24x4xf32> to vector<18x16x4xf32>
    %44 = vector.shape_cast %43 : vector<18x16x4xf32> to vector<288x4xf32>
    %c1_54 = arith.constant 1 : index
    %c2_55 = arith.constant 2 : index
    %c0_56 = arith.constant 0 : index
    %c0_57 = arith.constant 0 : index
    %45 = vector.load %arg5[%c1_54, %c2_55, %c0_56, %c0_57] : memref<3x3x4x4xf32, #tpu.memory_space<vmem>>, vector<1x1x4x4xf32>
    %46 = vector.shape_cast %45 : vector<1x1x4x4xf32> to vector<4x4xf32>
    %cst_58 = arith.constant dense<0.000000e+00> : vector<288x4xf32>
    %47 = tpu.matmul %44, %46, %cst_58 {dimension_numbers = #tpu.dot_dimension_numbers<[1], [0], [0], [1], [0, 0, 1, 1], [], []>} : vector<288x4xf32>, vector<4x4xf32>, vector<288x4xf32> -> vector<288x4xf32>
    %48 = arith.addf %42, %47 : vector<288x4xf32>
    %49 = vector.extract_strided_slice %13 {offsets = [2, 0, 0], sizes = [18, 16, 4], strides = [1, 1, 1]} : vector<20x24x4xf32> to vector<18x16x4xf32>
    %50 = vector.shape_cast %49 : vector<18x16x4xf32> to vector<288x4xf32>
    %c2_59 = arith.constant 2 : index
    %c0_60 = arith.constant 0 : index
    %c0_61 = arith.constant 0 : index
    %c0_62 = arith.constant 0 : index
    %51 = vector.load %arg5[%c2_59, %c0_60, %c0_61, %c0_62] : memref<3x3x4x4xf32, #tpu.memory_space<vmem>>, vector<1x1x4x4xf32>
    %52 = vector.shape_cast %51 : vector<1x1x4x4xf32> to vector<4x4xf32>
    %cst_63 = arith.constant dense<0.000000e+00> : vector<288x4xf32>
    %53 = tpu.matmul %50, %52, %cst_63 {dimension_numbers = #tpu.dot_dimension_numbers<[1], [0], [0], [1], [0, 0, 1, 1], [], []>} : vector<288x4xf32>, vector<4x4xf32>, vector<288x4xf32> -> vector<288x4xf32>
    %54 = arith.addf %48, %53 : vector<288x4xf32>
    %55 = vector.extract_strided_slice %13 {offsets = [2, 1, 0], sizes = [18, 16, 4], strides = [1, 1, 1]} : vector<20x24x4xf32> to vector<18x16x4xf32>
    %56 = vector.shape_cast %55 : vector<18x16x4xf32> to vector<288x4xf32>
    %c2_64 = arith.constant 2 : index
    %c1_65 = arith.constant 1 : index
    %c0_66 = arith.constant 0 : index
    %c0_67 = arith.constant 0 : index
    %57 = vector.load %arg5[%c2_64, %c1_65, %c0_66, %c0_67] : memref<3x3x4x4xf32, #tpu.memory_space<vmem>>, vector<1x1x4x4xf32>
    %58 = vector.shape_cast %57 : vector<1x1x4x4xf32> to vector<4x4xf32>
    %cst_68 = arith.constant dense<0.000000e+00> : vector<288x4xf32>
    %59 = tpu.matmul %56, %58, %cst_68 {dimension_numbers = #tpu.dot_dimension_numbers<[1], [0], [0], [1], [0, 0, 1, 1], [], []>} : vector<288x4xf32>, vector<4x4xf32>, vector<288x4xf32> -> vector<288x4xf32>
    %60 = arith.addf %54, %59 : vector<288x4xf32>
    %61 = vector.extract_strided_slice %13 {offsets = [2, 2, 0], sizes = [18, 16, 4], strides = [1, 1, 1]} : vector<20x24x4xf32> to vector<18x16x4xf32>
    %62 = vector.shape_cast %61 : vector<18x16x4xf32> to vector<288x4xf32>
    %c2_69 = arith.constant 2 : index
    %c2_70 = arith.constant 2 : index
    %c0_71 = arith.constant 0 : index
    %c0_72 = arith.constant 0 : index
    %63 = vector.load %arg5[%c2_69, %c2_70, %c0_71, %c0_72] : memref<3x3x4x4xf32, #tpu.memory_space<vmem>>, vector<1x1x4x4xf32>
    %64 = vector.shape_cast %63 : vector<1x1x4x4xf32> to vector<4x4xf32>
    %cst_73 = arith.constant dense<0.000000e+00> : vector<288x4xf32>
    %65 = tpu.matmul %62, %64, %cst_73 {dimension_numbers = #tpu.dot_dimension_numbers<[1], [0], [0], [1], [0, 0, 1, 1], [], []>} : vector<288x4xf32>, vector<4x4xf32>, vector<288x4xf32> -> vector<288x4xf32>
    %66 = arith.addf %60, %65 : vector<288x4xf32>
    %c0_74 = arith.constant 0 : index
    %c0_75 = arith.constant 0 : index
    %67 = vector.load %arg7[%c0_74, %c0_75] : memref<1x4xf32, #tpu.memory_space<vmem>>, vector<1x4xf32>
    %68 = vector.broadcast %67 : vector<1x4xf32> to vector<288x4xf32>
    %69 = arith.addf %66, %68 : vector<288x4xf32>
    %cst_76 = arith.constant 0.000000e+00 : f32
    %70 = vector.broadcast %cst_76 : f32 to vector<288x4xf32>
    %71 = arith.maximumf %69, %70 : vector<288x4xf32>
    %72 = vector.shape_cast %71 : vector<288x4xf32> to vector<18x16x4xf32>
    %c0_77 = arith.constant 0 : index
    %c1_78 = arith.constant 1 : index
    %c0_79 = arith.constant 0 : index
    %73 = vector.load %arg11[%c0_77, %c1_78, %c0_79] : memref<18x24x4xf32, #tpu.memory_space<vmem>>, vector<18x16x4xf32>
    tpu.vector_store %arg11[%c0_77, %c1_78, %c0_79], %72 {strides = array<i32>} : memref<18x24x4xf32, #tpu.memory_space<vmem>>, vector<18x16x4xf32>,
    %74 = vector.extract_strided_slice %72 {offsets = [0, 1, 0], sizes = [18, 1, 4], strides = [1, 1, 1]} : vector<18x16x4xf32> to vector<18x1x4xf32>
    %c0_80 = arith.constant 0 : index
    %c0_81 = arith.constant 0 : index
    %c0_82 = arith.constant 0 : index
    %75 = vector.load %arg11[%c0_80, %c0_81, %c0_82] : memref<18x24x4xf32, #tpu.memory_space<vmem>>, vector<18x1x4xf32>
    tpu.vector_store %arg11[%c0_80, %c0_81, %c0_82], %74 {strides = array<i32>} : memref<18x24x4xf32, #tpu.memory_space<vmem>>, vector<18x1x4xf32>,
    %76 = vector.extract_strided_slice %72 {offsets = [0, 14, 0], sizes = [18, 1, 4], strides = [1, 1, 1]} : vector<18x16x4xf32> to vector<18x1x4xf32>
    %c0_83 = arith.constant 0 : index
    %c17_84 = arith.constant 17 : index
    %c0_85 = arith.constant 0 : index
    %77 = vector.load %arg11[%c0_83, %c17_84, %c0_85] : memref<18x24x4xf32, #tpu.memory_space<vmem>>, vector<18x1x4xf32>
    tpu.vector_store %arg11[%c0_83, %c17_84, %c0_85], %76 {strides = array<i32>} : memref<18x24x4xf32, #tpu.memory_space<vmem>>, vector<18x1x4xf32>,
    %c0_i32 = arith.constant 0 : i32
    %78 = arith.cmpi eq, %arg1, %c0_i32 : i32
    %79 = arith.extui %78 : i1 to i32
    %c0_i32_86 = arith.constant 0 : i32
    %80 = arith.cmpi ne, %79, %c0_i32_86 : i32
    scf.if %80 {
      %c2_147 = arith.constant 2 : index
      %c0_148 = arith.constant 0 : index
      %c0_149 = arith.constant 0 : index
      %148 = vector.load %arg11[%c2_147, %c0_148, %c0_149] : memref<18x24x4xf32, #tpu.memory_space<vmem>>, vector<1x24x4xf32>
      %c0_150 = arith.constant 0 : index
      %c0_151 = arith.constant 0 : index
      %c0_152 = arith.constant 0 : index
      %149 = vector.load %arg11[%c0_150, %c0_151, %c0_152] : memref<18x24x4xf32, #tpu.memory_space<vmem>>, vector<1x24x4xf32>
      tpu.vector_store %arg11[%c0_150, %c0_151, %c0_152], %148 {strides = array<i32>} : memref<18x24x4xf32, #tpu.memory_space<vmem>>, vector<1x24x4xf32>,
    } else {
    }
    %c0_i32_87 = arith.constant 0 : i32
    %81 = arith.cmpi eq, %arg1, %c0_i32_87 : i32
    %82 = arith.extui %81 : i1 to i32
    %c0_i32_88 = arith.constant 0 : i32
    %83 = arith.cmpi ne, %82, %c0_i32_88 : i32
    scf.if %83 {
      %c15_147 = arith.constant 15 : index
      %c0_148 = arith.constant 0 : index
      %c0_149 = arith.constant 0 : index
      %148 = vector.load %arg11[%c15_147, %c0_148, %c0_149] : memref<18x24x4xf32, #tpu.memory_space<vmem>>, vector<1x24x4xf32>
      %c17_150 = arith.constant 17 : index
      %c0_151 = arith.constant 0 : index
      %c0_152 = arith.constant 0 : index
      %149 = vector.load %arg11[%c17_150, %c0_151, %c0_152] : memref<18x24x4xf32, #tpu.memory_space<vmem>>, vector<1x24x4xf32>
      tpu.vector_store %arg11[%c17_150, %c0_151, %c0_152], %148 {strides = array<i32>} : memref<18x24x4xf32, #tpu.memory_space<vmem>>, vector<1x24x4xf32>,
    } else {
    }
    %c0_89 = arith.constant 0 : index
    %c0_90 = arith.constant 0 : index
    %c0_91 = arith.constant 0 : index
    %84 = vector.load %arg11[%c0_89, %c0_90, %c0_91] : memref<18x24x4xf32, #tpu.memory_space<vmem>>, vector<18x24x4xf32>
    %85 = vector.extract_strided_slice %84 {offsets = [0, 0, 0], sizes = [16, 16, 4], strides = [1, 1, 1]} : vector<18x24x4xf32> to vector<16x16x4xf32>
    %86 = vector.shape_cast %85 : vector<16x16x4xf32> to vector<256x4xf32>
    %c0_92 = arith.constant 0 : index
    %c0_93 = arith.constant 0 : index
    %c0_94 = arith.constant 0 : index
    %c0_95 = arith.constant 0 : index
    %87 = vector.load %arg6[%c0_92, %c0_93, %c0_94, %c0_95] : memref<3x3x4x4xf32, #tpu.memory_space<vmem>>, vector<1x1x4x4xf32>
    %88 = vector.shape_cast %87 : vector<1x1x4x4xf32> to vector<4x4xf32>
    %cst_96 = arith.constant dense<0.000000e+00> : vector<256x4xf32>
    %89 = tpu.matmul %86, %88, %cst_96 {dimension_numbers = #tpu.dot_dimension_numbers<[1], [0], [0], [1], [0, 0, 1, 1], [], []>} : vector<256x4xf32>, vector<4x4xf32>, vector<256x4xf32> -> vector<256x4xf32>
    %90 = vector.extract_strided_slice %84 {offsets = [0, 1, 0], sizes = [16, 16, 4], strides = [1, 1, 1]} : vector<18x24x4xf32> to vector<16x16x4xf32>
    %91 = vector.shape_cast %90 : vector<16x16x4xf32> to vector<256x4xf32>
    %c0_97 = arith.constant 0 : index
    %c1_98 = arith.constant 1 : index
    %c0_99 = arith.constant 0 : index
    %c0_100 = arith.constant 0 : index
    %92 = vector.load %arg6[%c0_97, %c1_98, %c0_99, %c0_100] : memref<3x3x4x4xf32, #tpu.memory_space<vmem>>, vector<1x1x4x4xf32>
    %93 = vector.shape_cast %92 : vector<1x1x4x4xf32> to vector<4x4xf32>
    %cst_101 = arith.constant dense<0.000000e+00> : vector<256x4xf32>
    %94 = tpu.matmul %91, %93, %cst_101 {dimension_numbers = #tpu.dot_dimension_numbers<[1], [0], [0], [1], [0, 0, 1, 1], [], []>} : vector<256x4xf32>, vector<4x4xf32>, vector<256x4xf32> -> vector<256x4xf32>
    %95 = arith.addf %89, %94 : vector<256x4xf32>
    %96 = vector.extract_strided_slice %84 {offsets = [0, 2, 0], sizes = [16, 16, 4], strides = [1, 1, 1]} : vector<18x24x4xf32> to vector<16x16x4xf32>
    %97 = vector.shape_cast %96 : vector<16x16x4xf32> to vector<256x4xf32>
    %c0_102 = arith.constant 0 : index
    %c2_103 = arith.constant 2 : index
    %c0_104 = arith.constant 0 : index
    %c0_105 = arith.constant 0 : index
    %98 = vector.load %arg6[%c0_102, %c2_103, %c0_104, %c0_105] : memref<3x3x4x4xf32, #tpu.memory_space<vmem>>, vector<1x1x4x4xf32>
    %99 = vector.shape_cast %98 : vector<1x1x4x4xf32> to vector<4x4xf32>
    %cst_106 = arith.constant dense<0.000000e+00> : vector<256x4xf32>
    %100 = tpu.matmul %97, %99, %cst_106 {dimension_numbers = #tpu.dot_dimension_numbers<[1], [0], [0], [1], [0, 0, 1, 1], [], []>} : vector<256x4xf32>, vector<4x4xf32>, vector<256x4xf32> -> vector<256x4xf32>
    %101 = arith.addf %95, %100 : vector<256x4xf32>
    %102 = vector.extract_strided_slice %84 {offsets = [1, 0, 0], sizes = [16, 16, 4], strides = [1, 1, 1]} : vector<18x24x4xf32> to vector<16x16x4xf32>
    %103 = vector.shape_cast %102 : vector<16x16x4xf32> to vector<256x4xf32>
    %c1_107 = arith.constant 1 : index
    %c0_108 = arith.constant 0 : index
    %c0_109 = arith.constant 0 : index
    %c0_110 = arith.constant 0 : index
    %104 = vector.load %arg6[%c1_107, %c0_108, %c0_109, %c0_110] : memref<3x3x4x4xf32, #tpu.memory_space<vmem>>, vector<1x1x4x4xf32>
    %105 = vector.shape_cast %104 : vector<1x1x4x4xf32> to vector<4x4xf32>
    %cst_111 = arith.constant dense<0.000000e+00> : vector<256x4xf32>
    %106 = tpu.matmul %103, %105, %cst_111 {dimension_numbers = #tpu.dot_dimension_numbers<[1], [0], [0], [1], [0, 0, 1, 1], [], []>} : vector<256x4xf32>, vector<4x4xf32>, vector<256x4xf32> -> vector<256x4xf32>
    %107 = arith.addf %101, %106 : vector<256x4xf32>
    %108 = vector.extract_strided_slice %84 {offsets = [1, 1, 0], sizes = [16, 16, 4], strides = [1, 1, 1]} : vector<18x24x4xf32> to vector<16x16x4xf32>
    %109 = vector.shape_cast %108 : vector<16x16x4xf32> to vector<256x4xf32>
    %c1_112 = arith.constant 1 : index
    %c1_113 = arith.constant 1 : index
    %c0_114 = arith.constant 0 : index
    %c0_115 = arith.constant 0 : index
    %110 = vector.load %arg6[%c1_112, %c1_113, %c0_114, %c0_115] : memref<3x3x4x4xf32, #tpu.memory_space<vmem>>, vector<1x1x4x4xf32>
    %111 = vector.shape_cast %110 : vector<1x1x4x4xf32> to vector<4x4xf32>
    %cst_116 = arith.constant dense<0.000000e+00> : vector<256x4xf32>
    %112 = tpu.matmul %109, %111, %cst_116 {dimension_numbers = #tpu.dot_dimension_numbers<[1], [0], [0], [1], [0, 0, 1, 1], [], []>} : vector<256x4xf32>, vector<4x4xf32>, vector<256x4xf32> -> vector<256x4xf32>
    %113 = arith.addf %107, %112 : vector<256x4xf32>
    %114 = vector.extract_strided_slice %84 {offsets = [1, 2, 0], sizes = [16, 16, 4], strides = [1, 1, 1]} : vector<18x24x4xf32> to vector<16x16x4xf32>
    %115 = vector.shape_cast %114 : vector<16x16x4xf32> to vector<256x4xf32>
    %c1_117 = arith.constant 1 : index
    %c2_118 = arith.constant 2 : index
    %c0_119 = arith.constant 0 : index
    %c0_120 = arith.constant 0 : index
    %116 = vector.load %arg6[%c1_117, %c2_118, %c0_119, %c0_120] : memref<3x3x4x4xf32, #tpu.memory_space<vmem>>, vector<1x1x4x4xf32>
    %117 = vector.shape_cast %116 : vector<1x1x4x4xf32> to vector<4x4xf32>
    %cst_121 = arith.constant dense<0.000000e+00> : vector<256x4xf32>
    %118 = tpu.matmul %115, %117, %cst_121 {dimension_numbers = #tpu.dot_dimension_numbers<[1], [0], [0], [1], [0, 0, 1, 1], [], []>} : vector<256x4xf32>, vector<4x4xf32>, vector<256x4xf32> -> vector<256x4xf32>
    %119 = arith.addf %113, %118 : vector<256x4xf32>
    %120 = vector.extract_strided_slice %84 {offsets = [2, 0, 0], sizes = [16, 16, 4], strides = [1, 1, 1]} : vector<18x24x4xf32> to vector<16x16x4xf32>
    %121 = vector.shape_cast %120 : vector<16x16x4xf32> to vector<256x4xf32>
    %c2_122 = arith.constant 2 : index
    %c0_123 = arith.constant 0 : index
    %c0_124 = arith.constant 0 : index
    %c0_125 = arith.constant 0 : index
    %122 = vector.load %arg6[%c2_122, %c0_123, %c0_124, %c0_125] : memref<3x3x4x4xf32, #tpu.memory_space<vmem>>, vector<1x1x4x4xf32>
    %123 = vector.shape_cast %122 : vector<1x1x4x4xf32> to vector<4x4xf32>
    %cst_126 = arith.constant dense<0.000000e+00> : vector<256x4xf32>
    %124 = tpu.matmul %121, %123, %cst_126 {dimension_numbers = #tpu.dot_dimension_numbers<[1], [0], [0], [1], [0, 0, 1, 1], [], []>} : vector<256x4xf32>, vector<4x4xf32>, vector<256x4xf32> -> vector<256x4xf32>
    %125 = arith.addf %119, %124 : vector<256x4xf32>
    %126 = vector.extract_strided_slice %84 {offsets = [2, 1, 0], sizes = [16, 16, 4], strides = [1, 1, 1]} : vector<18x24x4xf32> to vector<16x16x4xf32>
    %127 = vector.shape_cast %126 : vector<16x16x4xf32> to vector<256x4xf32>
    %c2_127 = arith.constant 2 : index
    %c1_128 = arith.constant 1 : index
    %c0_129 = arith.constant 0 : index
    %c0_130 = arith.constant 0 : index
    %128 = vector.load %arg6[%c2_127, %c1_128, %c0_129, %c0_130] : memref<3x3x4x4xf32, #tpu.memory_space<vmem>>, vector<1x1x4x4xf32>
    %129 = vector.shape_cast %128 : vector<1x1x4x4xf32> to vector<4x4xf32>
    %cst_131 = arith.constant dense<0.000000e+00> : vector<256x4xf32>
    %130 = tpu.matmul %127, %129, %cst_131 {dimension_numbers = #tpu.dot_dimension_numbers<[1], [0], [0], [1], [0, 0, 1, 1], [], []>} : vector<256x4xf32>, vector<4x4xf32>, vector<256x4xf32> -> vector<256x4xf32>
    %131 = arith.addf %125, %130 : vector<256x4xf32>
    %132 = vector.extract_strided_slice %84 {offsets = [2, 2, 0], sizes = [16, 16, 4], strides = [1, 1, 1]} : vector<18x24x4xf32> to vector<16x16x4xf32>
    %133 = vector.shape_cast %132 : vector<16x16x4xf32> to vector<256x4xf32>
    %c2_132 = arith.constant 2 : index
    %c2_133 = arith.constant 2 : index
    %c0_134 = arith.constant 0 : index
    %c0_135 = arith.constant 0 : index
    %134 = vector.load %arg6[%c2_132, %c2_133, %c0_134, %c0_135] : memref<3x3x4x4xf32, #tpu.memory_space<vmem>>, vector<1x1x4x4xf32>
    %135 = vector.shape_cast %134 : vector<1x1x4x4xf32> to vector<4x4xf32>
    %cst_136 = arith.constant dense<0.000000e+00> : vector<256x4xf32>
    %136 = tpu.matmul %133, %135, %cst_136 {dimension_numbers = #tpu.dot_dimension_numbers<[1], [0], [0], [1], [0, 0, 1, 1], [], []>} : vector<256x4xf32>, vector<4x4xf32>, vector<256x4xf32> -> vector<256x4xf32>
    %137 = arith.addf %131, %136 : vector<256x4xf32>
    %c0_137 = arith.constant 0 : index
    %c0_138 = arith.constant 0 : index
    %138 = vector.load %arg8[%c0_137, %c0_138] : memref<1x4xf32, #tpu.memory_space<vmem>>, vector<1x4xf32>
    %139 = vector.broadcast %138 : vector<1x4xf32> to vector<256x4xf32>
    %140 = arith.addf %137, %139 : vector<256x4xf32>
    %141 = vector.shape_cast %140 : vector<256x4xf32> to vector<16x16x4xf32>
    %c0_139 = arith.constant 0 : index
    %c0_140 = arith.constant 0 : index
    %c0_141 = arith.constant 0 : index
    %c0_142 = arith.constant 0 : index
    %142 = vector.load %arg2[%c0_139, %c0_140, %c0_141, %c0_142] : memref<1x16x16x4xf32, #tpu.memory_space<vmem>>, vector<1x16x16x4xf32>
    %143 = vector.shape_cast %142 : vector<1x16x16x4xf32> to vector<16x16x4xf32>
    %144 = arith.addf %141, %143 : vector<16x16x4xf32>
    %c0_143 = arith.constant 0 : index
    %c0_144 = arith.constant 0 : index
    %c0_145 = arith.constant 0 : index
    %c0_146 = arith.constant 0 : index
    %145 = vector.load %arg9[%c0_143, %c0_144, %c0_145, %c0_146] : memref<1x16x16x4xf32, #tpu.memory_space<vmem>>, vector<1x16x16x4xf32>
    %146 = vector.shape_cast %145 : vector<1x16x16x4xf32> to vector<16x16x4xf32>
    %147 = vector.shape_cast %144 : vector<16x16x4xf32> to vector<1x16x16x4xf32>
    tpu.vector_store %arg9[%c0_143, %c0_144, %c0_145, %c0_146], %147 {strides = array<i32>} : memref<1x16x16x4xf32, #tpu.memory_space<vmem>>, vector<1x16x16x4xf32>,
    return
  }
  func.func @transform_0(%arg0: i32, %arg1: i32) -> (i32, i32, i32, i32) {
    %c0_i32 = arith.constant 0 : i32
    %c0_i32_0 = arith.constant 0 : i32
    %c0_i32_1 = arith.constant 0 : i32
    return %arg0, %arg1, %c0_i32, %c0_i32_0 : i32, i32, i32, i32
  }
  func.func @transform_1(%arg0: i32, %arg1: i32) -> (i32, i32, i32, i32) {
    %c8_i32 = arith.constant 8 : i32
    %0 = arith.muli %arg1, %c8_i32 : i32
    %c1_i32 = arith.constant 1 : i32
    %1 = arith.subi %0, %c1_i32 : i32
    %c0_i32 = arith.constant 0 : i32
    %2 = arith.maxsi %1, %c0_i32 : i32
    %c0_i32_0 = arith.constant 0 : i32
    %c0_i32_1 = arith.constant 0 : i32
    %c0_i32_2 = arith.constant 0 : i32
    return %arg0, %2, %c0_i32_0, %c0_i32_1 : i32, i32, i32, i32
  }
  func.func @transform_2(%arg0: i32, %arg1: i32) -> (i32, i32, i32, i32) {
    %c1_i32 = arith.constant 1 : i32
    %0 = arith.addi %arg1, %c1_i32 : i32
    %c8_i32 = arith.constant 8 : i32
    %1 = arith.muli %0, %c8_i32 : i32
    %c7_i32 = arith.constant 7 : i32
    %2 = arith.minsi %1, %c7_i32 : i32
    %c0_i32 = arith.constant 0 : i32
    %c0_i32_0 = arith.constant 0 : i32
    %c0_i32_1 = arith.constant 0 : i32
    return %arg0, %2, %c0_i32, %c0_i32_0 : i32, i32, i32, i32
  }
  func.func @transform_3(%arg0: i32, %arg1: i32) -> (i32, i32, i32, i32) {
    %c0_i32 = arith.constant 0 : i32
    %c0_i32_0 = arith.constant 0 : i32
    %c0_i32_1 = arith.constant 0 : i32
    %c0_i32_2 = arith.constant 0 : i32
    %c0_i32_3 = arith.constant 0 : i32
    return %c0_i32, %c0_i32_0, %c0_i32_1, %c0_i32_2 : i32, i32, i32, i32
  }
  func.func @transform_4(%arg0: i32, %arg1: i32) -> (i32, i32, i32, i32) {
    %c0_i32 = arith.constant 0 : i32
    %c0_i32_0 = arith.constant 0 : i32
    %c0_i32_1 = arith.constant 0 : i32
    %c0_i32_2 = arith.constant 0 : i32
    %c0_i32_3 = arith.constant 0 : i32
    return %c0_i32, %c0_i32_0, %c0_i32_1, %c0_i32_2 : i32, i32, i32, i32
  }
  func.func @transform_5(%arg0: i32, %arg1: i32) -> (i32, i32) {
    %c0_i32 = arith.constant 0 : i32
    %c0_i32_0 = arith.constant 0 : i32
    %c0_i32_1 = arith.constant 0 : i32
    return %c0_i32, %c0_i32_0 : i32, i32
  }
  func.func @transform_6(%arg0: i32, %arg1: i32) -> (i32, i32) {
    %c0_i32 = arith.constant 0 : i32
    %c0_i32_0 = arith.constant 0 : i32
    %c0_i32_1 = arith.constant 0 : i32
    return %c0_i32, %c0_i32_0 : i32, i32
  }
  func.func @transform_7(%arg0: i32, %arg1: i32) -> (i32, i32, i32, i32) {
    %c0_i32 = arith.constant 0 : i32
    %c0_i32_0 = arith.constant 0 : i32
    %c0_i32_1 = arith.constant 0 : i32
    return %arg0, %arg1, %c0_i32, %c0_i32_0 : i32, i32, i32, i32
  }
}

</mosaic_0001>

<llo_original>
// kernel: resblock_forward.1
$region0: #{resblock_forward.1}
  #allocation0 [shape = 'u32[]', space=smem, size = 0x4, offset = 0x4, fixed_abs, tag = 'smem constant byte address 0x4 - core index']
  #allocation1 [shape = 'u32[144,128]{1,0:T(1,128)}', space=vmem, size = 0x12000, scoped, tag = 'internal scratch']
  #allocation2 [shape = 'f32[20,24,4]{2,1,0:T(8,128)}', space=vmem, size = 0x3c000, scoped, tag = 'scratch operand']
  #allocation3 [shape = 'f32[18,24,4]{2,1,0:T(8,128)}', space=vmem, size = 0x36000, scoped, tag = 'scratch operand']
  %s0 = inlined_call_operand.vmem [shape: f32[2,16,16,4], index: 0, kind: input, shape index: {}, may-alias: {0,1,2}]
  %s1 = inlined_call_operand.vmem [shape: f32[2,16,16,4], index: 1, kind: input, shape index: {}, may-alias: {0,1,2}]
  %s2 = inlined_call_operand.vmem [shape: f32[2,16,16,4], index: 2, kind: input, shape index: {}, may-alias: {0,1,2}]
  %s3 = inlined_call_operand.vmem [shape: f32[3,3,4,4], index: 3, kind: input, shape index: {}]
  %s4 = inlined_call_operand.vmem [shape: f32[3,3,4,4], index: 4, kind: input, shape index: {}]
  %s5 = inlined_call_operand.vmem [shape: f32[1,4], index: 5, kind: input, shape index: {}]
  %s6 = inlined_call_operand.vmem [shape: f32[1,4], index: 6, kind: input, shape index: {}]
  %s7 = inlined_call_operand.vmem [shape: f32[2,16,16,4], index: 7, kind: output, shape index: {}]
  %s8 = sld [smem:[#allocation0]]
  $region65: #{resblock_forward.1} parent=0
    _
  %s10 = ssub.s32 1, %s8
  %s11 = scalar_select 0, %s10, %s8
  loop: start=0, step=1, limit=4
  $region2: #{resblock_forward.1} parent=0 // loop_pre_header
    _
  $region3: #{resblock_forward.1} parent=0 // loop_header
    %s13 = sphi 0, %s17
    %p14 = scmp.ge.s32.totalorder %s13, 4
    %s20 = sphi 0, %s32
    %s21 = sphi 0, %s28
    %s22 = sphi 0, %s20
    %s23 = sphi 0, %s21
    %s24 = sphi 0, %s22
    %s25 = sphi 0, %s23
    %s37 = sphi 0, %s39
    %s40 = sphi 0, %s37
    %s41 = sphi 0, %s40
    %s57 = sphi 0, %s41
    %s73 = sphi 0, %s75
    %s76 = sphi 0, %s73
    %s77 = sphi 0, %s76
    %s93 = sphi 0, %s77
    %s109 = sphi 0, %s111
    %s112 = sphi 0, %s109
    %s113 = sphi 0, %s112
    %s129 = sphi 0, %s113
    %s133 = sphi 0, %s133
    %s135 = sphi 0, %s133
    %s136 = sphi 0, %s135
    %s150 = sphi 0, %s136
    %s154 = sphi 0, %s154
    %s156 = sphi 0, %s154
    %s157 = sphi 0, %s156
    %s171 = sphi 0, %s157
    %s175 = sphi 0, %s175
    %s177 = sphi 0, %s175
    %s178 = sphi 0, %s177
    %s192 = sphi 0, %s178
    %s196 = sphi 0, %s196
    %s198 = sphi 0, %s196
    %s199 = sphi 0, %s198
    %s213 = sphi 0, %s199
    %s221 = sphi 0, %s223
    %s224 = sphi 0, %s221
    %s225 = sphi 0, %s224
    %s241 = sphi 0, %s225
  $region4: #{resblock_forward.1} parent=0 // loop_header_branch
    %16 = sbr.rel (%p14) target = $region8
  $region5: #{resblock_forward.1} parent=0 // loop_body
    %s18 = ssub.s32 %s13, 1
    %s19 = ssub.s32 %s13, 2
    %s26 = sadd.s32 1, %s21
    %p27 = scmp.ge.s32.totalorder %s26, 1
    %s28 = scalar_select %p27, 0, %s26
    %s29 = sadd.s32 1, %s20
    %s30 = scalar_select %p27, %s29, %s20
    %p31 = scmp.ge.s32.totalorder %s30, 2
    %s32 = scalar_select %p31, 0, %s30
    %s33 = ssub.s32 %s20, %s32
    %s34 = ssub.s32 %s21, %s28
    %s35 = sor.u32 %s33, %s34
    %p36 = scmp.eq.s32.totalorder %s35, 0
    %s38 = sadd.s32 %s37, 1
    %s39 = scalar_select %p36, %s37, %s38
    %p42 = pneg %p36
    %p43 = scmp.eq.s32.totalorder %s13, 1
    %p44 = por %p42, %p43
    %p45 = scmp.ne.s32.totalorder %s37, %s40
    %p46 = scmp.eq.s32.totalorder %s13, 0
    %p47 = por %p45, %p46
    %p48 = scmp.ne.s32.totalorder %s37, %s40
    %p49 = scmp.eq.s32.totalorder %s18, 1
    %p50 = por %p48, %p49
    %p51 = scmp.ne.s32.totalorder %s40, %s41
    %p52 = scmp.eq.s32.totalorder %s18, 0
    %p53 = por %p51, %p52
    %p54 = scmp.ne.s32.totalorder %s40, %s41
    %p55 = scmp.eq.s32.totalorder %s19, 1
    %p56 = por %p54, %p55
    %p58 = scmp.ne.s32.totalorder %s41, %s57
    %p59 = scmp.eq.s32.totalorder %s19, 0
    %p60 = por %p58, %p59
    %s61 = smul.u32 %s21, 8
    %s62 = ssub.s32 %s61, 1
    %p63 = scmp.gt.s32.totalorder %s62, 0
    %s64 = scalar_select %p63, %s62, 0
    %s65 = smul.u32 %s28, 8
    %s66 = ssub.s32 %s65, 1
    %p67 = scmp.gt.s32.totalorder %s66, 0
    %s68 = scalar_select %p67, %s66, 0
    %s69 = ssub.s32 %s20, %s32
    %s70 = ssub.s32 %s64, %s68
    %s71 = sor.u32 %s69, %s70
    %p72 = scmp.eq.s32.totalorder %s71, 0
    %s74 = sadd.s32 %s73, 1
    %s75 = scalar_select %p72, %s73, %s74
    %p78 = pneg %p72
    %p79 = scmp.eq.s32.totalorder %s13, 1
    %p80 = por %p78, %p79
    %p81 = scmp.ne.s32.totalorder %s73, %s76
    %p82 = scmp.eq.s32.totalorder %s13, 0
    %p83 = por %p81, %p82
    %p84 = scmp.ne.s32.totalorder %s73, %s76
    %p85 = scmp.eq.s32.totalorder %s18, 1
    %p86 = por %p84, %p85
    %p87 = scmp.ne.s32.totalorder %s76, %s77
    %p88 = scmp.eq.s32.totalorder %s18, 0
    %p89 = por %p87, %p88
    %p90 = scmp.ne.s32.totalorder %s76, %s77
    %p91 = scmp.eq.s32.totalorder %s19, 1
    %p92 = por %p90, %p91
    %p94 = scmp.ne.s32.totalorder %s77, %s93
    %p95 = scmp.eq.s32.totalorder %s19, 0
    %p96 = por %p94, %p95
    %s97 = sadd.s32 %s21, 1
    %s98 = smul.u32 %s97, 8
    %p99 = scmp.lt.s32.totalorder %s98, 7
    %s100 = scalar_select %p99, %s98, 7
    %s101 = sadd.s32 %s28, 1
    %s102 = smul.u32 %s101, 8
    %p103 = scmp.lt.s32.totalorder %s102, 7
    %s104 = scalar_select %p103, %s102, 7
    %s105 = ssub.s32 %s20, %s32
    %s106 = ssub.s32 %s100, %s104
    %s107 = sor.u32 %s105, %s106
    %p108 = scmp.eq.s32.totalorder %s107, 0
    %s110 = sadd.s32 %s109, 1
    %s111 = scalar_select %p108, %s109, %s110
    %p114 = pneg %p108
    %p115 = scmp.eq.s32.totalorder %s13, 1
    %p116 = por %p114, %p115
    %p117 = scmp.ne.s32.totalorder %s109, %s112
    %p118 = scmp.eq.s32.totalorder %s13, 0
    %p119 = por %p117, %p118
    %p120 = scmp.ne.s32.totalorder %s109, %s112
    %p121 = scmp.eq.s32.totalorder %s18, 1
    %p122 = por %p120, %p121
    %p123 = scmp.ne.s32.totalorder %s112, %s113
    %p124 = scmp.eq.s32.totalorder %s18, 0
    %p125 = por %p123, %p124
    %p126 = scmp.ne.s32.totalorder %s112, %s113
    %p127 = scmp.eq.s32.totalorder %s19, 1
    %p128 = por %p126, %p127
    %p130 = scmp.ne.s32.totalorder %s113, %s129
    %p131 = scmp.eq.s32.totalorder %s19, 0
    %p132 = por %p130, %p131
    %s134 = sadd.s32 %s133, 1
    %p137 = scmp.eq.s32.totalorder %s13, 1
    %p138 = scmp.ne.s32.totalorder %s133, %s135
    %p139 = scmp.eq.s32.totalorder %s13, 0
    %p140 = por %p138, %p139
    %p141 = scmp.ne.s32.totalorder %s133, %s135
    %p142 = scmp.eq.s32.totalorder %s18, 1
    %p143 = por %p141, %p142
    %p144 = scmp.ne.s32.totalorder %s135, %s136
    %p145 = scmp.eq.s32.totalorder %s18, 0
    %p146 = por %p144, %p145
    %p147 = scmp.ne.s32.totalorder %s135, %s136
    %p148 = scmp.eq.s32.totalorder %s19, 1
    %p149 = por %p147, %p148
    %p151 = scmp.ne.s32.totalorder %s136, %s150
    %p152 = scmp.eq.s32.totalorder %s19, 0
    %p153 = por %p151, %p152
    %s155 = sadd.s32 %s154, 1
    %p158 = scmp.eq.s32.totalorder %s13, 1
    %p159 = scmp.ne.s32.totalorder %s154, %s156
    %p160 = scmp.eq.s32.totalorder %s13, 0
    %p161 = por %p159, %p160
    %p162 = scmp.ne.s32.totalorder %s154, %s156
    %p163 = scmp.eq.s32.totalorder %s18, 1
    %p164 = por %p162, %p163
    %p165 = scmp.ne.s32.totalorder %s156, %s157
    %p166 = scmp.eq.s32.totalorder %s18, 0
    %p167 = por %p165, %p166
    %p168 = scmp.ne.s32.totalorder %s156, %s157
    %p169 = scmp.eq.s32.totalorder %s19, 1
    %p170 = por %p168, %p169
    %p172 = scmp.ne.s32.totalorder %s157, %s171
    %p173 = scmp.eq.s32.totalorder %s19, 0
    %p174 = por %p172, %p173
    %s176 = sadd.s32 %s175, 1
    %p179 = scmp.eq.s32.totalorder %s13, 1
    %p180 = scmp.ne.s32.totalorder %s175, %s177
    %p181 = scmp.eq.s32.totalorder %s13, 0
    %p182 = por %p180, %p181
    %p183 = scmp.ne.s32.totalorder %s175, %s177
    %p184 = scmp.eq.s32.totalorder %s18, 1
    %p185 = por %p183, %p184
    %p186 = scmp.ne.s32.totalorder %s177, %s178
    %p187 = scmp.eq.s32.totalorder %s18, 0
    %p188 = por %p186, %p187
    %p189 = scmp.ne.s32.totalorder %s177, %s178
    %p190 = scmp.eq.s32.totalorder %s19, 1
    %p191 = por %p189, %p190
    %p193 = scmp.ne.s32.totalorder %s178, %s192
    %p194 = scmp.eq.s32.totalorder %s19, 0
    %p195 = por %p193, %p194
    %s197 = sadd.s32 %s196, 1
    %p200 = scmp.eq.s32.totalorder %s13, 1
    %p201 = scmp.ne.s32.totalorder %s196, %s198
    %p202 = scmp.eq.s32.totalorder %s13, 0
    %p203 = por %p201, %p202
    %p204 = scmp.ne.s32.totalorder %s196, %s198
    %p205 = scmp.eq.s32.totalorder %s18, 1
    %p206 = por %p204, %p205
    %p207 = scmp.ne.s32.totalorder %s198, %s199
    %p208 = scmp.eq.s32.totalorder %s18, 0
    %p209 = por %p207, %p208
    %p210 = scmp.ne.s32.totalorder %s198, %s199
    %p211 = scmp.eq.s32.totalorder %s19, 1
    %p212 = por %p210, %p211
    %p214 = scmp.ne.s32.totalorder %s199, %s213
    %p215 = scmp.eq.s32.totalorder %s19, 0
    %p216 = por %p214, %p215
    %s217 = ssub.s32 %s20, %s32
    %s218 = ssub.s32 %s21, %s28
    %s219 = sor.u32 %s217, %s218
    %p220 = scmp.eq.s32.totalorder %s219, 0
    %s222 = sadd.s32 %s221, 1
    %s223 = scalar_select %p220, %s221, %s222
    %p226 = pneg %p220
    %p227 = scmp.eq.s32.totalorder %s13, 1
    %p228 = por %p226, %p227
    %p229 = scmp.ne.s32.totalorder %s221, %s224
    %p230 = scmp.eq.s32.totalorder %s13, 0
    %p231 = por %p229, %p230
    %p232 = scmp.ne.s32.totalorder %s221, %s224
    %p233 = scmp.eq.s32.totalorder %s18, 1
    %p234 = por %p232, %p233
    %p235 = scmp.ne.s32.totalorder %s224, %s225
    %p236 = scmp.eq.s32.totalorder %s18, 0
    %p237 = por %p235, %p236
    %p238 = scmp.ne.s32.totalorder %s224, %s225
    %p239 = scmp.eq.s32.totalorder %s19, 1
    %p240 = por %p238, %p239
    %p242 = scmp.ne.s32.totalorder %s225, %s241
    %p243 = scmp.eq.s32.totalorder %s19, 0
    %p244 = por %p242, %p243
    %p245 = scmp.le.s32.totalorder 1, %s13
    %p246 = scmp.lt.s32.totalorder %s13, 3
    %p247 = pnand %p245, %p246
    %p248 = pneg %p247
    // Predicated region
    $region9: #{resblock_forward.1} parent=5 // pred_check
      _
    $region10: #{resblock_forward.1} parent=5 // pred_check_branch
      %250 = sbr.rel (%p247) target = $region12
    $region11: #{resblock_forward.1} parent=5 // pred_region
      %s251 = ssub.s32 %s13, 1
      // Predicated region
      $region13: #{resblock_forward.1} parent=11 // pred_check
        %p252 = pneg %p146
      $region14: #{resblock_forward.1} parent=11 // pred_check_branch
        %254 = sbr.rel (%p252) target = $region16
      $region15: #{resblock_forward.1} parent=11 // pred_region
        _
      $region16: #{resblock_forward.1} parent=11 // pred_fallthru
        _
      // Predicated region
      $region17: #{resblock_forward.1} parent=11 // pred_check
        %p255 = pneg %p167
      $region18: #{resblock_forward.1} parent=11 // pred_check_branch
        %257 = sbr.rel (%p255) target = $region20
      $region19: #{resblock_forward.1} parent=11 // pred_region
        _
      $region20: #{resblock_forward.1} parent=11 // pred_fallthru
        _
      // Predicated region
      $region21: #{resblock_forward.1} parent=11 // pred_check
        %p258 = pneg %p188
      $region22: #{resblock_forward.1} parent=11 // pred_check_branch
        %260 = sbr.rel (%p258) target = $region24
      $region23: #{resblock_forward.1} parent=11 // pred_region
        _
      $region24: #{resblock_forward.1} parent=11 // pred_fallthru
        _
      // Predicated region
      $region25: #{resblock_forward.1} parent=11 // pred_check
        %p261 = pneg %p209
      $region26: #{resblock_forward.1} parent=11 // pred_check_branch
        %263 = sbr.rel (%p261) target = $region28
      $region27: #{resblock_forward.1} parent=11 // pred_region
        _
      $region28: #{resblock_forward.1} parent=11 // pred_fallthru
        _
    $region12: #{resblock_forward.1} parent=5 // pred_fallthru
      _
    %p264 = scmp.lt.s32.totalorder %s13, 2
    // Predicated region
    $region29: #{resblock_forward.1} parent=5 // pred_check
      %p265 = pneg %p264
    $region30: #{resblock_forward.1} parent=5 // pred_check_branch
      %267 = sbr.rel (%p265) target = $region32
    $region31: #{resblock_forward.1} parent=5 // pred_region
      // Predicated region
      $region33: #{resblock_forward.1} parent=31 // pred_check
        %p268 = pneg %p47
      $region34: #{resblock_forward.1} parent=31 // pred_check_branch
        %270 = sbr.rel (%p268) target = $region36
      $region35: #{resblock_forward.1} parent=31 // pred_region
        %s271 = smul.u32 16, %s21
        %p272 = scmp.lt.s32.totalorder %s20, 1
        %s273 = scalar_select %p272, %s20, 1
        %p274 = scmp.lt.s32.totalorder %s271, 15
        %s275 = scalar_select %p274, %s271, 15
        %s276 = smul.addr %s275, 2
        %s277 = smul.addr %s273, 32
        %s278 = sadd.s32 %s276, %s277
        %s279 = smul.addr %s278, 8
        %s280 = scalar_lea.vmem %s0, %s279
        %s281 = smul.u32 16, %s21
      $region36: #{resblock_forward.1} parent=31 // pred_fallthru
        _
      // Predicated region
      $region37: #{resblock_forward.1} parent=31 // pred_check
        %p282 = pneg %p83
      $region38: #{resblock_forward.1} parent=31 // pred_check_branch
        %284 = sbr.rel (%p282) target = $region40
      $region39: #{resblock_forward.1} parent=31 // pred_region
        %s285 = smul.u32 %s21, 8
        %s286 = ssub.s32 %s285, 1
        %p287 = scmp.gt.s32.totalorder %s286, 0
        %s288 = scalar_select %p287, %s286, 0
        %s289 = smul.u32 2, %s288
        %p290 = scmp.lt.s32.totalorder %s20, 1
        %s291 = scalar_select %p290, %s20, 1
        %p292 = scmp.lt.s32.totalorder %s289, 15
        %s293 = scalar_select %p292, %s289, 15
        %s294 = smul.addr %s293, 2
        %s295 = smul.addr %s291, 32
        %s296 = sadd.s32 %s294, %s295
        %s297 = smul.addr %s296, 8
        %s298 = scalar_lea.vmem %s1, %s297
        %s299 = smul.u32 %s21, 8
        %s300 = ssub.s32 %s299, 1
        %p301 = scmp.gt.s32.totalorder %s300, 0
        %s302 = scalar_select %p301, %s300, 0
        %s303 = smul.u32 2, %s302
      $region40: #{resblock_forward.1} parent=31 // pred_fallthru
        _
      // Predicated region
      $region41: #{resblock_forward.1} parent=31 // pred_check
        %p304 = pneg %p119
      $region42: #{resblock_forward.1} parent=31 // pred_check_branch
        %306 = sbr.rel (%p304) target = $region44
      $region43: #{resblock_forward.1} parent=31 // pred_region
        %s307 = sadd.s32 %s21, 1
        %s308 = smul.u32 %s307, 8
        %p309 = scmp.lt.s32.totalorder %s308, 7
        %s310 = scalar_select %p309, %s308, 7
        %s311 = smul.u32 2, %s310
        %p312 = scmp.lt.s32.totalorder %s20, 1
        %s313 = scalar_select %p312, %s20, 1
        %p314 = scmp.lt.s32.totalorder %s311, 15
        %s315 = scalar_select %p314, %s311, 15
        %s316 = smul.addr %s315, 2
        %s317 = smul.addr %s313, 32
        %s318 = sadd.s32 %s316, %s317
        %s319 = smul.addr %s318, 8
        %s320 = scalar_lea.vmem %s2, %s319
        %s321 = sadd.s32 %s21, 1
        %s322 = smul.u32 %s321, 8
        %p323 = scmp.lt.s32.totalorder %s322, 7
        %s324 = scalar_select %p323, %s322, 7
        %s325 = smul.u32 2, %s324
      $region44: #{resblock_forward.1} parent=31 // pred_fallthru
        _
    $region32: #{resblock_forward.1} parent=5 // pred_fallthru
      _
    %p326 = scmp.le.s32.totalorder 1, %s13
    %p327 = scmp.lt.s32.totalorder %s13, 3
    %p328 = pnand %p326, %p327
    %p329 = pneg %p328
    // Predicated region
    $region45: #{resblock_forward.1} parent=5 // pred_check
      _
    $region46: #{resblock_forward.1} parent=5 // pred_check_branch
      %331 = sbr.rel (%p328) target = $region48
    $region47: #{resblock_forward.1} parent=5 // pred_region
      %s332 = ssub.s32 %s13, 1
      %s333 = smul.u32 16, %s23
      %p334 = scmp.lt.s32.totalorder %s22, 1
      %s335 = scalar_select %p334, %s22, 1
      %p336 = scmp.lt.s32.totalorder %s333, 15
      %s337 = scalar_select %p336, %s333, 15
      %s338 = smul.addr %s337, 2
      %s339 = smul.addr %s335, 32
      %s340 = sadd.s32 %s338, %s339
      %s341 = smul.addr %s340, 8
      %s342 = scalar_lea.vmem %s0, %s341
      %p343 = pneg %p53
      %p344 = pneg %p50
      %s345 = smul.u32 %s23, 8
      %s346 = ssub.s32 %s345, 1
      %p347 = scmp.gt.s32.totalorder %s346, 0
      %s348 = scalar_select %p347, %s346, 0
      %s349 = smul.u32 2, %s348
      %p350 = scmp.lt.s32.totalorder %s22, 1
      %s351 = scalar_select %p350, %s22, 1
      %p352 = scmp.lt.s32.totalorder %s349, 15
      %s353 = scalar_select %p352, %s349, 15
      %s354 = smul.addr %s353, 2
      %s355 = smul.addr %s351, 32
      %s356 = sadd.s32 %s354, %s355
      %s357 = smul.addr %s356, 8
      %s358 = scalar_lea.vmem %s1, %s357
      %p359 = pneg %p89
      %p360 = pneg %p86
      %s361 = sadd.s32 %s23, 1
      %s362 = smul.u32 %s361, 8
      %p363 = scmp.lt.s32.totalorder %s362, 7
      %s364 = scalar_select %p363, %s362, 7
      %s365 = smul.u32 2, %s364
      %p366 = scmp.lt.s32.totalorder %s22, 1
      %s367 = scalar_select %p366, %s22, 1
      %p368 = scmp.lt.s32.totalorder %s365, 15
      %s369 = scalar_select %p368, %s365, 15
      %s370 = smul.addr %s369, 2
      %s371 = smul.addr %s367, 32
      %s372 = sadd.s32 %s370, %s371
      %s373 = smul.addr %s372, 8
      %s374 = scalar_lea.vmem %s2, %s373
      %p375 = pneg %p125
      %p376 = pneg %p122
      %p377 = pneg %p146
      %p378 = pneg %p143
      %p379 = pneg %p167
      %p380 = pneg %p164
      %p381 = pneg %p188
      %p382 = pneg %p185
      %p383 = pneg %p209
      %p384 = pneg %p206
      %p385 = pneg %p237
      %p386 = pneg %p234
      %s387 = smul.u32 16, %s23
      %p388 = scmp.lt.s32.totalorder %s22, 1
      %s389 = scalar_select %p388, %s22, 1
      %p390 = scmp.lt.s32.totalorder %s387, 15
      %s391 = scalar_select %p390, %s387, 15
      %s392 = smul.addr %s391, 2
      %s393 = smul.addr %s389, 32
      %s394 = sadd.s32 %s392, %s393
      %s395 = smul.addr %s394, 8
      %s396 = scalar_lea.vmem %s7, %s395
      %s397 = smul.u32 16, %s23
      %p398 = scmp.lt.s32.totalorder %s22, 1
      %s399 = scalar_select %p398, %s22, 1
      %p400 = scmp.lt.s32.totalorder %s397, 15
      %s401 = scalar_select %p400, %s397, 15
      %s402 = smul.addr %s401, 2
      %s403 = smul.addr %s399, 32
      %s404 = sadd.s32 %s402, %s403
      %s405 = smul.addr %s404, 8
      %s406 = scalar_lea.vmem %s0, %s405
      %s407 = smul.u32 16, %s23
      %s408 = smul.u32 %s23, 8
      %s409 = ssub.s32 %s408, 1
      %p410 = scmp.gt.s32.totalorder %s409, 0
      %s411 = scalar_select %p410, %s409, 0
      %s412 = smul.u32 2, %s411
      %p413 = scmp.lt.s32.totalorder %s22, 1
      %s414 = scalar_select %p413, %s22, 1
      %p415 = scmp.lt.s32.totalorder %s412, 15
      %s416 = scalar_select %p415, %s412, 15
      %s417 = smul.addr %s416, 2
      %s418 = smul.addr %s414, 32
      %s419 = sadd.s32 %s417, %s418
      %s420 = smul.addr %s419, 8
      %s421 = scalar_lea.vmem %s1, %s420
      %s422 = smul.u32 %s23, 8
      %s423 = ssub.s32 %s422, 1
      %p424 = scmp.gt.s32.totalorder %s423, 0
      %s425 = scalar_select %p424, %s423, 0
      %s426 = smul.u32 2, %s425
      %s427 = sadd.s32 %s23, 1
      %s428 = smul.u32 %s427, 8
      %p429 = scmp.lt.s32.totalorder %s428, 7
      %s430 = scalar_select %p429, %s428, 7
      %s431 = smul.u32 2, %s430
      %p432 = scmp.lt.s32.totalorder %s22, 1
      %s433 = scalar_select %p432, %s22, 1
      %p434 = scmp.lt.s32.totalorder %s431, 15
      %s435 = scalar_select %p434, %s431, 15
      %s436 = smul.addr %s435, 2
      %s437 = smul.addr %s433, 32
      %s438 = sadd.s32 %s436, %s437
      %s439 = smul.addr %s438, 8
      %s440 = scalar_lea.vmem %s2, %s439
      %s441 = sadd.s32 %s23, 1
      %s442 = smul.u32 %s441, 8
      %p443 = scmp.lt.s32.totalorder %s442, 7
      %s444 = scalar_select %p443, %s442, 7
      %s445 = smul.u32 2, %s444
      %s446 = smul.u32 16, %s23
      %p447 = scmp.lt.s32.totalorder %s22, 1
      %s448 = scalar_select %p447, %s22, 1
      %p449 = scmp.lt.s32.totalorder %s446, 15
      %s450 = scalar_select %p449, %s446, 15
      %s451 = smul.addr %s450, 2
      %s452 = smul.addr %s448, 32
      %s453 = sadd.s32 %s451, %s452
      %s454 = smul.addr %s453, 8
      %s455 = scalar_lea.vmem %s7, %s454
      %s456 = smul.u32 16, %s23
      %v457 = vld [vmem:[%s421] sm:$0xff]
      %v458 = vld [vmem:[%s421 + $0x8] sm:$0xff]
      %v459 = vld [vmem:[%s421 + $0x10] sm:$0xff]
      %v460 = vld [vmem:[%s421 + $0x18] sm:$0xff]
      %vm461 = vcmask 31744
      %462 = vst.msk [vmem:[#allocation2 + $0x1] sm:$0xff] %vm461, %v457
      %463 = vst.msk [vmem:[#allocation2 + $0x9] sm:$0xff] %vm461, %v458
      %464 = vst.msk [vmem:[#allocation2 + $0x19] sm:$0xff] %vm461, %v459
      %465 = vst.msk [vmem:[#allocation2 + $0x21] sm:$0xff] %vm461, %v460
      %v466 = vld [vmem:[%s406] sm:$0xff]
      %v467 = vld [vmem:[%s406 + $0x8] sm:$0xff]
      %v468 = vld [vmem:[%s406 + $0x10] sm:$0xff]
      %v469 = vld [vmem:[%s406 + $0x18] sm:$0xff]
      %v470 = vld [vmem:[%s406 + $0x20] sm:$0xff]
      %v471 = vld [vmem:[%s406 + $0x28] sm:$0xff]
      %v472 = vld [vmem:[%s406 + $0x30] sm:$0xff]
      %v473 = vld [vmem:[%s406 + $0x38] sm:$0xff]
      %v474 = vld [vmem:[%s406 + $0x40] sm:$0xff]
      %v475 = vld [vmem:[%s406 + $0x48] sm:$0xff]
      %v476 = vld [vmem:[%s406 + $0x50] sm:$0xff]
      %v477 = vld [vmem:[%s406 + $0x58] sm:$0xff]
      %v478 = vld [vmem:[%s406 + $0x60] sm:$0xff]
      %v479 = vld [vmem:[%s406 + $0x68] sm:$0xff]
      %v480 = vld [vmem:[%s406 + $0x70] sm:$0xff]
      %v481 = vld [vmem:[%s406 + $0x78] sm:$0xff]
      %v482 = vld [vmem:[%s406 + $0x80] sm:$0xff]
      %v483 = vld [vmem:[%s406 + $0x88] sm:$0xff]
      %v484 = vld [vmem:[%s406 + $0x90] sm:$0xff]
      %v485 = vld [vmem:[%s406 + $0x98] sm:$0xff]
      %v486 = vld [vmem:[%s406 + $0xa0] sm:$0xff]
      %v487 = vld [vmem:[%s406 + $0xa8] sm:$0xff]
      %v488 = vld [vmem:[%s406 + $0xb0] sm:$0xff]
      %v489 = vld [vmem:[%s406 + $0xb8] sm:$0xff]
      %v490 = vld [vmem:[%s406 + $0xc0] sm:$0xff]
      %v491 = vld [vmem:[%s406 + $0xc8] sm:$0xff]
      %v492 = vld [vmem:[%s406 + $0xd0] sm:$0xff]
      %v493 = vld [vmem:[%s406 + $0xd8] sm:$0xff]
      %v494 = vld [vmem:[%s406 + $0xe0] sm:$0xff]
      %v495 = vld [vmem:[%s406 + $0xe8] sm:$0xff]
      %v496 = vld [vmem:[%s406 + $0xf0] sm:$0xff]
      %v497 = vld [vmem:[%s406 + $0xf8] sm:$0xff]
      %s498 = scalar_lea.vmem [#allocation2], 48
      %499 = vst.msk [vmem:[%s498 + $0x1] sm:$0xff] %vm461, %v466
      %500 = vst.msk [vmem:[%s498 + $0x9] sm:$0xff] %vm461, %v467
      %501 = vst.msk [vmem:[%s498 + $0x19] sm:$0xff] %vm461, %v468
      %502 = vst.msk [vmem:[%s498 + $0x21] sm:$0xff] %vm461, %v469
      %503 = vst.msk [vmem:[%s498 + $0x31] sm:$0xff] %vm461, %v470
      %504 = vst.msk [vmem:[%s498 + $0x39] sm:$0xff] %vm461, %v471
      %505 = vst.msk [vmem:[%s498 + $0x49] sm:$0xff] %vm461, %v472
      %506 = vst.msk [vmem:[%s498 + $0x51] sm:$0xff] %vm461, %v473
      %507 = vst.msk [vmem:[%s498 + $0x61] sm:$0xff] %vm461, %v474
      %508 = vst.msk [vmem:[%s498 + $0x69] sm:$0xff] %vm461, %v475
      %509 = vst.msk [vmem:[%s498 + $0x79] sm:$0xff] %vm461, %v476
      %510 = vst.msk [vmem:[%s498 + $0x81] sm:$0xff] %vm461, %v477
      %511 = vst.msk [vmem:[%s498 + $0x91] sm:$0xff] %vm461, %v478
      %512 = vst.msk [vmem:[%s498 + $0x99] sm:$0xff] %vm461, %v479
      %513 = vst.msk [vmem:[%s498 + $0xa9] sm:$0xff] %vm461, %v480
      %514 = vst.msk [vmem:[%s498 + $0xb1] sm:$0xff] %vm461, %v481
      %515 = vst.msk [vmem:[%s498 + $0xc1] sm:$0xff] %vm461, %v482
      %516 = vst.msk [vmem:[%s498 + $0xc9] sm:$0xff] %vm461, %v483
      %517 = vst.msk [vmem:[%s498 + $0xd9] sm:$0xff] %vm461, %v484
      %518 = vst.msk [vmem:[%s498 + $0xe1] sm:$0xff] %vm461, %v485
      %519 = vst.msk [vmem:[%s498 + $0xf1] sm:$0xff] %vm461, %v486
      %520 = vst.msk [vmem:[%s498 + $0xf9] sm:$0xff] %vm461, %v487
      %521 = vst.msk [vmem:[%s498 + $0x109] sm:$0xff] %vm461, %v488
      %522 = vst.msk [vmem:[%s498 + $0x111] sm:$0xff] %vm461, %v489
      %523 = vst.msk [vmem:[%s498 + $0x121] sm:$0xff] %vm461, %v490
      %524 = vst.msk [vmem:[%s498 + $0x129] sm:$0xff] %vm461, %v491
      %525 = vst.msk [vmem:[%s498 + $0x139] sm:$0xff] %vm461, %v492
      %526 = vst.msk [vmem:[%s498 + $0x141] sm:$0xff] %vm461, %v493
      %527 = vst.msk [vmem:[%s498 + $0x151] sm:$0xff] %vm461, %v494
      %528 = vst.msk [vmem:[%s498 + $0x159] sm:$0xff] %vm461, %v495
      %529 = vst.msk [vmem:[%s498 + $0x169] sm:$0xff] %vm461, %v496
      %530 = vst.msk [vmem:[%s498 + $0x171] sm:$0xff] %vm461, %v497
      %v531 = vld [vmem:[%s440] sm:$0xff]
      %v532 = vld [vmem:[%s440 + $0x8] sm:$0xff]
      %v533 = vld [vmem:[%s440 + $0x10] sm:$0xff]
      %v534 = vld [vmem:[%s440 + $0x18] sm:$0xff]
      %s535 = scalar_lea.vmem [#allocation2], 432
      %536 = vst.msk [vmem:[%s535 + $0x1] sm:$0xff] %vm461, %v531
      %537 = vst.msk [vmem:[%s535 + $0x9] sm:$0xff] %vm461, %v532
      %538 = vst.msk [vmem:[%s535 + $0x19] sm:$0xff] %vm461, %v533
      %539 = vst.msk [vmem:[%s535 + $0x21] sm:$0xff] %vm461, %v534
      %v540 = vld [vmem:[#allocation2 + $0x2] sm:$0x1]
      %v541 = vld [vmem:[#allocation2 + $0x1a] sm:$0x1]
      %v542 = vld [vmem:[#allocation2 + $0x32] sm:$0x1]
      %v543 = vld [vmem:[#allocation2 + $0x4a] sm:$0x1]
      %v544 = vld [vmem:[#allocation2 + $0x62] sm:$0x1]
      %v545 = vld [vmem:[#allocation2 + $0x7a] sm:$0x1]
      %v546 = vld [vmem:[#allocation2 + $0x92] sm:$0x1]
      %v547 = vld [vmem:[#allocation2 + $0xaa] sm:$0x1]
      %v548 = vld [vmem:[#allocation2 + $0xc2] sm:$0x1]
      %v549 = vld [vmem:[#allocation2 + $0xda] sm:$0x1]
      %v550 = vld [vmem:[#allocation2 + $0xf2] sm:$0x1]
      %v551 = vld [vmem:[#allocation2 + $0x10a] sm:$0x1]
      %v552 = vld [vmem:[#allocation2 + $0x122] sm:$0x1]
      %v553 = vld [vmem:[#allocation2 + $0x13a] sm:$0x1]
      %v554 = vld [vmem:[#allocation2 + $0x152] sm:$0x1]
      %v555 = vld [vmem:[#allocation2 + $0x16a] sm:$0x1]
      %v556 = vld [vmem:[#allocation2 + $0x182] sm:$0x1]
      %v557 = vld [vmem:[#allocation2 + $0x19a] sm:$0x1]
      %v558 = vld [vmem:[#allocation2 + $0x1b2] sm:$0x1]
      %v559 = vld [vmem:[#allocation2 + $0x1ca] sm:$0x1]
      %vm560 = vcmask 24576
      %561 = vst.msk [vmem:[#allocation2] sm:$0x1] %vm560, %v540
      %562 = vst.msk [vmem:[#allocation2 + $0x18] sm:$0x1] %vm560, %v541
      %563 = vst.msk [vmem:[#allocation2 + $0x30] sm:$0x1] %vm560, %v542
      %564 = vst.msk [vmem:[#allocation2 + $0x48] sm:$0x1] %vm560, %v543
      %565 = vst.msk [vmem:[#allocation2 + $0x60] sm:$0x1] %vm560, %v544
      %566 = vst.msk [vmem:[#allocation2 + $0x78] sm:$0x1] %vm560, %v545
      %567 = vst.msk [vmem:[#allocation2 + $0x90] sm:$0x1] %vm560, %v546
      %568 = vst.msk [vmem:[#allocation2 + $0xa8] sm:$0x1] %vm560, %v547
      %569 = vst.msk [vmem:[#allocation2 + $0xc0] sm:$0x1] %vm560, %v548
      %570 = vst.msk [vmem:[#allocation2 + $0xd8] sm:$0x1] %vm560, %v549
      %571 = vst.msk [vmem:[#allocation2 + $0xf0] sm:$0x1] %vm560, %v550
      %572 = vst.msk [vmem:[#allocation2 + $0x108] sm:$0x1] %vm560, %v551
      %573 = vst.msk [vmem:[#allocation2 + $0x120] sm:$0x1] %vm560, %v552
      %574 = vst.msk [vmem:[#allocation2 + $0x138] sm:$0x1] %vm560, %v553
      %575 = vst.msk [vmem:[#allocation2 + $0x150] sm:$0x1] %vm560, %v554
      %576 = vst.msk [vmem:[#allocation2 + $0x168] sm:$0x1] %vm560, %v555
      %577 = vst.msk [vmem:[#allocation2 + $0x180] sm:$0x1] %vm560, %v556
      %578 = vst.msk [vmem:[#allocation2 + $0x198] sm:$0x1] %vm560, %v557
      %579 = vst.msk [vmem:[#allocation2 + $0x1b0] sm:$0x1] %vm560, %v558
      %580 = vst.msk [vmem:[#allocation2 + $0x1c8] sm:$0x1] %vm560, %v559
      %v581 = vld [vmem:[#allocation2 + $0xf] sm:$0x1]
      %v582 = vld [vmem:[#allocation2 + $0x27] sm:$0x1]
      %v583 = vld [vmem:[#allocation2 + $0x3f] sm:$0x1]
      %v584 = vld [vmem:[#allocation2 + $0x57] sm:$0x1]
      %v585 = vld [vmem:[#allocation2 + $0x6f] sm:$0x1]
      %v586 = vld [vmem:[#allocation2 + $0x87] sm:$0x1]
      %v587 = vld [vmem:[#allocation2 + $0x9f] sm:$0x1]
      %v588 = vld [vmem:[#allocation2 + $0xb7] sm:$0x1]
      %v589 = vld [vmem:[#allocation2 + $0xcf] sm:$0x1]
      %v590 = vld [vmem:[#allocation2 + $0xe7] sm:$0x1]
      %v591 = vld [vmem:[#allocation2 + $0xff] sm:$0x1]
      %v592 = vld [vmem:[#allocation2 + $0x117] sm:$0x1]
      %v593 = vld [vmem:[#allocation2 + $0x12f] sm:$0x1]
      %v594 = vld [vmem:[#allocation2 + $0x147] sm:$0x1]
      %v595 = vld [vmem:[#allocation2 + $0x15f] sm:$0x1]
      %v596 = vld [vmem:[#allocation2 + $0x177] sm:$0x1]
      %v597 = vld [vmem:[#allocation2 + $0x18f] sm:$0x1]
      %v598 = vld [vmem:[#allocation2 + $0x1a7] sm:$0x1]
      %v599 = vld [vmem:[#allocation2 + $0x1bf] sm:$0x1]
      %v600 = vld [vmem:[#allocation2 + $0x1d7] sm:$0x1]
      %601 = vst.msk [vmem:[#allocation2 + $0x11] sm:$0x1] %vm560, %v581
      %602 = vst.msk [vmem:[#allocation2 + $0x29] sm:$0x1] %vm560, %v582
      %603 = vst.msk [vmem:[#allocation2 + $0x41] sm:$0x1] %vm560, %v583
      %604 = vst.msk [vmem:[#allocation2 + $0x59] sm:$0x1] %vm560, %v584
      %605 = vst.msk [vmem:[#allocation2 + $0x71] sm:$0x1] %vm560, %v585
      %606 = vst.msk [vmem:[#allocation2 + $0x89] sm:$0x1] %vm560, %v586
      %607 = vst.msk [vmem:[#allocation2 + $0xa1] sm:$0x1] %vm560, %v587
      %608 = vst.msk [vmem:[#allocation2 + $0xb9] sm:$0x1] %vm560, %v588
      %609 = vst.msk [vmem:[#allocation2 + $0xd1] sm:$0x1] %vm560, %v589
      %610 = vst.msk [vmem:[#allocation2 + $0xe9] sm:$0x1] %vm560, %v590
      %611 = vst.msk [vmem:[#allocation2 + $0x101] sm:$0x1] %vm560, %v591
      %612 = vst.msk [vmem:[#allocation2 + $0x119] sm:$0x1] %vm560, %v592
      %613 = vst.msk [vmem:[#allocation2 + $0x131] sm:$0x1] %vm560, %v593
      %614 = vst.msk [vmem:[#allocation2 + $0x149] sm:$0x1] %vm560, %v594
      %615 = vst.msk [vmem:[#allocation2 + $0x161] sm:$0x1] %vm560, %v595
      %616 = vst.msk [vmem:[#allocation2 + $0x179] sm:$0x1] %vm560, %v596
      %617 = vst.msk [vmem:[#allocation2 + $0x191] sm:$0x1] %vm560, %v597
      %618 = vst.msk [vmem:[#allocation2 + $0x1a9] sm:$0x1] %vm560, %v598
      %619 = vst.msk [vmem:[#allocation2 + $0x1c1] sm:$0x1] %vm560, %v599
      %620 = vst.msk [vmem:[#allocation2 + $0x1d9] sm:$0x1] %vm560, %v600
      %v621 = vld [vmem:[#allocation2] sm:$0xff]
      %v622 = vld [vmem:[#allocation2 + $0x8] sm:$0xff]
      %v623 = vld [vmem:[#allocation2 + $0x10] sm:$0xff]
      %v624 = vld [vmem:[#allocation2 + $0x18] sm:$0xff]
      %v625 = vld [vmem:[#allocation2 + $0x20] sm:$0xff]
      %v626 = vld [vmem:[#allocation2 + $0x28] sm:$0xff]
      %v627 = vld [vmem:[#allocation2 + $0x30] sm:$0xff]
      %v628 = vld [vmem:[#allocation2 + $0x38] sm:$0xff]
      %v629 = vld [vmem:[#allocation2 + $0x40] sm:$0xff]
      %v630 = vld [vmem:[#allocation2 + $0x48] sm:$0xff]
      %v631 = vld [vmem:[#allocation2 + $0x50] sm:$0xff]
      %v632 = vld [vmem:[#allocation2 + $0x58] sm:$0xff]
      %v633 = vld [vmem:[#allocation2 + $0x60] sm:$0xff]
      %v634 = vld [vmem:[#allocation2 + $0x68] sm:$0xff]
      %v635 = vld [vmem:[#allocation2 + $0x70] sm:$0xff]
      %v636 = vld [vmem:[#allocation2 + $0x78] sm:$0xff]
      %v637 = vld [vmem:[#allocation2 + $0x80] sm:$0xff]
      %v638 = vld [vmem:[#allocation2 + $0x88] sm:$0xff]
      %v639 = vld [vmem:[#allocation2 + $0x90] sm:$0xff]
      %v640 = vld [vmem:[#allocation2 + $0x98] sm:$0xff]
      %v641 = vld [vmem:[#allocation2 + $0xa0] sm:$0xff]
      %v642 = vld [vmem:[#allocation2 + $0xa8] sm:$0xff]
      %v643 = vld [vmem:[#allocation2 + $0xb0] sm:$0xff]
      %v644 = vld [vmem:[#allocation2 + $0xb8] sm:$0xff]
      %v645 = vld [vmem:[#allocation2 + $0xc0] sm:$0xff]
      %v646 = vld [vmem:[#allocation2 + $0xc8] sm:$0xff]
      %v647 = vld [vmem:[#allocation2 + $0xd0] sm:$0xff]
      %v648 = vld [vmem:[#allocation2 + $0xd8] sm:$0xff]
      %v649 = vld [vmem:[#allocation2 + $0xe0] sm:$0xff]
      %v650 = vld [vmem:[#allocation2 + $0xe8] sm:$0xff]
      %v651 = vld [vmem:[#allocation2 + $0xf0] sm:$0xff]
      %v652 = vld [vmem:[#allocation2 + $0xf8] sm:$0xff]
      %v653 = vld [vmem:[#allocation2 + $0x100] sm:$0xff]
      %v654 = vld [vmem:[#allocation2 + $0x108] sm:$0xff]
      %v655 = vld [vmem:[#allocation2 + $0x110] sm:$0xff]
      %v656 = vld [vmem:[#allocation2 + $0x118] sm:$0xff]
      %v657 = vld [vmem:[#allocation2 + $0x120] sm:$0xff]
      %v658 = vld [vmem:[#allocation2 + $0x128] sm:$0xff]
      %v659 = vld [vmem:[#allocation2 + $0x130] sm:$0xff]
      %v660 = vld [vmem:[#allocation2 + $0x138] sm:$0xff]
      %v661 = vld [vmem:[#allocation2 + $0x140] sm:$0xff]
      %v662 = vld [vmem:[#allocation2 + $0x148] sm:$0xff]
      %v663 = vld [vmem:[#allocation2 + $0x150] sm:$0xff]
      %v664 = vld [vmem:[#allocation2 + $0x158] sm:$0xff]
      %v665 = vld [vmem:[#allocation2 + $0x160] sm:$0xff]
      %v666 = vld [vmem:[#allocation2 + $0x168] sm:$0xff]
      %v667 = vld [vmem:[#allocation2 + $0x170] sm:$0xff]
      %v668 = vld [vmem:[#allocation2 + $0x178] sm:$0xff]
      %v669 = vld [vmem:[#allocation2 + $0x180] sm:$0xff]
      %v670 = vld [vmem:[#allocation2 + $0x188] sm:$0xff]
      %v671 = vld [vmem:[#allocation2 + $0x190] sm:$0xff]
      %v672 = vld [vmem:[#allocation2 + $0x198] sm:$0xff]
      %v673 = vld [vmem:[#allocation2 + $0x1a0] sm:$0xff]
      %v674 = vld [vmem:[#allocation2 + $0x1a8] sm:$0xff]
      %v675 = vld [vmem:[#allocation2 + $0x1b0] sm:$0xff]
      %v676 = vld [vmem:[#allocation2 + $0x1b8] sm:$0xff]
      %v677 = vld [vmem:[#allocation2 + $0x1c0] sm:$0xff]
      %v678 = vld [vmem:[#allocation2 + $0x1c8] sm:$0xff]
      %v679 = vld [vmem:[#allocation2 + $0x1d0] sm:$0xff]
      %v680 = vld [vmem:[#allocation2 + $0x1d8] sm:$0xff]
      %v681 = vld [vmem:[%s3] sm:$0xf]
      %vm736 = vcmask 1046528
      %v737 = vrot.slane %v621, 1
      %v738 = vrot.slane %v622, 1
      %v739 = vsel %vm736, %v737, %v738
      %v740 = vrot.slane %v623, 1
      %v741 = vsel %vm736, %v738, %v740
      %v742 = vrot.slane %v624, 1
      %v743 = vrot.slane %v625, 1
      %v744 = vsel %vm736, %v742, %v743
      %v745 = vrot.slane %v626, 1
      %v746 = vsel %vm736, %v743, %v745
      %v747 = vrot.slane %v627, 1
      %v748 = vrot.slane %v628, 1
      %v749 = vsel %vm736, %v747, %v748
      %v750 = vrot.slane %v629, 1
      %v751 = vsel %vm736, %v748, %v750
      %v752 = vrot.slane %v630, 1
      %v753 = vrot.slane %v631, 1
      %v754 = vsel %vm736, %v752, %v753
      %v755 = vrot.slane %v632, 1
      %v756 = vsel %vm736, %v753, %v755
      %v757 = vrot.slane %v633, 1
      %v758 = vrot.slane %v634, 1
      %v759 = vsel %vm736, %v757, %v758
      %v760 = vrot.slane %v635, 1
      %v761 = vsel %vm736, %v758, %v760
      %v762 = vrot.slane %v636, 1
      %v763 = vrot.slane %v637, 1
      %v764 = vsel %vm736, %v762, %v763
      %v765 = vrot.slane %v638, 1
      %v766 = vsel %vm736, %v763, %v765
      %v767 = vrot.slane %v639, 1
      %v768 = vrot.slane %v640, 1
      %v769 = vsel %vm736, %v767, %v768
      %v770 = vrot.slane %v641, 1
      %v771 = vsel %vm736, %v768, %v770
      %v772 = vrot.slane %v642, 1
      %v773 = vrot.slane %v643, 1
      %v774 = vsel %vm736, %v772, %v773
      %v775 = vrot.slane %v644, 1
      %v776 = vsel %vm736, %v773, %v775
      %v777 = vrot.slane %v645, 1
      %v778 = vrot.slane %v646, 1
      %v779 = vsel %vm736, %v777, %v778
      %v780 = vrot.slane %v647, 1
      %v781 = vsel %vm736, %v778, %v780
      %v782 = vrot.slane %v648, 1
      %v783 = vrot.slane %v649, 1
      %v784 = vsel %vm736, %v782, %v783
      %v785 = vrot.slane %v650, 1
      %v786 = vsel %vm736, %v783, %v785
      %v787 = vrot.slane %v651, 1
      %v788 = vrot.slane %v652, 1
      %v789 = vsel %vm736, %v787, %v788
      %v790 = vrot.slane %v653, 1
      %v791 = vsel %vm736, %v788, %v790
      %v792 = vrot.slane %v654, 1
      %v793 = vrot.slane %v655, 1
      %v794 = vsel %vm736, %v792, %v793
      %v795 = vrot.slane %v656, 1
      %v796 = vsel %vm736, %v793, %v795
      %v797 = vrot.slane %v657, 1
      %v798 = vrot.slane %v658, 1
      %v799 = vsel %vm736, %v797, %v798
      %v800 = vrot.slane %v659, 1
      %v801 = vsel %vm736, %v798, %v800
      %v802 = vrot.slane %v660, 1
      %v803 = vrot.slane %v661, 1
      %v804 = vsel %vm736, %v802, %v803
      %v805 = vrot.slane %v662, 1
      %v806 = vsel %vm736, %v803, %v805
      %v807 = vrot.slane %v663, 1
      %v808 = vrot.slane %v664, 1
      %v809 = vsel %vm736, %v807, %v808
      %v810 = vrot.slane %v665, 1
      %v811 = vsel %vm736, %v808, %v810
      %v812 = vrot.slane %v666, 1
      %v813 = vrot.slane %v667, 1
      %v814 = vsel %vm736, %v812, %v813
      %v815 = vrot.slane %v668, 1
      %v816 = vsel %vm736, %v813, %v815
      %v817 = vrot.slane %v669, 1
      %v818 = vrot.slane %v670, 1
      %v819 = vsel %vm736, %v817, %v818
      %v820 = vrot.slane %v671, 1
      %v821 = vsel %vm736, %v818, %v820
      %v822 = vrot.slane %v672, 1
      %v823 = vrot.slane %v673, 1
      %v824 = vsel %vm736, %v822, %v823
      %v825 = vrot.slane %v674, 1
      %v826 = vsel %vm736, %v823, %v825
      %s827 = scalar_lea.vmem %s3, 4
      %v828 = vld [vmem:[%s827] sm:$0xf]
      %v829 = vsel %vm461, %v739, 0
      %v831 = vsel %vm461, %v741, 0
      %v833 = vsel %vm461, %v744, 0
      %v835 = vsel %vm461, %v746, 0
      %v837 = vsel %vm461, %v749, 0
      %v839 = vsel %vm461, %v751, 0
      %v841 = vsel %vm461, %v754, 0
      %v843 = vsel %vm461, %v756, 0
      %v845 = vsel %vm461, %v759, 0
      %v847 = vsel %vm461, %v761, 0
      %v849 = vsel %vm461, %v764, 0
      %v851 = vsel %vm461, %v766, 0
      %v853 = vsel %vm461, %v769, 0
      %v855 = vsel %vm461, %v771, 0
      %v857 = vsel %vm461, %v774, 0
      %v859 = vsel %vm461, %v776, 0
      %v861 = vsel %vm461, %v779, 0
      %v863 = vsel %vm461, %v781, 0
      %v865 = vsel %vm461, %v784, 0
      %v867 = vsel %vm461, %v786, 0
      %v869 = vsel %vm461, %v789, 0
      %v871 = vsel %vm461, %v791, 0
      %v873 = vsel %vm461, %v794, 0
      %v875 = vsel %vm461, %v796, 0
      %v877 = vsel %vm461, %v799, 0
      %v879 = vsel %vm461, %v801, 0
      %v881 = vsel %vm461, %v804, 0
      %v883 = vsel %vm461, %v806, 0
      %v885 = vsel %vm461, %v809, 0
      %v887 = vsel %vm461, %v811, 0
      %v889 = vsel %vm461, %v814, 0
      %v891 = vsel %vm461, %v816, 0
      %v893 = vsel %vm461, %v819, 0
      %v895 = vsel %vm461, %v821, 0
      %v897 = vsel %vm461, %v824, 0
      %v899 = vsel %vm461, %v826, 0
      %vm901 = vcmask 1043456
      %v903 = vsel %vm901, %v828, 0
      %905 = vmatprep.subr.mxu0 0.0
      %906 = vmatpush1.msra.mxu0 0.0
      %907 = vmatprep.subr.mxu0 0.0
      %908 = vmatpush1.msra.mxu0 0.0
      %909 = vmatprep.subr.mxu0 0.0
      %910 = vmatpush1.msra.mxu0 0.0
      %911 = vmatprep.subr.mxu0 0.0
      %912 = vmatpush1.msra.mxu0 0.0
      %913 = vmatprep.subr.mxu0 0.0
      %914 = vmatpush1.msra.mxu0 0.0
      %915 = vmatprep.subr.mxu0 0.0
      %916 = vmatpush1.msra.mxu0 0.0
      %917 = vmatprep.subr.mxu0 0.0
      %918 = vmatpush1.msra.mxu0 0.0
      %919 = vmatprep.subr.mxu0 0.0
      %920 = vmatpush1.msra.mxu0 0.0
      %921 = vmatprep.subr.mxu0 0.0
      %922 = vmatpush1.msra.mxu0 0.0
      %923 = vmatprep.subr.mxu0 0.0
      %924 = vmatpush1.msra.mxu0 0.0
      %925 = vmatprep.subr.mxu0 0.0
      %926 = vmatpush1.msra.mxu0 0.0
      %927 = vmatprep.subr.mxu0 0.0
      %928 = vmatpush1.msra.mxu0 0.0
      %929 = vmatprep.subr.mxu0 0.0
      %930 = vmatpush1.msra.mxu0 0.0
      %931 = vmatprep.subr.mxu0 0.0
      %932 = vmatpush1.msra.mxu0 0.0
      %933 = vmatprep.subr.mxu0 0.0
      %934 = vmatpush1.msra.mxu0 0.0
      %935 = vmatprep.subr.mxu0 0.0
      %936 = vmatpush1.msra.mxu0 %v903
      %937 = vmatprep.subr.mxu0 0.0
      %938 = vmatpush2.msra.mxu0 0.0
      %939 = vmatprep.subr.mxu0 0.0
      %940 = vmatpush2.msra.mxu0 0.0
      %941 = vmatprep.subr.mxu0 0.0
      %942 = vmatpush2.msra.mxu0 0.0
      %943 = vmatprep.subr.mxu0 0.0
      %944 = vmatpush2.msra.mxu0 0.0
      %945 = vmatprep.subr.mxu0 0.0
      %946 = vmatpush2.msra.mxu0 0.0
      %947 = vmatprep.subr.mxu0 0.0
      %948 = vmatpush2.msra.mxu0 0.0
      %949 = vmatprep.subr.mxu0 0.0
      %950 = vmatpush2.msra.mxu0 0.0
      %951 = vmatprep.subr.mxu0 0.0
      %952 = vmatpush2.msra.mxu0 0.0
      %953 = vmatprep.subr.mxu0 0.0
      %954 = vmatpush2.msra.mxu0 0.0
      %955 = vmatprep.subr.mxu0 0.0
      %956 = vmatpush2.msra.mxu0 0.0
      %957 = vmatprep.subr.mxu0 0.0
      %958 = vmatpush2.msra.mxu0 0.0
      %959 = vmatprep.subr.mxu0 0.0
      %960 = vmatpush2.msra.mxu0 0.0
      %961 = vmatprep.subr.mxu0 0.0
      %962 = vmatpush2.msra.mxu0 0.0
      %963 = vmatprep.subr.mxu0 0.0
      %964 = vmatpush2.msra.mxu0 0.0
      %965 = vmatprep.subr.mxu0 0.0
      %966 = vmatpush2.msra.mxu0 0.0
      %967 = vmatprep.subr.mxu0 0.0
      %968 = vmatpush2.msra.mxu0 0.0
      %969 = vmatprep.mubr.f32.mxu0 0.0
      %970 = vmatmul.mubr.f32.gmra.mxu0 %v829
      %v971 = vpop.f32.mrf.mxu0
      %v972 = vadd.f32 0.0, %v971
      %v973 = vpop.f32.mrf.mxu0
      %974 = vmatprep.mubr.f32.mxu0 0.0
      %975 = vmatmul.mubr.f32.gmra.mxu0 %v831
      %v976 = vpop.f32.mrf.mxu0
      %v977 = vadd.f32 0.0, %v976
      %v978 = vpop.f32.mrf.mxu0
      %979 = vmatprep.mubr.f32.mxu0 0.0
      %980 = vmatmul.mubr.f32.gmra.mxu0 %v833
      %v981 = vpop.f32.mrf.mxu0
      %v982 = vadd.f32 0.0, %v981
      %v983 = vpop.f32.mrf.mxu0
      %984 = vmatprep.mubr.f32.mxu0 0.0
      %985 = vmatmul.mubr.f32.gmra.mxu0 %v835
      %v986 = vpop.f32.mrf.mxu0
      %v987 = vadd.f32 0.0, %v986
      %v988 = vpop.f32.mrf.mxu0
      %989 = vmatprep.mubr.f32.mxu0 0.0
      %990 = vmatmul.mubr.f32.gmra.mxu0 %v837
      %v991 = vpop.f32.mrf.mxu0
      %v992 = vadd.f32 0.0, %v991
      %v993 = vpop.f32.mrf.mxu0
      %994 = vmatprep.mubr.f32.mxu0 0.0
      %995 = vmatmul.mubr.f32.gmra.mxu0 %v839
      %v996 = vpop.f32.mrf.mxu0
      %v997 = vadd.f32 0.0, %v996
      %v998 = vpop.f32.mrf.mxu0
      %999 = vmatprep.mubr.f32.mxu0 0.0
      %1000 = vmatmul.mubr.f32.gmra.mxu0 %v841
      %v1001 = vpop.f32.mrf.mxu0
      %v1002 = vadd.f32 0.0, %v1001
      %v1003 = vpop.f32.mrf.mxu0
      %1004 = vmatprep.mubr.f32.mxu0 0.0
      %1005 = vmatmul.mubr.f32.gmra.mxu0 %v843
      %v1006 = vpop.f32.mrf.mxu0
      %v1007 = vadd.f32 0.0, %v1006
      %v1008 = vpop.f32.mrf.mxu0
      %1009 = vmatprep.mubr.f32.mxu0 0.0
      %1010 = vmatmul.mubr.f32.gmra.mxu0 %v845
      %v1011 = vpop.f32.mrf.mxu0
      %v1012 = vadd.f32 0.0, %v1011
      %v1013 = vpop.f32.mrf.mxu0
      %1014 = vmatprep.mubr.f32.mxu0 0.0
      %1015 = vmatmul.mubr.f32.gmra.mxu0 %v847
      %v1016 = vpop.f32.mrf.mxu0
      %v1017 = vadd.f32 0.0, %v1016
      %v1018 = vpop.f32.mrf.mxu0
      %1019 = vmatprep.mubr.f32.mxu0 0.0
      %1020 = vmatmul.mubr.f32.gmra.mxu0 %v849
      %v1021 = vpop.f32.mrf.mxu0
      %v1022 = vadd.f32 0.0, %v1021
      %v1023 = vpop.f32.mrf.mxu0
      %1024 = vmatprep.mubr.f32.mxu0 0.0
      %1025 = vmatmul.mubr.f32.gmra.mxu0 %v851
      %v1026 = vpop.f32.mrf.mxu0
      %v1027 = vadd.f32 0.0, %v1026
      %v1028 = vpop.f32.mrf.mxu0
      %1029 = vmatprep.mubr.f32.mxu0 0.0
      %1030 = vmatmul.mubr.f32.gmra.mxu0 %v853
      %v1031 = vpop.f32.mrf.mxu0
      %v1032 = vadd.f32 0.0, %v1031
      %v1033 = vpop.f32.mrf.mxu0
      %1034 = vmatprep.mubr.f32.mxu0 0.0
      %1035 = vmatmul.mubr.f32.gmra.mxu0 %v855
      %v1036 = vpop.f32.mrf.mxu0
      %v1037 = vadd.f32 0.0, %v1036
      %v1038 = vpop.f32.mrf.mxu0
      %1039 = vmatprep.mubr.f32.mxu0 0.0
      %1040 = vmatmul.mubr.f32.gmra.mxu0 %v857
      %v1041 = vpop.f32.mrf.mxu0
      %v1042 = vadd.f32 0.0, %v1041
      %v1043 = vpop.f32.mrf.mxu0
      %1044 = vmatprep.mubr.f32.mxu0 0.0
      %1045 = vmatmul.mubr.f32.gmra.mxu0 %v859
      %v1046 = vpop.f32.mrf.mxu0
      %v1047 = vadd.f32 0.0, %v1046
      %v1048 = vpop.f32.mrf.mxu0
      %1049 = vmatprep.mubr.f32.mxu0 0.0
      %1050 = vmatmul.mubr.f32.gmra.mxu0 %v861
      %v1051 = vpop.f32.mrf.mxu0
      %v1052 = vadd.f32 0.0, %v1051
      %v1053 = vpop.f32.mrf.mxu0
      %1054 = vmatprep.mubr.f32.mxu0 0.0
      %1055 = vmatmul.mubr.f32.gmra.mxu0 %v863
      %v1056 = vpop.f32.mrf.mxu0
      %v1057 = vadd.f32 0.0, %v1056
      %v1058 = vpop.f32.mrf.mxu0
      %1059 = vmatprep.mubr.f32.mxu0 0.0
      %1060 = vmatmul.mubr.f32.gmra.mxu0 %v865
      %v1061 = vpop.f32.mrf.mxu0
      %v1062 = vadd.f32 0.0, %v1061
      %v1063 = vpop.f32.mrf.mxu0
      %1064 = vmatprep.mubr.f32.mxu0 0.0
      %1065 = vmatmul.mubr.f32.gmra.mxu0 %v867
      %v1066 = vpop.f32.mrf.mxu0
      %v1067 = vadd.f32 0.0, %v1066
      %v1068 = vpop.f32.mrf.mxu0
      %1069 = vmatprep.mubr.f32.mxu0 0.0
      %1070 = vmatmul.mubr.f32.gmra.mxu0 %v869
      %v1071 = vpop.f32.mrf.mxu0
      %v1072 = vadd.f32 0.0, %v1071
      %v1073 = vpop.f32.mrf.mxu0
      %1074 = vmatprep.mubr.f32.mxu0 0.0
      %1075 = vmatmul.mubr.f32.gmra.mxu0 %v871
      %v1076 = vpop.f32.mrf.mxu0
      %v1077 = vadd.f32 0.0, %v1076
      %v1078 = vpop.f32.mrf.mxu0
      %1079 = vmatprep.mubr.f32.mxu0 0.0
      %1080 = vmatmul.mubr.f32.gmra.mxu0 %v873
      %v1081 = vpop.f32.mrf.mxu0
      %v1082 = vadd.f32 0.0, %v1081
      %v1083 = vpop.f32.mrf.mxu0
      %1084 = vmatprep.mubr.f32.mxu0 0.0
      %1085 = vmatmul.mubr.f32.gmra.mxu0 %v875
      %v1086 = vpop.f32.mrf.mxu0
      %v1087 = vadd.f32 0.0, %v1086
      %v1088 = vpop.f32.mrf.mxu0
      %1089 = vmatprep.mubr.f32.mxu0 0.0
      %1090 = vmatmul.mubr.f32.gmra.mxu0 %v877
      %v1091 = vpop.f32.mrf.mxu0
      %v1092 = vadd.f32 0.0, %v1091
      %v1093 = vpop.f32.mrf.mxu0
      %1094 = vmatprep.mubr.f32.mxu0 0.0
      %1095 = vmatmul.mubr.f32.gmra.mxu0 %v879
      %v1096 = vpop.f32.mrf.mxu0
      %v1097 = vadd.f32 0.0, %v1096
      %v1098 = vpop.f32.mrf.mxu0
      %1099 = vmatprep.mubr.f32.mxu0 0.0
      %1100 = vmatmul.mubr.f32.gmra.mxu0 %v881
      %v1101 = vpop.f32.mrf.mxu0
      %v1102 = vadd.f32 0.0, %v1101
      %v1103 = vpop.f32.mrf.mxu0
      %1104 = vmatprep.mubr.f32.mxu0 0.0
      %1105 = vmatmul.mubr.f32.gmra.mxu0 %v883
      %v1106 = vpop.f32.mrf.mxu0
      %v1107 = vadd.f32 0.0, %v1106
      %v1108 = vpop.f32.mrf.mxu0
      %1109 = vmatprep.mubr.f32.mxu0 0.0
      %1110 = vmatmul.mubr.f32.gmra.mxu0 %v885
      %v1111 = vpop.f32.mrf.mxu0
      %v1112 = vadd.f32 0.0, %v1111
      %v1113 = vpop.f32.mrf.mxu0
      %1114 = vmatprep.mubr.f32.mxu0 0.0
      %1115 = vmatmul.mubr.f32.gmra.mxu0 %v887
      %v1116 = vpop.f32.mrf.mxu0
      %v1117 = vadd.f32 0.0, %v1116
      %v1118 = vpop.f32.mrf.mxu0
      %1119 = vmatprep.mubr.f32.mxu0 0.0
      %1120 = vmatmul.mubr.f32.gmra.mxu0 %v889
      %v1121 = vpop.f32.mrf.mxu0
      %v1122 = vadd.f32 0.0, %v1121
      %v1123 = vpop.f32.mrf.mxu0
      %1124 = vmatprep.mubr.f32.mxu0 0.0
      %1125 = vmatmul.mubr.f32.gmra.mxu0 %v891
      %v1126 = vpop.f32.mrf.mxu0
      %v1127 = vadd.f32 0.0, %v1126
      %v1128 = vpop.f32.mrf.mxu0
      %1129 = vmatprep.mubr.f32.mxu0 0.0
      %1130 = vmatmul.mubr.f32.gmra.mxu0 %v893
      %v1131 = vpop.f32.mrf.mxu0
      %v1132 = vadd.f32 0.0, %v1131
      %v1133 = vpop.f32.mrf.mxu0
      %1134 = vmatprep.mubr.f32.mxu0 0.0
      %1135 = vmatmul.mubr.f32.gmra.mxu0 %v895
      %v1136 = vpop.f32.mrf.mxu0
      %v1137 = vadd.f32 0.0, %v1136
      %v1138 = vpop.f32.mrf.mxu0
      %1139 = vmatprep.mubr.f32.mxu0 0.0
      %1140 = vmatmul.mubr.f32.gmra.mxu0 %v897
      %v1141 = vpop.f32.mrf.mxu0
      %v1142 = vadd.f32 0.0, %v1141
      %v1143 = vpop.f32.mrf.mxu0
      %1144 = vmatprep.mubr.f32.mxu0 0.0
      %1145 = vmatmul.mubr.f32.gmra.mxu0 %v899
      %v1146 = vpop.f32.mrf.mxu0
      %v1147 = vadd.f32 0.0, %v1146
      %v1148 = vpop.f32.mrf.mxu0
      %1149 = vdwg.mxu0
      %v1150 = vsel %vm461, %v621, 0
      %v1152 = vsel %vm461, %v622, 0
      %v1154 = vsel %vm461, %v624, 0
      %v1156 = vsel %vm461, %v625, 0
      %v1158 = vsel %vm461, %v627, 0
      %v1160 = vsel %vm461, %v628, 0
      %v1162 = vsel %vm461, %v630, 0
      %v1164 = vsel %vm461, %v631, 0
      %v1166 = vsel %vm461, %v633, 0
      %v1168 = vsel %vm461, %v634, 0
      %v1170 = vsel %vm461, %v636, 0
      %v1172 = vsel %vm461, %v637, 0
      %v1174 = vsel %vm461, %v639, 0
      %v1176 = vsel %vm461, %v640, 0
      %v1178 = vsel %vm461, %v642, 0
      %v1180 = vsel %vm461, %v643, 0
      %v1182 = vsel %vm461, %v645, 0
      %v1184 = vsel %vm461, %v646, 0
      %v1186 = vsel %vm461, %v648, 0
      %v1188 = vsel %vm461, %v649, 0
      %v1190 = vsel %vm461, %v651, 0
      %v1192 = vsel %vm461, %v652, 0
      %v1194 = vsel %vm461, %v654, 0
      %v1196 = vsel %vm461, %v655, 0
      %v1198 = vsel %vm461, %v657, 0
      %v1200 = vsel %vm461, %v658, 0
      %v1202 = vsel %vm461, %v660, 0
      %v1204 = vsel %vm461, %v661, 0
      %v1206 = vsel %vm461, %v663, 0
      %v1208 = vsel %vm461, %v664, 0
      %v1210 = vsel %vm461, %v666, 0
      %v1212 = vsel %vm461, %v667, 0
      %v1214 = vsel %vm461, %v669, 0
      %v1216 = vsel %vm461, %v670, 0
      %v1218 = vsel %vm461, %v672, 0
      %v1220 = vsel %vm461, %v673, 0
      %v1223 = vsel %vm901, %v681, 0
      %1225 = vmatprep.subr.mxu0 0.0
      %1226 = vmatpush1.msra.mxu0 0.0
      %1227 = vmatprep.subr.mxu0 0.0
      %1228 = vmatpush1.msra.mxu0 0.0
      %1229 = vmatprep.subr.mxu0 0.0
      %1230 = vmatpush1.msra.mxu0 0.0
      %1231 = vmatprep.subr.mxu0 0.0
      %1232 = vmatpush1.msra.mxu0 0.0
      %1233 = vmatprep.subr.mxu0 0.0
      %1234 = vmatpush1.msra.mxu0 0.0
      %1235 = vmatprep.subr.mxu0 0.0
      %1236 = vmatpush1.msra.mxu0 0.0
      %1237 = vmatprep.subr.mxu0 0.0
      %1238 = vmatpush1.msra.mxu0 0.0
      %1239 = vmatprep.subr.mxu0 0.0
      %1240 = vmatpush1.msra.mxu0 0.0
      %1241 = vmatprep.subr.mxu0 0.0
      %1242 = vmatpush1.msra.mxu0 0.0
      %1243 = vmatprep.subr.mxu0 0.0
      %1244 = vmatpush1.msra.mxu0 0.0
      %1245 = vmatprep.subr.mxu0 0.0
      %1246 = vmatpush1.msra.mxu0 0.0
      %1247 = vmatprep.subr.mxu0 0.0
      %1248 = vmatpush1.msra.mxu0 0.0
      %1249 = vmatprep.subr.mxu0 0.0
      %1250 = vmatpush1.msra.mxu0 0.0
      %1251 = vmatprep.subr.mxu0 0.0
      %1252 = vmatpush1.msra.mxu0 0.0
      %1253 = vmatprep.subr.mxu0 0.0
      %1254 = vmatpush1.msra.mxu0 0.0
      %1255 = vmatprep.subr.mxu0 0.0
      %1256 = vmatpush1.msra.mxu0 %v1223
      %1257 = vmatprep.subr.mxu0 0.0
      %1258 = vmatpush2.msra.mxu0 0.0
      %1259 = vmatprep.subr.mxu0 0.0
      %1260 = vmatpush2.msra.mxu0 0.0
      %1261 = vmatprep.subr.mxu0 0.0
      %1262 = vmatpush2.msra.mxu0 0.0
      %1263 = vmatprep.subr.mxu0 0.0
      %1264 = vmatpush2.msra.mxu0 0.0
      %1265 = vmatprep.subr.mxu0 0.0
      %1266 = vmatpush2.msra.mxu0 0.0
      %1267 = vmatprep.subr.mxu0 0.0
      %1268 = vmatpush2.msra.mxu0 0.0
      %1269 = vmatprep.subr.mxu0 0.0
      %1270 = vmatpush2.msra.mxu0 0.0
      %1271 = vmatprep.subr.mxu0 0.0
      %1272 = vmatpush2.msra.mxu0 0.0
      %1273 = vmatprep.subr.mxu0 0.0
      %1274 = vmatpush2.msra.mxu0 0.0
      %1275 = vmatprep.subr.mxu0 0.0
      %1276 = vmatpush2.msra.mxu0 0.0
      %1277 = vmatprep.subr.mxu0 0.0
      %1278 = vmatpush2.msra.mxu0 0.0
      %1279 = vmatprep.subr.mxu0 0.0
      %1280 = vmatpush2.msra.mxu0 0.0
      %1281 = vmatprep.subr.mxu0 0.0
      %1282 = vmatpush2.msra.mxu0 0.0
      %1283 = vmatprep.subr.mxu0 0.0
      %1284 = vmatpush2.msra.mxu0 0.0
      %1285 = vmatprep.subr.mxu0 0.0
      %1286 = vmatpush2.msra.mxu0 0.0
      %1287 = vmatprep.subr.mxu0 0.0
      %1288 = vmatpush2.msra.mxu0 0.0
      %1289 = vmatprep.mubr.f32.mxu0 0.0
      %1290 = vmatmul.mubr.f32.gmra.mxu0 %v1150
      %v1291 = vpop.f32.mrf.mxu0
      %v1292 = vadd.f32 %v972, %v1291
      %v1293 = vpop.f32.mrf.mxu0
      %1294 = vmatprep.mubr.f32.mxu0 0.0
      %1295 = vmatmul.mubr.f32.gmra.mxu0 %v1152
      %v1296 = vpop.f32.mrf.mxu0
      %v1297 = vadd.f32 %v977, %v1296
      %v1298 = vpop.f32.mrf.mxu0
      %1299 = vmatprep.mubr.f32.mxu0 0.0
      %1300 = vmatmul.mubr.f32.gmra.mxu0 %v1154
      %v1301 = vpop.f32.mrf.mxu0
      %v1302 = vadd.f32 %v982, %v1301
      %v1303 = vpop.f32.mrf.mxu0
      %1304 = vmatprep.mubr.f32.mxu0 0.0
      %1305 = vmatmul.mubr.f32.gmra.mxu0 %v1156
      %v1306 = vpop.f32.mrf.mxu0
      %v1307 = vadd.f32 %v987, %v1306
      %v1308 = vpop.f32.mrf.mxu0
      %1309 = vmatprep.mubr.f32.mxu0 0.0
      %1310 = vmatmul.mubr.f32.gmra.mxu0 %v1158
      %v1311 = vpop.f32.mrf.mxu0
      %v1312 = vadd.f32 %v992, %v1311
      %v1313 = vpop.f32.mrf.mxu0
      %1314 = vmatprep.mubr.f32.mxu0 0.0
      %1315 = vmatmul.mubr.f32.gmra.mxu0 %v1160
      %v1316 = vpop.f32.mrf.mxu0
      %v1317 = vadd.f32 %v997, %v1316
      %v1318 = vpop.f32.mrf.mxu0
      %1319 = vmatprep.mubr.f32.mxu0 0.0
      %1320 = vmatmul.mubr.f32.gmra.mxu0 %v1162
      %v1321 = vpop.f32.mrf.mxu0
      %v1322 = vadd.f32 %v1002, %v1321
      %v1323 = vpop.f32.mrf.mxu0
      %1324 = vmatprep.mubr.f32.mxu0 0.0
      %1325 = vmatmul.mubr.f32.gmra.mxu0 %v1164
      %v1326 = vpop.f32.mrf.mxu0
      %v1327 = vadd.f32 %v1007, %v1326
      %v1328 = vpop.f32.mrf.mxu0
      %1329 = vmatprep.mubr.f32.mxu0 0.0
      %1330 = vmatmul.mubr.f32.gmra.mxu0 %v1166
      %v1331 = vpop.f32.mrf.mxu0
      %v1332 = vadd.f32 %v1012, %v1331
      %v1333 = vpop.f32.mrf.mxu0
      %1334 = vmatprep.mubr.f32.mxu0 0.0
      %1335 = vmatmul.mubr.f32.gmra.mxu0 %v1168
      %v1336 = vpop.f32.mrf.mxu0
      %v1337 = vadd.f32 %v1017, %v1336
      %v1338 = vpop.f32.mrf.mxu0
      %1339 = vmatprep.mubr.f32.mxu0 0.0
      %1340 = vmatmul.mubr.f32.gmra.mxu0 %v1170
      %v1341 = vpop.f32.mrf.mxu0
      %v1342 = vadd.f32 %v1022, %v1341
      %v1343 = vpop.f32.mrf.mxu0
      %1344 = vmatprep.mubr.f32.mxu0 0.0
      %1345 = vmatmul.mubr.f32.gmra.mxu0 %v1172
      %v1346 = vpop.f32.mrf.mxu0
      %v1347 = vadd.f32 %v1027, %v1346
      %v1348 = vpop.f32.mrf.mxu0
      %1349 = vmatprep.mubr.f32.mxu0 0.0
      %1350 = vmatmul.mubr.f32.gmra.mxu0 %v1174
      %v1351 = vpop.f32.mrf.mxu0
      %v1352 = vadd.f32 %v1032, %v1351
      %v1353 = vpop.f32.mrf.mxu0
      %1354 = vmatprep.mubr.f32.mxu0 0.0
      %1355 = vmatmul.mubr.f32.gmra.mxu0 %v1176
      %v1356 = vpop.f32.mrf.mxu0
      %v1357 = vadd.f32 %v1037, %v1356
      %v1358 = vpop.f32.mrf.mxu0
      %1359 = vmatprep.mubr.f32.mxu0 0.0
      %1360 = vmatmul.mubr.f32.gmra.mxu0 %v1178
      %v1361 = vpop.f32.mrf.mxu0
      %v1362 = vadd.f32 %v1042, %v1361
      %v1363 = vpop.f32.mrf.mxu0
      %1364 = vmatprep.mubr.f32.mxu0 0.0
      %1365 = vmatmul.mubr.f32.gmra.mxu0 %v1180
      %v1366 = vpop.f32.mrf.mxu0
      %v1367 = vadd.f32 %v1047, %v1366
      %v1368 = vpop.f32.mrf.mxu0
      %1369 = vmatprep.mubr.f32.mxu0 0.0
      %1370 = vmatmul.mubr.f32.gmra.mxu0 %v1182
      %v1371 = vpop.f32.mrf.mxu0
      %v1372 = vadd.f32 %v1052, %v1371
      %v1373 = vpop.f32.mrf.mxu0
      %1374 = vmatprep.mubr.f32.mxu0 0.0
      %1375 = vmatmul.mubr.f32.gmra.mxu0 %v1184
      %v1376 = vpop.f32.mrf.mxu0
      %v1377 = vadd.f32 %v1057, %v1376
      %v1378 = vpop.f32.mrf.mxu0
      %1379 = vmatprep.mubr.f32.mxu0 0.0
      %1380 = vmatmul.mubr.f32.gmra.mxu0 %v1186
      %v1381 = vpop.f32.mrf.mxu0
      %v1382 = vadd.f32 %v1062, %v1381
      %v1383 = vpop.f32.mrf.mxu0
      %1384 = vmatprep.mubr.f32.mxu0 0.0
      %1385 = vmatmul.mubr.f32.gmra.mxu0 %v1188
      %v1386 = vpop.f32.mrf.mxu0
      %v1387 = vadd.f32 %v1067, %v1386
      %v1388 = vpop.f32.mrf.mxu0
      %1389 = vmatprep.mubr.f32.mxu0 0.0
      %1390 = vmatmul.mubr.f32.gmra.mxu0 %v1190
      %v1391 = vpop.f32.mrf.mxu0
      %v1392 = vadd.f32 %v1072, %v1391
      %v1393 = vpop.f32.mrf.mxu0
      %1394 = vmatprep.mubr.f32.mxu0 0.0
      %1395 = vmatmul.mubr.f32.gmra.mxu0 %v1192
      %v1396 = vpop.f32.mrf.mxu0
      %v1397 = vadd.f32 %v1077, %v1396
      %v1398 = vpop.f32.mrf.mxu0
      %1399 = vmatprep.mubr.f32.mxu0 0.0
      %1400 = vmatmul.mubr.f32.gmra.mxu0 %v1194
      %v1401 = vpop.f32.mrf.mxu0
      %v1402 = vadd.f32 %v1082, %v1401
      %v1403 = vpop.f32.mrf.mxu0
      %1404 = vmatprep.mubr.f32.mxu0 0.0
      %1405 = vmatmul.mubr.f32.gmra.mxu0 %v1196
      %v1406 = vpop.f32.mrf.mxu0
      %v1407 = vadd.f32 %v1087, %v1406
      %v1408 = vpop.f32.mrf.mxu0
      %1409 = vmatprep.mubr.f32.mxu0 0.0
      %1410 = vmatmul.mubr.f32.gmra.mxu0 %v1198
      %v1411 = vpop.f32.mrf.mxu0
      %v1412 = vadd.f32 %v1092, %v1411
      %v1413 = vpop.f32.mrf.mxu0
      %1414 = vmatprep.mubr.f32.mxu0 0.0
      %1415 = vmatmul.mubr.f32.gmra.mxu0 %v1200
      %v1416 = vpop.f32.mrf.mxu0
      %v1417 = vadd.f32 %v1097, %v1416
      %v1418 = vpop.f32.mrf.mxu0
      %1419 = vmatprep.mubr.f32.mxu0 0.0
      %1420 = vmatmul.mubr.f32.gmra.mxu0 %v1202
      %v1421 = vpop.f32.mrf.mxu0
      %v1422 = vadd.f32 %v1102, %v1421
      %v1423 = vpop.f32.mrf.mxu0
      %1424 = vmatprep.mubr.f32.mxu0 0.0
      %1425 = vmatmul.mubr.f32.gmra.mxu0 %v1204
      %v1426 = vpop.f32.mrf.mxu0
      %v1427 = vadd.f32 %v1107, %v1426
      %v1428 = vpop.f32.mrf.mxu0
      %1429 = vmatprep.mubr.f32.mxu0 0.0
      %1430 = vmatmul.mubr.f32.gmra.mxu0 %v1206
      %v1431 = vpop.f32.mrf.mxu0
      %v1432 = vadd.f32 %v1112, %v1431
      %v1433 = vpop.f32.mrf.mxu0
      %1434 = vmatprep.mubr.f32.mxu0 0.0
      %1435 = vmatmul.mubr.f32.gmra.mxu0 %v1208
      %v1436 = vpop.f32.mrf.mxu0
      %v1437 = vadd.f32 %v1117, %v1436
      %v1438 = vpop.f32.mrf.mxu0
      %1439 = vmatprep.mubr.f32.mxu0 0.0
      %1440 = vmatmul.mubr.f32.gmra.mxu0 %v1210
      %v1441 = vpop.f32.mrf.mxu0
      %v1442 = vadd.f32 %v1122, %v1441
      %v1443 = vpop.f32.mrf.mxu0
      %1444 = vmatprep.mubr.f32.mxu0 0.0
      %1445 = vmatmul.mubr.f32.gmra.mxu0 %v1212
      %v1446 = vpop.f32.mrf.mxu0
      %v1447 = vadd.f32 %v1127, %v1446
      %v1448 = vpop.f32.mrf.mxu0
      %1449 = vmatprep.mubr.f32.mxu0 0.0
      %1450 = vmatmul.mubr.f32.gmra.mxu0 %v1214
      %v1451 = vpop.f32.mrf.mxu0
      %v1452 = vadd.f32 %v1132, %v1451
      %v1453 = vpop.f32.mrf.mxu0
      %1454 = vmatprep.mubr.f32.mxu0 0.0
      %1455 = vmatmul.mubr.f32.gmra.mxu0 %v1216
      %v1456 = vpop.f32.mrf.mxu0
      %v1457 = vadd.f32 %v1137, %v1456
      %v1458 = vpop.f32.mrf.mxu0
      %1459 = vmatprep.mubr.f32.mxu0 0.0
      %1460 = vmatmul.mubr.f32.gmra.mxu0 %v1218
      %v1461 = vpop.f32.mrf.mxu0
      %v1462 = vadd.f32 %v1142, %v1461
      %v1463 = vpop.f32.mrf.mxu0
      %1464 = vmatprep.mubr.f32.mxu0 0.0
      %1465 = vmatmul.mubr.f32.gmra.mxu0 %v1220
      %v1466 = vpop.f32.mrf.mxu0
      %v1467 = vadd.f32 %v1147, %v1466
      %v1468 = vpop.f32.mrf.mxu0
      %1469 = vdwg.mxu0
      %vm1470 = vcmask 1045504
      %v1471 = vrot.slane %v621, 2
      %v1472 = vrot.slane %v622, 2
      %v1473 = vsel %vm1470, %v1471, %v1472
      %v1474 = vrot.slane %v623, 2
      %v1475 = vsel %vm1470, %v1472, %v1474
      %v1476 = vrot.slane %v624, 2
      %v1477 = vrot.slane %v625, 2
      %v1478 = vsel %vm1470, %v1476, %v1477
      %v1479 = vrot.slane %v626, 2
      %v1480 = vsel %vm1470, %v1477, %v1479
      %v1481 = vrot.slane %v627, 2
      %v1482 = vrot.slane %v628, 2
      %v1483 = vsel %vm1470, %v1481, %v1482
      %v1484 = vrot.slane %v629, 2
      %v1485 = vsel %vm1470, %v1482, %v1484
      %v1486 = vrot.slane %v630, 2
      %v1487 = vrot.slane %v631, 2
      %v1488 = vsel %vm1470, %v1486, %v1487
      %v1489 = vrot.slane %v632, 2
      %v1490 = vsel %vm1470, %v1487, %v1489
      %v1491 = vrot.slane %v633, 2
      %v1492 = vrot.slane %v634, 2
      %v1493 = vsel %vm1470, %v1491, %v1492
      %v1494 = vrot.slane %v635, 2
      %v1495 = vsel %vm1470, %v1492, %v1494
      %v1496 = vrot.slane %v636, 2
      %v1497 = vrot.slane %v637, 2
      %v1498 = vsel %vm1470, %v1496, %v1497
      %v1499 = vrot.slane %v638, 2
      %v1500 = vsel %vm1470, %v1497, %v1499
      %v1501 = vrot.slane %v639, 2
      %v1502 = vrot.slane %v640, 2
      %v1503 = vsel %vm1470, %v1501, %v1502
      %v1504 = vrot.slane %v641, 2
      %v1505 = vsel %vm1470, %v1502, %v1504
      %v1506 = vrot.slane %v642, 2
      %v1507 = vrot.slane %v643, 2
      %v1508 = vsel %vm1470, %v1506, %v1507
      %v1509 = vrot.slane %v644, 2
      %v1510 = vsel %vm1470, %v1507, %v1509
      %v1511 = vrot.slane %v645, 2
      %v1512 = vrot.slane %v646, 2
      %v1513 = vsel %vm1470, %v1511, %v1512
      %v1514 = vrot.slane %v647, 2
      %v1515 = vsel %vm1470, %v1512, %v1514
      %v1516 = vrot.slane %v648, 2
      %v1517 = vrot.slane %v649, 2
      %v1518 = vsel %vm1470, %v1516, %v1517
      %v1519 = vrot.slane %v650, 2
      %v1520 = vsel %vm1470, %v1517, %v1519
      %v1521 = vrot.slane %v651, 2
      %v1522 = vrot.slane %v652, 2
      %v1523 = vsel %vm1470, %v1521, %v1522
      %v1524 = vrot.slane %v653, 2
      %v1525 = vsel %vm1470, %v1522, %v1524
      %v1526 = vrot.slane %v654, 2
      %v1527 = vrot.slane %v655, 2
      %v1528 = vsel %vm1470, %v1526, %v1527
      %v1529 = vrot.slane %v656, 2
      %v1530 = vsel %vm1470, %v1527, %v1529
      %v1531 = vrot.slane %v657, 2
      %v1532 = vrot.slane %v658, 2
      %v1533 = vsel %vm1470, %v1531, %v1532
      %v1534 = vrot.slane %v659, 2
      %v1535 = vsel %vm1470, %v1532, %v1534
      %v1536 = vrot.slane %v660, 2
      %v1537 = vrot.slane %v661, 2
      %v1538 = vsel %vm1470, %v1536, %v1537
      %v1539 = vrot.slane %v662, 2
      %v1540 = vsel %vm1470, %v1537, %v1539
      %v1541 = vrot.slane %v663, 2
      %v1542 = vrot.slane %v664, 2
      %v1543 = vsel %vm1470, %v1541, %v1542
      %v1544 = vrot.slane %v665, 2
      %v1545 = vsel %vm1470, %v1542, %v1544
      %v1546 = vrot.slane %v666, 2
      %v1547 = vrot.slane %v667, 2
      %v1548 = vsel %vm1470, %v1546, %v1547
      %v1549 = vrot.slane %v668, 2
      %v1550 = vsel %vm1470, %v1547, %v1549
      %v1551 = vrot.slane %v669, 2
      %v1552 = vrot.slane %v670, 2
      %v1553 = vsel %vm1470, %v1551, %v1552
      %v1554 = vrot.slane %v671, 2
      %v1555 = vsel %vm1470, %v1552, %v1554
      %v1556 = vrot.slane %v672, 2
      %v1557 = vrot.slane %v673, 2
      %v1558 = vsel %vm1470, %v1556, %v1557
      %v1559 = vrot.slane %v674, 2
      %v1560 = vsel %vm1470, %v1557, %v1559
      %s1561 = scalar_lea.vmem %s3, 8
      %v1562 = vld [vmem:[%s1561] sm:$0xf]
      %v1563 = vsel %vm461, %v1473, 0
      %v1565 = vsel %vm461, %v1475, 0
      %v1567 = vsel %vm461, %v1478, 0
      %v1569 = vsel %vm461, %v1480, 0
      %v1571 = vsel %vm461, %v1483, 0
      %v1573 = vsel %vm461, %v1485, 0
      %v1575 = vsel %vm461, %v1488, 0
      %v1577 = vsel %vm461, %v1490, 0
      %v1579 = vsel %vm461, %v1493, 0
      %v1581 = vsel %vm461, %v1495, 0
      %v1583 = vsel %vm461, %v1498, 0
      %v1585 = vsel %vm461, %v1500, 0
      %v1587 = vsel %vm461, %v1503, 0
      %v1589 = vsel %vm461, %v1505, 0
      %v1591 = vsel %vm461, %v1508, 0
      %v1593 = vsel %vm461, %v1510, 0
      %v1595 = vsel %vm461, %v1513, 0
      %v1597 = vsel %vm461, %v1515, 0
      %v1599 = vsel %vm461, %v1518, 0
      %v1601 = vsel %vm461, %v1520, 0
      %v1603 = vsel %vm461, %v1523, 0
      %v1605 = vsel %vm461, %v1525, 0
      %v1607 = vsel %vm461, %v1528, 0
      %v1609 = vsel %vm461, %v1530, 0
      %v1611 = vsel %vm461, %v1533, 0
      %v1613 = vsel %vm461, %v1535, 0
      %v1615 = vsel %vm461, %v1538, 0
      %v1617 = vsel %vm461, %v1540, 0
      %v1619 = vsel %vm461, %v1543, 0
      %v1621 = vsel %vm461, %v1545, 0
      %v1623 = vsel %vm461, %v1548, 0
      %v1625 = vsel %vm461, %v1550, 0
      %v1627 = vsel %vm461, %v1553, 0
      %v1629 = vsel %vm461, %v1555, 0
      %v1631 = vsel %vm461, %v1558, 0
      %v1633 = vsel %vm461, %v1560, 0
      %v1636 = vsel %vm901, %v1562, 0
      %1638 = vmatprep.subr.mxu0 0.0
      %1639 = vmatpush1.msra.mxu0 0.0
      %1640 = vmatprep.subr.mxu0 0.0
      %1641 = vmatpush1.msra.mxu0 0.0
      %1642 = vmatprep.subr.mxu0 0.0
      %1643 = vmatpush1.msra.mxu0 0.0
      %1644 = vmatprep.subr.mxu0 0.0
      %1645 = vmatpush1.msra.mxu0 0.0
      %1646 = vmatprep.subr.mxu0 0.0
      %1647 = vmatpush1.msra.mxu0 0.0
      %1648 = vmatprep.subr.mxu0 0.0
      %1649 = vmatpush1.msra.mxu0 0.0
      %1650 = vmatprep.subr.mxu0 0.0
      %1651 = vmatpush1.msra.mxu0 0.0
      %1652 = vmatprep.subr.mxu0 0.0
      %1653 = vmatpush1.msra.mxu0 0.0
      %1654 = vmatprep.subr.mxu0 0.0
      %1655 = vmatpush1.msra.mxu0 0.0
      %1656 = vmatprep.subr.mxu0 0.0
      %1657 = vmatpush1.msra.mxu0 0.0
      %1658 = vmatprep.subr.mxu0 0.0
      %1659 = vmatpush1.msra.mxu0 0.0
      %1660 = vmatprep.subr.mxu0 0.0
      %1661 = vmatpush1.msra.mxu0 0.0
      %1662 = vmatprep.subr.mxu0 0.0
      %1663 = vmatpush1.msra.mxu0 0.0
      %1664 = vmatprep.subr.mxu0 0.0
      %1665 = vmatpush1.msra.mxu0 0.0
      %1666 = vmatprep.subr.mxu0 0.0
      %1667 = vmatpush1.msra.mxu0 0.0
      %1668 = vmatprep.subr.mxu0 0.0
      %1669 = vmatpush1.msra.mxu0 %v1636
      %1670 = vmatprep.subr.mxu0 0.0
      %1671 = vmatpush2.msra.mxu0 0.0
      %1672 = vmatprep.subr.mxu0 0.0
      %1673 = vmatpush2.msra.mxu0 0.0
      %1674 = vmatprep.subr.mxu0 0.0
      %1675 = vmatpush2.msra.mxu0 0.0
      %1676 = vmatprep.subr.mxu0 0.0
      %1677 = vmatpush2.msra.mxu0 0.0
      %1678 = vmatprep.subr.mxu0 0.0
      %1679 = vmatpush2.msra.mxu0 0.0
      %1680 = vmatprep.subr.mxu0 0.0
      %1681 = vmatpush2.msra.mxu0 0.0
      %1682 = vmatprep.subr.mxu0 0.0
      %1683 = vmatpush2.msra.mxu0 0.0
      %1684 = vmatprep.subr.mxu0 0.0
      %1685 = vmatpush2.msra.mxu0 0.0
      %1686 = vmatprep.subr.mxu0 0.0
      %1687 = vmatpush2.msra.mxu0 0.0
      %1688 = vmatprep.subr.mxu0 0.0
      %1689 = vmatpush2.msra.mxu0 0.0
      %1690 = vmatprep.subr.mxu0 0.0
      %1691 = vmatpush2.msra.mxu0 0.0
      %1692 = vmatprep.subr.mxu0 0.0
      %1693 = vmatpush2.msra.mxu0 0.0
      %1694 = vmatprep.subr.mxu0 0.0
      %1695 = vmatpush2.msra.mxu0 0.0
      %1696 = vmatprep.subr.mxu0 0.0
      %1697 = vmatpush2.msra.mxu0 0.0
      %1698 = vmatprep.subr.mxu0 0.0
      %1699 = vmatpush2.msra.mxu0 0.0
      %1700 = vmatprep.subr.mxu0 0.0
      %1701 = vmatpush2.msra.mxu0 0.0
      %1702 = vmatprep.mubr.f32.mxu0 0.0
      %1703 = vmatmul.mubr.f32.gmra.mxu0 %v1563
      %v1704 = vpop.f32.mrf.mxu0
      %v1705 = vadd.f32 0.0, %v1704
      %v1706 = vpop.f32.mrf.mxu0
      %1707 = vmatprep.mubr.f32.mxu0 0.0
      %1708 = vmatmul.mubr.f32.gmra.mxu0 %v1565
      %v1709 = vpop.f32.mrf.mxu0
      %v1710 = vadd.f32 0.0, %v1709
      %v1711 = vpop.f32.mrf.mxu0
      %1712 = vmatprep.mubr.f32.mxu0 0.0
      %1713 = vmatmul.mubr.f32.gmra.mxu0 %v1567
      %v1714 = vpop.f32.mrf.mxu0
      %v1715 = vadd.f32 0.0, %v1714
      %v1716 = vpop.f32.mrf.mxu0
      %1717 = vmatprep.mubr.f32.mxu0 0.0
      %1718 = vmatmul.mubr.f32.gmra.mxu0 %v1569
      %v1719 = vpop.f32.mrf.mxu0
      %v1720 = vadd.f32 0.0, %v1719
      %v1721 = vpop.f32.mrf.mxu0
      %1722 = vmatprep.mubr.f32.mxu0 0.0
      %1723 = vmatmul.mubr.f32.gmra.mxu0 %v1571
      %v1724 = vpop.f32.mrf.mxu0
      %v1725 = vadd.f32 0.0, %v1724
      %v1726 = vpop.f32.mrf.mxu0
      %1727 = vmatprep.mubr.f32.mxu0 0.0
      %1728 = vmatmul.mubr.f32.gmra.mxu0 %v1573
      %v1729 = vpop.f32.mrf.mxu0
      %v1730 = vadd.f32 0.0, %v1729
      %v1731 = vpop.f32.mrf.mxu0
      %1732 = vmatprep.mubr.f32.mxu0 0.0
      %1733 = vmatmul.mubr.f32.gmra.mxu0 %v1575
      %v1734 = vpop.f32.mrf.mxu0
      %v1735 = vadd.f32 0.0, %v1734
      %v1736 = vpop.f32.mrf.mxu0
      %1737 = vmatprep.mubr.f32.mxu0 0.0
      %1738 = vmatmul.mubr.f32.gmra.mxu0 %v1577
      %v1739 = vpop.f32.mrf.mxu0
      %v1740 = vadd.f32 0.0, %v1739
      %v1741 = vpop.f32.mrf.mxu0
      %1742 = vmatprep.mubr.f32.mxu0 0.0
      %1743 = vmatmul.mubr.f32.gmra.mxu0 %v1579
      %v1744 = vpop.f32.mrf.mxu0
      %v1745 = vadd.f32 0.0, %v1744
      %v1746 = vpop.f32.mrf.mxu0
      %1747 = vmatprep.mubr.f32.mxu0 0.0
      %1748 = vmatmul.mubr.f32.gmra.mxu0 %v1581
      %v1749 = vpop.f32.mrf.mxu0
      %v1750 = vadd.f32 0.0, %v1749
      %v1751 = vpop.f32.mrf.mxu0
      %1752 = vmatprep.mubr.f32.mxu0 0.0
      %1753 = vmatmul.mubr.f32.gmra.mxu0 %v1583
      %v1754 = vpop.f32.mrf.mxu0
      %v1755 = vadd.f32 0.0, %v1754
      %v1756 = vpop.f32.mrf.mxu0
      %1757 = vmatprep.mubr.f32.mxu0 0.0
      %1758 = vmatmul.mubr.f32.gmra.mxu0 %v1585
      %v1759 = vpop.f32.mrf.mxu0
      %v1760 = vadd.f32 0.0, %v1759
      %v1761 = vpop.f32.mrf.mxu0
      %1762 = vmatprep.mubr.f32.mxu0 0.0
      %1763 = vmatmul.mubr.f32.gmra.mxu0 %v1587
      %v1764 = vpop.f32.mrf.mxu0
      %v1765 = vadd.f32 0.0, %v1764
      %v1766 = vpop.f32.mrf.mxu0
      %1767 = vmatprep.mubr.f32.mxu0 0.0
      %1768 = vmatmul.mubr.f32.gmra.mxu0 %v1589
      %v1769 = vpop.f32.mrf.mxu0
      %v1770 = vadd.f32 0.0, %v1769
      %v1771 = vpop.f32.mrf.mxu0
      %1772 = vmatprep.mubr.f32.mxu0 0.0
      %1773 = vmatmul.mubr.f32.gmra.mxu0 %v1591
      %v1774 = vpop.f32.mrf.mxu0
      %v1775 = vadd.f32 0.0, %v1774
      %v1776 = vpop.f32.mrf.mxu0
      %1777 = vmatprep.mubr.f32.mxu0 0.0
      %1778 = vmatmul.mubr.f32.gmra.mxu0 %v1593
      %v1779 = vpop.f32.mrf.mxu0
      %v1780 = vadd.f32 0.0, %v1779
      %v1781 = vpop.f32.mrf.mxu0
      %1782 = vmatprep.mubr.f32.mxu0 0.0
      %1783 = vmatmul.mubr.f32.gmra.mxu0 %v1595
      %v1784 = vpop.f32.mrf.mxu0
      %v1785 = vadd.f32 0.0, %v1784
      %v1786 = vpop.f32.mrf.mxu0
      %1787 = vmatprep.mubr.f32.mxu0 0.0
      %1788 = vmatmul.mubr.f32.gmra.mxu0 %v1597
      %v1789 = vpop.f32.mrf.mxu0
      %v1790 = vadd.f32 0.0, %v1789
      %v1791 = vpop.f32.mrf.mxu0
      %1792 = vmatprep.mubr.f32.mxu0 0.0
      %1793 = vmatmul.mubr.f32.gmra.mxu0 %v1599
      %v1794 = vpop.f32.mrf.mxu0
      %v1795 = vadd.f32 0.0, %v1794
      %v1796 = vpop.f32.mrf.mxu0
      %1797 = vmatprep.mubr.f32.mxu0 0.0
      %1798 = vmatmul.mubr.f32.gmra.mxu0 %v1601
      %v1799 = vpop.f32.mrf.mxu0
      %v1800 = vadd.f32 0.0, %v1799
      %v1801 = vpop.f32.mrf.mxu0
      %1802 = vmatprep.mubr.f32.mxu0 0.0
      %1803 = vmatmul.mubr.f32.gmra.mxu0 %v1603
      %v1804 = vpop.f32.mrf.mxu0
      %v1805 = vadd.f32 0.0, %v1804
      %v1806 = vpop.f32.mrf.mxu0
      %1807 = vmatprep.mubr.f32.mxu0 0.0
      %1808 = vmatmul.mubr.f32.gmra.mxu0 %v1605
      %v1809 = vpop.f32.mrf.mxu0
      %v1810 = vadd.f32 0.0, %v1809
      %v1811 = vpop.f32.mrf.mxu0
      %1812 = vmatprep.mubr.f32.mxu0 0.0
      %1813 = vmatmul.mubr.f32.gmra.mxu0 %v1607
      %v1814 = vpop.f32.mrf.mxu0
      %v1815 = vadd.f32 0.0, %v1814
      %v1816 = vpop.f32.mrf.mxu0
      %1817 = vmatprep.mubr.f32.mxu0 0.0
      %1818 = vmatmul.mubr.f32.gmra.mxu0 %v1609
      %v1819 = vpop.f32.mrf.mxu0
      %v1820 = vadd.f32 0.0, %v1819
      %v1821 = vpop.f32.mrf.mxu0
      %1822 = vmatprep.mubr.f32.mxu0 0.0
      %1823 = vmatmul.mubr.f32.gmra.mxu0 %v1611
      %v1824 = vpop.f32.mrf.mxu0
      %v1825 = vadd.f32 0.0, %v1824
      %v1826 = vpop.f32.mrf.mxu0
      %1827 = vmatprep.mubr.f32.mxu0 0.0
      %1828 = vmatmul.mubr.f32.gmra.mxu0 %v1613
      %v1829 = vpop.f32.mrf.mxu0
      %v1830 = vadd.f32 0.0, %v1829
      %v1831 = vpop.f32.mrf.mxu0
      %1832 = vmatprep.mubr.f32.mxu0 0.0
      %1833 = vmatmul.mubr.f32.gmra.mxu0 %v1615
      %v1834 = vpop.f32.mrf.mxu0
      %v1835 = vadd.f32 0.0, %v1834
      %v1836 = vpop.f32.mrf.mxu0
      %1837 = vmatprep.mubr.f32.mxu0 0.0
      %1838 = vmatmul.mubr.f32.gmra.mxu0 %v1617
      %v1839 = vpop.f32.mrf.mxu0
      %v1840 = vadd.f32 0.0, %v1839
      %v1841 = vpop.f32.mrf.mxu0
      %1842 = vmatprep.mubr.f32.mxu0 0.0
      %1843 = vmatmul.mubr.f32.gmra.mxu0 %v1619
      %v1844 = vpop.f32.mrf.mxu0
      %v1845 = vadd.f32 0.0, %v1844
      %v1846 = vpop.f32.mrf.mxu0
      %1847 = vmatprep.mubr.f32.mxu0 0.0
      %1848 = vmatmul.mubr.f32.gmra.mxu0 %v1621
      %v1849 = vpop.f32.mrf.mxu0
      %v1850 = vadd.f32 0.0, %v1849
      %v1851 = vpop.f32.mrf.mxu0
      %1852 = vmatprep.mubr.f32.mxu0 0.0
      %1853 = vmatmul.mubr.f32.gmra.mxu0 %v1623
      %v1854 = vpop.f32.mrf.mxu0
      %v1855 = vadd.f32 0.0, %v1854
      %v1856 = vpop.f32.mrf.mxu0
      %1857 = vmatprep.mubr.f32.mxu0 0.0
      %1858 = vmatmul.mubr.f32.gmra.mxu0 %v1625
      %v1859 = vpop.f32.mrf.mxu0
      %v1860 = vadd.f32 0.0, %v1859
      %v1861 = vpop.f32.mrf.mxu0
      %1862 = vmatprep.mubr.f32.mxu0 0.0
      %1863 = vmatmul.mubr.f32.gmra.mxu0 %v1627
      %v1864 = vpop.f32.mrf.mxu0
      %v1865 = vadd.f32 0.0, %v1864
      %v1866 = vpop.f32.mrf.mxu0
      %1867 = vmatprep.mubr.f32.mxu0 0.0
      %1868 = vmatmul.mubr.f32.gmra.mxu0 %v1629
      %v1869 = vpop.f32.mrf.mxu0
      %v1870 = vadd.f32 0.0, %v1869
      %v1871 = vpop.f32.mrf.mxu0
      %1872 = vmatprep.mubr.f32.mxu0 0.0
      %1873 = vmatmul.mubr.f32.gmra.mxu0 %v1631
      %v1874 = vpop.f32.mrf.mxu0
      %v1875 = vadd.f32 0.0, %v1874
      %v1876 = vpop.f32.mrf.mxu0
      %1877 = vmatprep.mubr.f32.mxu0 0.0
      %1878 = vmatmul.mubr.f32.gmra.mxu0 %v1633
      %v1879 = vpop.f32.mrf.mxu0
      %v1880 = vadd.f32 0.0, %v1879
      %v1881 = vpop.f32.mrf.mxu0
      %1882 = vdwg.mxu0
      %v1883 = vadd.f32 %v1292, %v1705
      %v1884 = vadd.f32 %v1297, %v1710
      %v1885 = vadd.f32 %v1302, %v1715
      %v1886 = vadd.f32 %v1307, %v1720
      %v1887 = vadd.f32 %v1312, %v1725
      %v1888 = vadd.f32 %v1317, %v1730
      %v1889 = vadd.f32 %v1322, %v1735
      %v1890 = vadd.f32 %v1327, %v1740
      %v1891 = vadd.f32 %v1332, %v1745
      %v1892 = vadd.f32 %v1337, %v1750
      %v1893 = vadd.f32 %v1342, %v1755
      %v1894 = vadd.f32 %v1347, %v1760
      %v1895 = vadd.f32 %v1352, %v1765
      %v1896 = vadd.f32 %v1357, %v1770
      %v1897 = vadd.f32 %v1362, %v1775
      %v1898 = vadd.f32 %v1367, %v1780
      %v1899 = vadd.f32 %v1372, %v1785
      %v1900 = vadd.f32 %v1377, %v1790
      %v1901 = vadd.f32 %v1382, %v1795
      %v1902 = vadd.f32 %v1387, %v1800
      %v1903 = vadd.f32 %v1392, %v1805
      %v1904 = vadd.f32 %v1397, %v1810
      %v1905 = vadd.f32 %v1402, %v1815
      %v1906 = vadd.f32 %v1407, %v1820
      %v1907 = vadd.f32 %v1412, %v1825
      %v1908 = vadd.f32 %v1417, %v1830
      %v1909 = vadd.f32 %v1422, %v1835
      %v1910 = vadd.f32 %v1427, %v1840
      %v1911 = vadd.f32 %v1432, %v1845
      %v1912 = vadd.f32 %v1437, %v1850
      %v1913 = vadd.f32 %v1442, %v1855
      %v1914 = vadd.f32 %v1447, %v1860
      %v1915 = vadd.f32 %v1452, %v1865
      %v1916 = vadd.f32 %v1457, %v1870
      %v1917 = vadd.f32 %v1462, %v1875
      %v1918 = vadd.f32 %v1467, %v1880
      %s1919 = scalar_lea.vmem %s3, 12
      %v1920 = vld [vmem:[%s1919] sm:$0xf]
      %v1922 = vsel %vm461, %v675, 0
      %v1925 = vsel %vm461, %v676, 0
      %v1928 = vsel %vm901, %v1920, 0
      %1930 = vmatprep.subr.mxu0 0.0
      %1931 = vmatpush1.msra.mxu0 0.0
      %1932 = vmatprep.subr.mxu0 0.0
      %1933 = vmatpush1.msra.mxu0 0.0
      %1934 = vmatprep.subr.mxu0 0.0
      %1935 = vmatpush1.msra.mxu0 0.0
      %1936 = vmatprep.subr.mxu0 0.0
      %1937 = vmatpush1.msra.mxu0 0.0
      %1938 = vmatprep.subr.mxu0 0.0
      %1939 = vmatpush1.msra.mxu0 0.0
      %1940 = vmatprep.subr.mxu0 0.0
      %1941 = vmatpush1.msra.mxu0 0.0
      %1942 = vmatprep.subr.mxu0 0.0
      %1943 = vmatpush1.msra.mxu0 0.0
      %1944 = vmatprep.subr.mxu0 0.0
      %1945 = vmatpush1.msra.mxu0 0.0
      %1946 = vmatprep.subr.mxu0 0.0
      %1947 = vmatpush1.msra.mxu0 0.0
      %1948 = vmatprep.subr.mxu0 0.0
      %1949 = vmatpush1.msra.mxu0 0.0
      %1950 = vmatprep.subr.mxu0 0.0
      %1951 = vmatpush1.msra.mxu0 0.0
      %1952 = vmatprep.subr.mxu0 0.0
      %1953 = vmatpush1.msra.mxu0 0.0
      %1954 = vmatprep.subr.mxu0 0.0
      %1955 = vmatpush1.msra.mxu0 0.0
      %1956 = vmatprep.subr.mxu0 0.0
      %1957 = vmatpush1.msra.mxu0 0.0
      %1958 = vmatprep.subr.mxu0 0.0
      %1959 = vmatpush1.msra.mxu0 0.0
      %1960 = vmatprep.subr.mxu0 0.0
      %1961 = vmatpush1.msra.mxu0 %v1928
      %1962 = vmatprep.subr.mxu0 0.0
      %1963 = vmatpush2.msra.mxu0 0.0
      %1964 = vmatprep.subr.mxu0 0.0
      %1965 = vmatpush2.msra.mxu0 0.0
      %1966 = vmatprep.subr.mxu0 0.0
      %1967 = vmatpush2.msra.mxu0 0.0
      %1968 = vmatprep.subr.mxu0 0.0
      %1969 = vmatpush2.msra.mxu0 0.0
      %1970 = vmatprep.subr.mxu0 0.0
      %1971 = vmatpush2.msra.mxu0 0.0
      %1972 = vmatprep.subr.mxu0 0.0
      %1973 = vmatpush2.msra.mxu0 0.0
      %1974 = vmatprep.subr.mxu0 0.0
      %1975 = vmatpush2.msra.mxu0 0.0
      %1976 = vmatprep.subr.mxu0 0.0
      %1977 = vmatpush2.msra.mxu0 0.0
      %1978 = vmatprep.subr.mxu0 0.0
      %1979 = vmatpush2.msra.mxu0 0.0
      %1980 = vmatprep.subr.mxu0 0.0
      %1981 = vmatpush2.msra.mxu0 0.0
      %1982 = vmatprep.subr.mxu0 0.0
      %1983 = vmatpush2.msra.mxu0 0.0
      %1984 = vmatprep.subr.mxu0 0.0
      %1985 = vmatpush2.msra.mxu0 0.0
      %1986 = vmatprep.subr.mxu0 0.0
      %1987 = vmatpush2.msra.mxu0 0.0
      %1988 = vmatprep.subr.mxu0 0.0
      %1989 = vmatpush2.msra.mxu0 0.0
      %1990 = vmatprep.subr.mxu0 0.0
      %1991 = vmatpush2.msra.mxu0 0.0
      %1992 = vmatprep.subr.mxu0 0.0
      %1993 = vmatpush2.msra.mxu0 0.0
      %1994 = vmatprep.mubr.f32.mxu0 0.0
      %1995 = vmatmul.mubr.f32.gmra.mxu0 %v1154
      %v1996 = vpop.f32.mrf.mxu0
      %v1997 = vadd.f32 0.0, %v1996
      %v1998 = vpop.f32.mrf.mxu0
      %1999 = vmatprep.mubr.f32.mxu0 0.0
      %2000 = vmatmul.mubr.f32.gmra.mxu0 %v1156
      %v2001 = vpop.f32.mrf.mxu0
      %v2002 = vadd.f32 0.0, %v2001
      %v2003 = vpop.f32.mrf.mxu0
      %2004 = vmatprep.mubr.f32.mxu0 0.0
      %2005 = vmatmul.mubr.f32.gmra.mxu0 %v1158
      %v2006 = vpop.f32.mrf.mxu0
      %v2007 = vadd.f32 0.0, %v2006
      %v2008 = vpop.f32.mrf.mxu0
      %2009 = vmatprep.mubr.f32.mxu0 0.0
      %2010 = vmatmul.mubr.f32.gmra.mxu0 %v1160
      %v2011 = vpop.f32.mrf.mxu0
      %v2012 = vadd.f32 0.0, %v2011
      %v2013 = vpop.f32.mrf.mxu0
      %2014 = vmatprep.mubr.f32.mxu0 0.0
      %2015 = vmatmul.mubr.f32.gmra.mxu0 %v1162
      %v2016 = vpop.f32.mrf.mxu0
      %v2017 = vadd.f32 0.0, %v2016
      %v2018 = vpop.f32.mrf.mxu0
      %2019 = vmatprep.mubr.f32.mxu0 0.0
      %2020 = vmatmul.mubr.f32.gmra.mxu0 %v1164
      %v2021 = vpop.f32.mrf.mxu0
      %v2022 = vadd.f32 0.0, %v2021
      %v2023 = vpop.f32.mrf.mxu0
      %2024 = vmatprep.mubr.f32.mxu0 0.0
      %2025 = vmatmul.mubr.f32.gmra.mxu0 %v1166
      %v2026 = vpop.f32.mrf.mxu0
      %v2027 = vadd.f32 0.0, %v2026
      %v2028 = vpop.f32.mrf.mxu0
      %2029 = vmatprep.mubr.f32.mxu0 0.0
      %2030 = vmatmul.mubr.f32.gmra.mxu0 %v1168
      %v2031 = vpop.f32.mrf.mxu0
      %v2032 = vadd.f32 0.0, %v2031
      %v2033 = vpop.f32.mrf.mxu0
      %2034 = vmatprep.mubr.f32.mxu0 0.0
      %2035 = vmatmul.mubr.f32.gmra.mxu0 %v1170
      %v2036 = vpop.f32.mrf.mxu0
      %v2037 = vadd.f32 0.0, %v2036
      %v2038 = vpop.f32.mrf.mxu0
      %2039 = vmatprep.mubr.f32.mxu0 0.0
      %2040 = vmatmul.mubr.f32.gmra.mxu0 %v1172
      %v2041 = vpop.f32.mrf.mxu0
      %v2042 = vadd.f32 0.0, %v2041
      %v2043 = vpop.f32.mrf.mxu0
      %2044 = vmatprep.mubr.f32.mxu0 0.0
      %2045 = vmatmul.mubr.f32.gmra.mxu0 %v1174
      %v2046 = vpop.f32.mrf.mxu0
      %v2047 = vadd.f32 0.0, %v2046
      %v2048 = vpop.f32.mrf.mxu0
      %2049 = vmatprep.mubr.f32.mxu0 0.0
      %2050 = vmatmul.mubr.f32.gmra.mxu0 %v1176
      %v2051 = vpop.f32.mrf.mxu0
      %v2052 = vadd.f32 0.0, %v2051
      %v2053 = vpop.f32.mrf.mxu0
      %2054 = vmatprep.mubr.f32.mxu0 0.0
      %2055 = vmatmul.mubr.f32.gmra.mxu0 %v1178
      %v2056 = vpop.f32.mrf.mxu0
      %v2057 = vadd.f32 0.0, %v2056
      %v2058 = vpop.f32.mrf.mxu0
      %2059 = vmatprep.mubr.f32.mxu0 0.0
      %2060 = vmatmul.mubr.f32.gmra.mxu0 %v1180
      %v2061 = vpop.f32.mrf.mxu0
      %v2062 = vadd.f32 0.0, %v2061
      %v2063 = vpop.f32.mrf.mxu0
      %2064 = vmatprep.mubr.f32.mxu0 0.0
      %2065 = vmatmul.mubr.f32.gmra.mxu0 %v1182
      %v2066 = vpop.f32.mrf.mxu0
      %v2067 = vadd.f32 0.0, %v2066
      %v2068 = vpop.f32.mrf.mxu0
      %2069 = vmatprep.mubr.f32.mxu0 0.0
      %2070 = vmatmul.mubr.f32.gmra.mxu0 %v1184
      %v2071 = vpop.f32.mrf.mxu0
      %v2072 = vadd.f32 0.0, %v2071
      %v2073 = vpop.f32.mrf.mxu0
      %2074 = vmatprep.mubr.f32.mxu0 0.0
      %2075 = vmatmul.mubr.f32.gmra.mxu0 %v1186
      %v2076 = vpop.f32.mrf.mxu0
      %v2077 = vadd.f32 0.0, %v2076
      %v2078 = vpop.f32.mrf.mxu0
      %2079 = vmatprep.mubr.f32.mxu0 0.0
      %2080 = vmatmul.mubr.f32.gmra.mxu0 %v1188
      %v2081 = vpop.f32.mrf.mxu0
      %v2082 = vadd.f32 0.0, %v2081
      %v2083 = vpop.f32.mrf.mxu0
      %2084 = vmatprep.mubr.f32.mxu0 0.0
      %2085 = vmatmul.mubr.f32.gmra.mxu0 %v1190
      %v2086 = vpop.f32.mrf.mxu0
      %v2087 = vadd.f32 0.0, %v2086
      %v2088 = vpop.f32.mrf.mxu0
      %2089 = vmatprep.mubr.f32.mxu0 0.0
      %2090 = vmatmul.mubr.f32.gmra.mxu0 %v1192
      %v2091 = vpop.f32.mrf.mxu0
      %v2092 = vadd.f32 0.0, %v2091
      %v2093 = vpop.f32.mrf.mxu0
      %2094 = vmatprep.mubr.f32.mxu0 0.0
      %2095 = vmatmul.mubr.f32.gmra.mxu0 %v1194
      %v2096 = vpop.f32.mrf.mxu0
      %v2097 = vadd.f32 0.0, %v2096
      %v2098 = vpop.f32.mrf.mxu0
      %2099 = vmatprep.mubr.f32.mxu0 0.0
      %2100 = vmatmul.mubr.f32.gmra.mxu0 %v1196
      %v2101 = vpop.f32.mrf.mxu0
      %v2102 = vadd.f32 0.0, %v2101
      %v2103 = vpop.f32.mrf.mxu0
      %2104 = vmatprep.mubr.f32.mxu0 0.0
      %2105 = vmatmul.mubr.f32.gmra.mxu0 %v1198
      %v2106 = vpop.f32.mrf.mxu0
      %v2107 = vadd.f32 0.0, %v2106
      %v2108 = vpop.f32.mrf.mxu0
      %2109 = vmatprep.mubr.f32.mxu0 0.0
      %2110 = vmatmul.mubr.f32.gmra.mxu0 %v1200
      %v2111 = vpop.f32.mrf.mxu0
      %v2112 = vadd.f32 0.0, %v2111
      %v2113 = vpop.f32.mrf.mxu0
      %2114 = vmatprep.mubr.f32.mxu0 0.0
      %2115 = vmatmul.mubr.f32.gmra.mxu0 %v1202
      %v2116 = vpop.f32.mrf.mxu0
      %v2117 = vadd.f32 0.0, %v2116
      %v2118 = vpop.f32.mrf.mxu0
      %2119 = vmatprep.mubr.f32.mxu0 0.0
      %2120 = vmatmul.mubr.f32.gmra.mxu0 %v1204
      %v2121 = vpop.f32.mrf.mxu0
      %v2122 = vadd.f32 0.0, %v2121
      %v2123 = vpop.f32.mrf.mxu0
      %2124 = vmatprep.mubr.f32.mxu0 0.0
      %2125 = vmatmul.mubr.f32.gmra.mxu0 %v1206
      %v2126 = vpop.f32.mrf.mxu0
      %v2127 = vadd.f32 0.0, %v2126
      %v2128 = vpop.f32.mrf.mxu0
      %2129 = vmatprep.mubr.f32.mxu0 0.0
      %2130 = vmatmul.mubr.f32.gmra.mxu0 %v1208
      %v2131 = vpop.f32.mrf.mxu0
      %v2132 = vadd.f32 0.0, %v2131
      %v2133 = vpop.f32.mrf.mxu0
      %2134 = vmatprep.mubr.f32.mxu0 0.0
      %2135 = vmatmul.mubr.f32.gmra.mxu0 %v1210
      %v2136 = vpop.f32.mrf.mxu0
      %v2137 = vadd.f32 0.0, %v2136
      %v2138 = vpop.f32.mrf.mxu0
      %2139 = vmatprep.mubr.f32.mxu0 0.0
      %2140 = vmatmul.mubr.f32.gmra.mxu0 %v1212
      %v2141 = vpop.f32.mrf.mxu0
      %v2142 = vadd.f32 0.0, %v2141
      %v2143 = vpop.f32.mrf.mxu0
      %2144 = vmatprep.mubr.f32.mxu0 0.0
      %2145 = vmatmul.mubr.f32.gmra.mxu0 %v1214
      %v2146 = vpop.f32.mrf.mxu0
      %v2147 = vadd.f32 0.0, %v2146
      %v2148 = vpop.f32.mrf.mxu0
      %2149 = vmatprep.mubr.f32.mxu0 0.0
      %2150 = vmatmul.mubr.f32.gmra.mxu0 %v1216
      %v2151 = vpop.f32.mrf.mxu0
      %v2152 = vadd.f32 0.0, %v2151
      %v2153 = vpop.f32.mrf.mxu0
      %2154 = vmatprep.mubr.f32.mxu0 0.0
      %2155 = vmatmul.mubr.f32.gmra.mxu0 %v1218
      %v2156 = vpop.f32.mrf.mxu0
      %v2157 = vadd.f32 0.0, %v2156
      %v2158 = vpop.f32.mrf.mxu0
      %2159 = vmatprep.mubr.f32.mxu0 0.0
      %2160 = vmatmul.mubr.f32.gmra.mxu0 %v1220
      %v2161 = vpop.f32.mrf.mxu0
      %v2162 = vadd.f32 0.0, %v2161
      %v2163 = vpop.f32.mrf.mxu0
      %2164 = vmatprep.mubr.f32.mxu0 0.0
      %2165 = vmatmul.mubr.f32.gmra.mxu0 %v1922
      %v2166 = vpop.f32.mrf.mxu0
      %v2167 = vadd.f32 0.0, %v2166
      %v2168 = vpop.f32.mrf.mxu0
      %2169 = vmatprep.mubr.f32.mxu0 0.0
      %2170 = vmatmul.mubr.f32.gmra.mxu0 %v1925
      %v2171 = vpop.f32.mrf.mxu0
      %v2172 = vadd.f32 0.0, %v2171
      %v2173 = vpop.f32.mrf.mxu0
      %2174 = vdwg.mxu0
      %v2175 = vadd.f32 %v1883, %v1997
      %v2176 = vadd.f32 %v1884, %v2002
      %v2177 = vadd.f32 %v1885, %v2007
      %v2178 = vadd.f32 %v1886, %v2012
      %v2179 = vadd.f32 %v1887, %v2017
      %v2180 = vadd.f32 %v1888, %v2022
      %v2181 = vadd.f32 %v1889, %v2027
      %v2182 = vadd.f32 %v1890, %v2032
      %v2183 = vadd.f32 %v1891, %v2037
      %v2184 = vadd.f32 %v1892, %v2042
      %v2185 = vadd.f32 %v1893, %v2047
      %v2186 = vadd.f32 %v1894, %v2052
      %v2187 = vadd.f32 %v1895, %v2057
      %v2188 = vadd.f32 %v1896, %v2062
      %v2189 = vadd.f32 %v1897, %v2067
      %v2190 = vadd.f32 %v1898, %v2072
      %v2191 = vadd.f32 %v1899, %v2077
      %v2192 = vadd.f32 %v1900, %v2082
      %v2193 = vadd.f32 %v1901, %v2087
      %v2194 = vadd.f32 %v1902, %v2092
      %v2195 = vadd.f32 %v1903, %v2097
      %v2196 = vadd.f32 %v1904, %v2102
      %v2197 = vadd.f32 %v1905, %v2107
      %v2198 = vadd.f32 %v1906, %v2112
      %v2199 = vadd.f32 %v1907, %v2117
      %v2200 = vadd.f32 %v1908, %v2122
      %v2201 = vadd.f32 %v1909, %v2127
      %v2202 = vadd.f32 %v1910, %v2132
      %v2203 = vadd.f32 %v1911, %v2137
      %v2204 = vadd.f32 %v1912, %v2142
      %v2205 = vadd.f32 %v1913, %v2147
      %v2206 = vadd.f32 %v1914, %v2152
      %v2207 = vadd.f32 %v1915, %v2157
      %v2208 = vadd.f32 %v1916, %v2162
      %v2209 = vadd.f32 %v1917, %v2167
      %v2210 = vadd.f32 %v1918, %v2172
      %v2212 = vrot.slane %v675, 1
      %v2213 = vrot.slane %v676, 1
      %v2214 = vsel %vm736, %v2212, %v2213
      %v2215 = vrot.slane %v677, 1
      %v2216 = vsel %vm736, %v2213, %v2215
      %s2217 = scalar_lea.vmem %s3, 16
      %v2218 = vld [vmem:[%s2217] sm:$0xf]
      %v2219 = vsel %vm461, %v2214, 0
      %v2221 = vsel %vm461, %v2216, 0
      %v2224 = vsel %vm901, %v2218, 0
      %2226 = vmatprep.subr.mxu0 0.0
      %2227 = vmatpush1.msra.mxu0 0.0
      %2228 = vmatprep.subr.mxu0 0.0
      %2229 = vmatpush1.msra.mxu0 0.0
      %2230 = vmatprep.subr.mxu0 0.0
      %2231 = vmatpush1.msra.mxu0 0.0
      %2232 = vmatprep.subr.mxu0 0.0
      %2233 = vmatpush1.msra.mxu0 0.0
      %2234 = vmatprep.subr.mxu0 0.0
      %2235 = vmatpush1.msra.mxu0 0.0
      %2236 = vmatprep.subr.mxu0 0.0
      %2237 = vmatpush1.msra.mxu0 0.0
      %2238 = vmatprep.subr.mxu0 0.0
      %2239 = vmatpush1.msra.mxu0 0.0
      %2240 = vmatprep.subr.mxu0 0.0
      %2241 = vmatpush1.msra.mxu0 0.0
      %2242 = vmatprep.subr.mxu0 0.0
      %2243 = vmatpush1.msra.mxu0 0.0
      %2244 = vmatprep.subr.mxu0 0.0
      %2245 = vmatpush1.msra.mxu0 0.0
      %2246 = vmatprep.subr.mxu0 0.0
      %2247 = vmatpush1.msra.mxu0 0.0
      %2248 = vmatprep.subr.mxu0 0.0
      %2249 = vmatpush1.msra.mxu0 0.0
      %2250 = vmatprep.subr.mxu0 0.0
      %2251 = vmatpush1.msra.mxu0 0.0
      %2252 = vmatprep.subr.mxu0 0.0
      %2253 = vmatpush1.msra.mxu0 0.0
      %2254 = vmatprep.subr.mxu0 0.0
      %2255 = vmatpush1.msra.mxu0 0.0
      %2256 = vmatprep.subr.mxu0 0.0
      %2257 = vmatpush1.msra.mxu0 %v2224
      %2258 = vmatprep.subr.mxu0 0.0
      %2259 = vmatpush2.msra.mxu0 0.0
      %2260 = vmatprep.subr.mxu0 0.0
      %2261 = vmatpush2.msra.mxu0 0.0
      %2262 = vmatprep.subr.mxu0 0.0
      %2263 = vmatpush2.msra.mxu0 0.0
      %2264 = vmatprep.subr.mxu0 0.0
      %2265 = vmatpush2.msra.mxu0 0.0
      %2266 = vmatprep.subr.mxu0 0.0
      %2267 = vmatpush2.msra.mxu0 0.0
      %2268 = vmatprep.subr.mxu0 0.0
      %2269 = vmatpush2.msra.mxu0 0.0
      %2270 = vmatprep.subr.mxu0 0.0
      %2271 = vmatpush2.msra.mxu0 0.0
      %2272 = vmatprep.subr.mxu0 0.0
      %2273 = vmatpush2.msra.mxu0 0.0
      %2274 = vmatprep.subr.mxu0 0.0
      %2275 = vmatpush2.msra.mxu0 0.0
      %2276 = vmatprep.subr.mxu0 0.0
      %2277 = vmatpush2.msra.mxu0 0.0
      %2278 = vmatprep.subr.mxu0 0.0
      %2279 = vmatpush2.msra.mxu0 0.0
      %2280 = vmatprep.subr.mxu0 0.0
      %2281 = vmatpush2.msra.mxu0 0.0
      %2282 = vmatprep.subr.mxu0 0.0
      %2283 = vmatpush2.msra.mxu0 0.0
      %2284 = vmatprep.subr.mxu0 0.0
      %2285 = vmatpush2.msra.mxu0 0.0
      %2286 = vmatprep.subr.mxu0 0.0
      %2287 = vmatpush2.msra.mxu0 0.0
      %2288 = vmatprep.subr.mxu0 0.0
      %2289 = vmatpush2.msra.mxu0 0.0
      %2290 = vmatprep.mubr.f32.mxu0 0.0
      %2291 = vmatmul.mubr.f32.gmra.mxu0 %v833
      %v2292 = vpop.f32.mrf.mxu0
      %v2293 = vadd.f32 0.0, %v2292
      %v2294 = vpop.f32.mrf.mxu0
      %2295 = vmatprep.mubr.f32.mxu0 0.0
      %2296 = vmatmul.mubr.f32.gmra.mxu0 %v835
      %v2297 = vpop.f32.mrf.mxu0
      %v2298 = vadd.f32 0.0, %v2297
      %v2299 = vpop.f32.mrf.mxu0
      %2300 = vmatprep.mubr.f32.mxu0 0.0
      %2301 = vmatmul.mubr.f32.gmra.mxu0 %v837
      %v2302 = vpop.f32.mrf.mxu0
      %v2303 = vadd.f32 0.0, %v2302
      %v2304 = vpop.f32.mrf.mxu0
      %2305 = vmatprep.mubr.f32.mxu0 0.0
      %2306 = vmatmul.mubr.f32.gmra.mxu0 %v839
      %v2307 = vpop.f32.mrf.mxu0
      %v2308 = vadd.f32 0.0, %v2307
      %v2309 = vpop.f32.mrf.mxu0
      %2310 = vmatprep.mubr.f32.mxu0 0.0
      %2311 = vmatmul.mubr.f32.gmra.mxu0 %v841
      %v2312 = vpop.f32.mrf.mxu0
      %v2313 = vadd.f32 0.0, %v2312
      %v2314 = vpop.f32.mrf.mxu0
      %2315 = vmatprep.mubr.f32.mxu0 0.0
      %2316 = vmatmul.mubr.f32.gmra.mxu0 %v843
      %v2317 = vpop.f32.mrf.mxu0
      %v2318 = vadd.f32 0.0, %v2317
      %v2319 = vpop.f32.mrf.mxu0
      %2320 = vmatprep.mubr.f32.mxu0 0.0
      %2321 = vmatmul.mubr.f32.gmra.mxu0 %v845
      %v2322 = vpop.f32.mrf.mxu0
      %v2323 = vadd.f32 0.0, %v2322
      %v2324 = vpop.f32.mrf.mxu0
      %2325 = vmatprep.mubr.f32.mxu0 0.0
      %2326 = vmatmul.mubr.f32.gmra.mxu0 %v847
      %v2327 = vpop.f32.mrf.mxu0
      %v2328 = vadd.f32 0.0, %v2327
      %v2329 = vpop.f32.mrf.mxu0
      %2330 = vmatprep.mubr.f32.mxu0 0.0
      %2331 = vmatmul.mubr.f32.gmra.mxu0 %v849
      %v2332 = vpop.f32.mrf.mxu0
      %v2333 = vadd.f32 0.0, %v2332
      %v2334 = vpop.f32.mrf.mxu0
      %2335 = vmatprep.mubr.f32.mxu0 0.0
      %2336 = vmatmul.mubr.f32.gmra.mxu0 %v851
      %v2337 = vpop.f32.mrf.mxu0
      %v2338 = vadd.f32 0.0, %v2337
      %v2339 = vpop.f32.mrf.mxu0
      %2340 = vmatprep.mubr.f32.mxu0 0.0
      %2341 = vmatmul.mubr.f32.gmra.mxu0 %v853
      %v2342 = vpop.f32.mrf.mxu0
      %v2343 = vadd.f32 0.0, %v2342
      %v2344 = vpop.f32.mrf.mxu0
      %2345 = vmatprep.mubr.f32.mxu0 0.0
      %2346 = vmatmul.mubr.f32.gmra.mxu0 %v855
      %v2347 = vpop.f32.mrf.mxu0
      %v2348 = vadd.f32 0.0, %v2347
      %v2349 = vpop.f32.mrf.mxu0
      %2350 = vmatprep.mubr.f32.mxu0 0.0
      %2351 = vmatmul.mubr.f32.gmra.mxu0 %v857
      %v2352 = vpop.f32.mrf.mxu0
      %v2353 = vadd.f32 0.0, %v2352
      %v2354 = vpop.f32.mrf.mxu0
      %2355 = vmatprep.mubr.f32.mxu0 0.0
      %2356 = vmatmul.mubr.f32.gmra.mxu0 %v859
      %v2357 = vpop.f32.mrf.mxu0
      %v2358 = vadd.f32 0.0, %v2357
      %v2359 = vpop.f32.mrf.mxu0
      %2360 = vmatprep.mubr.f32.mxu0 0.0
      %2361 = vmatmul.mubr.f32.gmra.mxu0 %v861
      %v2362 = vpop.f32.mrf.mxu0
      %v2363 = vadd.f32 0.0, %v2362
      %v2364 = vpop.f32.mrf.mxu0
      %2365 = vmatprep.mubr.f32.mxu0 0.0
      %2366 = vmatmul.mubr.f32.gmra.mxu0 %v863
      %v2367 = vpop.f32.mrf.mxu0
      %v2368 = vadd.f32 0.0, %v2367
      %v2369 = vpop.f32.mrf.mxu0
      %2370 = vmatprep.mubr.f32.mxu0 0.0
      %2371 = vmatmul.mubr.f32.gmra.mxu0 %v865
      %v2372 = vpop.f32.mrf.mxu0
      %v2373 = vadd.f32 0.0, %v2372
      %v2374 = vpop.f32.mrf.mxu0
      %2375 = vmatprep.mubr.f32.mxu0 0.0
      %2376 = vmatmul.mubr.f32.gmra.mxu0 %v867
      %v2377 = vpop.f32.mrf.mxu0
      %v2378 = vadd.f32 0.0, %v2377
      %v2379 = vpop.f32.mrf.mxu0
      %2380 = vmatprep.mubr.f32.mxu0 0.0
      %2381 = vmatmul.mubr.f32.gmra.mxu0 %v869
      %v2382 = vpop.f32.mrf.mxu0
      %v2383 = vadd.f32 0.0, %v2382
      %v2384 = vpop.f32.mrf.mxu0
      %2385 = vmatprep.mubr.f32.mxu0 0.0
      %2386 = vmatmul.mubr.f32.gmra.mxu0 %v871
      %v2387 = vpop.f32.mrf.mxu0
      %v2388 = vadd.f32 0.0, %v2387
      %v2389 = vpop.f32.mrf.mxu0
      %2390 = vmatprep.mubr.f32.mxu0 0.0
      %2391 = vmatmul.mubr.f32.gmra.mxu0 %v873
      %v2392 = vpop.f32.mrf.mxu0
      %v2393 = vadd.f32 0.0, %v2392
      %v2394 = vpop.f32.mrf.mxu0
      %2395 = vmatprep.mubr.f32.mxu0 0.0
      %2396 = vmatmul.mubr.f32.gmra.mxu0 %v875
      %v2397 = vpop.f32.mrf.mxu0
      %v2398 = vadd.f32 0.0, %v2397
      %v2399 = vpop.f32.mrf.mxu0
      %2400 = vmatprep.mubr.f32.mxu0 0.0
      %2401 = vmatmul.mubr.f32.gmra.mxu0 %v877
      %v2402 = vpop.f32.mrf.mxu0
      %v2403 = vadd.f32 0.0, %v2402
      %v2404 = vpop.f32.mrf.mxu0
      %2405 = vmatprep.mubr.f32.mxu0 0.0
      %2406 = vmatmul.mubr.f32.gmra.mxu0 %v879
      %v2407 = vpop.f32.mrf.mxu0
      %v2408 = vadd.f32 0.0, %v2407
      %v2409 = vpop.f32.mrf.mxu0
      %2410 = vmatprep.mubr.f32.mxu0 0.0
      %2411 = vmatmul.mubr.f32.gmra.mxu0 %v881
      %v2412 = vpop.f32.mrf.mxu0
      %v2413 = vadd.f32 0.0, %v2412
      %v2414 = vpop.f32.mrf.mxu0
      %2415 = vmatprep.mubr.f32.mxu0 0.0
      %2416 = vmatmul.mubr.f32.gmra.mxu0 %v883
      %v2417 = vpop.f32.mrf.mxu0
      %v2418 = vadd.f32 0.0, %v2417
      %v2419 = vpop.f32.mrf.mxu0
      %2420 = vmatprep.mubr.f32.mxu0 0.0
      %2421 = vmatmul.mubr.f32.gmra.mxu0 %v885
      %v2422 = vpop.f32.mrf.mxu0
      %v2423 = vadd.f32 0.0, %v2422
      %v2424 = vpop.f32.mrf.mxu0
      %2425 = vmatprep.mubr.f32.mxu0 0.0
      %2426 = vmatmul.mubr.f32.gmra.mxu0 %v887
      %v2427 = vpop.f32.mrf.mxu0
      %v2428 = vadd.f32 0.0, %v2427
      %v2429 = vpop.f32.mrf.mxu0
      %2430 = vmatprep.mubr.f32.mxu0 0.0
      %2431 = vmatmul.mubr.f32.gmra.mxu0 %v889
      %v2432 = vpop.f32.mrf.mxu0
      %v2433 = vadd.f32 0.0, %v2432
      %v2434 = vpop.f32.mrf.mxu0
      %2435 = vmatprep.mubr.f32.mxu0 0.0
      %2436 = vmatmul.mubr.f32.gmra.mxu0 %v891
      %v2437 = vpop.f32.mrf.mxu0
      %v2438 = vadd.f32 0.0, %v2437
      %v2439 = vpop.f32.mrf.mxu0
      %2440 = vmatprep.mubr.f32.mxu0 0.0
      %2441 = vmatmul.mubr.f32.gmra.mxu0 %v893
      %v2442 = vpop.f32.mrf.mxu0
      %v2443 = vadd.f32 0.0, %v2442
      %v2444 = vpop.f32.mrf.mxu0
      %2445 = vmatprep.mubr.f32.mxu0 0.0
      %2446 = vmatmul.mubr.f32.gmra.mxu0 %v895
      %v2447 = vpop.f32.mrf.mxu0
      %v2448 = vadd.f32 0.0, %v2447
      %v2449 = vpop.f32.mrf.mxu0
      %2450 = vmatprep.mubr.f32.mxu0 0.0
      %2451 = vmatmul.mubr.f32.gmra.mxu0 %v897
      %v2452 = vpop.f32.mrf.mxu0
      %v2453 = vadd.f32 0.0, %v2452
      %v2454 = vpop.f32.mrf.mxu0
      %2455 = vmatprep.mubr.f32.mxu0 0.0
      %2456 = vmatmul.mubr.f32.gmra.mxu0 %v899
      %v2457 = vpop.f32.mrf.mxu0
      %v2458 = vadd.f32 0.0, %v2457
      %v2459 = vpop.f32.mrf.mxu0
      %2460 = vmatprep.mubr.f32.mxu0 0.0
      %2461 = vmatmul.mubr.f32.gmra.mxu0 %v2219
      %v2462 = vpop.f32.mrf.mxu0
      %v2463 = vadd.f32 0.0, %v2462
      %v2464 = vpop.f32.mrf.mxu0
      %2465 = vmatprep.mubr.f32.mxu0 0.0
      %2466 = vmatmul.mubr.f32.gmra.mxu0 %v2221
      %v2467 = vpop.f32.mrf.mxu0
      %v2468 = vadd.f32 0.0, %v2467
      %v2469 = vpop.f32.mrf.mxu0
      %2470 = vdwg.mxu0
      %v2471 = vadd.f32 %v2175, %v2293
      %v2472 = vadd.f32 %v2176, %v2298
      %v2473 = vadd.f32 %v2177, %v2303
      %v2474 = vadd.f32 %v2178, %v2308
      %v2475 = vadd.f32 %v2179, %v2313
      %v2476 = vadd.f32 %v2180, %v2318
      %v2477 = vadd.f32 %v2181, %v2323
      %v2478 = vadd.f32 %v2182, %v2328
      %v2479 = vadd.f32 %v2183, %v2333
      %v2480 = vadd.f32 %v2184, %v2338
      %v2481 = vadd.f32 %v2185, %v2343
      %v2482 = vadd.f32 %v2186, %v2348
      %v2483 = vadd.f32 %v2187, %v2353
      %v2484 = vadd.f32 %v2188, %v2358
      %v2485 = vadd.f32 %v2189, %v2363
      %v2486 = vadd.f32 %v2190, %v2368
      %v2487 = vadd.f32 %v2191, %v2373
      %v2488 = vadd.f32 %v2192, %v2378
      %v2489 = vadd.f32 %v2193, %v2383
      %v2490 = vadd.f32 %v2194, %v2388
      %v2491 = vadd.f32 %v2195, %v2393
      %v2492 = vadd.f32 %v2196, %v2398
      %v2493 = vadd.f32 %v2197, %v2403
      %v2494 = vadd.f32 %v2198, %v2408
      %v2495 = vadd.f32 %v2199, %v2413
      %v2496 = vadd.f32 %v2200, %v2418
      %v2497 = vadd.f32 %v2201, %v2423
      %v2498 = vadd.f32 %v2202, %v2428
      %v2499 = vadd.f32 %v2203, %v2433
      %v2500 = vadd.f32 %v2204, %v2438
      %v2501 = vadd.f32 %v2205, %v2443
      %v2502 = vadd.f32 %v2206, %v2448
      %v2503 = vadd.f32 %v2207, %v2453
      %v2504 = vadd.f32 %v2208, %v2458
      %v2505 = vadd.f32 %v2209, %v2463
      %v2506 = vadd.f32 %v2210, %v2468
      %v2507 = vrot.slane %v675, 2
      %v2508 = vrot.slane %v676, 2
      %v2509 = vsel %vm1470, %v2507, %v2508
      %v2510 = vrot.slane %v677, 2
      %v2511 = vsel %vm1470, %v2508, %v2510
      %s2512 = scalar_lea.vmem %s3, 20
      %v2513 = vld [vmem:[%s2512] sm:$0xf]
      %v2514 = vsel %vm461, %v2509, 0
      %v2516 = vsel %vm461, %v2511, 0
      %v2519 = vsel %vm901, %v2513, 0
      %2521 = vmatprep.subr.mxu0 0.0
      %2522 = vmatpush1.msra.mxu0 0.0
      %2523 = vmatprep.subr.mxu0 0.0
      %2524 = vmatpush1.msra.mxu0 0.0
      %2525 = vmatprep.subr.mxu0 0.0
      %2526 = vmatpush1.msra.mxu0 0.0
      %2527 = vmatprep.subr.mxu0 0.0
      %2528 = vmatpush1.msra.mxu0 0.0
      %2529 = vmatprep.subr.mxu0 0.0
      %2530 = vmatpush1.msra.mxu0 0.0
      %2531 = vmatprep.subr.mxu0 0.0
      %2532 = vmatpush1.msra.mxu0 0.0
      %2533 = vmatprep.subr.mxu0 0.0
      %2534 = vmatpush1.msra.mxu0 0.0
      %2535 = vmatprep.subr.mxu0 0.0
      %2536 = vmatpush1.msra.mxu0 0.0
      %2537 = vmatprep.subr.mxu0 0.0
      %2538 = vmatpush1.msra.mxu0 0.0
      %2539 = vmatprep.subr.mxu0 0.0
      %2540 = vmatpush1.msra.mxu0 0.0
      %2541 = vmatprep.subr.mxu0 0.0
      %2542 = vmatpush1.msra.mxu0 0.0
      %2543 = vmatprep.subr.mxu0 0.0
      %2544 = vmatpush1.msra.mxu0 0.0
      %2545 = vmatprep.subr.mxu0 0.0
      %2546 = vmatpush1.msra.mxu0 0.0
      %2547 = vmatprep.subr.mxu0 0.0
      %2548 = vmatpush1.msra.mxu0 0.0
      %2549 = vmatprep.subr.mxu0 0.0
      %2550 = vmatpush1.msra.mxu0 0.0
      %2551 = vmatprep.subr.mxu0 0.0
      %2552 = vmatpush1.msra.mxu0 %v2519
      %2553 = vmatprep.subr.mxu0 0.0
      %2554 = vmatpush2.msra.mxu0 0.0
      %2555 = vmatprep.subr.mxu0 0.0
      %2556 = vmatpush2.msra.mxu0 0.0
      %2557 = vmatprep.subr.mxu0 0.0
      %2558 = vmatpush2.msra.mxu0 0.0
      %2559 = vmatprep.subr.mxu0 0.0
      %2560 = vmatpush2.msra.mxu0 0.0
      %2561 = vmatprep.subr.mxu0 0.0
      %2562 = vmatpush2.msra.mxu0 0.0
      %2563 = vmatprep.subr.mxu0 0.0
      %2564 = vmatpush2.msra.mxu0 0.0
      %2565 = vmatprep.subr.mxu0 0.0
      %2566 = vmatpush2.msra.mxu0 0.0
      %2567 = vmatprep.subr.mxu0 0.0
      %2568 = vmatpush2.msra.mxu0 0.0
      %2569 = vmatprep.subr.mxu0 0.0
      %2570 = vmatpush2.msra.mxu0 0.0
      %2571 = vmatprep.subr.mxu0 0.0
      %2572 = vmatpush2.msra.mxu0 0.0
      %2573 = vmatprep.subr.mxu0 0.0
      %2574 = vmatpush2.msra.mxu0 0.0
      %2575 = vmatprep.subr.mxu0 0.0
      %2576 = vmatpush2.msra.mxu0 0.0
      %2577 = vmatprep.subr.mxu0 0.0
      %2578 = vmatpush2.msra.mxu0 0.0
      %2579 = vmatprep.subr.mxu0 0.0
      %2580 = vmatpush2.msra.mxu0 0.0
      %2581 = vmatprep.subr.mxu0 0.0
      %2582 = vmatpush2.msra.mxu0 0.0
      %2583 = vmatprep.subr.mxu0 0.0
      %2584 = vmatpush2.msra.mxu0 0.0
      %2585 = vmatprep.mubr.f32.mxu0 0.0
      %2586 = vmatmul.mubr.f32.gmra.mxu0 %v1567
      %v2587 = vpop.f32.mrf.mxu0
      %v2588 = vadd.f32 0.0, %v2587
      %v2589 = vpop.f32.mrf.mxu0
      %2590 = vmatprep.mubr.f32.mxu0 0.0
      %2591 = vmatmul.mubr.f32.gmra.mxu0 %v1569
      %v2592 = vpop.f32.mrf.mxu0
      %v2593 = vadd.f32 0.0, %v2592
      %v2594 = vpop.f32.mrf.mxu0
      %2595 = vmatprep.mubr.f32.mxu0 0.0
      %2596 = vmatmul.mubr.f32.gmra.mxu0 %v1571
      %v2597 = vpop.f32.mrf.mxu0
      %v2598 = vadd.f32 0.0, %v2597
      %v2599 = vpop.f32.mrf.mxu0
      %2600 = vmatprep.mubr.f32.mxu0 0.0
      %2601 = vmatmul.mubr.f32.gmra.mxu0 %v1573
      %v2602 = vpop.f32.mrf.mxu0
      %v2603 = vadd.f32 0.0, %v2602
      %v2604 = vpop.f32.mrf.mxu0
      %2605 = vmatprep.mubr.f32.mxu0 0.0
      %2606 = vmatmul.mubr.f32.gmra.mxu0 %v1575
      %v2607 = vpop.f32.mrf.mxu0
      %v2608 = vadd.f32 0.0, %v2607
      %v2609 = vpop.f32.mrf.mxu0
      %2610 = vmatprep.mubr.f32.mxu0 0.0
      %2611 = vmatmul.mubr.f32.gmra.mxu0 %v1577
      %v2612 = vpop.f32.mrf.mxu0
      %v2613 = vadd.f32 0.0, %v2612
      %v2614 = vpop.f32.mrf.mxu0
      %2615 = vmatprep.mubr.f32.mxu0 0.0
      %2616 = vmatmul.mubr.f32.gmra.mxu0 %v1579
      %v2617 = vpop.f32.mrf.mxu0
      %v2618 = vadd.f32 0.0, %v2617
      %v2619 = vpop.f32.mrf.mxu0
      %2620 = vmatprep.mubr.f32.mxu0 0.0
      %2621 = vmatmul.mubr.f32.gmra.mxu0 %v1581
      %v2622 = vpop.f32.mrf.mxu0
      %v2623 = vadd.f32 0.0, %v2622
      %v2624 = vpop.f32.mrf.mxu0
      %2625 = vmatprep.mubr.f32.mxu0 0.0
      %2626 = vmatmul.mubr.f32.gmra.mxu0 %v1583
      %v2627 = vpop.f32.mrf.mxu0
      %v2628 = vadd.f32 0.0, %v2627
      %v2629 = vpop.f32.mrf.mxu0
      %2630 = vmatprep.mubr.f32.mxu0 0.0
      %2631 = vmatmul.mubr.f32.gmra.mxu0 %v1585
      %v2632 = vpop.f32.mrf.mxu0
      %v2633 = vadd.f32 0.0, %v2632
      %v2634 = vpop.f32.mrf.mxu0
      %2635 = vmatprep.mubr.f32.mxu0 0.0
      %2636 = vmatmul.mubr.f32.gmra.mxu0 %v1587
      %v2637 = vpop.f32.mrf.mxu0
      %v2638 = vadd.f32 0.0, %v2637
      %v2639 = vpop.f32.mrf.mxu0
      %2640 = vmatprep.mubr.f32.mxu0 0.0
      %2641 = vmatmul.mubr.f32.gmra.mxu0 %v1589
      %v2642 = vpop.f32.mrf.mxu0
      %v2643 = vadd.f32 0.0, %v2642
      %v2644 = vpop.f32.mrf.mxu0
      %2645 = vmatprep.mubr.f32.mxu0 0.0
      %2646 = vmatmul.mubr.f32.gmra.mxu0 %v1591
      %v2647 = vpop.f32.mrf.mxu0
      %v2648 = vadd.f32 0.0, %v2647
      %v2649 = vpop.f32.mrf.mxu0
      %2650 = vmatprep.mubr.f32.mxu0 0.0
      %2651 = vmatmul.mubr.f32.gmra.mxu0 %v1593
      %v2652 = vpop.f32.mrf.mxu0
      %v2653 = vadd.f32 0.0, %v2652
      %v2654 = vpop.f32.mrf.mxu0
      %2655 = vmatprep.mubr.f32.mxu0 0.0
      %2656 = vmatmul.mubr.f32.gmra.mxu0 %v1595
      %v2657 = vpop.f32.mrf.mxu0
      %v2658 = vadd.f32 0.0, %v2657
      %v2659 = vpop.f32.mrf.mxu0
      %2660 = vmatprep.mubr.f32.mxu0 0.0
      %2661 = vmatmul.mubr.f32.gmra.mxu0 %v1597
      %v2662 = vpop.f32.mrf.mxu0
      %v2663 = vadd.f32 0.0, %v2662
      %v2664 = vpop.f32.mrf.mxu0
      %2665 = vmatprep.mubr.f32.mxu0 0.0
      %2666 = vmatmul.mubr.f32.gmra.mxu0 %v1599
      %v2667 = vpop.f32.mrf.mxu0
      %v2668 = vadd.f32 0.0, %v2667
      %v2669 = vpop.f32.mrf.mxu0
      %2670 = vmatprep.mubr.f32.mxu0 0.0
      %2671 = vmatmul.mubr.f32.gmra.mxu0 %v1601
      %v2672 = vpop.f32.mrf.mxu0
      %v2673 = vadd.f32 0.0, %v2672
      %v2674 = vpop.f32.mrf.mxu0
      %2675 = vmatprep.mubr.f32.mxu0 0.0
      %2676 = vmatmul.mubr.f32.gmra.mxu0 %v1603
      %v2677 = vpop.f32.mrf.mxu0
      %v2678 = vadd.f32 0.0, %v2677
      %v2679 = vpop.f32.mrf.mxu0
      %2680 = vmatprep.mubr.f32.mxu0 0.0
      %2681 = vmatmul.mubr.f32.gmra.mxu0 %v1605
      %v2682 = vpop.f32.mrf.mxu0
      %v2683 = vadd.f32 0.0, %v2682
      %v2684 = vpop.f32.mrf.mxu0
      %2685 = vmatprep.mubr.f32.mxu0 0.0
      %2686 = vmatmul.mubr.f32.gmra.mxu0 %v1607
      %v2687 = vpop.f32.mrf.mxu0
      %v2688 = vadd.f32 0.0, %v2687
      %v2689 = vpop.f32.mrf.mxu0
      %2690 = vmatprep.mubr.f32.mxu0 0.0
      %2691 = vmatmul.mubr.f32.gmra.mxu0 %v1609
      %v2692 = vpop.f32.mrf.mxu0
      %v2693 = vadd.f32 0.0, %v2692
      %v2694 = vpop.f32.mrf.mxu0
      %2695 = vmatprep.mubr.f32.mxu0 0.0
      %2696 = vmatmul.mubr.f32.gmra.mxu0 %v1611
      %v2697 = vpop.f32.mrf.mxu0
      %v2698 = vadd.f32 0.0, %v2697
      %v2699 = vpop.f32.mrf.mxu0
      %2700 = vmatprep.mubr.f32.mxu0 0.0
      %2701 = vmatmul.mubr.f32.gmra.mxu0 %v1613
      %v2702 = vpop.f32.mrf.mxu0
      %v2703 = vadd.f32 0.0, %v2702
      %v2704 = vpop.f32.mrf.mxu0
      %2705 = vmatprep.mubr.f32.mxu0 0.0
      %2706 = vmatmul.mubr.f32.gmra.mxu0 %v1615
      %v2707 = vpop.f32.mrf.mxu0
      %v2708 = vadd.f32 0.0, %v2707
      %v2709 = vpop.f32.mrf.mxu0
      %2710 = vmatprep.mubr.f32.mxu0 0.0
      %2711 = vmatmul.mubr.f32.gmra.mxu0 %v1617
      %v2712 = vpop.f32.mrf.mxu0
      %v2713 = vadd.f32 0.0, %v2712
      %v2714 = vpop.f32.mrf.mxu0
      %2715 = vmatprep.mubr.f32.mxu0 0.0
      %2716 = vmatmul.mubr.f32.gmra.mxu0 %v1619
      %v2717 = vpop.f32.mrf.mxu0
      %v2718 = vadd.f32 0.0, %v2717
      %v2719 = vpop.f32.mrf.mxu0
      %2720 = vmatprep.mubr.f32.mxu0 0.0
      %2721 = vmatmul.mubr.f32.gmra.mxu0 %v1621
      %v2722 = vpop.f32.mrf.mxu0
      %v2723 = vadd.f32 0.0, %v2722
      %v2724 = vpop.f32.mrf.mxu0
      %2725 = vmatprep.mubr.f32.mxu0 0.0
      %2726 = vmatmul.mubr.f32.gmra.mxu0 %v1623
      %v2727 = vpop.f32.mrf.mxu0
      %v2728 = vadd.f32 0.0, %v2727
      %v2729 = vpop.f32.mrf.mxu0
      %2730 = vmatprep.mubr.f32.mxu0 0.0
      %2731 = vmatmul.mubr.f32.gmra.mxu0 %v1625
      %v2732 = vpop.f32.mrf.mxu0
      %v2733 = vadd.f32 0.0, %v2732
      %v2734 = vpop.f32.mrf.mxu0
      %2735 = vmatprep.mubr.f32.mxu0 0.0
      %2736 = vmatmul.mubr.f32.gmra.mxu0 %v1627
      %v2737 = vpop.f32.mrf.mxu0
      %v2738 = vadd.f32 0.0, %v2737
      %v2739 = vpop.f32.mrf.mxu0
      %2740 = vmatprep.mubr.f32.mxu0 0.0
      %2741 = vmatmul.mubr.f32.gmra.mxu0 %v1629
      %v2742 = vpop.f32.mrf.mxu0
      %v2743 = vadd.f32 0.0, %v2742
      %v2744 = vpop.f32.mrf.mxu0
      %2745 = vmatprep.mubr.f32.mxu0 0.0
      %2746 = vmatmul.mubr.f32.gmra.mxu0 %v1631
      %v2747 = vpop.f32.mrf.mxu0
      %v2748 = vadd.f32 0.0, %v2747
      %v2749 = vpop.f32.mrf.mxu0
      %2750 = vmatprep.mubr.f32.mxu0 0.0
      %2751 = vmatmul.mubr.f32.gmra.mxu0 %v1633
      %v2752 = vpop.f32.mrf.mxu0
      %v2753 = vadd.f32 0.0, %v2752
      %v2754 = vpop.f32.mrf.mxu0
      %2755 = vmatprep.mubr.f32.mxu0 0.0
      %2756 = vmatmul.mubr.f32.gmra.mxu0 %v2514
      %v2757 = vpop.f32.mrf.mxu0
      %v2758 = vadd.f32 0.0, %v2757
      %v2759 = vpop.f32.mrf.mxu0
      %2760 = vmatprep.mubr.f32.mxu0 0.0
      %2761 = vmatmul.mubr.f32.gmra.mxu0 %v2516
      %v2762 = vpop.f32.mrf.mxu0
      %v2763 = vadd.f32 0.0, %v2762
      %v2764 = vpop.f32.mrf.mxu0
      %2765 = vdwg.mxu0
      %v2766 = vadd.f32 %v2471, %v2588
      %v2767 = vadd.f32 %v2472, %v2593
      %v2768 = vadd.f32 %v2473, %v2598
      %v2769 = vadd.f32 %v2474, %v2603
      %v2770 = vadd.f32 %v2475, %v2608
      %v2771 = vadd.f32 %v2476, %v2613
      %v2772 = vadd.f32 %v2477, %v2618
      %v2773 = vadd.f32 %v2478, %v2623
      %v2774 = vadd.f32 %v2479, %v2628
      %v2775 = vadd.f32 %v2480, %v2633
      %v2776 = vadd.f32 %v2481, %v2638
      %v2777 = vadd.f32 %v2482, %v2643
      %v2778 = vadd.f32 %v2483, %v2648
      %v2779 = vadd.f32 %v2484, %v2653
      %v2780 = vadd.f32 %v2485, %v2658
      %v2781 = vadd.f32 %v2486, %v2663
      %v2782 = vadd.f32 %v2487, %v2668
      %v2783 = vadd.f32 %v2488, %v2673
      %v2784 = vadd.f32 %v2489, %v2678
      %v2785 = vadd.f32 %v2490, %v2683
      %v2786 = vadd.f32 %v2491, %v2688
      %v2787 = vadd.f32 %v2492, %v2693
      %v2788 = vadd.f32 %v2493, %v2698
      %v2789 = vadd.f32 %v2494, %v2703
      %v2790 = vadd.f32 %v2495, %v2708
      %v2791 = vadd.f32 %v2496, %v2713
      %v2792 = vadd.f32 %v2497, %v2718
      %v2793 = vadd.f32 %v2498, %v2723
      %v2794 = vadd.f32 %v2499, %v2728
      %v2795 = vadd.f32 %v2500, %v2733
      %v2796 = vadd.f32 %v2501, %v2738
      %v2797 = vadd.f32 %v2502, %v2743
      %v2798 = vadd.f32 %v2503, %v2748
      %v2799 = vadd.f32 %v2504, %v2753
      %v2800 = vadd.f32 %v2505, %v2758
      %v2801 = vadd.f32 %v2506, %v2763
      %s2802 = scalar_lea.vmem %s3, 24
      %v2803 = vld [vmem:[%s2802] sm:$0xf]
      %v2805 = vsel %vm461, %v678, 0
      %v2808 = vsel %vm461, %v679, 0
      %v2811 = vsel %vm901, %v2803, 0
      %2813 = vmatprep.subr.mxu0 0.0
      %2814 = vmatpush1.msra.mxu0 0.0
      %2815 = vmatprep.subr.mxu0 0.0
      %2816 = vmatpush1.msra.mxu0 0.0
      %2817 = vmatprep.subr.mxu0 0.0
      %2818 = vmatpush1.msra.mxu0 0.0
      %2819 = vmatprep.subr.mxu0 0.0
      %2820 = vmatpush1.msra.mxu0 0.0
      %2821 = vmatprep.subr.mxu0 0.0
      %2822 = vmatpush1.msra.mxu0 0.0
      %2823 = vmatprep.subr.mxu0 0.0
      %2824 = vmatpush1.msra.mxu0 0.0
      %2825 = vmatprep.subr.mxu0 0.0
      %2826 = vmatpush1.msra.mxu0 0.0
      %2827 = vmatprep.subr.mxu0 0.0
      %2828 = vmatpush1.msra.mxu0 0.0
      %2829 = vmatprep.subr.mxu0 0.0
      %2830 = vmatpush1.msra.mxu0 0.0
      %2831 = vmatprep.subr.mxu0 0.0
      %2832 = vmatpush1.msra.mxu0 0.0
      %2833 = vmatprep.subr.mxu0 0.0
      %2834 = vmatpush1.msra.mxu0 0.0
      %2835 = vmatprep.subr.mxu0 0.0
      %2836 = vmatpush1.msra.mxu0 0.0
      %2837 = vmatprep.subr.mxu0 0.0
      %2838 = vmatpush1.msra.mxu0 0.0
      %2839 = vmatprep.subr.mxu0 0.0
      %2840 = vmatpush1.msra.mxu0 0.0
      %2841 = vmatprep.subr.mxu0 0.0
      %2842 = vmatpush1.msra.mxu0 0.0
      %2843 = vmatprep.subr.mxu0 0.0
      %2844 = vmatpush1.msra.mxu0 %v2811
      %2845 = vmatprep.subr.mxu0 0.0
      %2846 = vmatpush2.msra.mxu0 0.0
      %2847 = vmatprep.subr.mxu0 0.0
      %2848 = vmatpush2.msra.mxu0 0.0
      %2849 = vmatprep.subr.mxu0 0.0
      %2850 = vmatpush2.msra.mxu0 0.0
      %2851 = vmatprep.subr.mxu0 0.0
      %2852 = vmatpush2.msra.mxu0 0.0
      %2853 = vmatprep.subr.mxu0 0.0
      %2854 = vmatpush2.msra.mxu0 0.0
      %2855 = vmatprep.subr.mxu0 0.0
      %2856 = vmatpush2.msra.mxu0 0.0
      %2857 = vmatprep.subr.mxu0 0.0
      %2858 = vmatpush2.msra.mxu0 0.0
      %2859 = vmatprep.subr.mxu0 0.0
      %2860 = vmatpush2.msra.mxu0 0.0
      %2861 = vmatprep.subr.mxu0 0.0
      %2862 = vmatpush2.msra.mxu0 0.0
      %2863 = vmatprep.subr.mxu0 0.0
      %2864 = vmatpush2.msra.mxu0 0.0
      %2865 = vmatprep.subr.mxu0 0.0
      %2866 = vmatpush2.msra.mxu0 0.0
      %2867 = vmatprep.subr.mxu0 0.0
      %2868 = vmatpush2.msra.mxu0 0.0
      %2869 = vmatprep.subr.mxu0 0.0
      %2870 = vmatpush2.msra.mxu0 0.0
      %2871 = vmatprep.subr.mxu0 0.0
      %2872 = vmatpush2.msra.mxu0 0.0
      %2873 = vmatprep.subr.mxu0 0.0
      %2874 = vmatpush2.msra.mxu0 0.0
      %2875 = vmatprep.subr.mxu0 0.0
      %2876 = vmatpush2.msra.mxu0 0.0
      %2877 = vmatprep.mubr.f32.mxu0 0.0
      %2878 = vmatmul.mubr.f32.gmra.mxu0 %v1158
      %v2879 = vpop.f32.mrf.mxu0
      %v2880 = vadd.f32 0.0, %v2879
      %v2881 = vpop.f32.mrf.mxu0
      %2882 = vmatprep.mubr.f32.mxu0 0.0
      %2883 = vmatmul.mubr.f32.gmra.mxu0 %v1160
      %v2884 = vpop.f32.mrf.mxu0
      %v2885 = vadd.f32 0.0, %v2884
      %v2886 = vpop.f32.mrf.mxu0
      %2887 = vmatprep.mubr.f32.mxu0 0.0
      %2888 = vmatmul.mubr.f32.gmra.mxu0 %v1162
      %v2889 = vpop.f32.mrf.mxu0
      %v2890 = vadd.f32 0.0, %v2889
      %v2891 = vpop.f32.mrf.mxu0
      %2892 = vmatprep.mubr.f32.mxu0 0.0
      %2893 = vmatmul.mubr.f32.gmra.mxu0 %v1164
      %v2894 = vpop.f32.mrf.mxu0
      %v2895 = vadd.f32 0.0, %v2894
      %v2896 = vpop.f32.mrf.mxu0
      %2897 = vmatprep.mubr.f32.mxu0 0.0
      %2898 = vmatmul.mubr.f32.gmra.mxu0 %v1166
      %v2899 = vpop.f32.mrf.mxu0
      %v2900 = vadd.f32 0.0, %v2899
      %v2901 = vpop.f32.mrf.mxu0
      %2902 = vmatprep.mubr.f32.mxu0 0.0
      %2903 = vmatmul.mubr.f32.gmra.mxu0 %v1168
      %v2904 = vpop.f32.mrf.mxu0
      %v2905 = vadd.f32 0.0, %v2904
      %v2906 = vpop.f32.mrf.mxu0
      %2907 = vmatprep.mubr.f32.mxu0 0.0
      %2908 = vmatmul.mubr.f32.gmra.mxu0 %v1170
      %v2909 = vpop.f32.mrf.mxu0
      %v2910 = vadd.f32 0.0, %v2909
      %v2911 = vpop.f32.mrf.mxu0
      %2912 = vmatprep.mubr.f32.mxu0 0.0
      %2913 = vmatmul.mubr.f32.gmra.mxu0 %v1172
      %v2914 = vpop.f32.mrf.mxu0
      %v2915 = vadd.f32 0.0, %v2914
      %v2916 = vpop.f32.mrf.mxu0
      %2917 = vmatprep.mubr.f32.mxu0 0.0
      %2918 = vmatmul.mubr.f32.gmra.mxu0 %v1174
      %v2919 = vpop.f32.mrf.mxu0
      %v2920 = vadd.f32 0.0, %v2919
      %v2921 = vpop.f32.mrf.mxu0
      %2922 = vmatprep.mubr.f32.mxu0 0.0
      %2923 = vmatmul.mubr.f32.gmra.mxu0 %v1176
      %v2924 = vpop.f32.mrf.mxu0
      %v2925 = vadd.f32 0.0, %v2924
      %v2926 = vpop.f32.mrf.mxu0
      %2927 = vmatprep.mubr.f32.mxu0 0.0
      %2928 = vmatmul.mubr.f32.gmra.mxu0 %v1178
      %v2929 = vpop.f32.mrf.mxu0
      %v2930 = vadd.f32 0.0, %v2929
      %v2931 = vpop.f32.mrf.mxu0
      %2932 = vmatprep.mubr.f32.mxu0 0.0
      %2933 = vmatmul.mubr.f32.gmra.mxu0 %v1180
      %v2934 = vpop.f32.mrf.mxu0
      %v2935 = vadd.f32 0.0, %v2934
      %v2936 = vpop.f32.mrf.mxu0
      %2937 = vmatprep.mubr.f32.mxu0 0.0
      %2938 = vmatmul.mubr.f32.gmra.mxu0 %v1182
      %v2939 = vpop.f32.mrf.mxu0
      %v2940 = vadd.f32 0.0, %v2939
      %v2941 = vpop.f32.mrf.mxu0
      %2942 = vmatprep.mubr.f32.mxu0 0.0
      %2943 = vmatmul.mubr.f32.gmra.mxu0 %v1184
      %v2944 = vpop.f32.mrf.mxu0
      %v2945 = vadd.f32 0.0, %v2944
      %v2946 = vpop.f32.mrf.mxu0
      %2947 = vmatprep.mubr.f32.mxu0 0.0
      %2948 = vmatmul.mubr.f32.gmra.mxu0 %v1186
      %v2949 = vpop.f32.mrf.mxu0
      %v2950 = vadd.f32 0.0, %v2949
      %v2951 = vpop.f32.mrf.mxu0
      %2952 = vmatprep.mubr.f32.mxu0 0.0
      %2953 = vmatmul.mubr.f32.gmra.mxu0 %v1188
      %v2954 = vpop.f32.mrf.mxu0
      %v2955 = vadd.f32 0.0, %v2954
      %v2956 = vpop.f32.mrf.mxu0
      %2957 = vmatprep.mubr.f32.mxu0 0.0
      %2958 = vmatmul.mubr.f32.gmra.mxu0 %v1190
      %v2959 = vpop.f32.mrf.mxu0
      %v2960 = vadd.f32 0.0, %v2959
      %v2961 = vpop.f32.mrf.mxu0
      %2962 = vmatprep.mubr.f32.mxu0 0.0
      %2963 = vmatmul.mubr.f32.gmra.mxu0 %v1192
      %v2964 = vpop.f32.mrf.mxu0
      %v2965 = vadd.f32 0.0, %v2964
      %v2966 = vpop.f32.mrf.mxu0
      %2967 = vmatprep.mubr.f32.mxu0 0.0
      %2968 = vmatmul.mubr.f32.gmra.mxu0 %v1194
      %v2969 = vpop.f32.mrf.mxu0
      %v2970 = vadd.f32 0.0, %v2969
      %v2971 = vpop.f32.mrf.mxu0
      %2972 = vmatprep.mubr.f32.mxu0 0.0
      %2973 = vmatmul.mubr.f32.gmra.mxu0 %v1196
      %v2974 = vpop.f32.mrf.mxu0
      %v2975 = vadd.f32 0.0, %v2974
      %v2976 = vpop.f32.mrf.mxu0
      %2977 = vmatprep.mubr.f32.mxu0 0.0
      %2978 = vmatmul.mubr.f32.gmra.mxu0 %v1198
      %v2979 = vpop.f32.mrf.mxu0
      %v2980 = vadd.f32 0.0, %v2979
      %v2981 = vpop.f32.mrf.mxu0
      %2982 = vmatprep.mubr.f32.mxu0 0.0
      %2983 = vmatmul.mubr.f32.gmra.mxu0 %v1200
      %v2984 = vpop.f32.mrf.mxu0
      %v2985 = vadd.f32 0.0, %v2984
      %v2986 = vpop.f32.mrf.mxu0
      %2987 = vmatprep.mubr.f32.mxu0 0.0
      %2988 = vmatmul.mubr.f32.gmra.mxu0 %v1202
      %v2989 = vpop.f32.mrf.mxu0
      %v2990 = vadd.f32 0.0, %v2989
      %v2991 = vpop.f32.mrf.mxu0
      %2992 = vmatprep.mubr.f32.mxu0 0.0
      %2993 = vmatmul.mubr.f32.gmra.mxu0 %v1204
      %v2994 = vpop.f32.mrf.mxu0
      %v2995 = vadd.f32 0.0, %v2994
      %v2996 = vpop.f32.mrf.mxu0
      %2997 = vmatprep.mubr.f32.mxu0 0.0
      %2998 = vmatmul.mubr.f32.gmra.mxu0 %v1206
      %v2999 = vpop.f32.mrf.mxu0
      %v3000 = vadd.f32 0.0, %v2999
      %v3001 = vpop.f32.mrf.mxu0
      %3002 = vmatprep.mubr.f32.mxu0 0.0
      %3003 = vmatmul.mubr.f32.gmra.mxu0 %v1208
      %v3004 = vpop.f32.mrf.mxu0
      %v3005 = vadd.f32 0.0, %v3004
      %v3006 = vpop.f32.mrf.mxu0
      %3007 = vmatprep.mubr.f32.mxu0 0.0
      %3008 = vmatmul.mubr.f32.gmra.mxu0 %v1210
      %v3009 = vpop.f32.mrf.mxu0
      %v3010 = vadd.f32 0.0, %v3009
      %v3011 = vpop.f32.mrf.mxu0
      %3012 = vmatprep.mubr.f32.mxu0 0.0
      %3013 = vmatmul.mubr.f32.gmra.mxu0 %v1212
      %v3014 = vpop.f32.mrf.mxu0
      %v3015 = vadd.f32 0.0, %v3014
      %v3016 = vpop.f32.mrf.mxu0
      %3017 = vmatprep.mubr.f32.mxu0 0.0
      %3018 = vmatmul.mubr.f32.gmra.mxu0 %v1214
      %v3019 = vpop.f32.mrf.mxu0
      %v3020 = vadd.f32 0.0, %v3019
      %v3021 = vpop.f32.mrf.mxu0
      %3022 = vmatprep.mubr.f32.mxu0 0.0
      %3023 = vmatmul.mubr.f32.gmra.mxu0 %v1216
      %v3024 = vpop.f32.mrf.mxu0
      %v3025 = vadd.f32 0.0, %v3024
      %v3026 = vpop.f32.mrf.mxu0
      %3027 = vmatprep.mubr.f32.mxu0 0.0
      %3028 = vmatmul.mubr.f32.gmra.mxu0 %v1218
      %v3029 = vpop.f32.mrf.mxu0
      %v3030 = vadd.f32 0.0, %v3029
      %v3031 = vpop.f32.mrf.mxu0
      %3032 = vmatprep.mubr.f32.mxu0 0.0
      %3033 = vmatmul.mubr.f32.gmra.mxu0 %v1220
      %v3034 = vpop.f32.mrf.mxu0
      %v3035 = vadd.f32 0.0, %v3034
      %v3036 = vpop.f32.mrf.mxu0
      %3037 = vmatprep.mubr.f32.mxu0 0.0
      %3038 = vmatmul.mubr.f32.gmra.mxu0 %v1922
      %v3039 = vpop.f32.mrf.mxu0
      %v3040 = vadd.f32 0.0, %v3039
      %v3041 = vpop.f32.mrf.mxu0
      %3042 = vmatprep.mubr.f32.mxu0 0.0
      %3043 = vmatmul.mubr.f32.gmra.mxu0 %v1925
      %v3044 = vpop.f32.mrf.mxu0
      %v3045 = vadd.f32 0.0, %v3044
      %v3046 = vpop.f32.mrf.mxu0
      %3047 = vmatprep.mubr.f32.mxu0 0.0
      %3048 = vmatmul.mubr.f32.gmra.mxu0 %v2805
      %v3049 = vpop.f32.mrf.mxu0
      %v3050 = vadd.f32 0.0, %v3049
      %v3051 = vpop.f32.mrf.mxu0
      %3052 = vmatprep.mubr.f32.mxu0 0.0
      %3053 = vmatmul.mubr.f32.gmra.mxu0 %v2808
      %v3054 = vpop.f32.mrf.mxu0
      %v3055 = vadd.f32 0.0, %v3054
      %v3056 = vpop.f32.mrf.mxu0
      %3057 = vdwg.mxu0
      %v3058 = vadd.f32 %v2766, %v2880
      %v3059 = vadd.f32 %v2767, %v2885
      %v3060 = vadd.f32 %v2768, %v2890
      %v3061 = vadd.f32 %v2769, %v2895
      %v3062 = vadd.f32 %v2770, %v2900
      %v3063 = vadd.f32 %v2771, %v2905
      %v3064 = vadd.f32 %v2772, %v2910
      %v3065 = vadd.f32 %v2773, %v2915
      %v3066 = vadd.f32 %v2774, %v2920
      %v3067 = vadd.f32 %v2775, %v2925
      %v3068 = vadd.f32 %v2776, %v2930
      %v3069 = vadd.f32 %v2777, %v2935
      %v3070 = vadd.f32 %v2778, %v2940
      %v3071 = vadd.f32 %v2779, %v2945
      %v3072 = vadd.f32 %v2780, %v2950
      %v3073 = vadd.f32 %v2781, %v2955
      %v3074 = vadd.f32 %v2782, %v2960
      %v3075 = vadd.f32 %v2783, %v2965
      %v3076 = vadd.f32 %v2784, %v2970
      %v3077 = vadd.f32 %v2785, %v2975
      %v3078 = vadd.f32 %v2786, %v2980
      %v3079 = vadd.f32 %v2787, %v2985
      %v3080 = vadd.f32 %v2788, %v2990
      %v3081 = vadd.f32 %v2789, %v2995
      %v3082 = vadd.f32 %v2790, %v3000
      %v3083 = vadd.f32 %v2791, %v3005
      %v3084 = vadd.f32 %v2792, %v3010
      %v3085 = vadd.f32 %v2793, %v3015
      %v3086 = vadd.f32 %v2794, %v3020
      %v3087 = vadd.f32 %v2795, %v3025
      %v3088 = vadd.f32 %v2796, %v3030
      %v3089 = vadd.f32 %v2797, %v3035
      %v3090 = vadd.f32 %v2798, %v3040
      %v3091 = vadd.f32 %v2799, %v3045
      %v3092 = vadd.f32 %v2800, %v3050
      %v3093 = vadd.f32 %v2801, %v3055
      %v3095 = vrot.slane %v678, 1
      %v3096 = vrot.slane %v679, 1
      %v3097 = vsel %vm736, %v3095, %v3096
      %v3098 = vrot.slane %v680, 1
      %v3099 = vsel %vm736, %v3096, %v3098
      %s3100 = scalar_lea.vmem %s3, 28
      %v3101 = vld [vmem:[%s3100] sm:$0xf]
      %v3102 = vsel %vm461, %v3097, 0
      %v3104 = vsel %vm461, %v3099, 0
      %v3107 = vsel %vm901, %v3101, 0
      %3109 = vmatprep.subr.mxu0 0.0
      %3110 = vmatpush1.msra.mxu0 0.0
      %3111 = vmatprep.subr.mxu0 0.0
      %3112 = vmatpush1.msra.mxu0 0.0
      %3113 = vmatprep.subr.mxu0 0.0
      %3114 = vmatpush1.msra.mxu0 0.0
      %3115 = vmatprep.subr.mxu0 0.0
      %3116 = vmatpush1.msra.mxu0 0.0
      %3117 = vmatprep.subr.mxu0 0.0
      %3118 = vmatpush1.msra.mxu0 0.0
      %3119 = vmatprep.subr.mxu0 0.0
      %3120 = vmatpush1.msra.mxu0 0.0
      %3121 = vmatprep.subr.mxu0 0.0
      %3122 = vmatpush1.msra.mxu0 0.0
      %3123 = vmatprep.subr.mxu0 0.0
      %3124 = vmatpush1.msra.mxu0 0.0
      %3125 = vmatprep.subr.mxu0 0.0
      %3126 = vmatpush1.msra.mxu0 0.0
      %3127 = vmatprep.subr.mxu0 0.0
      %3128 = vmatpush1.msra.mxu0 0.0
      %3129 = vmatprep.subr.mxu0 0.0
      %3130 = vmatpush1.msra.mxu0 0.0
      %3131 = vmatprep.subr.mxu0 0.0
      %3132 = vmatpush1.msra.mxu0 0.0
      %3133 = vmatprep.subr.mxu0 0.0
      %3134 = vmatpush1.msra.mxu0 0.0
      %3135 = vmatprep.subr.mxu0 0.0
      %3136 = vmatpush1.msra.mxu0 0.0
      %3137 = vmatprep.subr.mxu0 0.0
      %3138 = vmatpush1.msra.mxu0 0.0
      %3139 = vmatprep.subr.mxu0 0.0
      %3140 = vmatpush1.msra.mxu0 %v3107
      %3141 = vmatprep.subr.mxu0 0.0
      %3142 = vmatpush2.msra.mxu0 0.0
      %3143 = vmatprep.subr.mxu0 0.0
      %3144 = vmatpush2.msra.mxu0 0.0
      %3145 = vmatprep.subr.mxu0 0.0
      %3146 = vmatpush2.msra.mxu0 0.0
      %3147 = vmatprep.subr.mxu0 0.0
      %3148 = vmatpush2.msra.mxu0 0.0
      %3149 = vmatprep.subr.mxu0 0.0
      %3150 = vmatpush2.msra.mxu0 0.0
      %3151 = vmatprep.subr.mxu0 0.0
      %3152 = vmatpush2.msra.mxu0 0.0
      %3153 = vmatprep.subr.mxu0 0.0
      %3154 = vmatpush2.msra.mxu0 0.0
      %3155 = vmatprep.subr.mxu0 0.0
      %3156 = vmatpush2.msra.mxu0 0.0
      %3157 = vmatprep.subr.mxu0 0.0
      %3158 = vmatpush2.msra.mxu0 0.0
      %3159 = vmatprep.subr.mxu0 0.0
      %3160 = vmatpush2.msra.mxu0 0.0
      %3161 = vmatprep.subr.mxu0 0.0
      %3162 = vmatpush2.msra.mxu0 0.0
      %3163 = vmatprep.subr.mxu0 0.0
      %3164 = vmatpush2.msra.mxu0 0.0
      %3165 = vmatprep.subr.mxu0 0.0
      %3166 = vmatpush2.msra.mxu0 0.0
      %3167 = vmatprep.subr.mxu0 0.0
      %3168 = vmatpush2.msra.mxu0 0.0
      %3169 = vmatprep.subr.mxu0 0.0
      %3170 = vmatpush2.msra.mxu0 0.0
      %3171 = vmatprep.subr.mxu0 0.0
      %3172 = vmatpush2.msra.mxu0 0.0
      %3173 = vmatprep.mubr.f32.mxu0 0.0
      %3174 = vmatmul.mubr.f32.gmra.mxu0 %v837
      %v3175 = vpop.f32.mrf.mxu0
      %v3176 = vadd.f32 0.0, %v3175
      %v3177 = vpop.f32.mrf.mxu0
      %3178 = vmatprep.mubr.f32.mxu0 0.0
      %3179 = vmatmul.mubr.f32.gmra.mxu0 %v839
      %v3180 = vpop.f32.mrf.mxu0
      %v3181 = vadd.f32 0.0, %v3180
      %v3182 = vpop.f32.mrf.mxu0
      %3183 = vmatprep.mubr.f32.mxu0 0.0
      %3184 = vmatmul.mubr.f32.gmra.mxu0 %v841
      %v3185 = vpop.f32.mrf.mxu0
      %v3186 = vadd.f32 0.0, %v3185
      %v3187 = vpop.f32.mrf.mxu0
      %3188 = vmatprep.mubr.f32.mxu0 0.0
      %3189 = vmatmul.mubr.f32.gmra.mxu0 %v843
      %v3190 = vpop.f32.mrf.mxu0
      %v3191 = vadd.f32 0.0, %v3190
      %v3192 = vpop.f32.mrf.mxu0
      %3193 = vmatprep.mubr.f32.mxu0 0.0
      %3194 = vmatmul.mubr.f32.gmra.mxu0 %v845
      %v3195 = vpop.f32.mrf.mxu0
      %v3196 = vadd.f32 0.0, %v3195
      %v3197 = vpop.f32.mrf.mxu0
      %3198 = vmatprep.mubr.f32.mxu0 0.0
      %3199 = vmatmul.mubr.f32.gmra.mxu0 %v847
      %v3200 = vpop.f32.mrf.mxu0
      %v3201 = vadd.f32 0.0, %v3200
      %v3202 = vpop.f32.mrf.mxu0
      %3203 = vmatprep.mubr.f32.mxu0 0.0
      %3204 = vmatmul.mubr.f32.gmra.mxu0 %v849
      %v3205 = vpop.f32.mrf.mxu0
      %v3206 = vadd.f32 0.0, %v3205
      %v3207 = vpop.f32.mrf.mxu0
      %3208 = vmatprep.mubr.f32.mxu0 0.0
      %3209 = vmatmul.mubr.f32.gmra.mxu0 %v851
      %v3210 = vpop.f32.mrf.mxu0
      %v3211 = vadd.f32 0.0, %v3210
      %v3212 = vpop.f32.mrf.mxu0
      %3213 = vmatprep.mubr.f32.mxu0 0.0
      %3214 = vmatmul.mubr.f32.gmra.mxu0 %v853
      %v3215 = vpop.f32.mrf.mxu0
      %v3216 = vadd.f32 0.0, %v3215
      %v3217 = vpop.f32.mrf.mxu0
      %3218 = vmatprep.mubr.f32.mxu0 0.0
      %3219 = vmatmul.mubr.f32.gmra.mxu0 %v855
      %v3220 = vpop.f32.mrf.mxu0
      %v3221 = vadd.f32 0.0, %v3220
      %v3222 = vpop.f32.mrf.mxu0
      %3223 = vmatprep.mubr.f32.mxu0 0.0
      %3224 = vmatmul.mubr.f32.gmra.mxu0 %v857
      %v3225 = vpop.f32.mrf.mxu0
      %v3226 = vadd.f32 0.0, %v3225
      %v3227 = vpop.f32.mrf.mxu0
      %3228 = vmatprep.mubr.f32.mxu0 0.0
      %3229 = vmatmul.mubr.f32.gmra.mxu0 %v859
      %v3230 = vpop.f32.mrf.mxu0
      %v3231 = vadd.f32 0.0, %v3230
      %v3232 = vpop.f32.mrf.mxu0
      %3233 = vmatprep.mubr.f32.mxu0 0.0
      %3234 = vmatmul.mubr.f32.gmra.mxu0 %v861
      %v3235 = vpop.f32.mrf.mxu0
      %v3236 = vadd.f32 0.0, %v3235
      %v3237 = vpop.f32.mrf.mxu0
      %3238 = vmatprep.mubr.f32.mxu0 0.0
      %3239 = vmatmul.mubr.f32.gmra.mxu0 %v863
      %v3240 = vpop.f32.mrf.mxu0
      %v3241 = vadd.f32 0.0, %v3240
      %v3242 = vpop.f32.mrf.mxu0
      %3243 = vmatprep.mubr.f32.mxu0 0.0
      %3244 = vmatmul.mubr.f32.gmra.mxu0 %v865
      %v3245 = vpop.f32.mrf.mxu0
      %v3246 = vadd.f32 0.0, %v3245
      %v3247 = vpop.f32.mrf.mxu0
      %3248 = vmatprep.mubr.f32.mxu0 0.0
      %3249 = vmatmul.mubr.f32.gmra.mxu0 %v867
      %v3250 = vpop.f32.mrf.mxu0
      %v3251 = vadd.f32 0.0, %v3250
      %v3252 = vpop.f32.mrf.mxu0
      %3253 = vmatprep.mubr.f32.mxu0 0.0
      %3254 = vmatmul.mubr.f32.gmra.mxu0 %v869
      %v3255 = vpop.f32.mrf.mxu0
      %v3256 = vadd.f32 0.0, %v3255
      %v3257 = vpop.f32.mrf.mxu0
      %3258 = vmatprep.mubr.f32.mxu0 0.0
      %3259 = vmatmul.mubr.f32.gmra.mxu0 %v871
      %v3260 = vpop.f32.mrf.mxu0
      %v3261 = vadd.f32 0.0, %v3260
      %v3262 = vpop.f32.mrf.mxu0
      %3263 = vmatprep.mubr.f32.mxu0 0.0
      %3264 = vmatmul.mubr.f32.gmra.mxu0 %v873
      %v3265 = vpop.f32.mrf.mxu0
      %v3266 = vadd.f32 0.0, %v3265
      %v3267 = vpop.f32.mrf.mxu0
      %3268 = vmatprep.mubr.f32.mxu0 0.0
      %3269 = vmatmul.mubr.f32.gmra.mxu0 %v875
      %v3270 = vpop.f32.mrf.mxu0
      %v3271 = vadd.f32 0.0, %v3270
      %v3272 = vpop.f32.mrf.mxu0
      %3273 = vmatprep.mubr.f32.mxu0 0.0
      %3274 = vmatmul.mubr.f32.gmra.mxu0 %v877
      %v3275 = vpop.f32.mrf.mxu0
      %v3276 = vadd.f32 0.0, %v3275
      %v3277 = vpop.f32.mrf.mxu0
      %3278 = vmatprep.mubr.f32.mxu0 0.0
      %3279 = vmatmul.mubr.f32.gmra.mxu0 %v879
      %v3280 = vpop.f32.mrf.mxu0
      %v3281 = vadd.f32 0.0, %v3280
      %v3282 = vpop.f32.mrf.mxu0
      %3283 = vmatprep.mubr.f32.mxu0 0.0
      %3284 = vmatmul.mubr.f32.gmra.mxu0 %v881
      %v3285 = vpop.f32.mrf.mxu0
      %v3286 = vadd.f32 0.0, %v3285
      %v3287 = vpop.f32.mrf.mxu0
      %3288 = vmatprep.mubr.f32.mxu0 0.0
      %3289 = vmatmul.mubr.f32.gmra.mxu0 %v883
      %v3290 = vpop.f32.mrf.mxu0
      %v3291 = vadd.f32 0.0, %v3290
      %v3292 = vpop.f32.mrf.mxu0
      %3293 = vmatprep.mubr.f32.mxu0 0.0
      %3294 = vmatmul.mubr.f32.gmra.mxu0 %v885
      %v3295 = vpop.f32.mrf.mxu0
      %v3296 = vadd.f32 0.0, %v3295
      %v3297 = vpop.f32.mrf.mxu0
      %3298 = vmatprep.mubr.f32.mxu0 0.0
      %3299 = vmatmul.mubr.f32.gmra.mxu0 %v887
      %v3300 = vpop.f32.mrf.mxu0
      %v3301 = vadd.f32 0.0, %v3300
      %v3302 = vpop.f32.mrf.mxu0
      %3303 = vmatprep.mubr.f32.mxu0 0.0
      %3304 = vmatmul.mubr.f32.gmra.mxu0 %v889
      %v3305 = vpop.f32.mrf.mxu0
      %v3306 = vadd.f32 0.0, %v3305
      %v3307 = vpop.f32.mrf.mxu0
      %3308 = vmatprep.mubr.f32.mxu0 0.0
      %3309 = vmatmul.mubr.f32.gmra.mxu0 %v891
      %v3310 = vpop.f32.mrf.mxu0
      %v3311 = vadd.f32 0.0, %v3310
      %v3312 = vpop.f32.mrf.mxu0
      %3313 = vmatprep.mubr.f32.mxu0 0.0
      %3314 = vmatmul.mubr.f32.gmra.mxu0 %v893
      %v3315 = vpop.f32.mrf.mxu0
      %v3316 = vadd.f32 0.0, %v3315
      %v3317 = vpop.f32.mrf.mxu0
      %3318 = vmatprep.mubr.f32.mxu0 0.0
      %3319 = vmatmul.mubr.f32.gmra.mxu0 %v895
      %v3320 = vpop.f32.mrf.mxu0
      %v3321 = vadd.f32 0.0, %v3320
      %v3322 = vpop.f32.mrf.mxu0
      %3323 = vmatprep.mubr.f32.mxu0 0.0
      %3324 = vmatmul.mubr.f32.gmra.mxu0 %v897
      %v3325 = vpop.f32.mrf.mxu0
      %v3326 = vadd.f32 0.0, %v3325
      %v3327 = vpop.f32.mrf.mxu0
      %3328 = vmatprep.mubr.f32.mxu0 0.0
      %3329 = vmatmul.mubr.f32.gmra.mxu0 %v899
      %v3330 = vpop.f32.mrf.mxu0
      %v3331 = vadd.f32 0.0, %v3330
      %v3332 = vpop.f32.mrf.mxu0
      %3333 = vmatprep.mubr.f32.mxu0 0.0
      %3334 = vmatmul.mubr.f32.gmra.mxu0 %v2219
      %v3335 = vpop.f32.mrf.mxu0
      %v3336 = vadd.f32 0.0, %v3335
      %v3337 = vpop.f32.mrf.mxu0
      %3338 = vmatprep.mubr.f32.mxu0 0.0
      %3339 = vmatmul.mubr.f32.gmra.mxu0 %v2221
      %v3340 = vpop.f32.mrf.mxu0
      %v3341 = vadd.f32 0.0, %v3340
      %v3342 = vpop.f32.mrf.mxu0
      %3343 = vmatprep.mubr.f32.mxu0 0.0
      %3344 = vmatmul.mubr.f32.gmra.mxu0 %v3102
      %v3345 = vpop.f32.mrf.mxu0
      %v3346 = vadd.f32 0.0, %v3345
      %v3347 = vpop.f32.mrf.mxu0
      %3348 = vmatprep.mubr.f32.mxu0 0.0
      %3349 = vmatmul.mubr.f32.gmra.mxu0 %v3104
      %v3350 = vpop.f32.mrf.mxu0
      %v3351 = vadd.f32 0.0, %v3350
      %v3352 = vpop.f32.mrf.mxu0
      %3353 = vdwg.mxu0
      %v3354 = vadd.f32 %v3058, %v3176
      %v3355 = vadd.f32 %v3059, %v3181
      %v3356 = vadd.f32 %v3060, %v3186
      %v3357 = vadd.f32 %v3061, %v3191
      %v3358 = vadd.f32 %v3062, %v3196
      %v3359 = vadd.f32 %v3063, %v3201
      %v3360 = vadd.f32 %v3064, %v3206
      %v3361 = vadd.f32 %v3065, %v3211
      %v3362 = vadd.f32 %v3066, %v3216
      %v3363 = vadd.f32 %v3067, %v3221
      %v3364 = vadd.f32 %v3068, %v3226
      %v3365 = vadd.f32 %v3069, %v3231
      %v3366 = vadd.f32 %v3070, %v3236
      %v3367 = vadd.f32 %v3071, %v3241
      %v3368 = vadd.f32 %v3072, %v3246
      %v3369 = vadd.f32 %v3073, %v3251
      %v3370 = vadd.f32 %v3074, %v3256
      %v3371 = vadd.f32 %v3075, %v3261
      %v3372 = vadd.f32 %v3076, %v3266
      %v3373 = vadd.f32 %v3077, %v3271
      %v3374 = vadd.f32 %v3078, %v3276
      %v3375 = vadd.f32 %v3079, %v3281
      %v3376 = vadd.f32 %v3080, %v3286
      %v3377 = vadd.f32 %v3081, %v3291
      %v3378 = vadd.f32 %v3082, %v3296
      %v3379 = vadd.f32 %v3083, %v3301
      %v3380 = vadd.f32 %v3084, %v3306
      %v3381 = vadd.f32 %v3085, %v3311
      %v3382 = vadd.f32 %v3086, %v3316
      %v3383 = vadd.f32 %v3087, %v3321
      %v3384 = vadd.f32 %v3088, %v3326
      %v3385 = vadd.f32 %v3089, %v3331
      %v3386 = vadd.f32 %v3090, %v3336
      %v3387 = vadd.f32 %v3091, %v3341
      %v3388 = vadd.f32 %v3092, %v3346
      %v3389 = vadd.f32 %v3093, %v3351
      %v3390 = vrot.slane %v678, 2
      %v3391 = vrot.slane %v679, 2
      %v3392 = vsel %vm1470, %v3390, %v3391
      %v3393 = vrot.slane %v680, 2
      %v3394 = vsel %vm1470, %v3391, %v3393
      %s3395 = scalar_lea.vmem %s3, 32
      %v3396 = vld [vmem:[%s3395] sm:$0xf]
      %v3397 = vsel %vm461, %v3392, 0
      %v3399 = vsel %vm461, %v3394, 0
      %v3402 = vsel %vm901, %v3396, 0
      %3404 = vmatprep.subr.mxu0 0.0
      %3405 = vmatpush1.msra.mxu0 0.0
      %3406 = vmatprep.subr.mxu0 0.0
      %3407 = vmatpush1.msra.mxu0 0.0
      %3408 = vmatprep.subr.mxu0 0.0
      %3409 = vmatpush1.msra.mxu0 0.0
      %3410 = vmatprep.subr.mxu0 0.0
      %3411 = vmatpush1.msra.mxu0 0.0
      %3412 = vmatprep.subr.mxu0 0.0
      %3413 = vmatpush1.msra.mxu0 0.0
      %3414 = vmatprep.subr.mxu0 0.0
      %3415 = vmatpush1.msra.mxu0 0.0
      %3416 = vmatprep.subr.mxu0 0.0
      %3417 = vmatpush1.msra.mxu0 0.0
      %3418 = vmatprep.subr.mxu0 0.0
      %3419 = vmatpush1.msra.mxu0 0.0
      %3420 = vmatprep.subr.mxu0 0.0
      %3421 = vmatpush1.msra.mxu0 0.0
      %3422 = vmatprep.subr.mxu0 0.0
      %3423 = vmatpush1.msra.mxu0 0.0
      %3424 = vmatprep.subr.mxu0 0.0
      %3425 = vmatpush1.msra.mxu0 0.0
      %3426 = vmatprep.subr.mxu0 0.0
      %3427 = vmatpush1.msra.mxu0 0.0
      %3428 = vmatprep.subr.mxu0 0.0
      %3429 = vmatpush1.msra.mxu0 0.0
      %3430 = vmatprep.subr.mxu0 0.0
      %3431 = vmatpush1.msra.mxu0 0.0
      %3432 = vmatprep.subr.mxu0 0.0
      %3433 = vmatpush1.msra.mxu0 0.0
      %3434 = vmatprep.subr.mxu0 0.0
      %3435 = vmatpush1.msra.mxu0 %v3402
      %3436 = vmatprep.subr.mxu0 0.0
      %3437 = vmatpush2.msra.mxu0 0.0
      %3438 = vmatprep.subr.mxu0 0.0
      %3439 = vmatpush2.msra.mxu0 0.0
      %3440 = vmatprep.subr.mxu0 0.0
      %3441 = vmatpush2.msra.mxu0 0.0
      %3442 = vmatprep.subr.mxu0 0.0
      %3443 = vmatpush2.msra.mxu0 0.0
      %3444 = vmatprep.subr.mxu0 0.0
      %3445 = vmatpush2.msra.mxu0 0.0
      %3446 = vmatprep.subr.mxu0 0.0
      %3447 = vmatpush2.msra.mxu0 0.0
      %3448 = vmatprep.subr.mxu0 0.0
      %3449 = vmatpush2.msra.mxu0 0.0
      %3450 = vmatprep.subr.mxu0 0.0
      %3451 = vmatpush2.msra.mxu0 0.0
      %3452 = vmatprep.subr.mxu0 0.0
      %3453 = vmatpush2.msra.mxu0 0.0
      %3454 = vmatprep.subr.mxu0 0.0
      %3455 = vmatpush2.msra.mxu0 0.0
      %3456 = vmatprep.subr.mxu0 0.0
      %3457 = vmatpush2.msra.mxu0 0.0
      %3458 = vmatprep.subr.mxu0 0.0
      %3459 = vmatpush2.msra.mxu0 0.0
      %3460 = vmatprep.subr.mxu0 0.0
      %3461 = vmatpush2.msra.mxu0 0.0
      %3462 = vmatprep.subr.mxu0 0.0
      %3463 = vmatpush2.msra.mxu0 0.0
      %3464 = vmatprep.subr.mxu0 0.0
      %3465 = vmatpush2.msra.mxu0 0.0
      %3466 = vmatprep.subr.mxu0 0.0
      %3467 = vmatpush2.msra.mxu0 0.0
      %3468 = vmatprep.mubr.f32.mxu0 0.0
      %3469 = vmatmul.mubr.f32.gmra.mxu0 %v1571
      %v3470 = vpop.f32.mrf.mxu0
      %v3471 = vadd.f32 0.0, %v3470
      %v3472 = vpop.f32.mrf.mxu0
      %3473 = vmatprep.mubr.f32.mxu0 0.0
      %3474 = vmatmul.mubr.f32.gmra.mxu0 %v1573
      %v3475 = vpop.f32.mrf.mxu0
      %v3476 = vadd.f32 0.0, %v3475
      %v3477 = vpop.f32.mrf.mxu0
      %3478 = vmatprep.mubr.f32.mxu0 0.0
      %3479 = vmatmul.mubr.f32.gmra.mxu0 %v1575
      %v3480 = vpop.f32.mrf.mxu0
      %v3481 = vadd.f32 0.0, %v3480
      %v3482 = vpop.f32.mrf.mxu0
      %3483 = vmatprep.mubr.f32.mxu0 0.0
      %3484 = vmatmul.mubr.f32.gmra.mxu0 %v1577
      %v3485 = vpop.f32.mrf.mxu0
      %v3486 = vadd.f32 0.0, %v3485
      %v3487 = vpop.f32.mrf.mxu0
      %3488 = vmatprep.mubr.f32.mxu0 0.0
      %3489 = vmatmul.mubr.f32.gmra.mxu0 %v1579
      %v3490 = vpop.f32.mrf.mxu0
      %v3491 = vadd.f32 0.0, %v3490
      %v3492 = vpop.f32.mrf.mxu0
      %3493 = vmatprep.mubr.f32.mxu0 0.0
      %3494 = vmatmul.mubr.f32.gmra.mxu0 %v1581
      %v3495 = vpop.f32.mrf.mxu0
      %v3496 = vadd.f32 0.0, %v3495
      %v3497 = vpop.f32.mrf.mxu0
      %3498 = vmatprep.mubr.f32.mxu0 0.0
      %3499 = vmatmul.mubr.f32.gmra.mxu0 %v1583
      %v3500 = vpop.f32.mrf.mxu0
      %v3501 = vadd.f32 0.0, %v3500
      %v3502 = vpop.f32.mrf.mxu0
      %3503 = vmatprep.mubr.f32.mxu0 0.0
      %3504 = vmatmul.mubr.f32.gmra.mxu0 %v1585
      %v3505 = vpop.f32.mrf.mxu0
      %v3506 = vadd.f32 0.0, %v3505
      %v3507 = vpop.f32.mrf.mxu0
      %3508 = vmatprep.mubr.f32.mxu0 0.0
      %3509 = vmatmul.mubr.f32.gmra.mxu0 %v1587
      %v3510 = vpop.f32.mrf.mxu0
      %v3511 = vadd.f32 0.0, %v3510
      %v3512 = vpop.f32.mrf.mxu0
      %3513 = vmatprep.mubr.f32.mxu0 0.0
      %3514 = vmatmul.mubr.f32.gmra.mxu0 %v1589
      %v3515 = vpop.f32.mrf.mxu0
      %v3516 = vadd.f32 0.0, %v3515
      %v3517 = vpop.f32.mrf.mxu0
      %3518 = vmatprep.mubr.f32.mxu0 0.0
      %3519 = vmatmul.mubr.f32.gmra.mxu0 %v1591
      %v3520 = vpop.f32.mrf.mxu0
      %v3521 = vadd.f32 0.0, %v3520
      %v3522 = vpop.f32.mrf.mxu0
      %3523 = vmatprep.mubr.f32.mxu0 0.0
      %3524 = vmatmul.mubr.f32.gmra.mxu0 %v1593
      %v3525 = vpop.f32.mrf.mxu0
      %v3526 = vadd.f32 0.0, %v3525
      %v3527 = vpop.f32.mrf.mxu0
      %3528 = vmatprep.mubr.f32.mxu0 0.0
      %3529 = vmatmul.mubr.f32.gmra.mxu0 %v1595
      %v3530 = vpop.f32.mrf.mxu0
      %v3531 = vadd.f32 0.0, %v3530
      %v3532 = vpop.f32.mrf.mxu0
      %3533 = vmatprep.mubr.f32.mxu0 0.0
      %3534 = vmatmul.mubr.f32.gmra.mxu0 %v1597
      %v3535 = vpop.f32.mrf.mxu0
      %v3536 = vadd.f32 0.0, %v3535
      %v3537 = vpop.f32.mrf.mxu0
      %3538 = vmatprep.mubr.f32.mxu0 0.0
      %3539 = vmatmul.mubr.f32.gmra.mxu0 %v1599
      %v3540 = vpop.f32.mrf.mxu0
      %v3541 = vadd.f32 0.0, %v3540
      %v3542 = vpop.f32.mrf.mxu0
      %3543 = vmatprep.mubr.f32.mxu0 0.0
      %3544 = vmatmul.mubr.f32.gmra.mxu0 %v1601
      %v3545 = vpop.f32.mrf.mxu0
      %v3546 = vadd.f32 0.0, %v3545
      %v3547 = vpop.f32.mrf.mxu0
      %3548 = vmatprep.mubr.f32.mxu0 0.0
      %3549 = vmatmul.mubr.f32.gmra.mxu0 %v1603
      %v3550 = vpop.f32.mrf.mxu0
      %v3551 = vadd.f32 0.0, %v3550
      %v3552 = vpop.f32.mrf.mxu0
      %3553 = vmatprep.mubr.f32.mxu0 0.0
      %3554 = vmatmul.mubr.f32.gmra.mxu0 %v1605
      %v3555 = vpop.f32.mrf.mxu0
      %v3556 = vadd.f32 0.0, %v3555
      %v3557 = vpop.f32.mrf.mxu0
      %3558 = vmatprep.mubr.f32.mxu0 0.0
      %3559 = vmatmul.mubr.f32.gmra.mxu0 %v1607
      %v3560 = vpop.f32.mrf.mxu0
      %v3561 = vadd.f32 0.0, %v3560
      %v3562 = vpop.f32.mrf.mxu0
      %3563 = vmatprep.mubr.f32.mxu0 0.0
      %3564 = vmatmul.mubr.f32.gmra.mxu0 %v1609
      %v3565 = vpop.f32.mrf.mxu0
      %v3566 = vadd.f32 0.0, %v3565
      %v3567 = vpop.f32.mrf.mxu0
      %3568 = vmatprep.mubr.f32.mxu0 0.0
      %3569 = vmatmul.mubr.f32.gmra.mxu0 %v1611
      %v3570 = vpop.f32.mrf.mxu0
      %v3571 = vadd.f32 0.0, %v3570
      %v3572 = vpop.f32.mrf.mxu0
      %3573 = vmatprep.mubr.f32.mxu0 0.0
      %3574 = vmatmul.mubr.f32.gmra.mxu0 %v1613
      %v3575 = vpop.f32.mrf.mxu0
      %v3576 = vadd.f32 0.0, %v3575
      %v3577 = vpop.f32.mrf.mxu0
      %3578 = vmatprep.mubr.f32.mxu0 0.0
      %3579 = vmatmul.mubr.f32.gmra.mxu0 %v1615
      %v3580 = vpop.f32.mrf.mxu0
      %v3581 = vadd.f32 0.0, %v3580
      %v3582 = vpop.f32.mrf.mxu0
      %3583 = vmatprep.mubr.f32.mxu0 0.0
      %3584 = vmatmul.mubr.f32.gmra.mxu0 %v1617
      %v3585 = vpop.f32.mrf.mxu0
      %v3586 = vadd.f32 0.0, %v3585
      %v3587 = vpop.f32.mrf.mxu0
      %3588 = vmatprep.mubr.f32.mxu0 0.0
      %3589 = vmatmul.mubr.f32.gmra.mxu0 %v1619
      %v3590 = vpop.f32.mrf.mxu0
      %v3591 = vadd.f32 0.0, %v3590
      %v3592 = vpop.f32.mrf.mxu0
      %3593 = vmatprep.mubr.f32.mxu0 0.0
      %3594 = vmatmul.mubr.f32.gmra.mxu0 %v1621
      %v3595 = vpop.f32.mrf.mxu0
      %v3596 = vadd.f32 0.0, %v3595
      %v3597 = vpop.f32.mrf.mxu0
      %3598 = vmatprep.mubr.f32.mxu0 0.0
      %3599 = vmatmul.mubr.f32.gmra.mxu0 %v1623
      %v3600 = vpop.f32.mrf.mxu0
      %v3601 = vadd.f32 0.0, %v3600
      %v3602 = vpop.f32.mrf.mxu0
      %3603 = vmatprep.mubr.f32.mxu0 0.0
      %3604 = vmatmul.mubr.f32.gmra.mxu0 %v1625
      %v3605 = vpop.f32.mrf.mxu0
      %v3606 = vadd.f32 0.0, %v3605
      %v3607 = vpop.f32.mrf.mxu0
      %3608 = vmatprep.mubr.f32.mxu0 0.0
      %3609 = vmatmul.mubr.f32.gmra.mxu0 %v1627
      %v3610 = vpop.f32.mrf.mxu0
      %v3611 = vadd.f32 0.0, %v3610
      %v3612 = vpop.f32.mrf.mxu0
      %3613 = vmatprep.mubr.f32.mxu0 0.0
      %3614 = vmatmul.mubr.f32.gmra.mxu0 %v1629
      %v3615 = vpop.f32.mrf.mxu0
      %v3616 = vadd.f32 0.0, %v3615
      %v3617 = vpop.f32.mrf.mxu0
      %3618 = vmatprep.mubr.f32.mxu0 0.0
      %3619 = vmatmul.mubr.f32.gmra.mxu0 %v1631
      %v3620 = vpop.f32.mrf.mxu0
      %v3621 = vadd.f32 0.0, %v3620
      %v3622 = vpop.f32.mrf.mxu0
      %3623 = vmatprep.mubr.f32.mxu0 0.0
      %3624 = vmatmul.mubr.f32.gmra.mxu0 %v1633
      %v3625 = vpop.f32.mrf.mxu0
      %v3626 = vadd.f32 0.0, %v3625
      %v3627 = vpop.f32.mrf.mxu0
      %3628 = vmatprep.mubr.f32.mxu0 0.0
      %3629 = vmatmul.mubr.f32.gmra.mxu0 %v2514
      %v3630 = vpop.f32.mrf.mxu0
      %v3631 = vadd.f32 0.0, %v3630
      %v3632 = vpop.f32.mrf.mxu0
      %3633 = vmatprep.mubr.f32.mxu0 0.0
      %3634 = vmatmul.mubr.f32.gmra.mxu0 %v2516
      %v3635 = vpop.f32.mrf.mxu0
      %v3636 = vadd.f32 0.0, %v3635
      %v3637 = vpop.f32.mrf.mxu0
      %3638 = vmatprep.mubr.f32.mxu0 0.0
      %3639 = vmatmul.mubr.f32.gmra.mxu0 %v3397
      %v3640 = vpop.f32.mrf.mxu0
      %v3641 = vadd.f32 0.0, %v3640
      %v3642 = vpop.f32.mrf.mxu0
      %3643 = vmatprep.mubr.f32.mxu0 0.0
      %3644 = vmatmul.mubr.f32.gmra.mxu0 %v3399
      %v3645 = vpop.f32.mrf.mxu0
      %v3646 = vadd.f32 0.0, %v3645
      %v3647 = vpop.f32.mrf.mxu0
      %3648 = vdwg.mxu0
      %v3649 = vadd.f32 %v3354, %v3471
      %v3650 = vadd.f32 %v3355, %v3476
      %v3651 = vadd.f32 %v3356, %v3481
      %v3652 = vadd.f32 %v3357, %v3486
      %v3653 = vadd.f32 %v3358, %v3491
      %v3654 = vadd.f32 %v3359, %v3496
      %v3655 = vadd.f32 %v3360, %v3501
      %v3656 = vadd.f32 %v3361, %v3506
      %v3657 = vadd.f32 %v3362, %v3511
      %v3658 = vadd.f32 %v3363, %v3516
      %v3659 = vadd.f32 %v3364, %v3521
      %v3660 = vadd.f32 %v3365, %v3526
      %v3661 = vadd.f32 %v3366, %v3531
      %v3662 = vadd.f32 %v3367, %v3536
      %v3663 = vadd.f32 %v3368, %v3541
      %v3664 = vadd.f32 %v3369, %v3546
      %v3665 = vadd.f32 %v3370, %v3551
      %v3666 = vadd.f32 %v3371, %v3556
      %v3667 = vadd.f32 %v3372, %v3561
      %v3668 = vadd.f32 %v3373, %v3566
      %v3669 = vadd.f32 %v3374, %v3571
      %v3670 = vadd.f32 %v3375, %v3576
      %v3671 = vadd.f32 %v3376, %v3581
      %v3672 = vadd.f32 %v3377, %v3586
      %v3673 = vadd.f32 %v3378, %v3591
      %v3674 = vadd.f32 %v3379, %v3596
      %v3675 = vadd.f32 %v3380, %v3601
      %v3676 = vadd.f32 %v3381, %v3606
      %v3677 = vadd.f32 %v3382, %v3611
      %v3678 = vadd.f32 %v3383, %v3616
      %v3679 = vadd.f32 %v3384, %v3621
      %v3680 = vadd.f32 %v3385, %v3626
      %v3681 = vadd.f32 %v3386, %v3631
      %v3682 = vadd.f32 %v3387, %v3636
      %v3683 = vadd.f32 %v3388, %v3641
      %v3684 = vadd.f32 %v3389, %v3646
      %v3685 = vld [vmem:[%s5] sm:$0x1]
      %v3687 = vlaneseq
      %v3688 = vshrl.u32 %v3687, 7
      %v3689 = vsub.s32 0, %v3688
      %v3690 = vrot.slane %v3685, %v3689
      %v3692 = vadd.f32 %v3649, %v3690
      %v3693 = vadd.f32 %v3650, %v3690
      %v3694 = vadd.f32 %v3651, %v3690
      %v3695 = vadd.f32 %v3652, %v3690
      %v3696 = vadd.f32 %v3653, %v3690
      %v3697 = vadd.f32 %v3654, %v3690
      %v3698 = vadd.f32 %v3655, %v3690
      %v3699 = vadd.f32 %v3656, %v3690
      %v3700 = vadd.f32 %v3657, %v3690
      %v3701 = vadd.f32 %v3658, %v3690
      %v3702 = vadd.f32 %v3659, %v3690
      %v3703 = vadd.f32 %v3660, %v3690
      %v3704 = vadd.f32 %v3661, %v3690
      %v3705 = vadd.f32 %v3662, %v3690
      %v3706 = vadd.f32 %v3663, %v3690
      %v3707 = vadd.f32 %v3664, %v3690
      %v3708 = vadd.f32 %v3665, %v3690
      %v3709 = vadd.f32 %v3666, %v3690
      %v3710 = vadd.f32 %v3667, %v3690
      %v3711 = vadd.f32 %v3668, %v3690
      %v3712 = vadd.f32 %v3669, %v3690
      %v3713 = vadd.f32 %v3670, %v3690
      %v3714 = vadd.f32 %v3671, %v3690
      %v3715 = vadd.f32 %v3672, %v3690
      %v3716 = vadd.f32 %v3673, %v3690
      %v3717 = vadd.f32 %v3674, %v3690
      %v3718 = vadd.f32 %v3675, %v3690
      %v3719 = vadd.f32 %v3676, %v3690
      %v3720 = vadd.f32 %v3677, %v3690
      %v3721 = vadd.f32 %v3678, %v3690
      %v3722 = vadd.f32 %v3679, %v3690
      %v3723 = vadd.f32 %v3680, %v3690
      %v3724 = vadd.f32 %v3681, %v3690
      %v3725 = vadd.f32 %v3682, %v3690
      %v3726 = vadd.f32 %v3683, %v3690
      %v3727 = vadd.f32 %v3684, %v3690
      %v3728 = vmax.f32 %v3692, 0.0
      %v3729 = vmax.f32 %v3693, 0.0
      %v3730 = vmax.f32 %v3694, 0.0
      %v3731 = vmax.f32 %v3695, 0.0
      %v3732 = vmax.f32 %v3696, 0.0
      %v3733 = vmax.f32 %v3697, 0.0
      %v3734 = vmax.f32 %v3698, 0.0
      %v3735 = vmax.f32 %v3699, 0.0
      %v3736 = vmax.f32 %v3700, 0.0
      %v3737 = vmax.f32 %v3701, 0.0
      %v3738 = vmax.f32 %v3702, 0.0
      %v3739 = vmax.f32 %v3703, 0.0
      %v3740 = vmax.f32 %v3704, 0.0
      %v3741 = vmax.f32 %v3705, 0.0
      %v3742 = vmax.f32 %v3706, 0.0
      %v3743 = vmax.f32 %v3707, 0.0
      %v3744 = vmax.f32 %v3708, 0.0
      %v3745 = vmax.f32 %v3709, 0.0
      %v3746 = vmax.f32 %v3710, 0.0
      %v3747 = vmax.f32 %v3711, 0.0
      %v3748 = vmax.f32 %v3712, 0.0
      %v3749 = vmax.f32 %v3713, 0.0
      %v3750 = vmax.f32 %v3714, 0.0
      %v3751 = vmax.f32 %v3715, 0.0
      %v3752 = vmax.f32 %v3716, 0.0
      %v3753 = vmax.f32 %v3717, 0.0
      %v3754 = vmax.f32 %v3718, 0.0
      %v3755 = vmax.f32 %v3719, 0.0
      %v3756 = vmax.f32 %v3720, 0.0
      %v3757 = vmax.f32 %v3721, 0.0
      %v3758 = vmax.f32 %v3722, 0.0
      %v3759 = vmax.f32 %v3723, 0.0
      %v3760 = vmax.f32 %v3724, 0.0
      %v3761 = vmax.f32 %v3725, 0.0
      %v3762 = vmax.f32 %v3726, 0.0
      %v3763 = vmax.f32 %v3727, 0.0
      %3764 = vst.msk [vmem:[#allocation3 + $0x1] sm:$0xff] %vm461, %v3728
      %3765 = vst.msk [vmem:[#allocation3 + $0x9] sm:$0xff] %vm461, %v3729
      %3766 = vst.msk [vmem:[#allocation3 + $0x19] sm:$0xff] %vm461, %v3730
      %3767 = vst.msk [vmem:[#allocation3 + $0x21] sm:$0xff] %vm461, %v3731
      %3768 = vst.msk [vmem:[#allocation3 + $0x31] sm:$0xff] %vm461, %v3732
      %3769 = vst.msk [vmem:[#allocation3 + $0x39] sm:$0xff] %vm461, %v3733
      %3770 = vst.msk [vmem:[#allocation3 + $0x49] sm:$0xff] %vm461, %v3734
      %3771 = vst.msk [vmem:[#allocation3 + $0x51] sm:$0xff] %vm461, %v3735
      %3772 = vst.msk [vmem:[#allocation3 + $0x61] sm:$0xff] %vm461, %v3736
      %3773 = vst.msk [vmem:[#allocation3 + $0x69] sm:$0xff] %vm461, %v3737
      %3774 = vst.msk [vmem:[#allocation3 + $0x79] sm:$0xff] %vm461, %v3738
      %3775 = vst.msk [vmem:[#allocation3 + $0x81] sm:$0xff] %vm461, %v3739
      %3776 = vst.msk [vmem:[#allocation3 + $0x91] sm:$0xff] %vm461, %v3740
      %3777 = vst.msk [vmem:[#allocation3 + $0x99] sm:$0xff] %vm461, %v3741
      %3778 = vst.msk [vmem:[#allocation3 + $0xa9] sm:$0xff] %vm461, %v3742
      %3779 = vst.msk [vmem:[#allocation3 + $0xb1] sm:$0xff] %vm461, %v3743
      %3780 = vst.msk [vmem:[#allocation3 + $0xc1] sm:$0xff] %vm461, %v3744
      %3781 = vst.msk [vmem:[#allocation3 + $0xc9] sm:$0xff] %vm461, %v3745
      %3782 = vst.msk [vmem:[#allocation3 + $0xd9] sm:$0xff] %vm461, %v3746
      %3783 = vst.msk [vmem:[#allocation3 + $0xe1] sm:$0xff] %vm461, %v3747
      %3784 = vst.msk [vmem:[#allocation3 + $0xf1] sm:$0xff] %vm461, %v3748
      %3785 = vst.msk [vmem:[#allocation3 + $0xf9] sm:$0xff] %vm461, %v3749
      %3786 = vst.msk [vmem:[#allocation3 + $0x109] sm:$0xff] %vm461, %v3750
      %3787 = vst.msk [vmem:[#allocation3 + $0x111] sm:$0xff] %vm461, %v3751
      %3788 = vst.msk [vmem:[#allocation3 + $0x121] sm:$0xff] %vm461, %v3752
      %3789 = vst.msk [vmem:[#allocation3 + $0x129] sm:$0xff] %vm461, %v3753
      %3790 = vst.msk [vmem:[#allocation3 + $0x139] sm:$0xff] %vm461, %v3754
      %3791 = vst.msk [vmem:[#allocation3 + $0x141] sm:$0xff] %vm461, %v3755
      %3792 = vst.msk [vmem:[#allocation3 + $0x151] sm:$0xff] %vm461, %v3756
      %3793 = vst.msk [vmem:[#allocation3 + $0x159] sm:$0xff] %vm461, %v3757
      %3794 = vst.msk [vmem:[#allocation3 + $0x169] sm:$0xff] %vm461, %v3758
      %3795 = vst.msk [vmem:[#allocation3 + $0x171] sm:$0xff] %vm461, %v3759
      %3796 = vst.msk [vmem:[#allocation3 + $0x181] sm:$0xff] %vm461, %v3760
      %3797 = vst.msk [vmem:[#allocation3 + $0x189] sm:$0xff] %vm461, %v3761
      %3798 = vst.msk [vmem:[#allocation3 + $0x199] sm:$0xff] %vm461, %v3762
      %3799 = vst.msk [vmem:[#allocation3 + $0x1a1] sm:$0xff] %vm461, %v3763
      %vm3800 = vcmask 25601
      %3801 = vst.msk [vmem:[#allocation3 - $0x1] sm:$0x2] %vm3800, %v3728
      %3802 = vst.msk [vmem:[#allocation3 + $0x17] sm:$0x2] %vm3800, %v3730
      %3803 = vst.msk [vmem:[#allocation3 + $0x2f] sm:$0x2] %vm3800, %v3732
      %3804 = vst.msk [vmem:[#allocation3 + $0x47] sm:$0x2] %vm3800, %v3734
      %3805 = vst.msk [vmem:[#allocation3 + $0x5f] sm:$0x2] %vm3800, %v3736
      %3806 = vst.msk [vmem:[#allocation3 + $0x77] sm:$0x2] %vm3800, %v3738
      %3807 = vst.msk [vmem:[#allocation3 + $0x8f] sm:$0x2] %vm3800, %v3740
      %3808 = vst.msk [vmem:[#allocation3 + $0xa7] sm:$0x2] %vm3800, %v3742
      %3809 = vst.msk [vmem:[#allocation3 + $0xbf] sm:$0x2] %vm3800, %v3744
      %3810 = vst.msk [vmem:[#allocation3 + $0xd7] sm:$0x2] %vm3800, %v3746
      %3811 = vst.msk [vmem:[#allocation3 + $0xef] sm:$0x2] %vm3800, %v3748
      %3812 = vst.msk [vmem:[#allocation3 + $0x107] sm:$0x2] %vm3800, %v3750
      %3813 = vst.msk [vmem:[#allocation3 + $0x11f] sm:$0x2] %vm3800, %v3752
      %3814 = vst.msk [vmem:[#allocation3 + $0x137] sm:$0x2] %vm3800, %v3754
      %3815 = vst.msk [vmem:[#allocation3 + $0x14f] sm:$0x2] %vm3800, %v3756
      %3816 = vst.msk [vmem:[#allocation3 + $0x167] sm:$0x2] %vm3800, %v3758
      %3817 = vst.msk [vmem:[#allocation3 + $0x17f] sm:$0x2] %vm3800, %v3760
      %3818 = vst.msk [vmem:[#allocation3 + $0x197] sm:$0x2] %vm3800, %v3762
      %vm3819 = vcmask 30726
      %3820 = vst.msk [vmem:[#allocation3 + $0xb] sm:$0x40] %vm3819, %v3729
      %3821 = vst.msk [vmem:[#allocation3 + $0x23] sm:$0x40] %vm3819, %v3731
      %3822 = vst.msk [vmem:[#allocation3 + $0x3b] sm:$0x40] %vm3819, %v3733
      %3823 = vst.msk [vmem:[#allocation3 + $0x53] sm:$0x40] %vm3819, %v3735
      %3824 = vst.msk [vmem:[#allocation3 + $0x6b] sm:$0x40] %vm3819, %v3737
      %3825 = vst.msk [vmem:[#allocation3 + $0x83] sm:$0x40] %vm3819, %v3739
      %3826 = vst.msk [vmem:[#allocation3 + $0x9b] sm:$0x40] %vm3819, %v3741
      %3827 = vst.msk [vmem:[#allocation3 + $0xb3] sm:$0x40] %vm3819, %v3743
      %3828 = vst.msk [vmem:[#allocation3 + $0xcb] sm:$0x40] %vm3819, %v3745
      %3829 = vst.msk [vmem:[#allocation3 + $0xe3] sm:$0x40] %vm3819, %v3747
      %3830 = vst.msk [vmem:[#allocation3 + $0xfb] sm:$0x40] %vm3819, %v3749
      %3831 = vst.msk [vmem:[#allocation3 + $0x113] sm:$0x40] %vm3819, %v3751
      %3832 = vst.msk [vmem:[#allocation3 + $0x12b] sm:$0x40] %vm3819, %v3753
      %3833 = vst.msk [vmem:[#allocation3 + $0x143] sm:$0x40] %vm3819, %v3755
      %3834 = vst.msk [vmem:[#allocation3 + $0x15b] sm:$0x40] %vm3819, %v3757
      %3835 = vst.msk [vmem:[#allocation3 + $0x173] sm:$0x40] %vm3819, %v3759
      %3836 = vst.msk [vmem:[#allocation3 + $0x18b] sm:$0x40] %vm3819, %v3761
      %3837 = vst.msk [vmem:[#allocation3 + $0x1a3] sm:$0x40] %vm3819, %v3763
      %p3838 = scmp.eq.s32.totalorder %s23, 0
      // Predicated region
      $region49: #{resblock_forward.1} parent=47 // pred_check
        %p3839 = pneg %p3838
      $region50: #{resblock_forward.1} parent=47 // pred_check_branch
        %3841 = sbr.rel (%p3839) target = $region52
      $region51: #{resblock_forward.1} parent=47 // pred_region
        %s3842 = scalar_lea.vmem [#allocation3], 48
        %v3843 = vld [vmem:[%s3842] sm:$0xff]
        %v3844 = vld [vmem:[%s3842 + $0x8] sm:$0xff]
        %v3845 = vld [vmem:[%s3842 + $0x10] sm:$0xff]
        %3846 = vst.msk [vmem:[#allocation3] sm:$0xff] %vm461, %v3843
        %3847 = vst.msk [vmem:[#allocation3 + $0x8] sm:$0xff] %vm461, %v3844
        %3848 = vst.msk [vmem:[#allocation3 + $0x10] sm:$0xff] %vm461, %v3845
        %s3849 = scalar_lea.vmem [#allocation3], 360
        %v3850 = vld [vmem:[%s3849] sm:$0xff]
        %v3851 = vld [vmem:[%s3849 + $0x8] sm:$0xff]
        %v3852 = vld [vmem:[%s3849 + $0x10] sm:$0xff]
        %s3853 = scalar_lea.vmem [#allocation3], 408
        %3854 = vst.msk [vmem:[%s3853] sm:$0xff] %vm461, %v3850
        %3855 = vst.msk [vmem:[%s3853 + $0x8] sm:$0xff] %vm461, %v3851
        %3856 = vst.msk [vmem:[%s3853 + $0x10] sm:$0xff] %vm461, %v3852
      $region52: #{resblock_forward.1} parent=47 // pred_fallthru
        _
      %v3857 = vld [vmem:[#allocation3] sm:$0xff]
      %v3858 = vld [vmem:[#allocation3 + $0x8] sm:$0xff]
      %v3859 = vld [vmem:[#allocation3 + $0x10] sm:$0xff]
      %v3860 = vld [vmem:[#allocation3 + $0x18] sm:$0xff]
      %v3861 = vld [vmem:[#allocation3 + $0x20] sm:$0xff]
      %v3862 = vld [vmem:[#allocation3 + $0x28] sm:$0xff]
      %v3863 = vld [vmem:[#allocation3 + $0x30] sm:$0xff]
      %v3864 = vld [vmem:[#allocation3 + $0x38] sm:$0xff]
      %v3865 = vld [vmem:[#allocation3 + $0x40] sm:$0xff]
      %v3866 = vld [vmem:[#allocation3 + $0x48] sm:$0xff]
      %v3867 = vld [vmem:[#allocation3 + $0x50] sm:$0xff]
      %v3868 = vld [vmem:[#allocation3 + $0x58] sm:$0xff]
      %v3869 = vld [vmem:[#allocation3 + $0x60] sm:$0xff]
      %v3870 = vld [vmem:[#allocation3 + $0x68] sm:$0xff]
      %v3871 = vld [vmem:[#allocation3 + $0x70] sm:$0xff]
      %v3872 = vld [vmem:[#allocation3 + $0x78] sm:$0xff]
      %v3873 = vld [vmem:[#allocation3 + $0x80] sm:$0xff]
      %v3874 = vld [vmem:[#allocation3 + $0x88] sm:$0xff]
      %v3875 = vld [vmem:[#allocation3 + $0x90] sm:$0xff]
      %v3876 = vld [vmem:[#allocation3 + $0x98] sm:$0xff]
      %v3877 = vld [vmem:[#allocation3 + $0xa0] sm:$0xff]
      %v3878 = vld [vmem:[#allocation3 + $0xa8] sm:$0xff]
      %v3879 = vld [vmem:[#allocation3 + $0xb0] sm:$0xff]
      %v3880 = vld [vmem:[#allocation3 + $0xb8] sm:$0xff]
      %v3881 = vld [vmem:[#allocation3 + $0xc0] sm:$0xff]
      %v3882 = vld [vmem:[#allocation3 + $0xc8] sm:$0xff]
      %v3883 = vld [vmem:[#allocation3 + $0xd0] sm:$0xff]
      %v3884 = vld [vmem:[#allocation3 + $0xd8] sm:$0xff]
      %v3885 = vld [vmem:[#allocation3 + $0xe0] sm:$0xff]
      %v3886 = vld [vmem:[#allocation3 + $0xe8] sm:$0xff]
      %v3887 = vld [vmem:[#allocation3 + $0xf0] sm:$0xff]
      %v3888 = vld [vmem:[#allocation3 + $0xf8] sm:$0xff]
      %v3889 = vld [vmem:[#allocation3 + $0x100] sm:$0xff]
      %v3890 = vld [vmem:[#allocation3 + $0x108] sm:$0xff]
      %v3891 = vld [vmem:[#allocation3 + $0x110] sm:$0xff]
      %v3892 = vld [vmem:[#allocation3 + $0x118] sm:$0xff]
      %v3893 = vld [vmem:[#allocation3 + $0x120] sm:$0xff]
      %v3894 = vld [vmem:[#allocation3 + $0x128] sm:$0xff]
      %v3895 = vld [vmem:[#allocation3 + $0x130] sm:$0xff]
      %v3896 = vld [vmem:[#allocation3 + $0x138] sm:$0xff]
      %v3897 = vld [vmem:[#allocation3 + $0x140] sm:$0xff]
      %v3898 = vld [vmem:[#allocation3 + $0x148] sm:$0xff]
      %v3899 = vld [vmem:[#allocation3 + $0x150] sm:$0xff]
      %v3900 = vld [vmem:[#allocation3 + $0x158] sm:$0xff]
      %v3901 = vld [vmem:[#allocation3 + $0x160] sm:$0xff]
      %v3902 = vld [vmem:[#allocation3 + $0x168] sm:$0xff]
      %v3903 = vld [vmem:[#allocation3 + $0x170] sm:$0xff]
      %v3904 = vld [vmem:[#allocation3 + $0x178] sm:$0xff]
      %v3905 = vld [vmem:[#allocation3 + $0x180] sm:$0xff]
      %v3906 = vld [vmem:[#allocation3 + $0x188] sm:$0xff]
      %v3907 = vld [vmem:[#allocation3 + $0x190] sm:$0xff]
      %v3908 = vld [vmem:[#allocation3 + $0x198] sm:$0xff]
      %v3909 = vld [vmem:[#allocation3 + $0x1a0] sm:$0xff]
      %v3910 = vld [vmem:[#allocation3 + $0x1a8] sm:$0xff]
      %v3911 = vld [vmem:[%s4] sm:$0xf]
      %v3960 = vrot.slane %v3857, 1
      %v3961 = vrot.slane %v3858, 1
      %v3962 = vsel %vm736, %v3960, %v3961
      %v3963 = vrot.slane %v3859, 1
      %v3964 = vsel %vm736, %v3961, %v3963
      %v3965 = vrot.slane %v3860, 1
      %v3966 = vrot.slane %v3861, 1
      %v3967 = vsel %vm736, %v3965, %v3966
      %v3968 = vrot.slane %v3862, 1
      %v3969 = vsel %vm736, %v3966, %v3968
      %v3970 = vrot.slane %v3863, 1
      %v3971 = vrot.slane %v3864, 1
      %v3972 = vsel %vm736, %v3970, %v3971
      %v3973 = vrot.slane %v3865, 1
      %v3974 = vsel %vm736, %v3971, %v3973
      %v3975 = vrot.slane %v3866, 1
      %v3976 = vrot.slane %v3867, 1
      %v3977 = vsel %vm736, %v3975, %v3976
      %v3978 = vrot.slane %v3868, 1
      %v3979 = vsel %vm736, %v3976, %v3978
      %v3980 = vrot.slane %v3869, 1
      %v3981 = vrot.slane %v3870, 1
      %v3982 = vsel %vm736, %v3980, %v3981
      %v3983 = vrot.slane %v3871, 1
      %v3984 = vsel %vm736, %v3981, %v3983
      %v3985 = vrot.slane %v3872, 1
      %v3986 = vrot.slane %v3873, 1
      %v3987 = vsel %vm736, %v3985, %v3986
      %v3988 = vrot.slane %v3874, 1
      %v3989 = vsel %vm736, %v3986, %v3988
      %v3990 = vrot.slane %v3875, 1
      %v3991 = vrot.slane %v3876, 1
      %v3992 = vsel %vm736, %v3990, %v3991
      %v3993 = vrot.slane %v3877, 1
      %v3994 = vsel %vm736, %v3991, %v3993
      %v3995 = vrot.slane %v3878, 1
      %v3996 = vrot.slane %v3879, 1
      %v3997 = vsel %vm736, %v3995, %v3996
      %v3998 = vrot.slane %v3880, 1
      %v3999 = vsel %vm736, %v3996, %v3998
      %v4000 = vrot.slane %v3881, 1
      %v4001 = vrot.slane %v3882, 1
      %v4002 = vsel %vm736, %v4000, %v4001
      %v4003 = vrot.slane %v3883, 1
      %v4004 = vsel %vm736, %v4001, %v4003
      %v4005 = vrot.slane %v3884, 1
      %v4006 = vrot.slane %v3885, 1
      %v4007 = vsel %vm736, %v4005, %v4006
      %v4008 = vrot.slane %v3886, 1
      %v4009 = vsel %vm736, %v4006, %v4008
      %v4010 = vrot.slane %v3887, 1
      %v4011 = vrot.slane %v3888, 1
      %v4012 = vsel %vm736, %v4010, %v4011
      %v4013 = vrot.slane %v3889, 1
      %v4014 = vsel %vm736, %v4011, %v4013
      %v4015 = vrot.slane %v3890, 1
      %v4016 = vrot.slane %v3891, 1
      %v4017 = vsel %vm736, %v4015, %v4016
      %v4018 = vrot.slane %v3892, 1
      %v4019 = vsel %vm736, %v4016, %v4018
      %v4020 = vrot.slane %v3893, 1
      %v4021 = vrot.slane %v3894, 1
      %v4022 = vsel %vm736, %v4020, %v4021
      %v4023 = vrot.slane %v3895, 1
      %v4024 = vsel %vm736, %v4021, %v4023
      %v4025 = vrot.slane %v3896, 1
      %v4026 = vrot.slane %v3897, 1
      %v4027 = vsel %vm736, %v4025, %v4026
      %v4028 = vrot.slane %v3898, 1
      %v4029 = vsel %vm736, %v4026, %v4028
      %v4030 = vrot.slane %v3899, 1
      %v4031 = vrot.slane %v3900, 1
      %v4032 = vsel %vm736, %v4030, %v4031
      %v4033 = vrot.slane %v3901, 1
      %v4034 = vsel %vm736, %v4031, %v4033
      %v4035 = vrot.slane %v3902, 1
      %v4036 = vrot.slane %v3903, 1
      %v4037 = vsel %vm736, %v4035, %v4036
      %v4038 = vrot.slane %v3904, 1
      %v4039 = vsel %vm736, %v4036, %v4038
      %s4040 = scalar_lea.vmem %s4, 4
      %v4041 = vld [vmem:[%s4040] sm:$0xf]
      %v4042 = vsel %vm461, %v3962, 0
      %v4044 = vsel %vm461, %v3964, 0
      %v4046 = vsel %vm461, %v3967, 0
      %v4048 = vsel %vm461, %v3969, 0
      %v4050 = vsel %vm461, %v3972, 0
      %v4052 = vsel %vm461, %v3974, 0
      %v4054 = vsel %vm461, %v3977, 0
      %v4056 = vsel %vm461, %v3979, 0
      %v4058 = vsel %vm461, %v3982, 0
      %v4060 = vsel %vm461, %v3984, 0
      %v4062 = vsel %vm461, %v3987, 0
      %v4064 = vsel %vm461, %v3989, 0
      %v4066 = vsel %vm461, %v3992, 0
      %v4068 = vsel %vm461, %v3994, 0
      %v4070 = vsel %vm461, %v3997, 0
      %v4072 = vsel %vm461, %v3999, 0
      %v4074 = vsel %vm461, %v4002, 0
      %v4076 = vsel %vm461, %v4004, 0
      %v4078 = vsel %vm461, %v4007, 0
      %v4080 = vsel %vm461, %v4009, 0
      %v4082 = vsel %vm461, %v4012, 0
      %v4084 = vsel %vm461, %v4014, 0
      %v4086 = vsel %vm461, %v4017, 0
      %v4088 = vsel %vm461, %v4019, 0
      %v4090 = vsel %vm461, %v4022, 0
      %v4092 = vsel %vm461, %v4024, 0
      %v4094 = vsel %vm461, %v4027, 0
      %v4096 = vsel %vm461, %v4029, 0
      %v4098 = vsel %vm461, %v4032, 0
      %v4100 = vsel %vm461, %v4034, 0
      %v4102 = vsel %vm461, %v4037, 0
      %v4104 = vsel %vm461, %v4039, 0
      %v4107 = vsel %vm901, %v4041, 0
      %4109 = vmatprep.subr.mxu0 0.0
      %4110 = vmatpush1.msra.mxu0 0.0
      %4111 = vmatprep.subr.mxu0 0.0
      %4112 = vmatpush1.msra.mxu0 0.0
      %4113 = vmatprep.subr.mxu0 0.0
      %4114 = vmatpush1.msra.mxu0 0.0
      %4115 = vmatprep.subr.mxu0 0.0
      %4116 = vmatpush1.msra.mxu0 0.0
      %4117 = vmatprep.subr.mxu0 0.0
      %4118 = vmatpush1.msra.mxu0 0.0
      %4119 = vmatprep.subr.mxu0 0.0
      %4120 = vmatpush1.msra.mxu0 0.0
      %4121 = vmatprep.subr.mxu0 0.0
      %4122 = vmatpush1.msra.mxu0 0.0
      %4123 = vmatprep.subr.mxu0 0.0
      %4124 = vmatpush1.msra.mxu0 0.0
      %4125 = vmatprep.subr.mxu0 0.0
      %4126 = vmatpush1.msra.mxu0 0.0
      %4127 = vmatprep.subr.mxu0 0.0
      %4128 = vmatpush1.msra.mxu0 0.0
      %4129 = vmatprep.subr.mxu0 0.0
      %4130 = vmatpush1.msra.mxu0 0.0
      %4131 = vmatprep.subr.mxu0 0.0
      %4132 = vmatpush1.msra.mxu0 0.0
      %4133 = vmatprep.subr.mxu0 0.0
      %4134 = vmatpush1.msra.mxu0 0.0
      %4135 = vmatprep.subr.mxu0 0.0
      %4136 = vmatpush1.msra.mxu0 0.0
      %4137 = vmatprep.subr.mxu0 0.0
      %4138 = vmatpush1.msra.mxu0 0.0
      %4139 = vmatprep.subr.mxu0 0.0
      %4140 = vmatpush1.msra.mxu0 %v4107
      %4141 = vmatprep.subr.mxu0 0.0
      %4142 = vmatpush2.msra.mxu0 0.0
      %4143 = vmatprep.subr.mxu0 0.0
      %4144 = vmatpush2.msra.mxu0 0.0
      %4145 = vmatprep.subr.mxu0 0.0
      %4146 = vmatpush2.msra.mxu0 0.0
      %4147 = vmatprep.subr.mxu0 0.0
      %4148 = vmatpush2.msra.mxu0 0.0
      %4149 = vmatprep.subr.mxu0 0.0
      %4150 = vmatpush2.msra.mxu0 0.0
      %4151 = vmatprep.subr.mxu0 0.0
      %4152 = vmatpush2.msra.mxu0 0.0
      %4153 = vmatprep.subr.mxu0 0.0
      %4154 = vmatpush2.msra.mxu0 0.0
      %4155 = vmatprep.subr.mxu0 0.0
      %4156 = vmatpush2.msra.mxu0 0.0
      %4157 = vmatprep.subr.mxu0 0.0
      %4158 = vmatpush2.msra.mxu0 0.0
      %4159 = vmatprep.subr.mxu0 0.0
      %4160 = vmatpush2.msra.mxu0 0.0
      %4161 = vmatprep.subr.mxu0 0.0
      %4162 = vmatpush2.msra.mxu0 0.0
      %4163 = vmatprep.subr.mxu0 0.0
      %4164 = vmatpush2.msra.mxu0 0.0
      %4165 = vmatprep.subr.mxu0 0.0
      %4166 = vmatpush2.msra.mxu0 0.0
      %4167 = vmatprep.subr.mxu0 0.0
      %4168 = vmatpush2.msra.mxu0 0.0
      %4169 = vmatprep.subr.mxu0 0.0
      %4170 = vmatpush2.msra.mxu0 0.0
      %4171 = vmatprep.subr.mxu0 0.0
      %4172 = vmatpush2.msra.mxu0 0.0
      %4173 = vmatprep.mubr.f32.mxu0 0.0
      %4174 = vmatmul.mubr.f32.gmra.mxu0 %v4042
      %v4175 = vpop.f32.mrf.mxu0
      %v4176 = vadd.f32 0.0, %v4175
      %v4177 = vpop.f32.mrf.mxu0
      %4178 = vmatprep.mubr.f32.mxu0 0.0
      %4179 = vmatmul.mubr.f32.gmra.mxu0 %v4044
      %v4180 = vpop.f32.mrf.mxu0
      %v4181 = vadd.f32 0.0, %v4180
      %v4182 = vpop.f32.mrf.mxu0
      %4183 = vmatprep.mubr.f32.mxu0 0.0
      %4184 = vmatmul.mubr.f32.gmra.mxu0 %v4046
      %v4185 = vpop.f32.mrf.mxu0
      %v4186 = vadd.f32 0.0, %v4185
      %v4187 = vpop.f32.mrf.mxu0
      %4188 = vmatprep.mubr.f32.mxu0 0.0
      %4189 = vmatmul.mubr.f32.gmra.mxu0 %v4048
      %v4190 = vpop.f32.mrf.mxu0
      %v4191 = vadd.f32 0.0, %v4190
      %v4192 = vpop.f32.mrf.mxu0
      %4193 = vmatprep.mubr.f32.mxu0 0.0
      %4194 = vmatmul.mubr.f32.gmra.mxu0 %v4050
      %v4195 = vpop.f32.mrf.mxu0
      %v4196 = vadd.f32 0.0, %v4195
      %v4197 = vpop.f32.mrf.mxu0
      %4198 = vmatprep.mubr.f32.mxu0 0.0
      %4199 = vmatmul.mubr.f32.gmra.mxu0 %v4052
      %v4200 = vpop.f32.mrf.mxu0
      %v4201 = vadd.f32 0.0, %v4200
      %v4202 = vpop.f32.mrf.mxu0
      %4203 = vmatprep.mubr.f32.mxu0 0.0
      %4204 = vmatmul.mubr.f32.gmra.mxu0 %v4054
      %v4205 = vpop.f32.mrf.mxu0
      %v4206 = vadd.f32 0.0, %v4205
      %v4207 = vpop.f32.mrf.mxu0
      %4208 = vmatprep.mubr.f32.mxu0 0.0
      %4209 = vmatmul.mubr.f32.gmra.mxu0 %v4056
      %v4210 = vpop.f32.mrf.mxu0
      %v4211 = vadd.f32 0.0, %v4210
      %v4212 = vpop.f32.mrf.mxu0
      %4213 = vmatprep.mubr.f32.mxu0 0.0
      %4214 = vmatmul.mubr.f32.gmra.mxu0 %v4058
      %v4215 = vpop.f32.mrf.mxu0
      %v4216 = vadd.f32 0.0, %v4215
      %v4217 = vpop.f32.mrf.mxu0
      %4218 = vmatprep.mubr.f32.mxu0 0.0
      %4219 = vmatmul.mubr.f32.gmra.mxu0 %v4060
      %v4220 = vpop.f32.mrf.mxu0
      %v4221 = vadd.f32 0.0, %v4220
      %v4222 = vpop.f32.mrf.mxu0
      %4223 = vmatprep.mubr.f32.mxu0 0.0
      %4224 = vmatmul.mubr.f32.gmra.mxu0 %v4062
      %v4225 = vpop.f32.mrf.mxu0
      %v4226 = vadd.f32 0.0, %v4225
      %v4227 = vpop.f32.mrf.mxu0
      %4228 = vmatprep.mubr.f32.mxu0 0.0
      %4229 = vmatmul.mubr.f32.gmra.mxu0 %v4064
      %v4230 = vpop.f32.mrf.mxu0
      %v4231 = vadd.f32 0.0, %v4230
      %v4232 = vpop.f32.mrf.mxu0
      %4233 = vmatprep.mubr.f32.mxu0 0.0
      %4234 = vmatmul.mubr.f32.gmra.mxu0 %v4066
      %v4235 = vpop.f32.mrf.mxu0
      %v4236 = vadd.f32 0.0, %v4235
      %v4237 = vpop.f32.mrf.mxu0
      %4238 = vmatprep.mubr.f32.mxu0 0.0
      %4239 = vmatmul.mubr.f32.gmra.mxu0 %v4068
      %v4240 = vpop.f32.mrf.mxu0
      %v4241 = vadd.f32 0.0, %v4240
      %v4242 = vpop.f32.mrf.mxu0
      %4243 = vmatprep.mubr.f32.mxu0 0.0
      %4244 = vmatmul.mubr.f32.gmra.mxu0 %v4070
      %v4245 = vpop.f32.mrf.mxu0
      %v4246 = vadd.f32 0.0, %v4245
      %v4247 = vpop.f32.mrf.mxu0
      %4248 = vmatprep.mubr.f32.mxu0 0.0
      %4249 = vmatmul.mubr.f32.gmra.mxu0 %v4072
      %v4250 = vpop.f32.mrf.mxu0
      %v4251 = vadd.f32 0.0, %v4250
      %v4252 = vpop.f32.mrf.mxu0
      %4253 = vmatprep.mubr.f32.mxu0 0.0
      %4254 = vmatmul.mubr.f32.gmra.mxu0 %v4074
      %v4255 = vpop.f32.mrf.mxu0
      %v4256 = vadd.f32 0.0, %v4255
      %v4257 = vpop.f32.mrf.mxu0
      %4258 = vmatprep.mubr.f32.mxu0 0.0
      %4259 = vmatmul.mubr.f32.gmra.mxu0 %v4076
      %v4260 = vpop.f32.mrf.mxu0
      %v4261 = vadd.f32 0.0, %v4260
      %v4262 = vpop.f32.mrf.mxu0
      %4263 = vmatprep.mubr.f32.mxu0 0.0
      %4264 = vmatmul.mubr.f32.gmra.mxu0 %v4078
      %v4265 = vpop.f32.mrf.mxu0
      %v4266 = vadd.f32 0.0, %v4265
      %v4267 = vpop.f32.mrf.mxu0
      %4268 = vmatprep.mubr.f32.mxu0 0.0
      %4269 = vmatmul.mubr.f32.gmra.mxu0 %v4080
      %v4270 = vpop.f32.mrf.mxu0
      %v4271 = vadd.f32 0.0, %v4270
      %v4272 = vpop.f32.mrf.mxu0
      %4273 = vmatprep.mubr.f32.mxu0 0.0
      %4274 = vmatmul.mubr.f32.gmra.mxu0 %v4082
      %v4275 = vpop.f32.mrf.mxu0
      %v4276 = vadd.f32 0.0, %v4275
      %v4277 = vpop.f32.mrf.mxu0
      %4278 = vmatprep.mubr.f32.mxu0 0.0
      %4279 = vmatmul.mubr.f32.gmra.mxu0 %v4084
      %v4280 = vpop.f32.mrf.mxu0
      %v4281 = vadd.f32 0.0, %v4280
      %v4282 = vpop.f32.mrf.mxu0
      %4283 = vmatprep.mubr.f32.mxu0 0.0
      %4284 = vmatmul.mubr.f32.gmra.mxu0 %v4086
      %v4285 = vpop.f32.mrf.mxu0
      %v4286 = vadd.f32 0.0, %v4285
      %v4287 = vpop.f32.mrf.mxu0
      %4288 = vmatprep.mubr.f32.mxu0 0.0
      %4289 = vmatmul.mubr.f32.gmra.mxu0 %v4088
      %v4290 = vpop.f32.mrf.mxu0
      %v4291 = vadd.f32 0.0, %v4290
      %v4292 = vpop.f32.mrf.mxu0
      %4293 = vmatprep.mubr.f32.mxu0 0.0
      %4294 = vmatmul.mubr.f32.gmra.mxu0 %v4090
      %v4295 = vpop.f32.mrf.mxu0
      %v4296 = vadd.f32 0.0, %v4295
      %v4297 = vpop.f32.mrf.mxu0
      %4298 = vmatprep.mubr.f32.mxu0 0.0
      %4299 = vmatmul.mubr.f32.gmra.mxu0 %v4092
      %v4300 = vpop.f32.mrf.mxu0
      %v4301 = vadd.f32 0.0, %v4300
      %v4302 = vpop.f32.mrf.mxu0
      %4303 = vmatprep.mubr.f32.mxu0 0.0
      %4304 = vmatmul.mubr.f32.gmra.mxu0 %v4094
      %v4305 = vpop.f32.mrf.mxu0
      %v4306 = vadd.f32 0.0, %v4305
      %v4307 = vpop.f32.mrf.mxu0
      %4308 = vmatprep.mubr.f32.mxu0 0.0
      %4309 = vmatmul.mubr.f32.gmra.mxu0 %v4096
      %v4310 = vpop.f32.mrf.mxu0
      %v4311 = vadd.f32 0.0, %v4310
      %v4312 = vpop.f32.mrf.mxu0
      %4313 = vmatprep.mubr.f32.mxu0 0.0
      %4314 = vmatmul.mubr.f32.gmra.mxu0 %v4098
      %v4315 = vpop.f32.mrf.mxu0
      %v4316 = vadd.f32 0.0, %v4315
      %v4317 = vpop.f32.mrf.mxu0
      %4318 = vmatprep.mubr.f32.mxu0 0.0
      %4319 = vmatmul.mubr.f32.gmra.mxu0 %v4100
      %v4320 = vpop.f32.mrf.mxu0
      %v4321 = vadd.f32 0.0, %v4320
      %v4322 = vpop.f32.mrf.mxu0
      %4323 = vmatprep.mubr.f32.mxu0 0.0
      %4324 = vmatmul.mubr.f32.gmra.mxu0 %v4102
      %v4325 = vpop.f32.mrf.mxu0
      %v4326 = vadd.f32 0.0, %v4325
      %v4327 = vpop.f32.mrf.mxu0
      %4328 = vmatprep.mubr.f32.mxu0 0.0
      %4329 = vmatmul.mubr.f32.gmra.mxu0 %v4104
      %v4330 = vpop.f32.mrf.mxu0
      %v4331 = vadd.f32 0.0, %v4330
      %v4332 = vpop.f32.mrf.mxu0
      %4333 = vdwg.mxu0
      %v4334 = vsel %vm461, %v3857, 0
      %v4336 = vsel %vm461, %v3858, 0
      %v4338 = vsel %vm461, %v3860, 0
      %v4340 = vsel %vm461, %v3861, 0
      %v4342 = vsel %vm461, %v3863, 0
      %v4344 = vsel %vm461, %v3864, 0
      %v4346 = vsel %vm461, %v3866, 0
      %v4348 = vsel %vm461, %v3867, 0
      %v4350 = vsel %vm461, %v3869, 0
      %v4352 = vsel %vm461, %v3870, 0
      %v4354 = vsel %vm461, %v3872, 0
      %v4356 = vsel %vm461, %v3873, 0
      %v4358 = vsel %vm461, %v3875, 0
      %v4360 = vsel %vm461, %v3876, 0
      %v4362 = vsel %vm461, %v3878, 0
      %v4364 = vsel %vm461, %v3879, 0
      %v4366 = vsel %vm461, %v3881, 0
      %v4368 = vsel %vm461, %v3882, 0
      %v4370 = vsel %vm461, %v3884, 0
      %v4372 = vsel %vm461, %v3885, 0
      %v4374 = vsel %vm461, %v3887, 0
      %v4376 = vsel %vm461, %v3888, 0
      %v4378 = vsel %vm461, %v3890, 0
      %v4380 = vsel %vm461, %v3891, 0
      %v4382 = vsel %vm461, %v3893, 0
      %v4384 = vsel %vm461, %v3894, 0
      %v4386 = vsel %vm461, %v3896, 0
      %v4388 = vsel %vm461, %v3897, 0
      %v4390 = vsel %vm461, %v3899, 0
      %v4392 = vsel %vm461, %v3900, 0
      %v4394 = vsel %vm461, %v3902, 0
      %v4396 = vsel %vm461, %v3903, 0
      %v4399 = vsel %vm901, %v3911, 0
      %4401 = vmatprep.subr.mxu0 0.0
      %4402 = vmatpush1.msra.mxu0 0.0
      %4403 = vmatprep.subr.mxu0 0.0
      %4404 = vmatpush1.msra.mxu0 0.0
      %4405 = vmatprep.subr.mxu0 0.0
      %4406 = vmatpush1.msra.mxu0 0.0
      %4407 = vmatprep.subr.mxu0 0.0
      %4408 = vmatpush1.msra.mxu0 0.0
      %4409 = vmatprep.subr.mxu0 0.0
      %4410 = vmatpush1.msra.mxu0 0.0
      %4411 = vmatprep.subr.mxu0 0.0
      %4412 = vmatpush1.msra.mxu0 0.0
      %4413 = vmatprep.subr.mxu0 0.0
      %4414 = vmatpush1.msra.mxu0 0.0
      %4415 = vmatprep.subr.mxu0 0.0
      %4416 = vmatpush1.msra.mxu0 0.0
      %4417 = vmatprep.subr.mxu0 0.0
      %4418 = vmatpush1.msra.mxu0 0.0
      %4419 = vmatprep.subr.mxu0 0.0
      %4420 = vmatpush1.msra.mxu0 0.0
      %4421 = vmatprep.subr.mxu0 0.0
      %4422 = vmatpush1.msra.mxu0 0.0
      %4423 = vmatprep.subr.mxu0 0.0
      %4424 = vmatpush1.msra.mxu0 0.0
      %4425 = vmatprep.subr.mxu0 0.0
      %4426 = vmatpush1.msra.mxu0 0.0
      %4427 = vmatprep.subr.mxu0 0.0
      %4428 = vmatpush1.msra.mxu0 0.0
      %4429 = vmatprep.subr.mxu0 0.0
      %4430 = vmatpush1.msra.mxu0 0.0
      %4431 = vmatprep.subr.mxu0 0.0
      %4432 = vmatpush1.msra.mxu0 %v4399
      %4433 = vmatprep.subr.mxu0 0.0
      %4434 = vmatpush2.msra.mxu0 0.0
      %4435 = vmatprep.subr.mxu0 0.0
      %4436 = vmatpush2.msra.mxu0 0.0
      %4437 = vmatprep.subr.mxu0 0.0
      %4438 = vmatpush2.msra.mxu0 0.0
      %4439 = vmatprep.subr.mxu0 0.0
      %4440 = vmatpush2.msra.mxu0 0.0
      %4441 = vmatprep.subr.mxu0 0.0
      %4442 = vmatpush2.msra.mxu0 0.0
      %4443 = vmatprep.subr.mxu0 0.0
      %4444 = vmatpush2.msra.mxu0 0.0
      %4445 = vmatprep.subr.mxu0 0.0
      %4446 = vmatpush2.msra.mxu0 0.0
      %4447 = vmatprep.subr.mxu0 0.0
      %4448 = vmatpush2.msra.mxu0 0.0
      %4449 = vmatprep.subr.mxu0 0.0
      %4450 = vmatpush2.msra.mxu0 0.0
      %4451 = vmatprep.subr.mxu0 0.0
      %4452 = vmatpush2.msra.mxu0 0.0
      %4453 = vmatprep.subr.mxu0 0.0
      %4454 = vmatpush2.msra.mxu0 0.0
      %4455 = vmatprep.subr.mxu0 0.0
      %4456 = vmatpush2.msra.mxu0 0.0
      %4457 = vmatprep.subr.mxu0 0.0
      %4458 = vmatpush2.msra.mxu0 0.0
      %4459 = vmatprep.subr.mxu0 0.0
      %4460 = vmatpush2.msra.mxu0 0.0
      %4461 = vmatprep.subr.mxu0 0.0
      %4462 = vmatpush2.msra.mxu0 0.0
      %4463 = vmatprep.subr.mxu0 0.0
      %4464 = vmatpush2.msra.mxu0 0.0
      %4465 = vmatprep.mubr.f32.mxu0 0.0
      %4466 = vmatmul.mubr.f32.gmra.mxu0 %v4334
      %v4467 = vpop.f32.mrf.mxu0
      %v4468 = vadd.f32 %v4176, %v4467
      %v4469 = vpop.f32.mrf.mxu0
      %4470 = vmatprep.mubr.f32.mxu0 0.0
      %4471 = vmatmul.mubr.f32.gmra.mxu0 %v4336
      %v4472 = vpop.f32.mrf.mxu0
      %v4473 = vadd.f32 %v4181, %v4472
      %v4474 = vpop.f32.mrf.mxu0
      %4475 = vmatprep.mubr.f32.mxu0 0.0
      %4476 = vmatmul.mubr.f32.gmra.mxu0 %v4338
      %v4477 = vpop.f32.mrf.mxu0
      %v4478 = vadd.f32 %v4186, %v4477
      %v4479 = vpop.f32.mrf.mxu0
      %4480 = vmatprep.mubr.f32.mxu0 0.0
      %4481 = vmatmul.mubr.f32.gmra.mxu0 %v4340
      %v4482 = vpop.f32.mrf.mxu0
      %v4483 = vadd.f32 %v4191, %v4482
      %v4484 = vpop.f32.mrf.mxu0
      %4485 = vmatprep.mubr.f32.mxu0 0.0
      %4486 = vmatmul.mubr.f32.gmra.mxu0 %v4342
      %v4487 = vpop.f32.mrf.mxu0
      %v4488 = vadd.f32 %v4196, %v4487
      %v4489 = vpop.f32.mrf.mxu0
      %4490 = vmatprep.mubr.f32.mxu0 0.0
      %4491 = vmatmul.mubr.f32.gmra.mxu0 %v4344
      %v4492 = vpop.f32.mrf.mxu0
      %v4493 = vadd.f32 %v4201, %v4492
      %v4494 = vpop.f32.mrf.mxu0
      %4495 = vmatprep.mubr.f32.mxu0 0.0
      %4496 = vmatmul.mubr.f32.gmra.mxu0 %v4346
      %v4497 = vpop.f32.mrf.mxu0
      %v4498 = vadd.f32 %v4206, %v4497
      %v4499 = vpop.f32.mrf.mxu0
      %4500 = vmatprep.mubr.f32.mxu0 0.0
      %4501 = vmatmul.mubr.f32.gmra.mxu0 %v4348
      %v4502 = vpop.f32.mrf.mxu0
      %v4503 = vadd.f32 %v4211, %v4502
      %v4504 = vpop.f32.mrf.mxu0
      %4505 = vmatprep.mubr.f32.mxu0 0.0
      %4506 = vmatmul.mubr.f32.gmra.mxu0 %v4350
      %v4507 = vpop.f32.mrf.mxu0
      %v4508 = vadd.f32 %v4216, %v4507
      %v4509 = vpop.f32.mrf.mxu0
      %4510 = vmatprep.mubr.f32.mxu0 0.0
      %4511 = vmatmul.mubr.f32.gmra.mxu0 %v4352
      %v4512 = vpop.f32.mrf.mxu0
      %v4513 = vadd.f32 %v4221, %v4512
      %v4514 = vpop.f32.mrf.mxu0
      %4515 = vmatprep.mubr.f32.mxu0 0.0
      %4516 = vmatmul.mubr.f32.gmra.mxu0 %v4354
      %v4517 = vpop.f32.mrf.mxu0
      %v4518 = vadd.f32 %v4226, %v4517
      %v4519 = vpop.f32.mrf.mxu0
      %4520 = vmatprep.mubr.f32.mxu0 0.0
      %4521 = vmatmul.mubr.f32.gmra.mxu0 %v4356
      %v4522 = vpop.f32.mrf.mxu0
      %v4523 = vadd.f32 %v4231, %v4522
      %v4524 = vpop.f32.mrf.mxu0
      %4525 = vmatprep.mubr.f32.mxu0 0.0
      %4526 = vmatmul.mubr.f32.gmra.mxu0 %v4358
      %v4527 = vpop.f32.mrf.mxu0
      %v4528 = vadd.f32 %v4236, %v4527
      %v4529 = vpop.f32.mrf.mxu0
      %4530 = vmatprep.mubr.f32.mxu0 0.0
      %4531 = vmatmul.mubr.f32.gmra.mxu0 %v4360
      %v4532 = vpop.f32.mrf.mxu0
      %v4533 = vadd.f32 %v4241, %v4532
      %v4534 = vpop.f32.mrf.mxu0
      %4535 = vmatprep.mubr.f32.mxu0 0.0
      %4536 = vmatmul.mubr.f32.gmra.mxu0 %v4362
      %v4537 = vpop.f32.mrf.mxu0
      %v4538 = vadd.f32 %v4246, %v4537
      %v4539 = vpop.f32.mrf.mxu0
      %4540 = vmatprep.mubr.f32.mxu0 0.0
      %4541 = vmatmul.mubr.f32.gmra.mxu0 %v4364
      %v4542 = vpop.f32.mrf.mxu0
      %v4543 = vadd.f32 %v4251, %v4542
      %v4544 = vpop.f32.mrf.mxu0
      %4545 = vmatprep.mubr.f32.mxu0 0.0
      %4546 = vmatmul.mubr.f32.gmra.mxu0 %v4366
      %v4547 = vpop.f32.mrf.mxu0
      %v4548 = vadd.f32 %v4256, %v4547
      %v4549 = vpop.f32.mrf.mxu0
      %4550 = vmatprep.mubr.f32.mxu0 0.0
      %4551 = vmatmul.mubr.f32.gmra.mxu0 %v4368
      %v4552 = vpop.f32.mrf.mxu0
      %v4553 = vadd.f32 %v4261, %v4552
      %v4554 = vpop.f32.mrf.mxu0
      %4555 = vmatprep.mubr.f32.mxu0 0.0
      %4556 = vmatmul.mubr.f32.gmra.mxu0 %v4370
      %v4557 = vpop.f32.mrf.mxu0
      %v4558 = vadd.f32 %v4266, %v4557
      %v4559 = vpop.f32.mrf.mxu0
      %4560 = vmatprep.mubr.f32.mxu0 0.0
      %4561 = vmatmul.mubr.f32.gmra.mxu0 %v4372
      %v4562 = vpop.f32.mrf.mxu0
      %v4563 = vadd.f32 %v4271, %v4562
      %v4564 = vpop.f32.mrf.mxu0
      %4565 = vmatprep.mubr.f32.mxu0 0.0
      %4566 = vmatmul.mubr.f32.gmra.mxu0 %v4374
      %v4567 = vpop.f32.mrf.mxu0
      %v4568 = vadd.f32 %v4276, %v4567
      %v4569 = vpop.f32.mrf.mxu0
      %4570 = vmatprep.mubr.f32.mxu0 0.0
      %4571 = vmatmul.mubr.f32.gmra.mxu0 %v4376
      %v4572 = vpop.f32.mrf.mxu0
      %v4573 = vadd.f32 %v4281, %v4572
      %v4574 = vpop.f32.mrf.mxu0
      %4575 = vmatprep.mubr.f32.mxu0 0.0
      %4576 = vmatmul.mubr.f32.gmra.mxu0 %v4378
      %v4577 = vpop.f32.mrf.mxu0
      %v4578 = vadd.f32 %v4286, %v4577
      %v4579 = vpop.f32.mrf.mxu0
      %4580 = vmatprep.mubr.f32.mxu0 0.0
      %4581 = vmatmul.mubr.f32.gmra.mxu0 %v4380
      %v4582 = vpop.f32.mrf.mxu0
      %v4583 = vadd.f32 %v4291, %v4582
      %v4584 = vpop.f32.mrf.mxu0
      %4585 = vmatprep.mubr.f32.mxu0 0.0
      %4586 = vmatmul.mubr.f32.gmra.mxu0 %v4382
      %v4587 = vpop.f32.mrf.mxu0
      %v4588 = vadd.f32 %v4296, %v4587
      %v4589 = vpop.f32.mrf.mxu0
      %4590 = vmatprep.mubr.f32.mxu0 0.0
      %4591 = vmatmul.mubr.f32.gmra.mxu0 %v4384
      %v4592 = vpop.f32.mrf.mxu0
      %v4593 = vadd.f32 %v4301, %v4592
      %v4594 = vpop.f32.mrf.mxu0
      %4595 = vmatprep.mubr.f32.mxu0 0.0
      %4596 = vmatmul.mubr.f32.gmra.mxu0 %v4386
      %v4597 = vpop.f32.mrf.mxu0
      %v4598 = vadd.f32 %v4306, %v4597
      %v4599 = vpop.f32.mrf.mxu0
      %4600 = vmatprep.mubr.f32.mxu0 0.0
      %4601 = vmatmul.mubr.f32.gmra.mxu0 %v4388
      %v4602 = vpop.f32.mrf.mxu0
      %v4603 = vadd.f32 %v4311, %v4602
      %v4604 = vpop.f32.mrf.mxu0
      %4605 = vmatprep.mubr.f32.mxu0 0.0
      %4606 = vmatmul.mubr.f32.gmra.mxu0 %v4390
      %v4607 = vpop.f32.mrf.mxu0
      %v4608 = vadd.f32 %v4316, %v4607
      %v4609 = vpop.f32.mrf.mxu0
      %4610 = vmatprep.mubr.f32.mxu0 0.0
      %4611 = vmatmul.mubr.f32.gmra.mxu0 %v4392
      %v4612 = vpop.f32.mrf.mxu0
      %v4613 = vadd.f32 %v4321, %v4612
      %v4614 = vpop.f32.mrf.mxu0
      %4615 = vmatprep.mubr.f32.mxu0 0.0
      %4616 = vmatmul.mubr.f32.gmra.mxu0 %v4394
      %v4617 = vpop.f32.mrf.mxu0
      %v4618 = vadd.f32 %v4326, %v4617
      %v4619 = vpop.f32.mrf.mxu0
      %4620 = vmatprep.mubr.f32.mxu0 0.0
      %4621 = vmatmul.mubr.f32.gmra.mxu0 %v4396
      %v4622 = vpop.f32.mrf.mxu0
      %v4623 = vadd.f32 %v4331, %v4622
      %v4624 = vpop.f32.mrf.mxu0
      %4625 = vdwg.mxu0
      %v4626 = vrot.slane %v3857, 2
      %v4627 = vrot.slane %v3858, 2
      %v4628 = vsel %vm1470, %v4626, %v4627
      %v4629 = vrot.slane %v3859, 2
      %v4630 = vsel %vm1470, %v4627, %v4629
      %v4631 = vrot.slane %v3860, 2
      %v4632 = vrot.slane %v3861, 2
      %v4633 = vsel %vm1470, %v4631, %v4632
      %v4634 = vrot.slane %v3862, 2
      %v4635 = vsel %vm1470, %v4632, %v4634
      %v4636 = vrot.slane %v3863, 2
      %v4637 = vrot.slane %v3864, 2
      %v4638 = vsel %vm1470, %v4636, %v4637
      %v4639 = vrot.slane %v3865, 2
      %v4640 = vsel %vm1470, %v4637, %v4639
      %v4641 = vrot.slane %v3866, 2
      %v4642 = vrot.slane %v3867, 2
      %v4643 = vsel %vm1470, %v4641, %v4642
      %v4644 = vrot.slane %v3868, 2
      %v4645 = vsel %vm1470, %v4642, %v4644
      %v4646 = vrot.slane %v3869, 2
      %v4647 = vrot.slane %v3870, 2
      %v4648 = vsel %vm1470, %v4646, %v4647
      %v4649 = vrot.slane %v3871, 2
      %v4650 = vsel %vm1470, %v4647, %v4649
      %v4651 = vrot.slane %v3872, 2
      %v4652 = vrot.slane %v3873, 2
      %v4653 = vsel %vm1470, %v4651, %v4652
      %v4654 = vrot.slane %v3874, 2
      %v4655 = vsel %vm1470, %v4652, %v4654
      %v4656 = vrot.slane %v3875, 2
      %v4657 = vrot.slane %v3876, 2
      %v4658 = vsel %vm1470, %v4656, %v4657
      %v4659 = vrot.slane %v3877, 2
      %v4660 = vsel %vm1470, %v4657, %v4659
      %v4661 = vrot.slane %v3878, 2
      %v4662 = vrot.slane %v3879, 2
      %v4663 = vsel %vm1470, %v4661, %v4662
      %v4664 = vrot.slane %v3880, 2
      %v4665 = vsel %vm1470, %v4662, %v4664
      %v4666 = vrot.slane %v3881, 2
      %v4667 = vrot.slane %v3882, 2
      %v4668 = vsel %vm1470, %v4666, %v4667
      %v4669 = vrot.slane %v3883, 2
      %v4670 = vsel %vm1470, %v4667, %v4669
      %v4671 = vrot.slane %v3884, 2
      %v4672 = vrot.slane %v3885, 2
      %v4673 = vsel %vm1470, %v4671, %v4672
      %v4674 = vrot.slane %v3886, 2
      %v4675 = vsel %vm1470, %v4672, %v4674
      %v4676 = vrot.slane %v3887, 2
      %v4677 = vrot.slane %v3888, 2
      %v4678 = vsel %vm1470, %v4676, %v4677
      %v4679 = vrot.slane %v3889, 2
      %v4680 = vsel %vm1470, %v4677, %v4679
      %v4681 = vrot.slane %v3890, 2
      %v4682 = vrot.slane %v3891, 2
      %v4683 = vsel %vm1470, %v4681, %v4682
      %v4684 = vrot.slane %v3892, 2
      %v4685 = vsel %vm1470, %v4682, %v4684
      %v4686 = vrot.slane %v3893, 2
      %v4687 = vrot.slane %v3894, 2
      %v4688 = vsel %vm1470, %v4686, %v4687
      %v4689 = vrot.slane %v3895, 2
      %v4690 = vsel %vm1470, %v4687, %v4689
      %v4691 = vrot.slane %v3896, 2
      %v4692 = vrot.slane %v3897, 2
      %v4693 = vsel %vm1470, %v4691, %v4692
      %v4694 = vrot.slane %v3898, 2
      %v4695 = vsel %vm1470, %v4692, %v4694
      %v4696 = vrot.slane %v3899, 2
      %v4697 = vrot.slane %v3900, 2
      %v4698 = vsel %vm1470, %v4696, %v4697
      %v4699 = vrot.slane %v3901, 2
      %v4700 = vsel %vm1470, %v4697, %v4699
      %v4701 = vrot.slane %v3902, 2
      %v4702 = vrot.slane %v3903, 2
      %v4703 = vsel %vm1470, %v4701, %v4702
      %v4704 = vrot.slane %v3904, 2
      %v4705 = vsel %vm1470, %v4702, %v4704
      %s4706 = scalar_lea.vmem %s4, 8
      %v4707 = vld [vmem:[%s4706] sm:$0xf]
      %v4708 = vsel %vm461, %v4628, 0
      %v4710 = vsel %vm461, %v4630, 0
      %v4712 = vsel %vm461, %v4633, 0
      %v4714 = vsel %vm461, %v4635, 0
      %v4716 = vsel %vm461, %v4638, 0
      %v4718 = vsel %vm461, %v4640, 0
      %v4720 = vsel %vm461, %v4643, 0
      %v4722 = vsel %vm461, %v4645, 0
      %v4724 = vsel %vm461, %v4648, 0
      %v4726 = vsel %vm461, %v4650, 0
      %v4728 = vsel %vm461, %v4653, 0
      %v4730 = vsel %vm461, %v4655, 0
      %v4732 = vsel %vm461, %v4658, 0
      %v4734 = vsel %vm461, %v4660, 0
      %v4736 = vsel %vm461, %v4663, 0
      %v4738 = vsel %vm461, %v4665, 0
      %v4740 = vsel %vm461, %v4668, 0
      %v4742 = vsel %vm461, %v4670, 0
      %v4744 = vsel %vm461, %v4673, 0
      %v4746 = vsel %vm461, %v4675, 0
      %v4748 = vsel %vm461, %v4678, 0
      %v4750 = vsel %vm461, %v4680, 0
      %v4752 = vsel %vm461, %v4683, 0
      %v4754 = vsel %vm461, %v4685, 0
      %v4756 = vsel %vm461, %v4688, 0
      %v4758 = vsel %vm461, %v4690, 0
      %v4760 = vsel %vm461, %v4693, 0
      %v4762 = vsel %vm461, %v4695, 0
      %v4764 = vsel %vm461, %v4698, 0
      %v4766 = vsel %vm461, %v4700, 0
      %v4768 = vsel %vm461, %v4703, 0
      %v4770 = vsel %vm461, %v4705, 0
      %v4773 = vsel %vm901, %v4707, 0
      %4775 = vmatprep.subr.mxu0 0.0
      %4776 = vmatpush1.msra.mxu0 0.0
      %4777 = vmatprep.subr.mxu0 0.0
      %4778 = vmatpush1.msra.mxu0 0.0
      %4779 = vmatprep.subr.mxu0 0.0
      %4780 = vmatpush1.msra.mxu0 0.0
      %4781 = vmatprep.subr.mxu0 0.0
      %4782 = vmatpush1.msra.mxu0 0.0
      %4783 = vmatprep.subr.mxu0 0.0
      %4784 = vmatpush1.msra.mxu0 0.0
      %4785 = vmatprep.subr.mxu0 0.0
      %4786 = vmatpush1.msra.mxu0 0.0
      %4787 = vmatprep.subr.mxu0 0.0
      %4788 = vmatpush1.msra.mxu0 0.0
      %4789 = vmatprep.subr.mxu0 0.0
      %4790 = vmatpush1.msra.mxu0 0.0
      %4791 = vmatprep.subr.mxu0 0.0
      %4792 = vmatpush1.msra.mxu0 0.0
      %4793 = vmatprep.subr.mxu0 0.0
      %4794 = vmatpush1.msra.mxu0 0.0
      %4795 = vmatprep.subr.mxu0 0.0
      %4796 = vmatpush1.msra.mxu0 0.0
      %4797 = vmatprep.subr.mxu0 0.0
      %4798 = vmatpush1.msra.mxu0 0.0
      %4799 = vmatprep.subr.mxu0 0.0
      %4800 = vmatpush1.msra.mxu0 0.0
      %4801 = vmatprep.subr.mxu0 0.0
      %4802 = vmatpush1.msra.mxu0 0.0
      %4803 = vmatprep.subr.mxu0 0.0
      %4804 = vmatpush1.msra.mxu0 0.0
      %4805 = vmatprep.subr.mxu0 0.0
      %4806 = vmatpush1.msra.mxu0 %v4773
      %4807 = vmatprep.subr.mxu0 0.0
      %4808 = vmatpush2.msra.mxu0 0.0
      %4809 = vmatprep.subr.mxu0 0.0
      %4810 = vmatpush2.msra.mxu0 0.0
      %4811 = vmatprep.subr.mxu0 0.0
      %4812 = vmatpush2.msra.mxu0 0.0
      %4813 = vmatprep.subr.mxu0 0.0
      %4814 = vmatpush2.msra.mxu0 0.0
      %4815 = vmatprep.subr.mxu0 0.0
      %4816 = vmatpush2.msra.mxu0 0.0
      %4817 = vmatprep.subr.mxu0 0.0
      %4818 = vmatpush2.msra.mxu0 0.0
      %4819 = vmatprep.subr.mxu0 0.0
      %4820 = vmatpush2.msra.mxu0 0.0
      %4821 = vmatprep.subr.mxu0 0.0
      %4822 = vmatpush2.msra.mxu0 0.0
      %4823 = vmatprep.subr.mxu0 0.0
      %4824 = vmatpush2.msra.mxu0 0.0
      %4825 = vmatprep.subr.mxu0 0.0
      %4826 = vmatpush2.msra.mxu0 0.0
      %4827 = vmatprep.subr.mxu0 0.0
      %4828 = vmatpush2.msra.mxu0 0.0
      %4829 = vmatprep.subr.mxu0 0.0
      %4830 = vmatpush2.msra.mxu0 0.0
      %4831 = vmatprep.subr.mxu0 0.0
      %4832 = vmatpush2.msra.mxu0 0.0
      %4833 = vmatprep.subr.mxu0 0.0
      %4834 = vmatpush2.msra.mxu0 0.0
      %4835 = vmatprep.subr.mxu0 0.0
      %4836 = vmatpush2.msra.mxu0 0.0
      %4837 = vmatprep.subr.mxu0 0.0
      %4838 = vmatpush2.msra.mxu0 0.0
      %4839 = vmatprep.mubr.f32.mxu0 0.0
      %4840 = vmatmul.mubr.f32.gmra.mxu0 %v4708
      %v4841 = vpop.f32.mrf.mxu0
      %v4842 = vadd.f32 0.0, %v4841
      %v4843 = vpop.f32.mrf.mxu0
      %4844 = vmatprep.mubr.f32.mxu0 0.0
      %4845 = vmatmul.mubr.f32.gmra.mxu0 %v4710
      %v4846 = vpop.f32.mrf.mxu0
      %v4847 = vadd.f32 0.0, %v4846
      %v4848 = vpop.f32.mrf.mxu0
      %4849 = vmatprep.mubr.f32.mxu0 0.0
      %4850 = vmatmul.mubr.f32.gmra.mxu0 %v4712
      %v4851 = vpop.f32.mrf.mxu0
      %v4852 = vadd.f32 0.0, %v4851
      %v4853 = vpop.f32.mrf.mxu0
      %4854 = vmatprep.mubr.f32.mxu0 0.0
      %4855 = vmatmul.mubr.f32.gmra.mxu0 %v4714
      %v4856 = vpop.f32.mrf.mxu0
      %v4857 = vadd.f32 0.0, %v4856
      %v4858 = vpop.f32.mrf.mxu0
      %4859 = vmatprep.mubr.f32.mxu0 0.0
      %4860 = vmatmul.mubr.f32.gmra.mxu0 %v4716
      %v4861 = vpop.f32.mrf.mxu0
      %v4862 = vadd.f32 0.0, %v4861
      %v4863 = vpop.f32.mrf.mxu0
      %4864 = vmatprep.mubr.f32.mxu0 0.0
      %4865 = vmatmul.mubr.f32.gmra.mxu0 %v4718
      %v4866 = vpop.f32.mrf.mxu0
      %v4867 = vadd.f32 0.0, %v4866
      %v4868 = vpop.f32.mrf.mxu0
      %4869 = vmatprep.mubr.f32.mxu0 0.0
      %4870 = vmatmul.mubr.f32.gmra.mxu0 %v4720
      %v4871 = vpop.f32.mrf.mxu0
      %v4872 = vadd.f32 0.0, %v4871
      %v4873 = vpop.f32.mrf.mxu0
      %4874 = vmatprep.mubr.f32.mxu0 0.0
      %4875 = vmatmul.mubr.f32.gmra.mxu0 %v4722
      %v4876 = vpop.f32.mrf.mxu0
      %v4877 = vadd.f32 0.0, %v4876
      %v4878 = vpop.f32.mrf.mxu0
      %4879 = vmatprep.mubr.f32.mxu0 0.0
      %4880 = vmatmul.mubr.f32.gmra.mxu0 %v4724
      %v4881 = vpop.f32.mrf.mxu0
      %v4882 = vadd.f32 0.0, %v4881
      %v4883 = vpop.f32.mrf.mxu0
      %4884 = vmatprep.mubr.f32.mxu0 0.0
      %4885 = vmatmul.mubr.f32.gmra.mxu0 %v4726
      %v4886 = vpop.f32.mrf.mxu0
      %v4887 = vadd.f32 0.0, %v4886
      %v4888 = vpop.f32.mrf.mxu0
      %4889 = vmatprep.mubr.f32.mxu0 0.0
      %4890 = vmatmul.mubr.f32.gmra.mxu0 %v4728
      %v4891 = vpop.f32.mrf.mxu0
      %v4892 = vadd.f32 0.0, %v4891
      %v4893 = vpop.f32.mrf.mxu0
      %4894 = vmatprep.mubr.f32.mxu0 0.0
      %4895 = vmatmul.mubr.f32.gmra.mxu0 %v4730
      %v4896 = vpop.f32.mrf.mxu0
      %v4897 = vadd.f32 0.0, %v4896
      %v4898 = vpop.f32.mrf.mxu0
      %4899 = vmatprep.mubr.f32.mxu0 0.0
      %4900 = vmatmul.mubr.f32.gmra.mxu0 %v4732
      %v4901 = vpop.f32.mrf.mxu0
      %v4902 = vadd.f32 0.0, %v4901
      %v4903 = vpop.f32.mrf.mxu0
      %4904 = vmatprep.mubr.f32.mxu0 0.0
      %4905 = vmatmul.mubr.f32.gmra.mxu0 %v4734
      %v4906 = vpop.f32.mrf.mxu0
      %v4907 = vadd.f32 0.0, %v4906
      %v4908 = vpop.f32.mrf.mxu0
      %4909 = vmatprep.mubr.f32.mxu0 0.0
      %4910 = vmatmul.mubr.f32.gmra.mxu0 %v4736
      %v4911 = vpop.f32.mrf.mxu0
      %v4912 = vadd.f32 0.0, %v4911
      %v4913 = vpop.f32.mrf.mxu0
      %4914 = vmatprep.mubr.f32.mxu0 0.0
      %4915 = vmatmul.mubr.f32.gmra.mxu0 %v4738
      %v4916 = vpop.f32.mrf.mxu0
      %v4917 = vadd.f32 0.0, %v4916
      %v4918 = vpop.f32.mrf.mxu0
      %4919 = vmatprep.mubr.f32.mxu0 0.0
      %4920 = vmatmul.mubr.f32.gmra.mxu0 %v4740
      %v4921 = vpop.f32.mrf.mxu0
      %v4922 = vadd.f32 0.0, %v4921
      %v4923 = vpop.f32.mrf.mxu0
      %4924 = vmatprep.mubr.f32.mxu0 0.0
      %4925 = vmatmul.mubr.f32.gmra.mxu0 %v4742
      %v4926 = vpop.f32.mrf.mxu0
      %v4927 = vadd.f32 0.0, %v4926
      %v4928 = vpop.f32.mrf.mxu0
      %4929 = vmatprep.mubr.f32.mxu0 0.0
      %4930 = vmatmul.mubr.f32.gmra.mxu0 %v4744
      %v4931 = vpop.f32.mrf.mxu0
      %v4932 = vadd.f32 0.0, %v4931
      %v4933 = vpop.f32.mrf.mxu0
      %4934 = vmatprep.mubr.f32.mxu0 0.0
      %4935 = vmatmul.mubr.f32.gmra.mxu0 %v4746
      %v4936 = vpop.f32.mrf.mxu0
      %v4937 = vadd.f32 0.0, %v4936
      %v4938 = vpop.f32.mrf.mxu0
      %4939 = vmatprep.mubr.f32.mxu0 0.0
      %4940 = vmatmul.mubr.f32.gmra.mxu0 %v4748
      %v4941 = vpop.f32.mrf.mxu0
      %v4942 = vadd.f32 0.0, %v4941
      %v4943 = vpop.f32.mrf.mxu0
      %4944 = vmatprep.mubr.f32.mxu0 0.0
      %4945 = vmatmul.mubr.f32.gmra.mxu0 %v4750
      %v4946 = vpop.f32.mrf.mxu0
      %v4947 = vadd.f32 0.0, %v4946
      %v4948 = vpop.f32.mrf.mxu0
      %4949 = vmatprep.mubr.f32.mxu0 0.0
      %4950 = vmatmul.mubr.f32.gmra.mxu0 %v4752
      %v4951 = vpop.f32.mrf.mxu0
      %v4952 = vadd.f32 0.0, %v4951
      %v4953 = vpop.f32.mrf.mxu0
      %4954 = vmatprep.mubr.f32.mxu0 0.0
      %4955 = vmatmul.mubr.f32.gmra.mxu0 %v4754
      %v4956 = vpop.f32.mrf.mxu0
      %v4957 = vadd.f32 0.0, %v4956
      %v4958 = vpop.f32.mrf.mxu0
      %4959 = vmatprep.mubr.f32.mxu0 0.0
      %4960 = vmatmul.mubr.f32.gmra.mxu0 %v4756
      %v4961 = vpop.f32.mrf.mxu0
      %v4962 = vadd.f32 0.0, %v4961
      %v4963 = vpop.f32.mrf.mxu0
      %4964 = vmatprep.mubr.f32.mxu0 0.0
      %4965 = vmatmul.mubr.f32.gmra.mxu0 %v4758
      %v4966 = vpop.f32.mrf.mxu0
      %v4967 = vadd.f32 0.0, %v4966
      %v4968 = vpop.f32.mrf.mxu0
      %4969 = vmatprep.mubr.f32.mxu0 0.0
      %4970 = vmatmul.mubr.f32.gmra.mxu0 %v4760
      %v4971 = vpop.f32.mrf.mxu0
      %v4972 = vadd.f32 0.0, %v4971
      %v4973 = vpop.f32.mrf.mxu0
      %4974 = vmatprep.mubr.f32.mxu0 0.0
      %4975 = vmatmul.mubr.f32.gmra.mxu0 %v4762
      %v4976 = vpop.f32.mrf.mxu0
      %v4977 = vadd.f32 0.0, %v4976
      %v4978 = vpop.f32.mrf.mxu0
      %4979 = vmatprep.mubr.f32.mxu0 0.0
      %4980 = vmatmul.mubr.f32.gmra.mxu0 %v4764
      %v4981 = vpop.f32.mrf.mxu0
      %v4982 = vadd.f32 0.0, %v4981
      %v4983 = vpop.f32.mrf.mxu0
      %4984 = vmatprep.mubr.f32.mxu0 0.0
      %4985 = vmatmul.mubr.f32.gmra.mxu0 %v4766
      %v4986 = vpop.f32.mrf.mxu0
      %v4987 = vadd.f32 0.0, %v4986
      %v4988 = vpop.f32.mrf.mxu0
      %4989 = vmatprep.mubr.f32.mxu0 0.0
      %4990 = vmatmul.mubr.f32.gmra.mxu0 %v4768
      %v4991 = vpop.f32.mrf.mxu0
      %v4992 = vadd.f32 0.0, %v4991
      %v4993 = vpop.f32.mrf.mxu0
      %4994 = vmatprep.mubr.f32.mxu0 0.0
      %4995 = vmatmul.mubr.f32.gmra.mxu0 %v4770
      %v4996 = vpop.f32.mrf.mxu0
      %v4997 = vadd.f32 0.0, %v4996
      %v4998 = vpop.f32.mrf.mxu0
      %4999 = vdwg.mxu0
      %v5000 = vadd.f32 %v4468, %v4842
      %v5001 = vadd.f32 %v4473, %v4847
      %v5002 = vadd.f32 %v4478, %v4852
      %v5003 = vadd.f32 %v4483, %v4857
      %v5004 = vadd.f32 %v4488, %v4862
      %v5005 = vadd.f32 %v4493, %v4867
      %v5006 = vadd.f32 %v4498, %v4872
      %v5007 = vadd.f32 %v4503, %v4877
      %v5008 = vadd.f32 %v4508, %v4882
      %v5009 = vadd.f32 %v4513, %v4887
      %v5010 = vadd.f32 %v4518, %v4892
      %v5011 = vadd.f32 %v4523, %v4897
      %v5012 = vadd.f32 %v4528, %v4902
      %v5013 = vadd.f32 %v4533, %v4907
      %v5014 = vadd.f32 %v4538, %v4912
      %v5015 = vadd.f32 %v4543, %v4917
      %v5016 = vadd.f32 %v4548, %v4922
      %v5017 = vadd.f32 %v4553, %v4927
      %v5018 = vadd.f32 %v4558, %v4932
      %v5019 = vadd.f32 %v4563, %v4937
      %v5020 = vadd.f32 %v4568, %v4942
      %v5021 = vadd.f32 %v4573, %v4947
      %v5022 = vadd.f32 %v4578, %v4952
      %v5023 = vadd.f32 %v4583, %v4957
      %v5024 = vadd.f32 %v4588, %v4962
      %v5025 = vadd.f32 %v4593, %v4967
      %v5026 = vadd.f32 %v4598, %v4972
      %v5027 = vadd.f32 %v4603, %v4977
      %v5028 = vadd.f32 %v4608, %v4982
      %v5029 = vadd.f32 %v4613, %v4987
      %v5030 = vadd.f32 %v4618, %v4992
      %v5031 = vadd.f32 %v4623, %v4997
      %s5032 = scalar_lea.vmem %s4, 12
      %v5033 = vld [vmem:[%s5032] sm:$0xf]
      %v5035 = vsel %vm461, %v3905, 0
      %v5038 = vsel %vm461, %v3906, 0
      %v5041 = vsel %vm901, %v5033, 0
      %5043 = vmatprep.subr.mxu0 0.0
      %5044 = vmatpush1.msra.mxu0 0.0
      %5045 = vmatprep.subr.mxu0 0.0
      %5046 = vmatpush1.msra.mxu0 0.0
      %5047 = vmatprep.subr.mxu0 0.0
      %5048 = vmatpush1.msra.mxu0 0.0
      %5049 = vmatprep.subr.mxu0 0.0
      %5050 = vmatpush1.msra.mxu0 0.0
      %5051 = vmatprep.subr.mxu0 0.0
      %5052 = vmatpush1.msra.mxu0 0.0
      %5053 = vmatprep.subr.mxu0 0.0
      %5054 = vmatpush1.msra.mxu0 0.0
      %5055 = vmatprep.subr.mxu0 0.0
      %5056 = vmatpush1.msra.mxu0 0.0
      %5057 = vmatprep.subr.mxu0 0.0
      %5058 = vmatpush1.msra.mxu0 0.0
      %5059 = vmatprep.subr.mxu0 0.0
      %5060 = vmatpush1.msra.mxu0 0.0
      %5061 = vmatprep.subr.mxu0 0.0
      %5062 = vmatpush1.msra.mxu0 0.0
      %5063 = vmatprep.subr.mxu0 0.0
      %5064 = vmatpush1.msra.mxu0 0.0
      %5065 = vmatprep.subr.mxu0 0.0
      %5066 = vmatpush1.msra.mxu0 0.0
      %5067 = vmatprep.subr.mxu0 0.0
      %5068 = vmatpush1.msra.mxu0 0.0
      %5069 = vmatprep.subr.mxu0 0.0
      %5070 = vmatpush1.msra.mxu0 0.0
      %5071 = vmatprep.subr.mxu0 0.0
      %5072 = vmatpush1.msra.mxu0 0.0
      %5073 = vmatprep.subr.mxu0 0.0
      %5074 = vmatpush1.msra.mxu0 %v5041
      %5075 = vmatprep.subr.mxu0 0.0
      %5076 = vmatpush2.msra.mxu0 0.0
      %5077 = vmatprep.subr.mxu0 0.0
      %5078 = vmatpush2.msra.mxu0 0.0
      %5079 = vmatprep.subr.mxu0 0.0
      %5080 = vmatpush2.msra.mxu0 0.0
      %5081 = vmatprep.subr.mxu0 0.0
      %5082 = vmatpush2.msra.mxu0 0.0
      %5083 = vmatprep.subr.mxu0 0.0
      %5084 = vmatpush2.msra.mxu0 0.0
      %5085 = vmatprep.subr.mxu0 0.0
      %5086 = vmatpush2.msra.mxu0 0.0
      %5087 = vmatprep.subr.mxu0 0.0
      %5088 = vmatpush2.msra.mxu0 0.0
      %5089 = vmatprep.subr.mxu0 0.0
      %5090 = vmatpush2.msra.mxu0 0.0
      %5091 = vmatprep.subr.mxu0 0.0
      %5092 = vmatpush2.msra.mxu0 0.0
      %5093 = vmatprep.subr.mxu0 0.0
      %5094 = vmatpush2.msra.mxu0 0.0
      %5095 = vmatprep.subr.mxu0 0.0
      %5096 = vmatpush2.msra.mxu0 0.0
      %5097 = vmatprep.subr.mxu0 0.0
      %5098 = vmatpush2.msra.mxu0 0.0
      %5099 = vmatprep.subr.mxu0 0.0
      %5100 = vmatpush2.msra.mxu0 0.0
      %5101 = vmatprep.subr.mxu0 0.0
      %5102 = vmatpush2.msra.mxu0 0.0
      %5103 = vmatprep.subr.mxu0 0.0
      %5104 = vmatpush2.msra.mxu0 0.0
      %5105 = vmatprep.subr.mxu0 0.0
      %5106 = vmatpush2.msra.mxu0 0.0
      %5107 = vmatprep.mubr.f32.mxu0 0.0
      %5108 = vmatmul.mubr.f32.gmra.mxu0 %v4338
      %v5109 = vpop.f32.mrf.mxu0
      %v5110 = vadd.f32 0.0, %v5109
      %v5111 = vpop.f32.mrf.mxu0
      %5112 = vmatprep.mubr.f32.mxu0 0.0
      %5113 = vmatmul.mubr.f32.gmra.mxu0 %v4340
      %v5114 = vpop.f32.mrf.mxu0
      %v5115 = vadd.f32 0.0, %v5114
      %v5116 = vpop.f32.mrf.mxu0
      %5117 = vmatprep.mubr.f32.mxu0 0.0
      %5118 = vmatmul.mubr.f32.gmra.mxu0 %v4342
      %v5119 = vpop.f32.mrf.mxu0
      %v5120 = vadd.f32 0.0, %v5119
      %v5121 = vpop.f32.mrf.mxu0
      %5122 = vmatprep.mubr.f32.mxu0 0.0
      %5123 = vmatmul.mubr.f32.gmra.mxu0 %v4344
      %v5124 = vpop.f32.mrf.mxu0
      %v5125 = vadd.f32 0.0, %v5124
      %v5126 = vpop.f32.mrf.mxu0
      %5127 = vmatprep.mubr.f32.mxu0 0.0
      %5128 = vmatmul.mubr.f32.gmra.mxu0 %v4346
      %v5129 = vpop.f32.mrf.mxu0
      %v5130 = vadd.f32 0.0, %v5129
      %v5131 = vpop.f32.mrf.mxu0
      %5132 = vmatprep.mubr.f32.mxu0 0.0
      %5133 = vmatmul.mubr.f32.gmra.mxu0 %v4348
      %v5134 = vpop.f32.mrf.mxu0
      %v5135 = vadd.f32 0.0, %v5134
      %v5136 = vpop.f32.mrf.mxu0
      %5137 = vmatprep.mubr.f32.mxu0 0.0
      %5138 = vmatmul.mubr.f32.gmra.mxu0 %v4350
      %v5139 = vpop.f32.mrf.mxu0
      %v5140 = vadd.f32 0.0, %v5139
      %v5141 = vpop.f32.mrf.mxu0
      %5142 = vmatprep.mubr.f32.mxu0 0.0
      %5143 = vmatmul.mubr.f32.gmra.mxu0 %v4352
      %v5144 = vpop.f32.mrf.mxu0
      %v5145 = vadd.f32 0.0, %v5144
      %v5146 = vpop.f32.mrf.mxu0
      %5147 = vmatprep.mubr.f32.mxu0 0.0
      %5148 = vmatmul.mubr.f32.gmra.mxu0 %v4354
      %v5149 = vpop.f32.mrf.mxu0
      %v5150 = vadd.f32 0.0, %v5149
      %v5151 = vpop.f32.mrf.mxu0
      %5152 = vmatprep.mubr.f32.mxu0 0.0
      %5153 = vmatmul.mubr.f32.gmra.mxu0 %v4356
      %v5154 = vpop.f32.mrf.mxu0
      %v5155 = vadd.f32 0.0, %v5154
      %v5156 = vpop.f32.mrf.mxu0
      %5157 = vmatprep.mubr.f32.mxu0 0.0
      %5158 = vmatmul.mubr.f32.gmra.mxu0 %v4358
      %v5159 = vpop.f32.mrf.mxu0
      %v5160 = vadd.f32 0.0, %v5159
      %v5161 = vpop.f32.mrf.mxu0
      %5162 = vmatprep.mubr.f32.mxu0 0.0
      %5163 = vmatmul.mubr.f32.gmra.mxu0 %v4360
      %v5164 = vpop.f32.mrf.mxu0
      %v5165 = vadd.f32 0.0, %v5164
      %v5166 = vpop.f32.mrf.mxu0
      %5167 = vmatprep.mubr.f32.mxu0 0.0
      %5168 = vmatmul.mubr.f32.gmra.mxu0 %v4362
      %v5169 = vpop.f32.mrf.mxu0
      %v5170 = vadd.f32 0.0, %v5169
      %v5171 = vpop.f32.mrf.mxu0
      %5172 = vmatprep.mubr.f32.mxu0 0.0
      %5173 = vmatmul.mubr.f32.gmra.mxu0 %v4364
      %v5174 = vpop.f32.mrf.mxu0
      %v5175 = vadd.f32 0.0, %v5174
      %v5176 = vpop.f32.mrf.mxu0
      %5177 = vmatprep.mubr.f32.mxu0 0.0
      %5178 = vmatmul.mubr.f32.gmra.mxu0 %v4366
      %v5179 = vpop.f32.mrf.mxu0
      %v5180 = vadd.f32 0.0, %v5179
      %v5181 = vpop.f32.mrf.mxu0
      %5182 = vmatprep.mubr.f32.mxu0 0.0
      %5183 = vmatmul.mubr.f32.gmra.mxu0 %v4368
      %v5184 = vpop.f32.mrf.mxu0
      %v5185 = vadd.f32 0.0, %v5184
      %v5186 = vpop.f32.mrf.mxu0
      %5187 = vmatprep.mubr.f32.mxu0 0.0
      %5188 = vmatmul.mubr.f32.gmra.mxu0 %v4370
      %v5189 = vpop.f32.mrf.mxu0
      %v5190 = vadd.f32 0.0, %v5189
      %v5191 = vpop.f32.mrf.mxu0
      %5192 = vmatprep.mubr.f32.mxu0 0.0
      %5193 = vmatmul.mubr.f32.gmra.mxu0 %v4372
      %v5194 = vpop.f32.mrf.mxu0
      %v5195 = vadd.f32 0.0, %v5194
      %v5196 = vpop.f32.mrf.mxu0
      %5197 = vmatprep.mubr.f32.mxu0 0.0
      %5198 = vmatmul.mubr.f32.gmra.mxu0 %v4374
      %v5199 = vpop.f32.mrf.mxu0
      %v5200 = vadd.f32 0.0, %v5199
      %v5201 = vpop.f32.mrf.mxu0
      %5202 = vmatprep.mubr.f32.mxu0 0.0
      %5203 = vmatmul.mubr.f32.gmra.mxu0 %v4376
      %v5204 = vpop.f32.mrf.mxu0
      %v5205 = vadd.f32 0.0, %v5204
      %v5206 = vpop.f32.mrf.mxu0
      %5207 = vmatprep.mubr.f32.mxu0 0.0
      %5208 = vmatmul.mubr.f32.gmra.mxu0 %v4378
      %v5209 = vpop.f32.mrf.mxu0
      %v5210 = vadd.f32 0.0, %v5209
      %v5211 = vpop.f32.mrf.mxu0
      %5212 = vmatprep.mubr.f32.mxu0 0.0
      %5213 = vmatmul.mubr.f32.gmra.mxu0 %v4380
      %v5214 = vpop.f32.mrf.mxu0
      %v5215 = vadd.f32 0.0, %v5214
      %v5216 = vpop.f32.mrf.mxu0
      %5217 = vmatprep.mubr.f32.mxu0 0.0
      %5218 = vmatmul.mubr.f32.gmra.mxu0 %v4382
      %v5219 = vpop.f32.mrf.mxu0
      %v5220 = vadd.f32 0.0, %v5219
      %v5221 = vpop.f32.mrf.mxu0
      %5222 = vmatprep.mubr.f32.mxu0 0.0
      %5223 = vmatmul.mubr.f32.gmra.mxu0 %v4384
      %v5224 = vpop.f32.mrf.mxu0
      %v5225 = vadd.f32 0.0, %v5224
      %v5226 = vpop.f32.mrf.mxu0
      %5227 = vmatprep.mubr.f32.mxu0 0.0
      %5228 = vmatmul.mubr.f32.gmra.mxu0 %v4386
      %v5229 = vpop.f32.mrf.mxu0
      %v5230 = vadd.f32 0.0, %v5229
      %v5231 = vpop.f32.mrf.mxu0
      %5232 = vmatprep.mubr.f32.mxu0 0.0
      %5233 = vmatmul.mubr.f32.gmra.mxu0 %v4388
      %v5234 = vpop.f32.mrf.mxu0
      %v5235 = vadd.f32 0.0, %v5234
      %v5236 = vpop.f32.mrf.mxu0
      %5237 = vmatprep.mubr.f32.mxu0 0.0
      %5238 = vmatmul.mubr.f32.gmra.mxu0 %v4390
      %v5239 = vpop.f32.mrf.mxu0
      %v5240 = vadd.f32 0.0, %v5239
      %v5241 = vpop.f32.mrf.mxu0
      %5242 = vmatprep.mubr.f32.mxu0 0.0
      %5243 = vmatmul.mubr.f32.gmra.mxu0 %v4392
      %v5244 = vpop.f32.mrf.mxu0
      %v5245 = vadd.f32 0.0, %v5244
      %v5246 = vpop.f32.mrf.mxu0
      %5247 = vmatprep.mubr.f32.mxu0 0.0
      %5248 = vmatmul.mubr.f32.gmra.mxu0 %v4394
      %v5249 = vpop.f32.mrf.mxu0
      %v5250 = vadd.f32 0.0, %v5249
      %v5251 = vpop.f32.mrf.mxu0
      %5252 = vmatprep.mubr.f32.mxu0 0.0
      %5253 = vmatmul.mubr.f32.gmra.mxu0 %v4396
      %v5254 = vpop.f32.mrf.mxu0
      %v5255 = vadd.f32 0.0, %v5254
      %v5256 = vpop.f32.mrf.mxu0
      %5257 = vmatprep.mubr.f32.mxu0 0.0
      %5258 = vmatmul.mubr.f32.gmra.mxu0 %v5035
      %v5259 = vpop.f32.mrf.mxu0
      %v5260 = vadd.f32 0.0, %v5259
      %v5261 = vpop.f32.mrf.mxu0
      %5262 = vmatprep.mubr.f32.mxu0 0.0
      %5263 = vmatmul.mubr.f32.gmra.mxu0 %v5038
      %v5264 = vpop.f32.mrf.mxu0
      %v5265 = vadd.f32 0.0, %v5264
      %v5266 = vpop.f32.mrf.mxu0
      %5267 = vdwg.mxu0
      %v5268 = vadd.f32 %v5000, %v5110
      %v5269 = vadd.f32 %v5001, %v5115
      %v5270 = vadd.f32 %v5002, %v5120
      %v5271 = vadd.f32 %v5003, %v5125
      %v5272 = vadd.f32 %v5004, %v5130
      %v5273 = vadd.f32 %v5005, %v5135
      %v5274 = vadd.f32 %v5006, %v5140
      %v5275 = vadd.f32 %v5007, %v5145
      %v5276 = vadd.f32 %v5008, %v5150
      %v5277 = vadd.f32 %v5009, %v5155
      %v5278 = vadd.f32 %v5010, %v5160
      %v5279 = vadd.f32 %v5011, %v5165
      %v5280 = vadd.f32 %v5012, %v5170
      %v5281 = vadd.f32 %v5013, %v5175
      %v5282 = vadd.f32 %v5014, %v5180
      %v5283 = vadd.f32 %v5015, %v5185
      %v5284 = vadd.f32 %v5016, %v5190
      %v5285 = vadd.f32 %v5017, %v5195
      %v5286 = vadd.f32 %v5018, %v5200
      %v5287 = vadd.f32 %v5019, %v5205
      %v5288 = vadd.f32 %v5020, %v5210
      %v5289 = vadd.f32 %v5021, %v5215
      %v5290 = vadd.f32 %v5022, %v5220
      %v5291 = vadd.f32 %v5023, %v5225
      %v5292 = vadd.f32 %v5024, %v5230
      %v5293 = vadd.f32 %v5025, %v5235
      %v5294 = vadd.f32 %v5026, %v5240
      %v5295 = vadd.f32 %v5027, %v5245
      %v5296 = vadd.f32 %v5028, %v5250
      %v5297 = vadd.f32 %v5029, %v5255
      %v5298 = vadd.f32 %v5030, %v5260
      %v5299 = vadd.f32 %v5031, %v5265
      %v5301 = vrot.slane %v3905, 1
      %v5302 = vrot.slane %v3906, 1
      %v5303 = vsel %vm736, %v5301, %v5302
      %v5304 = vrot.slane %v3907, 1
      %v5305 = vsel %vm736, %v5302, %v5304
      %s5306 = scalar_lea.vmem %s4, 16
      %v5307 = vld [vmem:[%s5306] sm:$0xf]
      %v5308 = vsel %vm461, %v5303, 0
      %v5310 = vsel %vm461, %v5305, 0
      %v5313 = vsel %vm901, %v5307, 0
      %5315 = vmatprep.subr.mxu0 0.0
      %5316 = vmatpush1.msra.mxu0 0.0
      %5317 = vmatprep.subr.mxu0 0.0
      %5318 = vmatpush1.msra.mxu0 0.0
      %5319 = vmatprep.subr.mxu0 0.0
      %5320 = vmatpush1.msra.mxu0 0.0
      %5321 = vmatprep.subr.mxu0 0.0
      %5322 = vmatpush1.msra.mxu0 0.0
      %5323 = vmatprep.subr.mxu0 0.0
      %5324 = vmatpush1.msra.mxu0 0.0
      %5325 = vmatprep.subr.mxu0 0.0
      %5326 = vmatpush1.msra.mxu0 0.0
      %5327 = vmatprep.subr.mxu0 0.0
      %5328 = vmatpush1.msra.mxu0 0.0
      %5329 = vmatprep.subr.mxu0 0.0
      %5330 = vmatpush1.msra.mxu0 0.0
      %5331 = vmatprep.subr.mxu0 0.0
      %5332 = vmatpush1.msra.mxu0 0.0
      %5333 = vmatprep.subr.mxu0 0.0
      %5334 = vmatpush1.msra.mxu0 0.0
      %5335 = vmatprep.subr.mxu0 0.0
      %5336 = vmatpush1.msra.mxu0 0.0
      %5337 = vmatprep.subr.mxu0 0.0
      %5338 = vmatpush1.msra.mxu0 0.0
      %5339 = vmatprep.subr.mxu0 0.0
      %5340 = vmatpush1.msra.mxu0 0.0
      %5341 = vmatprep.subr.mxu0 0.0
      %5342 = vmatpush1.msra.mxu0 0.0
      %5343 = vmatprep.subr.mxu0 0.0
      %5344 = vmatpush1.msra.mxu0 0.0
      %5345 = vmatprep.subr.mxu0 0.0
      %5346 = vmatpush1.msra.mxu0 %v5313
      %5347 = vmatprep.subr.mxu0 0.0
      %5348 = vmatpush2.msra.mxu0 0.0
      %5349 = vmatprep.subr.mxu0 0.0
      %5350 = vmatpush2.msra.mxu0 0.0
      %5351 = vmatprep.subr.mxu0 0.0
      %5352 = vmatpush2.msra.mxu0 0.0
      %5353 = vmatprep.subr.mxu0 0.0
      %5354 = vmatpush2.msra.mxu0 0.0
      %5355 = vmatprep.subr.mxu0 0.0
      %5356 = vmatpush2.msra.mxu0 0.0
      %5357 = vmatprep.subr.mxu0 0.0
      %5358 = vmatpush2.msra.mxu0 0.0
      %5359 = vmatprep.subr.mxu0 0.0
      %5360 = vmatpush2.msra.mxu0 0.0
      %5361 = vmatprep.subr.mxu0 0.0
      %5362 = vmatpush2.msra.mxu0 0.0
      %5363 = vmatprep.subr.mxu0 0.0
      %5364 = vmatpush2.msra.mxu0 0.0
      %5365 = vmatprep.subr.mxu0 0.0
      %5366 = vmatpush2.msra.mxu0 0.0
      %5367 = vmatprep.subr.mxu0 0.0
      %5368 = vmatpush2.msra.mxu0 0.0
      %5369 = vmatprep.subr.mxu0 0.0
      %5370 = vmatpush2.msra.mxu0 0.0
      %5371 = vmatprep.subr.mxu0 0.0
      %5372 = vmatpush2.msra.mxu0 0.0
      %5373 = vmatprep.subr.mxu0 0.0
      %5374 = vmatpush2.msra.mxu0 0.0
      %5375 = vmatprep.subr.mxu0 0.0
      %5376 = vmatpush2.msra.mxu0 0.0
      %5377 = vmatprep.subr.mxu0 0.0
      %5378 = vmatpush2.msra.mxu0 0.0
      %5379 = vmatprep.mubr.f32.mxu0 0.0
      %5380 = vmatmul.mubr.f32.gmra.mxu0 %v4046
      %v5381 = vpop.f32.mrf.mxu0
      %v5382 = vadd.f32 0.0, %v5381
      %v5383 = vpop.f32.mrf.mxu0
      %5384 = vmatprep.mubr.f32.mxu0 0.0
      %5385 = vmatmul.mubr.f32.gmra.mxu0 %v4048
      %v5386 = vpop.f32.mrf.mxu0
      %v5387 = vadd.f32 0.0, %v5386
      %v5388 = vpop.f32.mrf.mxu0
      %5389 = vmatprep.mubr.f32.mxu0 0.0
      %5390 = vmatmul.mubr.f32.gmra.mxu0 %v4050
      %v5391 = vpop.f32.mrf.mxu0
      %v5392 = vadd.f32 0.0, %v5391
      %v5393 = vpop.f32.mrf.mxu0
      %5394 = vmatprep.mubr.f32.mxu0 0.0
      %5395 = vmatmul.mubr.f32.gmra.mxu0 %v4052
      %v5396 = vpop.f32.mrf.mxu0
      %v5397 = vadd.f32 0.0, %v5396
      %v5398 = vpop.f32.mrf.mxu0
      %5399 = vmatprep.mubr.f32.mxu0 0.0
      %5400 = vmatmul.mubr.f32.gmra.mxu0 %v4054
      %v5401 = vpop.f32.mrf.mxu0
      %v5402 = vadd.f32 0.0, %v5401
      %v5403 = vpop.f32.mrf.mxu0
      %5404 = vmatprep.mubr.f32.mxu0 0.0
      %5405 = vmatmul.mubr.f32.gmra.mxu0 %v4056
      %v5406 = vpop.f32.mrf.mxu0
      %v5407 = vadd.f32 0.0, %v5406
      %v5408 = vpop.f32.mrf.mxu0
      %5409 = vmatprep.mubr.f32.mxu0 0.0
      %5410 = vmatmul.mubr.f32.gmra.mxu0 %v4058
      %v5411 = vpop.f32.mrf.mxu0
      %v5412 = vadd.f32 0.0, %v5411
      %v5413 = vpop.f32.mrf.mxu0
      %5414 = vmatprep.mubr.f32.mxu0 0.0
      %5415 = vmatmul.mubr.f32.gmra.mxu0 %v4060
      %v5416 = vpop.f32.mrf.mxu0
      %v5417 = vadd.f32 0.0, %v5416
      %v5418 = vpop.f32.mrf.mxu0
      %5419 = vmatprep.mubr.f32.mxu0 0.0
      %5420 = vmatmul.mubr.f32.gmra.mxu0 %v4062
      %v5421 = vpop.f32.mrf.mxu0
      %v5422 = vadd.f32 0.0, %v5421
      %v5423 = vpop.f32.mrf.mxu0
      %5424 = vmatprep.mubr.f32.mxu0 0.0
      %5425 = vmatmul.mubr.f32.gmra.mxu0 %v4064
      %v5426 = vpop.f32.mrf.mxu0
      %v5427 = vadd.f32 0.0, %v5426
      %v5428 = vpop.f32.mrf.mxu0
      %5429 = vmatprep.mubr.f32.mxu0 0.0
      %5430 = vmatmul.mubr.f32.gmra.mxu0 %v4066
      %v5431 = vpop.f32.mrf.mxu0
      %v5432 = vadd.f32 0.0, %v5431
      %v5433 = vpop.f32.mrf.mxu0
      %5434 = vmatprep.mubr.f32.mxu0 0.0
      %5435 = vmatmul.mubr.f32.gmra.mxu0 %v4068
      %v5436 = vpop.f32.mrf.mxu0
      %v5437 = vadd.f32 0.0, %v5436
      %v5438 = vpop.f32.mrf.mxu0
      %5439 = vmatprep.mubr.f32.mxu0 0.0
      %5440 = vmatmul.mubr.f32.gmra.mxu0 %v4070
      %v5441 = vpop.f32.mrf.mxu0
      %v5442 = vadd.f32 0.0, %v5441
      %v5443 = vpop.f32.mrf.mxu0
      %5444 = vmatprep.mubr.f32.mxu0 0.0
      %5445 = vmatmul.mubr.f32.gmra.mxu0 %v4072
      %v5446 = vpop.f32.mrf.mxu0
      %v5447 = vadd.f32 0.0, %v5446
      %v5448 = vpop.f32.mrf.mxu0
      %5449 = vmatprep.mubr.f32.mxu0 0.0
      %5450 = vmatmul.mubr.f32.gmra.mxu0 %v4074
      %v5451 = vpop.f32.mrf.mxu0
      %v5452 = vadd.f32 0.0, %v5451
      %v5453 = vpop.f32.mrf.mxu0
      %5454 = vmatprep.mubr.f32.mxu0 0.0
      %5455 = vmatmul.mubr.f32.gmra.mxu0 %v4076
      %v5456 = vpop.f32.mrf.mxu0
      %v5457 = vadd.f32 0.0, %v5456
      %v5458 = vpop.f32.mrf.mxu0
      %5459 = vmatprep.mubr.f32.mxu0 0.0
      %5460 = vmatmul.mubr.f32.gmra.mxu0 %v4078
      %v5461 = vpop.f32.mrf.mxu0
      %v5462 = vadd.f32 0.0, %v5461
      %v5463 = vpop.f32.mrf.mxu0
      %5464 = vmatprep.mubr.f32.mxu0 0.0
      %5465 = vmatmul.mubr.f32.gmra.mxu0 %v4080
      %v5466 = vpop.f32.mrf.mxu0
      %v5467 = vadd.f32 0.0, %v5466
      %v5468 = vpop.f32.mrf.mxu0
      %5469 = vmatprep.mubr.f32.mxu0 0.0
      %5470 = vmatmul.mubr.f32.gmra.mxu0 %v4082
      %v5471 = vpop.f32.mrf.mxu0
      %v5472 = vadd.f32 0.0, %v5471
      %v5473 = vpop.f32.mrf.mxu0
      %5474 = vmatprep.mubr.f32.mxu0 0.0
      %5475 = vmatmul.mubr.f32.gmra.mxu0 %v4084
      %v5476 = vpop.f32.mrf.mxu0
      %v5477 = vadd.f32 0.0, %v5476
      %v5478 = vpop.f32.mrf.mxu0
      %5479 = vmatprep.mubr.f32.mxu0 0.0
      %5480 = vmatmul.mubr.f32.gmra.mxu0 %v4086
      %v5481 = vpop.f32.mrf.mxu0
      %v5482 = vadd.f32 0.0, %v5481
      %v5483 = vpop.f32.mrf.mxu0
      %5484 = vmatprep.mubr.f32.mxu0 0.0
      %5485 = vmatmul.mubr.f32.gmra.mxu0 %v4088
      %v5486 = vpop.f32.mrf.mxu0
      %v5487 = vadd.f32 0.0, %v5486
      %v5488 = vpop.f32.mrf.mxu0
      %5489 = vmatprep.mubr.f32.mxu0 0.0
      %5490 = vmatmul.mubr.f32.gmra.mxu0 %v4090
      %v5491 = vpop.f32.mrf.mxu0
      %v5492 = vadd.f32 0.0, %v5491
      %v5493 = vpop.f32.mrf.mxu0
      %5494 = vmatprep.mubr.f32.mxu0 0.0
      %5495 = vmatmul.mubr.f32.gmra.mxu0 %v4092
      %v5496 = vpop.f32.mrf.mxu0
      %v5497 = vadd.f32 0.0, %v5496
      %v5498 = vpop.f32.mrf.mxu0
      %5499 = vmatprep.mubr.f32.mxu0 0.0
      %5500 = vmatmul.mubr.f32.gmra.mxu0 %v4094
      %v5501 = vpop.f32.mrf.mxu0
      %v5502 = vadd.f32 0.0, %v5501
      %v5503 = vpop.f32.mrf.mxu0
      %5504 = vmatprep.mubr.f32.mxu0 0.0
      %5505 = vmatmul.mubr.f32.gmra.mxu0 %v4096
      %v5506 = vpop.f32.mrf.mxu0
      %v5507 = vadd.f32 0.0, %v5506
      %v5508 = vpop.f32.mrf.mxu0
      %5509 = vmatprep.mubr.f32.mxu0 0.0
      %5510 = vmatmul.mubr.f32.gmra.mxu0 %v4098
      %v5511 = vpop.f32.mrf.mxu0
      %v5512 = vadd.f32 0.0, %v5511
      %v5513 = vpop.f32.mrf.mxu0
      %5514 = vmatprep.mubr.f32.mxu0 0.0
      %5515 = vmatmul.mubr.f32.gmra.mxu0 %v4100
      %v5516 = vpop.f32.mrf.mxu0
      %v5517 = vadd.f32 0.0, %v5516
      %v5518 = vpop.f32.mrf.mxu0
      %5519 = vmatprep.mubr.f32.mxu0 0.0
      %5520 = vmatmul.mubr.f32.gmra.mxu0 %v4102
      %v5521 = vpop.f32.mrf.mxu0
      %v5522 = vadd.f32 0.0, %v5521
      %v5523 = vpop.f32.mrf.mxu0
      %5524 = vmatprep.mubr.f32.mxu0 0.0
      %5525 = vmatmul.mubr.f32.gmra.mxu0 %v4104
      %v5526 = vpop.f32.mrf.mxu0
      %v5527 = vadd.f32 0.0, %v5526
      %v5528 = vpop.f32.mrf.mxu0
      %5529 = vmatprep.mubr.f32.mxu0 0.0
      %5530 = vmatmul.mubr.f32.gmra.mxu0 %v5308
      %v5531 = vpop.f32.mrf.mxu0
      %v5532 = vadd.f32 0.0, %v5531
      %v5533 = vpop.f32.mrf.mxu0
      %5534 = vmatprep.mubr.f32.mxu0 0.0
      %5535 = vmatmul.mubr.f32.gmra.mxu0 %v5310
      %v5536 = vpop.f32.mrf.mxu0
      %v5537 = vadd.f32 0.0, %v5536
      %v5538 = vpop.f32.mrf.mxu0
      %5539 = vdwg.mxu0
      %v5540 = vadd.f32 %v5268, %v5382
      %v5541 = vadd.f32 %v5269, %v5387
      %v5542 = vadd.f32 %v5270, %v5392
      %v5543 = vadd.f32 %v5271, %v5397
      %v5544 = vadd.f32 %v5272, %v5402
      %v5545 = vadd.f32 %v5273, %v5407
      %v5546 = vadd.f32 %v5274, %v5412
      %v5547 = vadd.f32 %v5275, %v5417
      %v5548 = vadd.f32 %v5276, %v5422
      %v5549 = vadd.f32 %v5277, %v5427
      %v5550 = vadd.f32 %v5278, %v5432
      %v5551 = vadd.f32 %v5279, %v5437
      %v5552 = vadd.f32 %v5280, %v5442
      %v5553 = vadd.f32 %v5281, %v5447
      %v5554 = vadd.f32 %v5282, %v5452
      %v5555 = vadd.f32 %v5283, %v5457
      %v5556 = vadd.f32 %v5284, %v5462
      %v5557 = vadd.f32 %v5285, %v5467
      %v5558 = vadd.f32 %v5286, %v5472
      %v5559 = vadd.f32 %v5287, %v5477
      %v5560 = vadd.f32 %v5288, %v5482
      %v5561 = vadd.f32 %v5289, %v5487
      %v5562 = vadd.f32 %v5290, %v5492
      %v5563 = vadd.f32 %v5291, %v5497
      %v5564 = vadd.f32 %v5292, %v5502
      %v5565 = vadd.f32 %v5293, %v5507
      %v5566 = vadd.f32 %v5294, %v5512
      %v5567 = vadd.f32 %v5295, %v5517
      %v5568 = vadd.f32 %v5296, %v5522
      %v5569 = vadd.f32 %v5297, %v5527
      %v5570 = vadd.f32 %v5298, %v5532
      %v5571 = vadd.f32 %v5299, %v5537
      %v5572 = vrot.slane %v3905, 2
      %v5573 = vrot.slane %v3906, 2
      %v5574 = vsel %vm1470, %v5572, %v5573
      %v5575 = vrot.slane %v3907, 2
      %v5576 = vsel %vm1470, %v5573, %v5575
      %s5577 = scalar_lea.vmem %s4, 20
      %v5578 = vld [vmem:[%s5577] sm:$0xf]
      %v5579 = vsel %vm461, %v5574, 0
      %v5581 = vsel %vm461, %v5576, 0
      %v5584 = vsel %vm901, %v5578, 0
      %5586 = vmatprep.subr.mxu0 0.0
      %5587 = vmatpush1.msra.mxu0 0.0
      %5588 = vmatprep.subr.mxu0 0.0
      %5589 = vmatpush1.msra.mxu0 0.0
      %5590 = vmatprep.subr.mxu0 0.0
      %5591 = vmatpush1.msra.mxu0 0.0
      %5592 = vmatprep.subr.mxu0 0.0
      %5593 = vmatpush1.msra.mxu0 0.0
      %5594 = vmatprep.subr.mxu0 0.0
      %5595 = vmatpush1.msra.mxu0 0.0
      %5596 = vmatprep.subr.mxu0 0.0
      %5597 = vmatpush1.msra.mxu0 0.0
      %5598 = vmatprep.subr.mxu0 0.0
      %5599 = vmatpush1.msra.mxu0 0.0
      %5600 = vmatprep.subr.mxu0 0.0
      %5601 = vmatpush1.msra.mxu0 0.0
      %5602 = vmatprep.subr.mxu0 0.0
      %5603 = vmatpush1.msra.mxu0 0.0
      %5604 = vmatprep.subr.mxu0 0.0
      %5605 = vmatpush1.msra.mxu0 0.0
      %5606 = vmatprep.subr.mxu0 0.0
      %5607 = vmatpush1.msra.mxu0 0.0
      %5608 = vmatprep.subr.mxu0 0.0
      %5609 = vmatpush1.msra.mxu0 0.0
      %5610 = vmatprep.subr.mxu0 0.0
      %5611 = vmatpush1.msra.mxu0 0.0
      %5612 = vmatprep.subr.mxu0 0.0
      %5613 = vmatpush1.msra.mxu0 0.0
      %5614 = vmatprep.subr.mxu0 0.0
      %5615 = vmatpush1.msra.mxu0 0.0
      %5616 = vmatprep.subr.mxu0 0.0
      %5617 = vmatpush1.msra.mxu0 %v5584
      %5618 = vmatprep.subr.mxu0 0.0
      %5619 = vmatpush2.msra.mxu0 0.0
      %5620 = vmatprep.subr.mxu0 0.0
      %5621 = vmatpush2.msra.mxu0 0.0
      %5622 = vmatprep.subr.mxu0 0.0
      %5623 = vmatpush2.msra.mxu0 0.0
      %5624 = vmatprep.subr.mxu0 0.0
      %5625 = vmatpush2.msra.mxu0 0.0
      %5626 = vmatprep.subr.mxu0 0.0
      %5627 = vmatpush2.msra.mxu0 0.0
      %5628 = vmatprep.subr.mxu0 0.0
      %5629 = vmatpush2.msra.mxu0 0.0
      %5630 = vmatprep.subr.mxu0 0.0
      %5631 = vmatpush2.msra.mxu0 0.0
      %5632 = vmatprep.subr.mxu0 0.0
      %5633 = vmatpush2.msra.mxu0 0.0
      %5634 = vmatprep.subr.mxu0 0.0
      %5635 = vmatpush2.msra.mxu0 0.0
      %5636 = vmatprep.subr.mxu0 0.0
      %5637 = vmatpush2.msra.mxu0 0.0
      %5638 = vmatprep.subr.mxu0 0.0
      %5639 = vmatpush2.msra.mxu0 0.0
      %5640 = vmatprep.subr.mxu0 0.0
      %5641 = vmatpush2.msra.mxu0 0.0
      %5642 = vmatprep.subr.mxu0 0.0
      %5643 = vmatpush2.msra.mxu0 0.0
      %5644 = vmatprep.subr.mxu0 0.0
      %5645 = vmatpush2.msra.mxu0 0.0
      %5646 = vmatprep.subr.mxu0 0.0
      %5647 = vmatpush2.msra.mxu0 0.0
      %5648 = vmatprep.subr.mxu0 0.0
      %5649 = vmatpush2.msra.mxu0 0.0
      %5650 = vmatprep.mubr.f32.mxu0 0.0
      %5651 = vmatmul.mubr.f32.gmra.mxu0 %v4712
      %v5652 = vpop.f32.mrf.mxu0
      %v5653 = vadd.f32 0.0, %v5652
      %v5654 = vpop.f32.mrf.mxu0
      %5655 = vmatprep.mubr.f32.mxu0 0.0
      %5656 = vmatmul.mubr.f32.gmra.mxu0 %v4714
      %v5657 = vpop.f32.mrf.mxu0
      %v5658 = vadd.f32 0.0, %v5657
      %v5659 = vpop.f32.mrf.mxu0
      %5660 = vmatprep.mubr.f32.mxu0 0.0
      %5661 = vmatmul.mubr.f32.gmra.mxu0 %v4716
      %v5662 = vpop.f32.mrf.mxu0
      %v5663 = vadd.f32 0.0, %v5662
      %v5664 = vpop.f32.mrf.mxu0
      %5665 = vmatprep.mubr.f32.mxu0 0.0
      %5666 = vmatmul.mubr.f32.gmra.mxu0 %v4718
      %v5667 = vpop.f32.mrf.mxu0
      %v5668 = vadd.f32 0.0, %v5667
      %v5669 = vpop.f32.mrf.mxu0
      %5670 = vmatprep.mubr.f32.mxu0 0.0
      %5671 = vmatmul.mubr.f32.gmra.mxu0 %v4720
      %v5672 = vpop.f32.mrf.mxu0
      %v5673 = vadd.f32 0.0, %v5672
      %v5674 = vpop.f32.mrf.mxu0
      %5675 = vmatprep.mubr.f32.mxu0 0.0
      %5676 = vmatmul.mubr.f32.gmra.mxu0 %v4722
      %v5677 = vpop.f32.mrf.mxu0
      %v5678 = vadd.f32 0.0, %v5677
      %v5679 = vpop.f32.mrf.mxu0
      %5680 = vmatprep.mubr.f32.mxu0 0.0
      %5681 = vmatmul.mubr.f32.gmra.mxu0 %v4724
      %v5682 = vpop.f32.mrf.mxu0
      %v5683 = vadd.f32 0.0, %v5682
      %v5684 = vpop.f32.mrf.mxu0
      %5685 = vmatprep.mubr.f32.mxu0 0.0
      %5686 = vmatmul.mubr.f32.gmra.mxu0 %v4726
      %v5687 = vpop.f32.mrf.mxu0
      %v5688 = vadd.f32 0.0, %v5687
      %v5689 = vpop.f32.mrf.mxu0
      %5690 = vmatprep.mubr.f32.mxu0 0.0
      %5691 = vmatmul.mubr.f32.gmra.mxu0 %v4728
      %v5692 = vpop.f32.mrf.mxu0
      %v5693 = vadd.f32 0.0, %v5692
      %v5694 = vpop.f32.mrf.mxu0
      %5695 = vmatprep.mubr.f32.mxu0 0.0
      %5696 = vmatmul.mubr.f32.gmra.mxu0 %v4730
      %v5697 = vpop.f32.mrf.mxu0
      %v5698 = vadd.f32 0.0, %v5697
      %v5699 = vpop.f32.mrf.mxu0
      %5700 = vmatprep.mubr.f32.mxu0 0.0
      %5701 = vmatmul.mubr.f32.gmra.mxu0 %v4732
      %v5702 = vpop.f32.mrf.mxu0
      %v5703 = vadd.f32 0.0, %v5702
      %v5704 = vpop.f32.mrf.mxu0
      %5705 = vmatprep.mubr.f32.mxu0 0.0
      %5706 = vmatmul.mubr.f32.gmra.mxu0 %v4734
      %v5707 = vpop.f32.mrf.mxu0
      %v5708 = vadd.f32 0.0, %v5707
      %v5709 = vpop.f32.mrf.mxu0
      %5710 = vmatprep.mubr.f32.mxu0 0.0
      %5711 = vmatmul.mubr.f32.gmra.mxu0 %v4736
      %v5712 = vpop.f32.mrf.mxu0
      %v5713 = vadd.f32 0.0, %v5712
      %v5714 = vpop.f32.mrf.mxu0
      %5715 = vmatprep.mubr.f32.mxu0 0.0
      %5716 = vmatmul.mubr.f32.gmra.mxu0 %v4738
      %v5717 = vpop.f32.mrf.mxu0
      %v5718 = vadd.f32 0.0, %v5717
      %v5719 = vpop.f32.mrf.mxu0
      %5720 = vmatprep.mubr.f32.mxu0 0.0
      %5721 = vmatmul.mubr.f32.gmra.mxu0 %v4740
      %v5722 = vpop.f32.mrf.mxu0
      %v5723 = vadd.f32 0.0, %v5722
      %v5724 = vpop.f32.mrf.mxu0
      %5725 = vmatprep.mubr.f32.mxu0 0.0
      %5726 = vmatmul.mubr.f32.gmra.mxu0 %v4742
      %v5727 = vpop.f32.mrf.mxu0
      %v5728 = vadd.f32 0.0, %v5727
      %v5729 = vpop.f32.mrf.mxu0
      %5730 = vmatprep.mubr.f32.mxu0 0.0
      %5731 = vmatmul.mubr.f32.gmra.mxu0 %v4744
      %v5732 = vpop.f32.mrf.mxu0
      %v5733 = vadd.f32 0.0, %v5732
      %v5734 = vpop.f32.mrf.mxu0
      %5735 = vmatprep.mubr.f32.mxu0 0.0
      %5736 = vmatmul.mubr.f32.gmra.mxu0 %v4746
      %v5737 = vpop.f32.mrf.mxu0
      %v5738 = vadd.f32 0.0, %v5737
      %v5739 = vpop.f32.mrf.mxu0
      %5740 = vmatprep.mubr.f32.mxu0 0.0
      %5741 = vmatmul.mubr.f32.gmra.mxu0 %v4748
      %v5742 = vpop.f32.mrf.mxu0
      %v5743 = vadd.f32 0.0, %v5742
      %v5744 = vpop.f32.mrf.mxu0
      %5745 = vmatprep.mubr.f32.mxu0 0.0
      %5746 = vmatmul.mubr.f32.gmra.mxu0 %v4750
      %v5747 = vpop.f32.mrf.mxu0
      %v5748 = vadd.f32 0.0, %v5747
      %v5749 = vpop.f32.mrf.mxu0
      %5750 = vmatprep.mubr.f32.mxu0 0.0
      %5751 = vmatmul.mubr.f32.gmra.mxu0 %v4752
      %v5752 = vpop.f32.mrf.mxu0
      %v5753 = vadd.f32 0.0, %v5752
      %v5754 = vpop.f32.mrf.mxu0
      %5755 = vmatprep.mubr.f32.mxu0 0.0
      %5756 = vmatmul.mubr.f32.gmra.mxu0 %v4754
      %v5757 = vpop.f32.mrf.mxu0
      %v5758 = vadd.f32 0.0, %v5757
      %v5759 = vpop.f32.mrf.mxu0
      %5760 = vmatprep.mubr.f32.mxu0 0.0
      %5761 = vmatmul.mubr.f32.gmra.mxu0 %v4756
      %v5762 = vpop.f32.mrf.mxu0
      %v5763 = vadd.f32 0.0, %v5762
      %v5764 = vpop.f32.mrf.mxu0
      %5765 = vmatprep.mubr.f32.mxu0 0.0
      %5766 = vmatmul.mubr.f32.gmra.mxu0 %v4758
      %v5767 = vpop.f32.mrf.mxu0
      %v5768 = vadd.f32 0.0, %v5767
      %v5769 = vpop.f32.mrf.mxu0
      %5770 = vmatprep.mubr.f32.mxu0 0.0
      %5771 = vmatmul.mubr.f32.gmra.mxu0 %v4760
      %v5772 = vpop.f32.mrf.mxu0
      %v5773 = vadd.f32 0.0, %v5772
      %v5774 = vpop.f32.mrf.mxu0
      %5775 = vmatprep.mubr.f32.mxu0 0.0
      %5776 = vmatmul.mubr.f32.gmra.mxu0 %v4762
      %v5777 = vpop.f32.mrf.mxu0
      %v5778 = vadd.f32 0.0, %v5777
      %v5779 = vpop.f32.mrf.mxu0
      %5780 = vmatprep.mubr.f32.mxu0 0.0
      %5781 = vmatmul.mubr.f32.gmra.mxu0 %v4764
      %v5782 = vpop.f32.mrf.mxu0
      %v5783 = vadd.f32 0.0, %v5782
      %v5784 = vpop.f32.mrf.mxu0
      %5785 = vmatprep.mubr.f32.mxu0 0.0
      %5786 = vmatmul.mubr.f32.gmra.mxu0 %v4766
      %v5787 = vpop.f32.mrf.mxu0
      %v5788 = vadd.f32 0.0, %v5787
      %v5789 = vpop.f32.mrf.mxu0
      %5790 = vmatprep.mubr.f32.mxu0 0.0
      %5791 = vmatmul.mubr.f32.gmra.mxu0 %v4768
      %v5792 = vpop.f32.mrf.mxu0
      %v5793 = vadd.f32 0.0, %v5792
      %v5794 = vpop.f32.mrf.mxu0
      %5795 = vmatprep.mubr.f32.mxu0 0.0
      %5796 = vmatmul.mubr.f32.gmra.mxu0 %v4770
      %v5797 = vpop.f32.mrf.mxu0
      %v5798 = vadd.f32 0.0, %v5797
      %v5799 = vpop.f32.mrf.mxu0
      %5800 = vmatprep.mubr.f32.mxu0 0.0
      %5801 = vmatmul.mubr.f32.gmra.mxu0 %v5579
      %v5802 = vpop.f32.mrf.mxu0
      %v5803 = vadd.f32 0.0, %v5802
      %v5804 = vpop.f32.mrf.mxu0
      %5805 = vmatprep.mubr.f32.mxu0 0.0
      %5806 = vmatmul.mubr.f32.gmra.mxu0 %v5581
      %v5807 = vpop.f32.mrf.mxu0
      %v5808 = vadd.f32 0.0, %v5807
      %v5809 = vpop.f32.mrf.mxu0
      %5810 = vdwg.mxu0
      %v5811 = vadd.f32 %v5540, %v5653
      %v5812 = vadd.f32 %v5541, %v5658
      %v5813 = vadd.f32 %v5542, %v5663
      %v5814 = vadd.f32 %v5543, %v5668
      %v5815 = vadd.f32 %v5544, %v5673
      %v5816 = vadd.f32 %v5545, %v5678
      %v5817 = vadd.f32 %v5546, %v5683
      %v5818 = vadd.f32 %v5547, %v5688
      %v5819 = vadd.f32 %v5548, %v5693
      %v5820 = vadd.f32 %v5549, %v5698
      %v5821 = vadd.f32 %v5550, %v5703
      %v5822 = vadd.f32 %v5551, %v5708
      %v5823 = vadd.f32 %v5552, %v5713
      %v5824 = vadd.f32 %v5553, %v5718
      %v5825 = vadd.f32 %v5554, %v5723
      %v5826 = vadd.f32 %v5555, %v5728
      %v5827 = vadd.f32 %v5556, %v5733
      %v5828 = vadd.f32 %v5557, %v5738
      %v5829 = vadd.f32 %v5558, %v5743
      %v5830 = vadd.f32 %v5559, %v5748
      %v5831 = vadd.f32 %v5560, %v5753
      %v5832 = vadd.f32 %v5561, %v5758
      %v5833 = vadd.f32 %v5562, %v5763
      %v5834 = vadd.f32 %v5563, %v5768
      %v5835 = vadd.f32 %v5564, %v5773
      %v5836 = vadd.f32 %v5565, %v5778
      %v5837 = vadd.f32 %v5566, %v5783
      %v5838 = vadd.f32 %v5567, %v5788
      %v5839 = vadd.f32 %v5568, %v5793
      %v5840 = vadd.f32 %v5569, %v5798
      %v5841 = vadd.f32 %v5570, %v5803
      %v5842 = vadd.f32 %v5571, %v5808
      %s5843 = scalar_lea.vmem %s4, 24
      %v5844 = vld [vmem:[%s5843] sm:$0xf]
      %v5846 = vsel %vm461, %v3908, 0
      %v5849 = vsel %vm461, %v3909, 0
      %v5852 = vsel %vm901, %v5844, 0
      %5854 = vmatprep.subr.mxu0 0.0
      %5855 = vmatpush1.msra.mxu0 0.0
      %5856 = vmatprep.subr.mxu0 0.0
      %5857 = vmatpush1.msra.mxu0 0.0
      %5858 = vmatprep.subr.mxu0 0.0
      %5859 = vmatpush1.msra.mxu0 0.0
      %5860 = vmatprep.subr.mxu0 0.0
      %5861 = vmatpush1.msra.mxu0 0.0
      %5862 = vmatprep.subr.mxu0 0.0
      %5863 = vmatpush1.msra.mxu0 0.0
      %5864 = vmatprep.subr.mxu0 0.0
      %5865 = vmatpush1.msra.mxu0 0.0
      %5866 = vmatprep.subr.mxu0 0.0
      %5867 = vmatpush1.msra.mxu0 0.0
      %5868 = vmatprep.subr.mxu0 0.0
      %5869 = vmatpush1.msra.mxu0 0.0
      %5870 = vmatprep.subr.mxu0 0.0
      %5871 = vmatpush1.msra.mxu0 0.0
      %5872 = vmatprep.subr.mxu0 0.0
      %5873 = vmatpush1.msra.mxu0 0.0
      %5874 = vmatprep.subr.mxu0 0.0
      %5875 = vmatpush1.msra.mxu0 0.0
      %5876 = vmatprep.subr.mxu0 0.0
      %5877 = vmatpush1.msra.mxu0 0.0
      %5878 = vmatprep.subr.mxu0 0.0
      %5879 = vmatpush1.msra.mxu0 0.0
      %5880 = vmatprep.subr.mxu0 0.0
      %5881 = vmatpush1.msra.mxu0 0.0
      %5882 = vmatprep.subr.mxu0 0.0
      %5883 = vmatpush1.msra.mxu0 0.0
      %5884 = vmatprep.subr.mxu0 0.0
      %5885 = vmatpush1.msra.mxu0 %v5852
      %5886 = vmatprep.subr.mxu0 0.0
      %5887 = vmatpush2.msra.mxu0 0.0
      %5888 = vmatprep.subr.mxu0 0.0
      %5889 = vmatpush2.msra.mxu0 0.0
      %5890 = vmatprep.subr.mxu0 0.0
      %5891 = vmatpush2.msra.mxu0 0.0
      %5892 = vmatprep.subr.mxu0 0.0
      %5893 = vmatpush2.msra.mxu0 0.0
      %5894 = vmatprep.subr.mxu0 0.0
      %5895 = vmatpush2.msra.mxu0 0.0
      %5896 = vmatprep.subr.mxu0 0.0
      %5897 = vmatpush2.msra.mxu0 0.0
      %5898 = vmatprep.subr.mxu0 0.0
      %5899 = vmatpush2.msra.mxu0 0.0
      %5900 = vmatprep.subr.mxu0 0.0
      %5901 = vmatpush2.msra.mxu0 0.0
      %5902 = vmatprep.subr.mxu0 0.0
      %5903 = vmatpush2.msra.mxu0 0.0
      %5904 = vmatprep.subr.mxu0 0.0
      %5905 = vmatpush2.msra.mxu0 0.0
      %5906 = vmatprep.subr.mxu0 0.0
      %5907 = vmatpush2.msra.mxu0 0.0
      %5908 = vmatprep.subr.mxu0 0.0
      %5909 = vmatpush2.msra.mxu0 0.0
      %5910 = vmatprep.subr.mxu0 0.0
      %5911 = vmatpush2.msra.mxu0 0.0
      %5912 = vmatprep.subr.mxu0 0.0
      %5913 = vmatpush2.msra.mxu0 0.0
      %5914 = vmatprep.subr.mxu0 0.0
      %5915 = vmatpush2.msra.mxu0 0.0
      %5916 = vmatprep.subr.mxu0 0.0
      %5917 = vmatpush2.msra.mxu0 0.0
      %5918 = vmatprep.mubr.f32.mxu0 0.0
      %5919 = vmatmul.mubr.f32.gmra.mxu0 %v4342
      %v5920 = vpop.f32.mrf.mxu0
      %v5921 = vadd.f32 0.0, %v5920
      %v5922 = vpop.f32.mrf.mxu0
      %5923 = vmatprep.mubr.f32.mxu0 0.0
      %5924 = vmatmul.mubr.f32.gmra.mxu0 %v4344
      %v5925 = vpop.f32.mrf.mxu0
      %v5926 = vadd.f32 0.0, %v5925
      %v5927 = vpop.f32.mrf.mxu0
      %5928 = vmatprep.mubr.f32.mxu0 0.0
      %5929 = vmatmul.mubr.f32.gmra.mxu0 %v4346
      %v5930 = vpop.f32.mrf.mxu0
      %v5931 = vadd.f32 0.0, %v5930
      %v5932 = vpop.f32.mrf.mxu0
      %5933 = vmatprep.mubr.f32.mxu0 0.0
      %5934 = vmatmul.mubr.f32.gmra.mxu0 %v4348
      %v5935 = vpop.f32.mrf.mxu0
      %v5936 = vadd.f32 0.0, %v5935
      %v5937 = vpop.f32.mrf.mxu0
      %5938 = vmatprep.mubr.f32.mxu0 0.0
      %5939 = vmatmul.mubr.f32.gmra.mxu0 %v4350
      %v5940 = vpop.f32.mrf.mxu0
      %v5941 = vadd.f32 0.0, %v5940
      %v5942 = vpop.f32.mrf.mxu0
      %5943 = vmatprep.mubr.f32.mxu0 0.0
      %5944 = vmatmul.mubr.f32.gmra.mxu0 %v4352
      %v5945 = vpop.f32.mrf.mxu0
      %v5946 = vadd.f32 0.0, %v5945
      %v5947 = vpop.f32.mrf.mxu0
      %5948 = vmatprep.mubr.f32.mxu0 0.0
      %5949 = vmatmul.mubr.f32.gmra.mxu0 %v4354
      %v5950 = vpop.f32.mrf.mxu0
      %v5951 = vadd.f32 0.0, %v5950
      %v5952 = vpop.f32.mrf.mxu0
      %5953 = vmatprep.mubr.f32.mxu0 0.0
      %5954 = vmatmul.mubr.f32.gmra.mxu0 %v4356
      %v5955 = vpop.f32.mrf.mxu0
      %v5956 = vadd.f32 0.0, %v5955
      %v5957 = vpop.f32.mrf.mxu0
      %5958 = vmatprep.mubr.f32.mxu0 0.0
      %5959 = vmatmul.mubr.f32.gmra.mxu0 %v4358
      %v5960 = vpop.f32.mrf.mxu0
      %v5961 = vadd.f32 0.0, %v5960
      %v5962 = vpop.f32.mrf.mxu0
      %5963 = vmatprep.mubr.f32.mxu0 0.0
      %5964 = vmatmul.mubr.f32.gmra.mxu0 %v4360
      %v5965 = vpop.f32.mrf.mxu0
      %v5966 = vadd.f32 0.0, %v5965
      %v5967 = vpop.f32.mrf.mxu0
      %5968 = vmatprep.mubr.f32.mxu0 0.0
      %5969 = vmatmul.mubr.f32.gmra.mxu0 %v4362
      %v5970 = vpop.f32.mrf.mxu0
      %v5971 = vadd.f32 0.0, %v5970
      %v5972 = vpop.f32.mrf.mxu0
      %5973 = vmatprep.mubr.f32.mxu0 0.0
      %5974 = vmatmul.mubr.f32.gmra.mxu0 %v4364
      %v5975 = vpop.f32.mrf.mxu0
      %v5976 = vadd.f32 0.0, %v5975
      %v5977 = vpop.f32.mrf.mxu0
      %5978 = vmatprep.mubr.f32.mxu0 0.0
      %5979 = vmatmul.mubr.f32.gmra.mxu0 %v4366
      %v5980 = vpop.f32.mrf.mxu0
      %v5981 = vadd.f32 0.0, %v5980
      %v5982 = vpop.f32.mrf.mxu0
      %5983 = vmatprep.mubr.f32.mxu0 0.0
      %5984 = vmatmul.mubr.f32.gmra.mxu0 %v4368
      %v5985 = vpop.f32.mrf.mxu0
      %v5986 = vadd.f32 0.0, %v5985
      %v5987 = vpop.f32.mrf.mxu0
      %5988 = vmatprep.mubr.f32.mxu0 0.0
      %5989 = vmatmul.mubr.f32.gmra.mxu0 %v4370
      %v5990 = vpop.f32.mrf.mxu0
      %v5991 = vadd.f32 0.0, %v5990
      %v5992 = vpop.f32.mrf.mxu0
      %5993 = vmatprep.mubr.f32.mxu0 0.0
      %5994 = vmatmul.mubr.f32.gmra.mxu0 %v4372
      %v5995 = vpop.f32.mrf.mxu0
      %v5996 = vadd.f32 0.0, %v5995
      %v5997 = vpop.f32.mrf.mxu0
      %5998 = vmatprep.mubr.f32.mxu0 0.0
      %5999 = vmatmul.mubr.f32.gmra.mxu0 %v4374
      %v6000 = vpop.f32.mrf.mxu0
      %v6001 = vadd.f32 0.0, %v6000
      %v6002 = vpop.f32.mrf.mxu0
      %6003 = vmatprep.mubr.f32.mxu0 0.0
      %6004 = vmatmul.mubr.f32.gmra.mxu0 %v4376
      %v6005 = vpop.f32.mrf.mxu0
      %v6006 = vadd.f32 0.0, %v6005
      %v6007 = vpop.f32.mrf.mxu0
      %6008 = vmatprep.mubr.f32.mxu0 0.0
      %6009 = vmatmul.mubr.f32.gmra.mxu0 %v4378
      %v6010 = vpop.f32.mrf.mxu0
      %v6011 = vadd.f32 0.0, %v6010
      %v6012 = vpop.f32.mrf.mxu0
      %6013 = vmatprep.mubr.f32.mxu0 0.0
      %6014 = vmatmul.mubr.f32.gmra.mxu0 %v4380
      %v6015 = vpop.f32.mrf.mxu0
      %v6016 = vadd.f32 0.0, %v6015
      %v6017 = vpop.f32.mrf.mxu0
      %6018 = vmatprep.mubr.f32.mxu0 0.0
      %6019 = vmatmul.mubr.f32.gmra.mxu0 %v4382
      %v6020 = vpop.f32.mrf.mxu0
      %v6021 = vadd.f32 0.0, %v6020
      %v6022 = vpop.f32.mrf.mxu0
      %6023 = vmatprep.mubr.f32.mxu0 0.0
      %6024 = vmatmul.mubr.f32.gmra.mxu0 %v4384
      %v6025 = vpop.f32.mrf.mxu0
      %v6026 = vadd.f32 0.0, %v6025
      %v6027 = vpop.f32.mrf.mxu0
      %6028 = vmatprep.mubr.f32.mxu0 0.0
      %6029 = vmatmul.mubr.f32.gmra.mxu0 %v4386
      %v6030 = vpop.f32.mrf.mxu0
      %v6031 = vadd.f32 0.0, %v6030
      %v6032 = vpop.f32.mrf.mxu0
      %6033 = vmatprep.mubr.f32.mxu0 0.0
      %6034 = vmatmul.mubr.f32.gmra.mxu0 %v4388
      %v6035 = vpop.f32.mrf.mxu0
      %v6036 = vadd.f32 0.0, %v6035
      %v6037 = vpop.f32.mrf.mxu0
      %6038 = vmatprep.mubr.f32.mxu0 0.0
      %6039 = vmatmul.mubr.f32.gmra.mxu0 %v4390
      %v6040 = vpop.f32.mrf.mxu0
      %v6041 = vadd.f32 0.0, %v6040
      %v6042 = vpop.f32.mrf.mxu0
      %6043 = vmatprep.mubr.f32.mxu0 0.0
      %6044 = vmatmul.mubr.f32.gmra.mxu0 %v4392
      %v6045 = vpop.f32.mrf.mxu0
      %v6046 = vadd.f32 0.0, %v6045
      %v6047 = vpop.f32.mrf.mxu0
      %6048 = vmatprep.mubr.f32.mxu0 0.0
      %6049 = vmatmul.mubr.f32.gmra.mxu0 %v4394
      %v6050 = vpop.f32.mrf.mxu0
      %v6051 = vadd.f32 0.0, %v6050
      %v6052 = vpop.f32.mrf.mxu0
      %6053 = vmatprep.mubr.f32.mxu0 0.0
      %6054 = vmatmul.mubr.f32.gmra.mxu0 %v4396
      %v6055 = vpop.f32.mrf.mxu0
      %v6056 = vadd.f32 0.0, %v6055
      %v6057 = vpop.f32.mrf.mxu0
      %6058 = vmatprep.mubr.f32.mxu0 0.0
      %6059 = vmatmul.mubr.f32.gmra.mxu0 %v5035
      %v6060 = vpop.f32.mrf.mxu0
      %v6061 = vadd.f32 0.0, %v6060
      %v6062 = vpop.f32.mrf.mxu0
      %6063 = vmatprep.mubr.f32.mxu0 0.0
      %6064 = vmatmul.mubr.f32.gmra.mxu0 %v5038
      %v6065 = vpop.f32.mrf.mxu0
      %v6066 = vadd.f32 0.0, %v6065
      %v6067 = vpop.f32.mrf.mxu0
      %6068 = vmatprep.mubr.f32.mxu0 0.0
      %6069 = vmatmul.mubr.f32.gmra.mxu0 %v5846
      %v6070 = vpop.f32.mrf.mxu0
      %v6071 = vadd.f32 0.0, %v6070
      %v6072 = vpop.f32.mrf.mxu0
      %6073 = vmatprep.mubr.f32.mxu0 0.0
      %6074 = vmatmul.mubr.f32.gmra.mxu0 %v5849
      %v6075 = vpop.f32.mrf.mxu0
      %v6076 = vadd.f32 0.0, %v6075
      %v6077 = vpop.f32.mrf.mxu0
      %6078 = vdwg.mxu0
      %v6079 = vadd.f32 %v5811, %v5921
      %v6080 = vadd.f32 %v5812, %v5926
      %v6081 = vadd.f32 %v5813, %v5931
      %v6082 = vadd.f32 %v5814, %v5936
      %v6083 = vadd.f32 %v5815, %v5941
      %v6084 = vadd.f32 %v5816, %v5946
      %v6085 = vadd.f32 %v5817, %v5951
      %v6086 = vadd.f32 %v5818, %v5956
      %v6087 = vadd.f32 %v5819, %v5961
      %v6088 = vadd.f32 %v5820, %v5966
      %v6089 = vadd.f32 %v5821, %v5971
      %v6090 = vadd.f32 %v5822, %v5976
      %v6091 = vadd.f32 %v5823, %v5981
      %v6092 = vadd.f32 %v5824, %v5986
      %v6093 = vadd.f32 %v5825, %v5991
      %v6094 = vadd.f32 %v5826, %v5996
      %v6095 = vadd.f32 %v5827, %v6001
      %v6096 = vadd.f32 %v5828, %v6006
      %v6097 = vadd.f32 %v5829, %v6011
      %v6098 = vadd.f32 %v5830, %v6016
      %v6099 = vadd.f32 %v5831, %v6021
      %v6100 = vadd.f32 %v5832, %v6026
      %v6101 = vadd.f32 %v5833, %v6031
      %v6102 = vadd.f32 %v5834, %v6036
      %v6103 = vadd.f32 %v5835, %v6041
      %v6104 = vadd.f32 %v5836, %v6046
      %v6105 = vadd.f32 %v5837, %v6051
      %v6106 = vadd.f32 %v5838, %v6056
      %v6107 = vadd.f32 %v5839, %v6061
      %v6108 = vadd.f32 %v5840, %v6066
      %v6109 = vadd.f32 %v5841, %v6071
      %v6110 = vadd.f32 %v5842, %v6076
      %v6112 = vrot.slane %v3908, 1
      %v6113 = vrot.slane %v3909, 1
      %v6114 = vsel %vm736, %v6112, %v6113
      %v6115 = vrot.slane %v3910, 1
      %v6116 = vsel %vm736, %v6113, %v6115
      %s6117 = scalar_lea.vmem %s4, 28
      %v6118 = vld [vmem:[%s6117] sm:$0xf]
      %v6119 = vsel %vm461, %v6114, 0
      %v6121 = vsel %vm461, %v6116, 0
      %v6124 = vsel %vm901, %v6118, 0
      %6126 = vmatprep.subr.mxu0 0.0
      %6127 = vmatpush1.msra.mxu0 0.0
      %6128 = vmatprep.subr.mxu0 0.0
      %6129 = vmatpush1.msra.mxu0 0.0
      %6130 = vmatprep.subr.mxu0 0.0
      %6131 = vmatpush1.msra.mxu0 0.0
      %6132 = vmatprep.subr.mxu0 0.0
      %6133 = vmatpush1.msra.mxu0 0.0
      %6134 = vmatprep.subr.mxu0 0.0
      %6135 = vmatpush1.msra.mxu0 0.0
      %6136 = vmatprep.subr.mxu0 0.0
      %6137 = vmatpush1.msra.mxu0 0.0
      %6138 = vmatprep.subr.mxu0 0.0
      %6139 = vmatpush1.msra.mxu0 0.0
      %6140 = vmatprep.subr.mxu0 0.0
      %6141 = vmatpush1.msra.mxu0 0.0
      %6142 = vmatprep.subr.mxu0 0.0
      %6143 = vmatpush1.msra.mxu0 0.0
      %6144 = vmatprep.subr.mxu0 0.0
      %6145 = vmatpush1.msra.mxu0 0.0
      %6146 = vmatprep.subr.mxu0 0.0
      %6147 = vmatpush1.msra.mxu0 0.0
      %6148 = vmatprep.subr.mxu0 0.0
      %6149 = vmatpush1.msra.mxu0 0.0
      %6150 = vmatprep.subr.mxu0 0.0
      %6151 = vmatpush1.msra.mxu0 0.0
      %6152 = vmatprep.subr.mxu0 0.0
      %6153 = vmatpush1.msra.mxu0 0.0
      %6154 = vmatprep.subr.mxu0 0.0
      %6155 = vmatpush1.msra.mxu0 0.0
      %6156 = vmatprep.subr.mxu0 0.0
      %6157 = vmatpush1.msra.mxu0 %v6124
      %6158 = vmatprep.subr.mxu0 0.0
      %6159 = vmatpush2.msra.mxu0 0.0
      %6160 = vmatprep.subr.mxu0 0.0
      %6161 = vmatpush2.msra.mxu0 0.0
      %6162 = vmatprep.subr.mxu0 0.0
      %6163 = vmatpush2.msra.mxu0 0.0
      %6164 = vmatprep.subr.mxu0 0.0
      %6165 = vmatpush2.msra.mxu0 0.0
      %6166 = vmatprep.subr.mxu0 0.0
      %6167 = vmatpush2.msra.mxu0 0.0
      %6168 = vmatprep.subr.mxu0 0.0
      %6169 = vmatpush2.msra.mxu0 0.0
      %6170 = vmatprep.subr.mxu0 0.0
      %6171 = vmatpush2.msra.mxu0 0.0
      %6172 = vmatprep.subr.mxu0 0.0
      %6173 = vmatpush2.msra.mxu0 0.0
      %6174 = vmatprep.subr.mxu0 0.0
      %6175 = vmatpush2.msra.mxu0 0.0
      %6176 = vmatprep.subr.mxu0 0.0
      %6177 = vmatpush2.msra.mxu0 0.0
      %6178 = vmatprep.subr.mxu0 0.0
      %6179 = vmatpush2.msra.mxu0 0.0
      %6180 = vmatprep.subr.mxu0 0.0
      %6181 = vmatpush2.msra.mxu0 0.0
      %6182 = vmatprep.subr.mxu0 0.0
      %6183 = vmatpush2.msra.mxu0 0.0
      %6184 = vmatprep.subr.mxu0 0.0
      %6185 = vmatpush2.msra.mxu0 0.0
      %6186 = vmatprep.subr.mxu0 0.0
      %6187 = vmatpush2.msra.mxu0 0.0
      %6188 = vmatprep.subr.mxu0 0.0
      %6189 = vmatpush2.msra.mxu0 0.0
      %6190 = vmatprep.mubr.f32.mxu0 0.0
      %6191 = vmatmul.mubr.f32.gmra.mxu0 %v4050
      %v6192 = vpop.f32.mrf.mxu0
      %v6193 = vadd.f32 0.0, %v6192
      %v6194 = vpop.f32.mrf.mxu0
      %6195 = vmatprep.mubr.f32.mxu0 0.0
      %6196 = vmatmul.mubr.f32.gmra.mxu0 %v4052
      %v6197 = vpop.f32.mrf.mxu0
      %v6198 = vadd.f32 0.0, %v6197
      %v6199 = vpop.f32.mrf.mxu0
      %6200 = vmatprep.mubr.f32.mxu0 0.0
      %6201 = vmatmul.mubr.f32.gmra.mxu0 %v4054
      %v6202 = vpop.f32.mrf.mxu0
      %v6203 = vadd.f32 0.0, %v6202
      %v6204 = vpop.f32.mrf.mxu0
      %6205 = vmatprep.mubr.f32.mxu0 0.0
      %6206 = vmatmul.mubr.f32.gmra.mxu0 %v4056
      %v6207 = vpop.f32.mrf.mxu0
      %v6208 = vadd.f32 0.0, %v6207
      %v6209 = vpop.f32.mrf.mxu0
      %6210 = vmatprep.mubr.f32.mxu0 0.0
      %6211 = vmatmul.mubr.f32.gmra.mxu0 %v4058
      %v6212 = vpop.f32.mrf.mxu0
      %v6213 = vadd.f32 0.0, %v6212
      %v6214 = vpop.f32.mrf.mxu0
      %6215 = vmatprep.mubr.f32.mxu0 0.0
      %6216 = vmatmul.mubr.f32.gmra.mxu0 %v4060
      %v6217 = vpop.f32.mrf.mxu0
      %v6218 = vadd.f32 0.0, %v6217
      %v6219 = vpop.f32.mrf.mxu0
      %6220 = vmatprep.mubr.f32.mxu0 0.0
      %6221 = vmatmul.mubr.f32.gmra.mxu0 %v4062
      %v6222 = vpop.f32.mrf.mxu0
      %v6223 = vadd.f32 0.0, %v6222
      %v6224 = vpop.f32.mrf.mxu0
      %6225 = vmatprep.mubr.f32.mxu0 0.0
      %6226 = vmatmul.mubr.f32.gmra.mxu0 %v4064
      %v6227 = vpop.f32.mrf.mxu0
      %v6228 = vadd.f32 0.0, %v6227
      %v6229 = vpop.f32.mrf.mxu0
      %6230 = vmatprep.mubr.f32.mxu0 0.0
      %6231 = vmatmul.mubr.f32.gmra.mxu0 %v4066
      %v6232 = vpop.f32.mrf.mxu0
      %v6233 = vadd.f32 0.0, %v6232
      %v6234 = vpop.f32.mrf.mxu0
      %6235 = vmatprep.mubr.f32.mxu0 0.0
      %6236 = vmatmul.mubr.f32.gmra.mxu0 %v4068
      %v6237 = vpop.f32.mrf.mxu0
      %v6238 = vadd.f32 0.0, %v6237
      %v6239 = vpop.f32.mrf.mxu0
      %6240 = vmatprep.mubr.f32.mxu0 0.0
      %6241 = vmatmul.mubr.f32.gmra.mxu0 %v4070
      %v6242 = vpop.f32.mrf.mxu0
      %v6243 = vadd.f32 0.0, %v6242
      %v6244 = vpop.f32.mrf.mxu0
      %6245 = vmatprep.mubr.f32.mxu0 0.0
      %6246 = vmatmul.mubr.f32.gmra.mxu0 %v4072
      %v6247 = vpop.f32.mrf.mxu0
      %v6248 = vadd.f32 0.0, %v6247
      %v6249 = vpop.f32.mrf.mxu0
      %6250 = vmatprep.mubr.f32.mxu0 0.0
      %6251 = vmatmul.mubr.f32.gmra.mxu0 %v4074
      %v6252 = vpop.f32.mrf.mxu0
      %v6253 = vadd.f32 0.0, %v6252
      %v6254 = vpop.f32.mrf.mxu0
      %6255 = vmatprep.mubr.f32.mxu0 0.0
      %6256 = vmatmul.mubr.f32.gmra.mxu0 %v4076
      %v6257 = vpop.f32.mrf.mxu0
      %v6258 = vadd.f32 0.0, %v6257
      %v6259 = vpop.f32.mrf.mxu0
      %6260 = vmatprep.mubr.f32.mxu0 0.0
      %6261 = vmatmul.mubr.f32.gmra.mxu0 %v4078
      %v6262 = vpop.f32.mrf.mxu0
      %v6263 = vadd.f32 0.0, %v6262
      %v6264 = vpop.f32.mrf.mxu0
      %6265 = vmatprep.mubr.f32.mxu0 0.0
      %6266 = vmatmul.mubr.f32.gmra.mxu0 %v4080
      %v6267 = vpop.f32.mrf.mxu0
      %v6268 = vadd.f32 0.0, %v6267
      %v6269 = vpop.f32.mrf.mxu0
      %6270 = vmatprep.mubr.f32.mxu0 0.0
      %6271 = vmatmul.mubr.f32.gmra.mxu0 %v4082
      %v6272 = vpop.f32.mrf.mxu0
      %v6273 = vadd.f32 0.0, %v6272
      %v6274 = vpop.f32.mrf.mxu0
      %6275 = vmatprep.mubr.f32.mxu0 0.0
      %6276 = vmatmul.mubr.f32.gmra.mxu0 %v4084
      %v6277 = vpop.f32.mrf.mxu0
      %v6278 = vadd.f32 0.0, %v6277
      %v6279 = vpop.f32.mrf.mxu0
      %6280 = vmatprep.mubr.f32.mxu0 0.0
      %6281 = vmatmul.mubr.f32.gmra.mxu0 %v4086
      %v6282 = vpop.f32.mrf.mxu0
      %v6283 = vadd.f32 0.0, %v6282
      %v6284 = vpop.f32.mrf.mxu0
      %6285 = vmatprep.mubr.f32.mxu0 0.0
      %6286 = vmatmul.mubr.f32.gmra.mxu0 %v4088
      %v6287 = vpop.f32.mrf.mxu0
      %v6288 = vadd.f32 0.0, %v6287
      %v6289 = vpop.f32.mrf.mxu0
      %6290 = vmatprep.mubr.f32.mxu0 0.0
      %6291 = vmatmul.mubr.f32.gmra.mxu0 %v4090
      %v6292 = vpop.f32.mrf.mxu0
      %v6293 = vadd.f32 0.0, %v6292
      %v6294 = vpop.f32.mrf.mxu0
      %6295 = vmatprep.mubr.f32.mxu0 0.0
      %6296 = vmatmul.mubr.f32.gmra.mxu0 %v4092
      %v6297 = vpop.f32.mrf.mxu0
      %v6298 = vadd.f32 0.0, %v6297
      %v6299 = vpop.f32.mrf.mxu0
      %6300 = vmatprep.mubr.f32.mxu0 0.0
      %6301 = vmatmul.mubr.f32.gmra.mxu0 %v4094
      %v6302 = vpop.f32.mrf.mxu0
      %v6303 = vadd.f32 0.0, %v6302
      %v6304 = vpop.f32.mrf.mxu0
      %6305 = vmatprep.mubr.f32.mxu0 0.0
      %6306 = vmatmul.mubr.f32.gmra.mxu0 %v4096
      %v6307 = vpop.f32.mrf.mxu0
      %v6308 = vadd.f32 0.0, %v6307
      %v6309 = vpop.f32.mrf.mxu0
      %6310 = vmatprep.mubr.f32.mxu0 0.0
      %6311 = vmatmul.mubr.f32.gmra.mxu0 %v4098
      %v6312 = vpop.f32.mrf.mxu0
      %v6313 = vadd.f32 0.0, %v6312
      %v6314 = vpop.f32.mrf.mxu0
      %6315 = vmatprep.mubr.f32.mxu0 0.0
      %6316 = vmatmul.mubr.f32.gmra.mxu0 %v4100
      %v6317 = vpop.f32.mrf.mxu0
      %v6318 = vadd.f32 0.0, %v6317
      %v6319 = vpop.f32.mrf.mxu0
      %6320 = vmatprep.mubr.f32.mxu0 0.0
      %6321 = vmatmul.mubr.f32.gmra.mxu0 %v4102
      %v6322 = vpop.f32.mrf.mxu0
      %v6323 = vadd.f32 0.0, %v6322
      %v6324 = vpop.f32.mrf.mxu0
      %6325 = vmatprep.mubr.f32.mxu0 0.0
      %6326 = vmatmul.mubr.f32.gmra.mxu0 %v4104
      %v6327 = vpop.f32.mrf.mxu0
      %v6328 = vadd.f32 0.0, %v6327
      %v6329 = vpop.f32.mrf.mxu0
      %6330 = vmatprep.mubr.f32.mxu0 0.0
      %6331 = vmatmul.mubr.f32.gmra.mxu0 %v5308
      %v6332 = vpop.f32.mrf.mxu0
      %v6333 = vadd.f32 0.0, %v6332
      %v6334 = vpop.f32.mrf.mxu0
      %6335 = vmatprep.mubr.f32.mxu0 0.0
      %6336 = vmatmul.mubr.f32.gmra.mxu0 %v5310
      %v6337 = vpop.f32.mrf.mxu0
      %v6338 = vadd.f32 0.0, %v6337
      %v6339 = vpop.f32.mrf.mxu0
      %6340 = vmatprep.mubr.f32.mxu0 0.0
      %6341 = vmatmul.mubr.f32.gmra.mxu0 %v6119
      %v6342 = vpop.f32.mrf.mxu0
      %v6343 = vadd.f32 0.0, %v6342
      %v6344 = vpop.f32.mrf.mxu0
      %6345 = vmatprep.mubr.f32.mxu0 0.0
      %6346 = vmatmul.mubr.f32.gmra.mxu0 %v6121
      %v6347 = vpop.f32.mrf.mxu0
      %v6348 = vadd.f32 0.0, %v6347
      %v6349 = vpop.f32.mrf.mxu0
      %6350 = vdwg.mxu0
      %v6351 = vadd.f32 %v6079, %v6193
      %v6352 = vadd.f32 %v6080, %v6198
      %v6353 = vadd.f32 %v6081, %v6203
      %v6354 = vadd.f32 %v6082, %v6208
      %v6355 = vadd.f32 %v6083, %v6213
      %v6356 = vadd.f32 %v6084, %v6218
      %v6357 = vadd.f32 %v6085, %v6223
      %v6358 = vadd.f32 %v6086, %v6228
      %v6359 = vadd.f32 %v6087, %v6233
      %v6360 = vadd.f32 %v6088, %v6238
      %v6361 = vadd.f32 %v6089, %v6243
      %v6362 = vadd.f32 %v6090, %v6248
      %v6363 = vadd.f32 %v6091, %v6253
      %v6364 = vadd.f32 %v6092, %v6258
      %v6365 = vadd.f32 %v6093, %v6263
      %v6366 = vadd.f32 %v6094, %v6268
      %v6367 = vadd.f32 %v6095, %v6273
      %v6368 = vadd.f32 %v6096, %v6278
      %v6369 = vadd.f32 %v6097, %v6283
      %v6370 = vadd.f32 %v6098, %v6288
      %v6371 = vadd.f32 %v6099, %v6293
      %v6372 = vadd.f32 %v6100, %v6298
      %v6373 = vadd.f32 %v6101, %v6303
      %v6374 = vadd.f32 %v6102, %v6308
      %v6375 = vadd.f32 %v6103, %v6313
      %v6376 = vadd.f32 %v6104, %v6318
      %v6377 = vadd.f32 %v6105, %v6323
      %v6378 = vadd.f32 %v6106, %v6328
      %v6379 = vadd.f32 %v6107, %v6333
      %v6380 = vadd.f32 %v6108, %v6338
      %v6381 = vadd.f32 %v6109, %v6343
      %v6382 = vadd.f32 %v6110, %v6348
      %v6383 = vrot.slane %v3908, 2
      %v6384 = vrot.slane %v3909, 2
      %v6385 = vsel %vm1470, %v6383, %v6384
      %v6386 = vrot.slane %v3910, 2
      %v6387 = vsel %vm1470, %v6384, %v6386
      %s6388 = scalar_lea.vmem %s4, 32
      %v6389 = vld [vmem:[%s6388] sm:$0xf]
      %v6390 = vsel %vm461, %v6385, 0
      %v6392 = vsel %vm461, %v6387, 0
      %v6395 = vsel %vm901, %v6389, 0
      %6397 = vmatprep.subr.mxu0 0.0
      %6398 = vmatpush1.msra.mxu0 0.0
      %6399 = vmatprep.subr.mxu0 0.0
      %6400 = vmatpush1.msra.mxu0 0.0
      %6401 = vmatprep.subr.mxu0 0.0
      %6402 = vmatpush1.msra.mxu0 0.0
      %6403 = vmatprep.subr.mxu0 0.0
      %6404 = vmatpush1.msra.mxu0 0.0
      %6405 = vmatprep.subr.mxu0 0.0
      %6406 = vmatpush1.msra.mxu0 0.0
      %6407 = vmatprep.subr.mxu0 0.0
      %6408 = vmatpush1.msra.mxu0 0.0
      %6409 = vmatprep.subr.mxu0 0.0
      %6410 = vmatpush1.msra.mxu0 0.0
      %6411 = vmatprep.subr.mxu0 0.0
      %6412 = vmatpush1.msra.mxu0 0.0
      %6413 = vmatprep.subr.mxu0 0.0
      %6414 = vmatpush1.msra.mxu0 0.0
      %6415 = vmatprep.subr.mxu0 0.0
      %6416 = vmatpush1.msra.mxu0 0.0
      %6417 = vmatprep.subr.mxu0 0.0
      %6418 = vmatpush1.msra.mxu0 0.0
      %6419 = vmatprep.subr.mxu0 0.0
      %6420 = vmatpush1.msra.mxu0 0.0
      %6421 = vmatprep.subr.mxu0 0.0
      %6422 = vmatpush1.msra.mxu0 0.0
      %6423 = vmatprep.subr.mxu0 0.0
      %6424 = vmatpush1.msra.mxu0 0.0
      %6425 = vmatprep.subr.mxu0 0.0
      %6426 = vmatpush1.msra.mxu0 0.0
      %6427 = vmatprep.subr.mxu0 0.0
      %6428 = vmatpush1.msra.mxu0 %v6395
      %6429 = vmatprep.subr.mxu0 0.0
      %6430 = vmatpush2.msra.mxu0 0.0
      %6431 = vmatprep.subr.mxu0 0.0
      %6432 = vmatpush2.msra.mxu0 0.0
      %6433 = vmatprep.subr.mxu0 0.0
      %6434 = vmatpush2.msra.mxu0 0.0
      %6435 = vmatprep.subr.mxu0 0.0
      %6436 = vmatpush2.msra.mxu0 0.0
      %6437 = vmatprep.subr.mxu0 0.0
      %6438 = vmatpush2.msra.mxu0 0.0
      %6439 = vmatprep.subr.mxu0 0.0
      %6440 = vmatpush2.msra.mxu0 0.0
      %6441 = vmatprep.subr.mxu0 0.0
      %6442 = vmatpush2.msra.mxu0 0.0
      %6443 = vmatprep.subr.mxu0 0.0
      %6444 = vmatpush2.msra.mxu0 0.0
      %6445 = vmatprep.subr.mxu0 0.0
      %6446 = vmatpush2.msra.mxu0 0.0
      %6447 = vmatprep.subr.mxu0 0.0
      %6448 = vmatpush2.msra.mxu0 0.0
      %6449 = vmatprep.subr.mxu0 0.0
      %6450 = vmatpush2.msra.mxu0 0.0
      %6451 = vmatprep.subr.mxu0 0.0
      %6452 = vmatpush2.msra.mxu0 0.0
      %6453 = vmatprep.subr.mxu0 0.0
      %6454 = vmatpush2.msra.mxu0 0.0
      %6455 = vmatprep.subr.mxu0 0.0
      %6456 = vmatpush2.msra.mxu0 0.0
      %6457 = vmatprep.subr.mxu0 0.0
      %6458 = vmatpush2.msra.mxu0 0.0
      %6459 = vmatprep.subr.mxu0 0.0
      %6460 = vmatpush2.msra.mxu0 0.0
      %6461 = vmatprep.mubr.f32.mxu0 0.0
      %6462 = vmatmul.mubr.f32.gmra.mxu0 %v4716
      %v6463 = vpop.f32.mrf.mxu0
      %v6464 = vadd.f32 0.0, %v6463
      %v6465 = vpop.f32.mrf.mxu0
      %6466 = vmatprep.mubr.f32.mxu0 0.0
      %6467 = vmatmul.mubr.f32.gmra.mxu0 %v4718
      %v6468 = vpop.f32.mrf.mxu0
      %v6469 = vadd.f32 0.0, %v6468
      %v6470 = vpop.f32.mrf.mxu0
      %6471 = vmatprep.mubr.f32.mxu0 0.0
      %6472 = vmatmul.mubr.f32.gmra.mxu0 %v4720
      %v6473 = vpop.f32.mrf.mxu0
      %v6474 = vadd.f32 0.0, %v6473
      %v6475 = vpop.f32.mrf.mxu0
      %6476 = vmatprep.mubr.f32.mxu0 0.0
      %6477 = vmatmul.mubr.f32.gmra.mxu0 %v4722
      %v6478 = vpop.f32.mrf.mxu0
      %v6479 = vadd.f32 0.0, %v6478
      %v6480 = vpop.f32.mrf.mxu0
      %6481 = vmatprep.mubr.f32.mxu0 0.0
      %6482 = vmatmul.mubr.f32.gmra.mxu0 %v4724
      %v6483 = vpop.f32.mrf.mxu0
      %v6484 = vadd.f32 0.0, %v6483
      %v6485 = vpop.f32.mrf.mxu0
      %6486 = vmatprep.mubr.f32.mxu0 0.0
      %6487 = vmatmul.mubr.f32.gmra.mxu0 %v4726
      %v6488 = vpop.f32.mrf.mxu0
      %v6489 = vadd.f32 0.0, %v6488
      %v6490 = vpop.f32.mrf.mxu0
      %6491 = vmatprep.mubr.f32.mxu0 0.0
      %6492 = vmatmul.mubr.f32.gmra.mxu0 %v4728
      %v6493 = vpop.f32.mrf.mxu0
      %v6494 = vadd.f32 0.0, %v6493
      %v6495 = vpop.f32.mrf.mxu0
      %6496 = vmatprep.mubr.f32.mxu0 0.0
      %6497 = vmatmul.mubr.f32.gmra.mxu0 %v4730
      %v6498 = vpop.f32.mrf.mxu0
      %v6499 = vadd.f32 0.0, %v6498
      %v6500 = vpop.f32.mrf.mxu0
      %6501 = vmatprep.mubr.f32.mxu0 0.0
      %6502 = vmatmul.mubr.f32.gmra.mxu0 %v4732
      %v6503 = vpop.f32.mrf.mxu0
      %v6504 = vadd.f32 0.0, %v6503
      %v6505 = vpop.f32.mrf.mxu0
      %6506 = vmatprep.mubr.f32.mxu0 0.0
      %6507 = vmatmul.mubr.f32.gmra.mxu0 %v4734
      %v6508 = vpop.f32.mrf.mxu0
      %v6509 = vadd.f32 0.0, %v6508
      %v6510 = vpop.f32.mrf.mxu0
      %6511 = vmatprep.mubr.f32.mxu0 0.0
      %6512 = vmatmul.mubr.f32.gmra.mxu0 %v4736
      %v6513 = vpop.f32.mrf.mxu0
      %v6514 = vadd.f32 0.0, %v6513
      %v6515 = vpop.f32.mrf.mxu0
      %6516 = vmatprep.mubr.f32.mxu0 0.0
      %6517 = vmatmul.mubr.f32.gmra.mxu0 %v4738
      %v6518 = vpop.f32.mrf.mxu0
      %v6519 = vadd.f32 0.0, %v6518
      %v6520 = vpop.f32.mrf.mxu0
      %6521 = vmatprep.mubr.f32.mxu0 0.0
      %6522 = vmatmul.mubr.f32.gmra.mxu0 %v4740
      %v6523 = vpop.f32.mrf.mxu0
      %v6524 = vadd.f32 0.0, %v6523
      %v6525 = vpop.f32.mrf.mxu0
      %6526 = vmatprep.mubr.f32.mxu0 0.0
      %6527 = vmatmul.mubr.f32.gmra.mxu0 %v4742
      %v6528 = vpop.f32.mrf.mxu0
      %v6529 = vadd.f32 0.0, %v6528
      %v6530 = vpop.f32.mrf.mxu0
      %6531 = vmatprep.mubr.f32.mxu0 0.0
      %6532 = vmatmul.mubr.f32.gmra.mxu0 %v4744
      %v6533 = vpop.f32.mrf.mxu0
      %v6534 = vadd.f32 0.0, %v6533
      %v6535 = vpop.f32.mrf.mxu0
      %6536 = vmatprep.mubr.f32.mxu0 0.0
      %6537 = vmatmul.mubr.f32.gmra.mxu0 %v4746
      %v6538 = vpop.f32.mrf.mxu0
      %v6539 = vadd.f32 0.0, %v6538
      %v6540 = vpop.f32.mrf.mxu0
      %6541 = vmatprep.mubr.f32.mxu0 0.0
      %6542 = vmatmul.mubr.f32.gmra.mxu0 %v4748
      %v6543 = vpop.f32.mrf.mxu0
      %v6544 = vadd.f32 0.0, %v6543
      %v6545 = vpop.f32.mrf.mxu0
      %6546 = vmatprep.mubr.f32.mxu0 0.0
      %6547 = vmatmul.mubr.f32.gmra.mxu0 %v4750
      %v6548 = vpop.f32.mrf.mxu0
      %v6549 = vadd.f32 0.0, %v6548
      %v6550 = vpop.f32.mrf.mxu0
      %6551 = vmatprep.mubr.f32.mxu0 0.0
      %6552 = vmatmul.mubr.f32.gmra.mxu0 %v4752
      %v6553 = vpop.f32.mrf.mxu0
      %v6554 = vadd.f32 0.0, %v6553
      %v6555 = vpop.f32.mrf.mxu0
      %6556 = vmatprep.mubr.f32.mxu0 0.0
      %6557 = vmatmul.mubr.f32.gmra.mxu0 %v4754
      %v6558 = vpop.f32.mrf.mxu0
      %v6559 = vadd.f32 0.0, %v6558
      %v6560 = vpop.f32.mrf.mxu0
      %6561 = vmatprep.mubr.f32.mxu0 0.0
      %6562 = vmatmul.mubr.f32.gmra.mxu0 %v4756
      %v6563 = vpop.f32.mrf.mxu0
      %v6564 = vadd.f32 0.0, %v6563
      %v6565 = vpop.f32.mrf.mxu0
      %6566 = vmatprep.mubr.f32.mxu0 0.0
      %6567 = vmatmul.mubr.f32.gmra.mxu0 %v4758
      %v6568 = vpop.f32.mrf.mxu0
      %v6569 = vadd.f32 0.0, %v6568
      %v6570 = vpop.f32.mrf.mxu0
      %6571 = vmatprep.mubr.f32.mxu0 0.0
      %6572 = vmatmul.mubr.f32.gmra.mxu0 %v4760
      %v6573 = vpop.f32.mrf.mxu0
      %v6574 = vadd.f32 0.0, %v6573
      %v6575 = vpop.f32.mrf.mxu0
      %6576 = vmatprep.mubr.f32.mxu0 0.0
      %6577 = vmatmul.mubr.f32.gmra.mxu0 %v4762
      %v6578 = vpop.f32.mrf.mxu0
      %v6579 = vadd.f32 0.0, %v6578
      %v6580 = vpop.f32.mrf.mxu0
      %6581 = vmatprep.mubr.f32.mxu0 0.0
      %6582 = vmatmul.mubr.f32.gmra.mxu0 %v4764
      %v6583 = vpop.f32.mrf.mxu0
      %v6584 = vadd.f32 0.0, %v6583
      %v6585 = vpop.f32.mrf.mxu0
      %6586 = vmatprep.mubr.f32.mxu0 0.0
      %6587 = vmatmul.mubr.f32.gmra.mxu0 %v4766
      %v6588 = vpop.f32.mrf.mxu0
      %v6589 = vadd.f32 0.0, %v6588
      %v6590 = vpop.f32.mrf.mxu0
      %6591 = vmatprep.mubr.f32.mxu0 0.0
      %6592 = vmatmul.mubr.f32.gmra.mxu0 %v4768
      %v6593 = vpop.f32.mrf.mxu0
      %v6594 = vadd.f32 0.0, %v6593
      %v6595 = vpop.f32.mrf.mxu0
      %6596 = vmatprep.mubr.f32.mxu0 0.0
      %6597 = vmatmul.mubr.f32.gmra.mxu0 %v4770
      %v6598 = vpop.f32.mrf.mxu0
      %v6599 = vadd.f32 0.0, %v6598
      %v6600 = vpop.f32.mrf.mxu0
      %6601 = vmatprep.mubr.f32.mxu0 0.0
      %6602 = vmatmul.mubr.f32.gmra.mxu0 %v5579
      %v6603 = vpop.f32.mrf.mxu0
      %v6604 = vadd.f32 0.0, %v6603
      %v6605 = vpop.f32.mrf.mxu0
      %6606 = vmatprep.mubr.f32.mxu0 0.0
      %6607 = vmatmul.mubr.f32.gmra.mxu0 %v5581
      %v6608 = vpop.f32.mrf.mxu0
      %v6609 = vadd.f32 0.0, %v6608
      %v6610 = vpop.f32.mrf.mxu0
      %6611 = vmatprep.mubr.f32.mxu0 0.0
      %6612 = vmatmul.mubr.f32.gmra.mxu0 %v6390
      %v6613 = vpop.f32.mrf.mxu0
      %v6614 = vadd.f32 0.0, %v6613
      %v6615 = vpop.f32.mrf.mxu0
      %6616 = vmatprep.mubr.f32.mxu0 0.0
      %6617 = vmatmul.mubr.f32.gmra.mxu0 %v6392
      %v6618 = vpop.f32.mrf.mxu0
      %v6619 = vadd.f32 0.0, %v6618
      %v6620 = vpop.f32.mrf.mxu0
      %6621 = vdwg.mxu0
      %v6622 = vadd.f32 %v6351, %v6464
      %v6623 = vadd.f32 %v6352, %v6469
      %v6624 = vadd.f32 %v6353, %v6474
      %v6625 = vadd.f32 %v6354, %v6479
      %v6626 = vadd.f32 %v6355, %v6484
      %v6627 = vadd.f32 %v6356, %v6489
      %v6628 = vadd.f32 %v6357, %v6494
      %v6629 = vadd.f32 %v6358, %v6499
      %v6630 = vadd.f32 %v6359, %v6504
      %v6631 = vadd.f32 %v6360, %v6509
      %v6632 = vadd.f32 %v6361, %v6514
      %v6633 = vadd.f32 %v6362, %v6519
      %v6634 = vadd.f32 %v6363, %v6524
      %v6635 = vadd.f32 %v6364, %v6529
      %v6636 = vadd.f32 %v6365, %v6534
      %v6637 = vadd.f32 %v6366, %v6539
      %v6638 = vadd.f32 %v6367, %v6544
      %v6639 = vadd.f32 %v6368, %v6549
      %v6640 = vadd.f32 %v6369, %v6554
      %v6641 = vadd.f32 %v6370, %v6559
      %v6642 = vadd.f32 %v6371, %v6564
      %v6643 = vadd.f32 %v6372, %v6569
      %v6644 = vadd.f32 %v6373, %v6574
      %v6645 = vadd.f32 %v6374, %v6579
      %v6646 = vadd.f32 %v6375, %v6584
      %v6647 = vadd.f32 %v6376, %v6589
      %v6648 = vadd.f32 %v6377, %v6594
      %v6649 = vadd.f32 %v6378, %v6599
      %v6650 = vadd.f32 %v6379, %v6604
      %v6651 = vadd.f32 %v6380, %v6609
      %v6652 = vadd.f32 %v6381, %v6614
      %v6653 = vadd.f32 %v6382, %v6619
      %v6654 = vld [vmem:[%s6] sm:$0x1]
      %v6656 = vlaneseq
      %v6657 = vshrl.u32 %v6656, 7
      %v6658 = vsub.s32 0, %v6657
      %v6659 = vrot.slane %v6654, %v6658
      %v6661 = vadd.f32 %v6622, %v6659
      %v6662 = vadd.f32 %v6623, %v6659
      %v6663 = vadd.f32 %v6624, %v6659
      %v6664 = vadd.f32 %v6625, %v6659
      %v6665 = vadd.f32 %v6626, %v6659
      %v6666 = vadd.f32 %v6627, %v6659
      %v6667 = vadd.f32 %v6628, %v6659
      %v6668 = vadd.f32 %v6629, %v6659
      %v6669 = vadd.f32 %v6630, %v6659
      %v6670 = vadd.f32 %v6631, %v6659
      %v6671 = vadd.f32 %v6632, %v6659
      %v6672 = vadd.f32 %v6633, %v6659
      %v6673 = vadd.f32 %v6634, %v6659
      %v6674 = vadd.f32 %v6635, %v6659
      %v6675 = vadd.f32 %v6636, %v6659
      %v6676 = vadd.f32 %v6637, %v6659
      %v6677 = vadd.f32 %v6638, %v6659
      %v6678 = vadd.f32 %v6639, %v6659
      %v6679 = vadd.f32 %v6640, %v6659
      %v6680 = vadd.f32 %v6641, %v6659
      %v6681 = vadd.f32 %v6642, %v6659
      %v6682 = vadd.f32 %v6643, %v6659
      %v6683 = vadd.f32 %v6644, %v6659
      %v6684 = vadd.f32 %v6645, %v6659
      %v6685 = vadd.f32 %v6646, %v6659
      %v6686 = vadd.f32 %v6647, %v6659
      %v6687 = vadd.f32 %v6648, %v6659
      %v6688 = vadd.f32 %v6649, %v6659
      %v6689 = vadd.f32 %v6650, %v6659
      %v6690 = vadd.f32 %v6651, %v6659
      %v6691 = vadd.f32 %v6652, %v6659
      %v6692 = vadd.f32 %v6653, %v6659
      %v6693 = vld [vmem:[%s406] sm:$0xff]
      %v6694 = vld [vmem:[%s406 + $0x8] sm:$0xff]
      %v6695 = vld [vmem:[%s406 + $0x10] sm:$0xff]
      %v6696 = vld [vmem:[%s406 + $0x18] sm:$0xff]
      %v6697 = vld [vmem:[%s406 + $0x20] sm:$0xff]
      %v6698 = vld [vmem:[%s406 + $0x28] sm:$0xff]
      %v6699 = vld [vmem:[%s406 + $0x30] sm:$0xff]
      %v6700 = vld [vmem:[%s406 + $0x38] sm:$0xff]
      %v6701 = vld [vmem:[%s406 + $0x40] sm:$0xff]
      %v6702 = vld [vmem:[%s406 + $0x48] sm:$0xff]
      %v6703 = vld [vmem:[%s406 + $0x50] sm:$0xff]
      %v6704 = vld [vmem:[%s406 + $0x58] sm:$0xff]
      %v6705 = vld [vmem:[%s406 + $0x60] sm:$0xff]
      %v6706 = vld [vmem:[%s406 + $0x68] sm:$0xff]
      %v6707 = vld [vmem:[%s406 + $0x70] sm:$0xff]
      %v6708 = vld [vmem:[%s406 + $0x78] sm:$0xff]
      %v6709 = vld [vmem:[%s406 + $0x80] sm:$0xff]
      %v6710 = vld [vmem:[%s406 + $0x88] sm:$0xff]
      %v6711 = vld [vmem:[%s406 + $0x90] sm:$0xff]
      %v6712 = vld [vmem:[%s406 + $0x98] sm:$0xff]
      %v6713 = vld [vmem:[%s406 + $0xa0] sm:$0xff]
      %v6714 = vld [vmem:[%s406 + $0xa8] sm:$0xff]
      %v6715 = vld [vmem:[%s406 + $0xb0] sm:$0xff]
      %v6716 = vld [vmem:[%s406 + $0xb8] sm:$0xff]
      %v6717 = vld [vmem:[%s406 + $0xc0] sm:$0xff]
      %v6718 = vld [vmem:[%s406 + $0xc8] sm:$0xff]
      %v6719 = vld [vmem:[%s406 + $0xd0] sm:$0xff]
      %v6720 = vld [vmem:[%s406 + $0xd8] sm:$0xff]
      %v6721 = vld [vmem:[%s406 + $0xe0] sm:$0xff]
      %v6722 = vld [vmem:[%s406 + $0xe8] sm:$0xff]
      %v6723 = vld [vmem:[%s406 + $0xf0] sm:$0xff]
      %v6724 = vld [vmem:[%s406 + $0xf8] sm:$0xff]
      %v6725 = vadd.f32 %v6661, %v6693
      %v6726 = vadd.f32 %v6662, %v6694
      %v6727 = vadd.f32 %v6663, %v6695
      %v6728 = vadd.f32 %v6664, %v6696
      %v6729 = vadd.f32 %v6665, %v6697
      %v6730 = vadd.f32 %v6666, %v6698
      %v6731 = vadd.f32 %v6667, %v6699
      %v6732 = vadd.f32 %v6668, %v6700
      %v6733 = vadd.f32 %v6669, %v6701
      %v6734 = vadd.f32 %v6670, %v6702
      %v6735 = vadd.f32 %v6671, %v6703
      %v6736 = vadd.f32 %v6672, %v6704
      %v6737 = vadd.f32 %v6673, %v6705
      %v6738 = vadd.f32 %v6674, %v6706
      %v6739 = vadd.f32 %v6675, %v6707
      %v6740 = vadd.f32 %v6676, %v6708
      %v6741 = vadd.f32 %v6677, %v6709
      %v6742 = vadd.f32 %v6678, %v6710
      %v6743 = vadd.f32 %v6679, %v6711
      %v6744 = vadd.f32 %v6680, %v6712
      %v6745 = vadd.f32 %v6681, %v6713
      %v6746 = vadd.f32 %v6682, %v6714
      %v6747 = vadd.f32 %v6683, %v6715
      %v6748 = vadd.f32 %v6684, %v6716
      %v6749 = vadd.f32 %v6685, %v6717
      %v6750 = vadd.f32 %v6686, %v6718
      %v6751 = vadd.f32 %v6687, %v6719
      %v6752 = vadd.f32 %v6688, %v6720
      %v6753 = vadd.f32 %v6689, %v6721
      %v6754 = vadd.f32 %v6690, %v6722
      %v6755 = vadd.f32 %v6691, %v6723
      %v6756 = vadd.f32 %v6692, %v6724
      %6757 = vst.msk [vmem:[%s455] sm:$0xff] %vm461, %v6725
      %6758 = vst.msk [vmem:[%s455 + $0x8] sm:$0xff] %vm461, %v6726
      %6759 = vst.msk [vmem:[%s455 + $0x10] sm:$0xff] %vm461, %v6727
      %6760 = vst.msk [vmem:[%s455 + $0x18] sm:$0xff] %vm461, %v6728
      %6761 = vst.msk [vmem:[%s455 + $0x20] sm:$0xff] %vm461, %v6729
      %6762 = vst.msk [vmem:[%s455 + $0x28] sm:$0xff] %vm461, %v6730
      %6763 = vst.msk [vmem:[%s455 + $0x30] sm:$0xff] %vm461, %v6731
      %6764 = vst.msk [vmem:[%s455 + $0x38] sm:$0xff] %vm461, %v6732
      %6765 = vst.msk [vmem:[%s455 + $0x40] sm:$0xff] %vm461, %v6733
      %6766 = vst.msk [vmem:[%s455 + $0x48] sm:$0xff] %vm461, %v6734
      %6767 = vst.msk [vmem:[%s455 + $0x50] sm:$0xff] %vm461, %v6735
      %6768 = vst.msk [vmem:[%s455 + $0x58] sm:$0xff] %vm461, %v6736
      %6769 = vst.msk [vmem:[%s455 + $0x60] sm:$0xff] %vm461, %v6737
      %6770 = vst.msk [vmem:[%s455 + $0x68] sm:$0xff] %vm461, %v6738
      %6771 = vst.msk [vmem:[%s455 + $0x70] sm:$0xff] %vm461, %v6739
      %6772 = vst.msk [vmem:[%s455 + $0x78] sm:$0xff] %vm461, %v6740
      %6773 = vst.msk [vmem:[%s455 + $0x80] sm:$0xff] %vm461, %v6741
      %6774 = vst.msk [vmem:[%s455 + $0x88] sm:$0xff] %vm461, %v6742
      %6775 = vst.msk [vmem:[%s455 + $0x90] sm:$0xff] %vm461, %v6743
      %6776 = vst.msk [vmem:[%s455 + $0x98] sm:$0xff] %vm461, %v6744
      %6777 = vst.msk [vmem:[%s455 + $0xa0] sm:$0xff] %vm461, %v6745
      %6778 = vst.msk [vmem:[%s455 + $0xa8] sm:$0xff] %vm461, %v6746
      %6779 = vst.msk [vmem:[%s455 + $0xb0] sm:$0xff] %vm461, %v6747
      %6780 = vst.msk [vmem:[%s455 + $0xb8] sm:$0xff] %vm461, %v6748
      %6781 = vst.msk [vmem:[%s455 + $0xc0] sm:$0xff] %vm461, %v6749
      %6782 = vst.msk [vmem:[%s455 + $0xc8] sm:$0xff] %vm461, %v6750
      %6783 = vst.msk [vmem:[%s455 + $0xd0] sm:$0xff] %vm461, %v6751
      %6784 = vst.msk [vmem:[%s455 + $0xd8] sm:$0xff] %vm461, %v6752
      %6785 = vst.msk [vmem:[%s455 + $0xe0] sm:$0xff] %vm461, %v6753
      %6786 = vst.msk [vmem:[%s455 + $0xe8] sm:$0xff] %vm461, %v6754
      %6787 = vst.msk [vmem:[%s455 + $0xf0] sm:$0xff] %vm461, %v6755
      %6788 = vst.msk [vmem:[%s455 + $0xf8] sm:$0xff] %vm461, %v6756
      %s6789 = smul.u32 16, %s23
      %p6790 = scmp.lt.s32.totalorder %s22, 1
      %s6791 = scalar_select %p6790, %s22, 1
      %p6792 = scmp.lt.s32.totalorder %s6789, 15
      %s6793 = scalar_select %p6792, %s6789, 15
      %s6794 = smul.addr %s6793, 2
      %s6795 = smul.addr %s6791, 32
      %s6796 = sadd.s32 %s6794, %s6795
      %s6797 = smul.addr %s6796, 8
      %s6798 = scalar_lea.vmem %s7, %s6797
      // Predicated region
      $region53: #{resblock_forward.1} parent=47 // pred_check
        %p6799 = pneg %p234
      $region54: #{resblock_forward.1} parent=47 // pred_check_branch
        %6801 = sbr.rel (%p6799) target = $region56
      $region55: #{resblock_forward.1} parent=47 // pred_region
        %s6802 = smul.u32 16, %s23
      $region56: #{resblock_forward.1} parent=47 // pred_fallthru
        _
    $region48: #{resblock_forward.1} parent=5 // pred_fallthru
      _
    %p6803 = scmp.le.s32.totalorder 2, %s13
    // Predicated region
    $region57: #{resblock_forward.1} parent=5 // pred_check
      %p6804 = pneg %p6803
    $region58: #{resblock_forward.1} parent=5 // pred_check_branch
      %6806 = sbr.rel (%p6804) target = $region60
    $region59: #{resblock_forward.1} parent=5 // pred_region
      %s6807 = ssub.s32 %s13, 2
      // Predicated region
      $region61: #{resblock_forward.1} parent=59 // pred_check
        %p6808 = pneg %p240
      $region62: #{resblock_forward.1} parent=59 // pred_check_branch
        %6810 = sbr.rel (%p6808) target = $region64
      $region63: #{resblock_forward.1} parent=59 // pred_region
        %s6811 = smul.u32 16, %s25
        %p6812 = scmp.lt.s32.totalorder %s24, 1
        %s6813 = scalar_select %p6812, %s24, 1
        %p6814 = scmp.lt.s32.totalorder %s6811, 15
        %s6815 = scalar_select %p6814, %s6811, 15
        %s6816 = smul.addr %s6815, 2
        %s6817 = smul.addr %s6813, 32
        %s6818 = sadd.s32 %s6816, %s6817
        %s6819 = smul.addr %s6818, 8
        %s6820 = scalar_lea.vmem %s7, %s6819
      $region64: #{resblock_forward.1} parent=59 // pred_fallthru
        _
    $region60: #{resblock_forward.1} parent=5 // pred_fallthru
      _
  $region6: #{resblock_forward.1} parent=0 // loop_footer
    %s17 = sadd.s32 1, %s13
  $region7: #{resblock_forward.1} parent=0 // loop_footer_branch
    %12 = sbr.rel target = $region3
  $region8: #{resblock_forward.1} parent=0 // loop_exit
    _

</llo_original>
